<compile_context>
chip_gen: v6e
topology: v6e:2x2x1
jax: 0.10.0
libtpu: 0.0.40
codegen_flags: <defaults>
</compile_context>

<pallas_src>
import functools

import jax
import jax.numpy as jnp
from jax.experimental import pallas as pl
from jax.experimental.pallas import tpu as pltpu

EPS = 1e-6      # vector-neuron eps (VNBatchNorm / VNLeakyReLU)
BN_EPS = 1e-5   # nn.BatchNorm1d default eps


# ---------------------------------------------------------------------------
# in-kernel helpers.  Every "vector feature" is a nested list vs[c][d] of dense
# (SUB, LANE) f32 slabs: fully dense vregs, time on the 128-wide lane axis.
# ---------------------------------------------------------------------------
def _load_chunk(x_ref, i, C, D):
    # x_ref: (C*D, cps, SUB, LANE); chunk i -> nested list [C][D] of (SUB, LANE) slabs
    return [[x_ref[c * D + d, i].astype(jnp.float32) for d in range(D)]
            for c in range(C)]


def _chan_mix(vs, w_ref, p_out, c_in):
    # nn.Linear(bias=False) over channels as VPU broadcast-FMAs; weights are scalars
    # read from SMEM (torch convention: w[out, in]).  Kept off the MXU on purpose.
    D = len(vs[0])
    out = []
    for p in range(p_out):
        dims = []
        for d in range(D):
            acc = w_ref[p, 0] * vs[0][d]
            for c in range(1, c_in):
                acc = acc + w_ref[p, c] * vs[c][d]
            dims.append(acc)
        out.append(dims)
    return out


def _vec_norm(v):
    # ||v|| over the vector dimension (explicit adds of D dense slabs) + EPS
    nsq = v[0] * v[0]
    for d in range(1, len(v)):
        nsq = nsq + v[d] * v[d]
    return jnp.sqrt(nsq) + EPS


def _dot_d(a, b):
    acc = a[0] * b[0]
    for d in range(1, len(a)):
        acc = acc + a[d] * b[d]
    return acc


def _vn_bn_apply(vs, scale_ref, shift_ref):
    # VNBatchNorm with pre-folded affine: out = v * (scale + shift / norm),
    # where scale = gamma * rsqrt(var + eps), shift = beta - mu * scale.
    out = []
    for p, v in enumerate(vs):
        inv_norm = pl.reciprocal(_vec_norm(v))
        factor = scale_ref[p] + shift_ref[p] * inv_norm
        out.append([vd * factor for vd in v])
    return out


def _vn_leaky_relu0(vs, wd_ref):
    # VNLeakyReLU with negative_slope = 0.0
    n = len(vs)
    ds = _chan_mix(vs, wd_ref, n, n)
    out = []
    for v, dd in zip(vs, ds):
        dot = _dot_d(v, dd)
        dsq = _dot_d(dd, dd)
        coef = jnp.where(dot >= 0.0, 0.0, dot * pl.reciprocal(dsq + EPS))
        out.append([vd - coef * dvd for vd, dvd in zip(v, dd)])
    return out


def _accumulate_norm_stats(vs, o_ref):
    # o_ref: resident per-batch (2P, SUB, LANE) accumulator.
    # Rows [0, P): sum of norms; rows [P, 2P): sum of squared norms.  Single fused RMW.
    norms = [_vec_norm(v) for v in vs]
    stacked = jnp.stack(norms + [n * n for n in norms], axis=0)
    o_ref[...] += stacked


# ---------------------------------------------------------------------------
# kernels (one per streaming pass)
# ---------------------------------------------------------------------------
def _stats1_kernel(x_ref, w1_ref, o_ref, *, C, D, P, cps):
    @pl.when(pl.program_id(1) == 0)
    def _():
        o_ref[...] = jnp.zeros_like(o_ref)

    @pl.loop(0, cps)
    def _(i):
        xs = _load_chunk(x_ref, i, C, D)
        h = _chan_mix(xs, w1_ref, P, C)           # conv1
        _accumulate_norm_stats(h, o_ref)          # -> bn1 batch stats


def _stats2_kernel(x_ref, w1_ref, wd_ref, w2_ref, s1_ref, t1_ref, o_ref,
                   *, C, D, P, cps):
    @pl.when(pl.program_id(1) == 0)
    def _():
        o_ref[...] = jnp.zeros_like(o_ref)

    @pl.loop(0, cps)
    def _(i):
        xs = _load_chunk(x_ref, i, C, D)
        h = _chan_mix(xs, w1_ref, P, C)           # conv1
        h = _vn_bn_apply(h, s1_ref, t1_ref)       # bn1
        h = _vn_leaky_relu0(h, wd_ref)            # relu
        h = _chan_mix(h, w2_ref, P, P)            # conv2
        _accumulate_norm_stats(h, o_ref)          # -> bn2 batch stats


def _apply_kernel(x_ref, w1_ref, wd_ref, w2_ref, s1_ref, t1_ref, s2_ref, t2_ref,
                  o_ref, *, C, D, P, cps):
    @pl.loop(0, cps)
    def _(i):
        xs = _load_chunk(x_ref, i, C, D)
        h = _chan_mix(xs, w1_ref, P, C)           # conv1
        h = _vn_bn_apply(h, s1_ref, t1_ref)       # bn1
        h = _vn_leaky_relu0(h, wd_ref)            # relu
        h = _chan_mix(h, w2_ref, P, P)            # conv2
        h = _vn_bn_apply(h, s2_ref, t2_ref)       # bn2
        h = [[hd + xd for hd, xd in zip(hp, xp)]  # residual (identity)
             for hp, xp in zip(h, xs)]
        h = _vn_leaky_relu0(h, wd_ref)            # final relu (same weights)
        for p in range(P):
            for d in range(D):
                o_ref[p * D + d, i] = h[p][d].astype(o_ref.dtype)


# ---------------------------------------------------------------------------
# wrapper
# ---------------------------------------------------------------------------
def _time_layout(T, max_tile_t):
    """Split the time axis into (n_chunks, SUB, LANE) + pick chunks per grid step."""
    LANE = 128
    assert T % LANE == 0, "T must be a multiple of 128"  # TODO(synk): pad + mask
    rows = T // LANE
    sub = 8 if rows % 8 == 0 else rows           # dense (8,128) chunks when possible
    n_chunks = rows // sub
    max_cps = max(1, max_tile_t // (sub * LANE))
    cps = 1
    for cand in range(min(max_cps, n_chunks), 0, -1):
        if n_chunks % cand == 0:
            cps = cand
            break
    return LANE, sub, n_chunks, cps


def vn_basic_block_1d(x_bcdt, params, *, max_tile_t=8192):
    """x_bcdt: [B, C, D, T] (PyTorch convention).  Returns [B, P, D, T]."""
    B, C, D, T = x_bcdt.shape
    P = params["w1"].shape[0]
    assert P == C, "identity residual path requires in_planes == planes"

    LANE, SUB, n_chunks, cps = _time_layout(T, max_tile_t)
    nt = n_chunks // cps

    # free, layout-preserving view: [B, C*D, n_chunks, SUB, LANE]
    x5 = x_bcdt.reshape(B, C * D, n_chunks, SUB, LANE)

    w1 = params["w1"].astype(jnp.float32)
    wd = params["wd"].astype(jnp.float32)
    w2 = params["w2"].astype(jnp.float32)

    smem = pl.BlockSpec(memory_space=pltpu.MemorySpace.SMEM)
    x_spec = pl.BlockSpec((None, C * D, cps, SUB, LANE), lambda b, t: (b, 0, t, 0, 0))
    stats_spec = pl.BlockSpec((None, 2 * P, SUB, LANE), lambda b, t: (b, 0, 0, 0))
    stats_shape = jax.ShapeDtypeStruct((B, 2 * P, SUB, LANE), jnp.float32)
    stats_params = pltpu.CompilerParams(
        dimension_semantics=("parallel", "arbitrary"))  # per-batch slab -> megacore OK

    n_total = float(B * T)

    # ---- pass 1: bn1 batch statistics over the full B*T extent ----
    s1_raw = pl.pallas_call(
        functools.partial(_stats1_kernel, C=C, D=D, P=P, cps=cps),
        out_shape=stats_shape,
        grid=(B, nt),
        in_specs=[x_spec, smem],
        out_specs=stats_spec,
        compiler_params=stats_params,
    )(x5, w1)
    s1 = jnp.sum(s1_raw, axis=(0, 2, 3))
    mu1 = s1[:P] / n_total
    var1 = s1[P:] / n_total - mu1 * mu1
    inv1 = jax.lax.rsqrt(var1 + BN_EPS)
    scale1 = params["g1"].astype(jnp.float32) * inv1
    shift1 = params["b1"].astype(jnp.float32) - mu1 * scale1

    # ---- pass 2: bn2 batch statistics (needs bn1 stats) ----
    s2_raw = pl.pallas_call(
        functools.partial(_stats2_kernel, C=C, D=D, P=P, cps=cps),
        out_shape=stats_shape,
        grid=(B, nt),
        in_specs=[x_spec] + [smem] * 5,
        out_specs=stats_spec,
        compiler_params=stats_params,
    )(x5, w1, wd, w2, scale1, shift1)
    s2 = jnp.sum(s2_raw, axis=(0, 2, 3))
    mu2 = s2[:P] / n_total
    var2 = s2[P:] / n_total - mu2 * mu2
    inv2 = jax.lax.rsqrt(var2 + BN_EPS)
    scale2 = params["g2"].astype(jnp.float32) * inv2
    shift2 = params["b2"].astype(jnp.float32) - mu2 * scale2

    # ---- pass 3: apply the full path, lane-dense tiled output writes ----
    out5 = pl.pallas_call(
        functools.partial(_apply_kernel, C=C, D=D, P=P, cps=cps),
        out_shape=jax.ShapeDtypeStruct((B, P * D, n_chunks, SUB, LANE), x_bcdt.dtype),
        grid=(B, nt),
        in_specs=[x_spec] + [smem] * 7,
        out_specs=pl.BlockSpec((None, P * D, cps, SUB, LANE),
                               lambda b, t: (b, 0, t, 0, 0)),
        compiler_params=pltpu.CompilerParams(
            dimension_semantics=("parallel", "parallel")),
    )(x5, w1, wd, w2, scale1, shift1, scale2, shift2)

    return out5.reshape(B, P, D, T)


# ---------------------------------------------------------------------------
# pure-JAX reference (mirrors the PyTorch forward exactly)
# ---------------------------------------------------------------------------
def ref_forward(x, params):
    w1, w2, wd = params["w1"], params["w2"], params["wd"]

    def lin(t, w):  # nn.Linear along channel axis (torch weight [out, in])
        return jnp.einsum("oc,bcdt->bodt", w, t)

    def bn(t, gamma, beta):
        norm = jnp.sqrt(jnp.sum(t * t, axis=2)) + EPS              # [B, C, T]
        mu = jnp.mean(norm, axis=(0, 2), keepdims=True)
        var = jnp.mean((norm - mu) ** 2, axis=(0, 2), keepdims=True)
        nbn = (norm - mu) / jnp.sqrt(var + BN_EPS) * gamma[None, :, None] + beta[None, :, None]
        return t / norm[:, :, None, :] * nbn[:, :, None, :]

    def relu(t, w):  # VNLeakyReLU, negative_slope = 0.0
        d = lin(t, w)
        dot = jnp.sum(t * d, axis=2, keepdims=True)
        dsq = jnp.sum(d * d, axis=2, keepdims=True)
        return jnp.where(dot >= 0, t, t - dot / (dsq + EPS) * d)

    out = lin(x, w1)
    out = bn(out, params["g1"], params["b1"])
    out = relu(out, wd)
    out = lin(out, w2)
    out = bn(out, params["g2"], params["b2"])
    out = out + x
    out = relu(out, wd)
    return out


if __name__ == "__main__":
    # batch, channels (in_planes=planes=4), vec dim, time
    B, C, D, T = 2, 4, 3, 16384
    in_planes = planes = C

    key = jax.random.PRNGKey(0)
    k1, k2, k3, kx = jax.random.split(key, 4)

    params = {
        "w1": jax.random.normal(k1, (planes, in_planes), jnp.float32) / jnp.sqrt(in_planes),
        "w2": jax.random.normal(k2, (planes, planes), jnp.float32) / jnp.sqrt(planes),
        "wd": jax.random.normal(k3, (planes, planes), jnp.float32) / jnp.sqrt(planes),
        "g1": 1.0 + 0.1 * jnp.arange(planes, dtype=jnp.float32),
        "b1": 0.01 * jnp.arange(planes, dtype=jnp.float32),
        "g2": 1.0 - 0.05 * jnp.arange(planes, dtype=jnp.float32),
        "b2": -0.02 * jnp.arange(planes, dtype=jnp.float32),
    }

    x = jax.random.normal(kx, (B, C, D, T), jnp.float32)

    out = jax.block_until_ready(jax.jit(vn_basic_block_1d)(x, params))
    ref = jax.block_until_ready(ref_forward(x, params))

    assert out.shape == (B, planes, D, T), out.shape
    max_err = float(jnp.max(jnp.abs(out - ref)))
    assert jnp.allclose(out, ref, rtol=5e-4, atol=5e-4), max_err
    print("KERNEL_OK")
</pallas_src>

<mosaic_0001>
module attributes {stable_mosaic.version = 11 : i64} {
  func.func @_stats1_kernel(%arg0: i32, %arg1: i32, %arg2: memref<1x12x8x8x128xf32, #tpu.memory_space<vmem>>, %arg3: memref<4x4xf32, #tpu.memory_space<smem>>, %arg4: memref<1x8x8x128xf32, #tpu.memory_space<vmem>>) attributes {dimension_semantics = [#tpu.dimension_semantics<parallel>, #tpu.dimension_semantics<arbitrary>], iteration_bounds = array<i64: 2, 2>, scalar_prefetch = 0 : i64, scratch_operands = 0 : i64, tpu.core_type = #tpu.core_type<tc>, window_params = [{transform_indices = @transform_0, window_bounds = array<i64: 1, 12, 8, 8, 128>}, {transform_indices = @transform_1, window_bounds = array<i64: 4, 4>}, {transform_indices = @transform_2, window_bounds = array<i64: 1, 8, 8, 128>}]} {
    %c0_i32 = arith.constant 0 : i32
    %0 = arith.cmpi eq, %arg1, %c0_i32 : i32
    %1 = arith.extui %0 : i1 to i32
    %c0_i32_0 = arith.constant 0 : i32
    %2 = arith.cmpi ne, %1, %c0_i32_0 : i32
    scf.if %2 {
      %cst = arith.constant 0.000000e+00 : f32
      %4 = vector.broadcast %cst : f32 to vector<8x8x128xf32>
      %c0 = arith.constant 0 : index
      %c0_3 = arith.constant 0 : index
      %c0_4 = arith.constant 0 : index
      %c0_5 = arith.constant 0 : index
      %5 = vector.load %arg4[%c0, %c0_3, %c0_4, %c0_5] : memref<1x8x8x128xf32, #tpu.memory_space<vmem>>, vector<1x8x8x128xf32>
      %6 = vector.shape_cast %5 : vector<1x8x8x128xf32> to vector<8x8x128xf32>
      %7 = vector.shape_cast %4 : vector<8x8x128xf32> to vector<1x8x8x128xf32>
      tpu.vector_store %arg4[%c0, %c0_3, %c0_4, %c0_5], %7 {strides = array<i32>} : memref<1x8x8x128xf32, #tpu.memory_space<vmem>>, vector<1x8x8x128xf32>,
    } else {
    }
    %c0_i32_1 = arith.constant 0 : i32
    %c8_i32 = arith.constant 8 : i32
    %3 = arith.addi %c0_i32_1, %c8_i32 : i32
    %c1_i32 = arith.constant 1 : i32
    scf.for %arg5 = %c0_i32_1 to %3 step %c1_i32  : i32 {
      %c1_i32_3 = arith.constant 1 : i32
      %4 = arith.muli %arg5, %c1_i32_3 : i32
      %c0_i32_4 = arith.constant 0 : i32
      %5 = arith.addi %c0_i32_4, %4 : i32
      %c0 = arith.constant 0 : index
      %c0_5 = arith.constant 0 : index
      %6 = arith.index_cast %5 : i32 to index
      %c0_6 = arith.constant 0 : index
      %c0_7 = arith.constant 0 : index
      %7 = vector.load %arg2[%c0, %c0_5, %6, %c0_6, %c0_7] : memref<1x12x8x8x128xf32, #tpu.memory_space<vmem>>, vector<1x1x1x8x128xf32>
      %8 = vector.shape_cast %7 : vector<1x1x1x8x128xf32> to vector<8x128xf32>
      %c0_8 = arith.constant 0 : index
      %c1 = arith.constant 1 : index
      %9 = arith.index_cast %5 : i32 to index
      %c0_9 = arith.constant 0 : index
      %c0_10 = arith.constant 0 : index
      %10 = vector.load %arg2[%c0_8, %c1, %9, %c0_9, %c0_10] : memref<1x12x8x8x128xf32, #tpu.memory_space<vmem>>, vector<1x1x1x8x128xf32>
      %11 = vector.shape_cast %10 : vector<1x1x1x8x128xf32> to vector<8x128xf32>
      %c0_11 = arith.constant 0 : index
      %c2 = arith.constant 2 : index
      %12 = arith.index_cast %5 : i32 to index
      %c0_12 = arith.constant 0 : index
      %c0_13 = arith.constant 0 : index
      %13 = vector.load %arg2[%c0_11, %c2, %12, %c0_12, %c0_13] : memref<1x12x8x8x128xf32, #tpu.memory_space<vmem>>, vector<1x1x1x8x128xf32>
      %14 = vector.shape_cast %13 : vector<1x1x1x8x128xf32> to vector<8x128xf32>
      %c0_14 = arith.constant 0 : index
      %c3 = arith.constant 3 : index
      %15 = arith.index_cast %5 : i32 to index
      %c0_15 = arith.constant 0 : index
      %c0_16 = arith.constant 0 : index
      %16 = vector.load %arg2[%c0_14, %c3, %15, %c0_15, %c0_16] : memref<1x12x8x8x128xf32, #tpu.memory_space<vmem>>, vector<1x1x1x8x128xf32>
      %17 = vector.shape_cast %16 : vector<1x1x1x8x128xf32> to vector<8x128xf32>
      %c0_17 = arith.constant 0 : index
      %c4 = arith.constant 4 : index
      %18 = arith.index_cast %5 : i32 to index
      %c0_18 = arith.constant 0 : index
      %c0_19 = arith.constant 0 : index
      %19 = vector.load %arg2[%c0_17, %c4, %18, %c0_18, %c0_19] : memref<1x12x8x8x128xf32, #tpu.memory_space<vmem>>, vector<1x1x1x8x128xf32>
      %20 = vector.shape_cast %19 : vector<1x1x1x8x128xf32> to vector<8x128xf32>
      %c0_20 = arith.constant 0 : index
      %c5 = arith.constant 5 : index
      %21 = arith.index_cast %5 : i32 to index
      %c0_21 = arith.constant 0 : index
      %c0_22 = arith.constant 0 : index
      %22 = vector.load %arg2[%c0_20, %c5, %21, %c0_21, %c0_22] : memref<1x12x8x8x128xf32, #tpu.memory_space<vmem>>, vector<1x1x1x8x128xf32>
      %23 = vector.shape_cast %22 : vector<1x1x1x8x128xf32> to vector<8x128xf32>
      %c0_23 = arith.constant 0 : index
      %c6 = arith.constant 6 : index
      %24 = arith.index_cast %5 : i32 to index
      %c0_24 = arith.constant 0 : index
      %c0_25 = arith.constant 0 : index
      %25 = vector.load %arg2[%c0_23, %c6, %24, %c0_24, %c0_25] : memref<1x12x8x8x128xf32, #tpu.memory_space<vmem>>, vector<1x1x1x8x128xf32>
      %26 = vector.shape_cast %25 : vector<1x1x1x8x128xf32> to vector<8x128xf32>
      %c0_26 = arith.constant 0 : index
      %c7 = arith.constant 7 : index
      %27 = arith.index_cast %5 : i32 to index
      %c0_27 = arith.constant 0 : index
      %c0_28 = arith.constant 0 : index
      %28 = vector.load %arg2[%c0_26, %c7, %27, %c0_27, %c0_28] : memref<1x12x8x8x128xf32, #tpu.memory_space<vmem>>, vector<1x1x1x8x128xf32>
      %29 = vector.shape_cast %28 : vector<1x1x1x8x128xf32> to vector<8x128xf32>
      %c0_29 = arith.constant 0 : index
      %c8 = arith.constant 8 : index
      %30 = arith.index_cast %5 : i32 to index
      %c0_30 = arith.constant 0 : index
      %c0_31 = arith.constant 0 : index
      %31 = vector.load %arg2[%c0_29, %c8, %30, %c0_30, %c0_31] : memref<1x12x8x8x128xf32, #tpu.memory_space<vmem>>, vector<1x1x1x8x128xf32>
      %32 = vector.shape_cast %31 : vector<1x1x1x8x128xf32> to vector<8x128xf32>
      %c0_32 = arith.constant 0 : index
      %c9 = arith.constant 9 : index
      %33 = arith.index_cast %5 : i32 to index
      %c0_33 = arith.constant 0 : index
      %c0_34 = arith.constant 0 : index
      %34 = vector.load %arg2[%c0_32, %c9, %33, %c0_33, %c0_34] : memref<1x12x8x8x128xf32, #tpu.memory_space<vmem>>, vector<1x1x1x8x128xf32>
      %35 = vector.shape_cast %34 : vector<1x1x1x8x128xf32> to vector<8x128xf32>
      %c0_35 = arith.constant 0 : index
      %c10 = arith.constant 10 : index
      %36 = arith.index_cast %5 : i32 to index
      %c0_36 = arith.constant 0 : index
      %c0_37 = arith.constant 0 : index
      %37 = vector.load %arg2[%c0_35, %c10, %36, %c0_36, %c0_37] : memref<1x12x8x8x128xf32, #tpu.memory_space<vmem>>, vector<1x1x1x8x128xf32>
      %38 = vector.shape_cast %37 : vector<1x1x1x8x128xf32> to vector<8x128xf32>
      %c0_38 = arith.constant 0 : index
      %c11 = arith.constant 11 : index
      %39 = arith.index_cast %5 : i32 to index
      %c0_39 = arith.constant 0 : index
      %c0_40 = arith.constant 0 : index
      %40 = vector.load %arg2[%c0_38, %c11, %39, %c0_39, %c0_40] : memref<1x12x8x8x128xf32, #tpu.memory_space<vmem>>, vector<1x1x1x8x128xf32>
      %41 = vector.shape_cast %40 : vector<1x1x1x8x128xf32> to vector<8x128xf32>
      %c0_41 = arith.constant 0 : index
      %c0_42 = arith.constant 0 : index
      %42 = memref.load %arg3[%c0_41, %c0_42] : memref<4x4xf32, #tpu.memory_space<smem>>
      %43 = vector.broadcast %42 : f32 to vector<8x128xf32>
      %44 = arith.mulf %43, %8 : vector<8x128xf32>
      %c0_43 = arith.constant 0 : index
      %c1_44 = arith.constant 1 : index
      %45 = memref.load %arg3[%c0_43, %c1_44] : memref<4x4xf32, #tpu.memory_space<smem>>
      %46 = vector.broadcast %45 : f32 to vector<8x128xf32>
      %47 = arith.mulf %46, %17 : vector<8x128xf32>
      %48 = arith.addf %44, %47 : vector<8x128xf32>
      %c0_45 = arith.constant 0 : index
      %c2_46 = arith.constant 2 : index
      %49 = memref.load %arg3[%c0_45, %c2_46] : memref<4x4xf32, #tpu.memory_space<smem>>
      %50 = vector.broadcast %49 : f32 to vector<8x128xf32>
      %51 = arith.mulf %50, %26 : vector<8x128xf32>
      %52 = arith.addf %48, %51 : vector<8x128xf32>
      %c0_47 = arith.constant 0 : index
      %c3_48 = arith.constant 3 : index
      %53 = memref.load %arg3[%c0_47, %c3_48] : memref<4x4xf32, #tpu.memory_space<smem>>
      %54 = vector.broadcast %53 : f32 to vector<8x128xf32>
      %55 = arith.mulf %54, %35 : vector<8x128xf32>
      %56 = arith.addf %52, %55 : vector<8x128xf32>
      %c0_49 = arith.constant 0 : index
      %c0_50 = arith.constant 0 : index
      %57 = memref.load %arg3[%c0_49, %c0_50] : memref<4x4xf32, #tpu.memory_space<smem>>
      %58 = vector.broadcast %57 : f32 to vector<8x128xf32>
      %59 = arith.mulf %58, %11 : vector<8x128xf32>
      %c0_51 = arith.constant 0 : index
      %c1_52 = arith.constant 1 : index
      %60 = memref.load %arg3[%c0_51, %c1_52] : memref<4x4xf32, #tpu.memory_space<smem>>
      %61 = vector.broadcast %60 : f32 to vector<8x128xf32>
      %62 = arith.mulf %61, %20 : vector<8x128xf32>
      %63 = arith.addf %59, %62 : vector<8x128xf32>
      %c0_53 = arith.constant 0 : index
      %c2_54 = arith.constant 2 : index
      %64 = memref.load %arg3[%c0_53, %c2_54] : memref<4x4xf32, #tpu.memory_space<smem>>
      %65 = vector.broadcast %64 : f32 to vector<8x128xf32>
      %66 = arith.mulf %65, %29 : vector<8x128xf32>
      %67 = arith.addf %63, %66 : vector<8x128xf32>
      %c0_55 = arith.constant 0 : index
      %c3_56 = arith.constant 3 : index
      %68 = memref.load %arg3[%c0_55, %c3_56] : memref<4x4xf32, #tpu.memory_space<smem>>
      %69 = vector.broadcast %68 : f32 to vector<8x128xf32>
      %70 = arith.mulf %69, %38 : vector<8x128xf32>
      %71 = arith.addf %67, %70 : vector<8x128xf32>
      %c0_57 = arith.constant 0 : index
      %c0_58 = arith.constant 0 : index
      %72 = memref.load %arg3[%c0_57, %c0_58] : memref<4x4xf32, #tpu.memory_space<smem>>
      %73 = vector.broadcast %72 : f32 to vector<8x128xf32>
      %74 = arith.mulf %73, %14 : vector<8x128xf32>
      %c0_59 = arith.constant 0 : index
      %c1_60 = arith.constant 1 : index
      %75 = memref.load %arg3[%c0_59, %c1_60] : memref<4x4xf32, #tpu.memory_space<smem>>
      %76 = vector.broadcast %75 : f32 to vector<8x128xf32>
      %77 = arith.mulf %76, %23 : vector<8x128xf32>
      %78 = arith.addf %74, %77 : vector<8x128xf32>
      %c0_61 = arith.constant 0 : index
      %c2_62 = arith.constant 2 : index
      %79 = memref.load %arg3[%c0_61, %c2_62] : memref<4x4xf32, #tpu.memory_space<smem>>
      %80 = vector.broadcast %79 : f32 to vector<8x128xf32>
      %81 = arith.mulf %80, %32 : vector<8x128xf32>
      %82 = arith.addf %78, %81 : vector<8x128xf32>
      %c0_63 = arith.constant 0 : index
      %c3_64 = arith.constant 3 : index
      %83 = memref.load %arg3[%c0_63, %c3_64] : memref<4x4xf32, #tpu.memory_space<smem>>
      %84 = vector.broadcast %83 : f32 to vector<8x128xf32>
      %85 = arith.mulf %84, %41 : vector<8x128xf32>
      %86 = arith.addf %82, %85 : vector<8x128xf32>
      %c1_65 = arith.constant 1 : index
      %c0_66 = arith.constant 0 : index
      %87 = memref.load %arg3[%c1_65, %c0_66] : memref<4x4xf32, #tpu.memory_space<smem>>
      %88 = vector.broadcast %87 : f32 to vector<8x128xf32>
      %89 = arith.mulf %88, %8 : vector<8x128xf32>
      %c1_67 = arith.constant 1 : index
      %c1_68 = arith.constant 1 : index
      %90 = memref.load %arg3[%c1_67, %c1_68] : memref<4x4xf32, #tpu.memory_space<smem>>
      %91 = vector.broadcast %90 : f32 to vector<8x128xf32>
      %92 = arith.mulf %91, %17 : vector<8x128xf32>
      %93 = arith.addf %89, %92 : vector<8x128xf32>
      %c1_69 = arith.constant 1 : index
      %c2_70 = arith.constant 2 : index
      %94 = memref.load %arg3[%c1_69, %c2_70] : memref<4x4xf32, #tpu.memory_space<smem>>
      %95 = vector.broadcast %94 : f32 to vector<8x128xf32>
      %96 = arith.mulf %95, %26 : vector<8x128xf32>
      %97 = arith.addf %93, %96 : vector<8x128xf32>
      %c1_71 = arith.constant 1 : index
      %c3_72 = arith.constant 3 : index
      %98 = memref.load %arg3[%c1_71, %c3_72] : memref<4x4xf32, #tpu.memory_space<smem>>
      %99 = vector.broadcast %98 : f32 to vector<8x128xf32>
      %100 = arith.mulf %99, %35 : vector<8x128xf32>
      %101 = arith.addf %97, %100 : vector<8x128xf32>
      %c1_73 = arith.constant 1 : index
      %c0_74 = arith.constant 0 : index
      %102 = memref.load %arg3[%c1_73, %c0_74] : memref<4x4xf32, #tpu.memory_space<smem>>
      %103 = vector.broadcast %102 : f32 to vector<8x128xf32>
      %104 = arith.mulf %103, %11 : vector<8x128xf32>
      %c1_75 = arith.constant 1 : index
      %c1_76 = arith.constant 1 : index
      %105 = memref.load %arg3[%c1_75, %c1_76] : memref<4x4xf32, #tpu.memory_space<smem>>
      %106 = vector.broadcast %105 : f32 to vector<8x128xf32>
      %107 = arith.mulf %106, %20 : vector<8x128xf32>
      %108 = arith.addf %104, %107 : vector<8x128xf32>
      %c1_77 = arith.constant 1 : index
      %c2_78 = arith.constant 2 : index
      %109 = memref.load %arg3[%c1_77, %c2_78] : memref<4x4xf32, #tpu.memory_space<smem>>
      %110 = vector.broadcast %109 : f32 to vector<8x128xf32>
      %111 = arith.mulf %110, %29 : vector<8x128xf32>
      %112 = arith.addf %108, %111 : vector<8x128xf32>
      %c1_79 = arith.constant 1 : index
      %c3_80 = arith.constant 3 : index
      %113 = memref.load %arg3[%c1_79, %c3_80] : memref<4x4xf32, #tpu.memory_space<smem>>
      %114 = vector.broadcast %113 : f32 to vector<8x128xf32>
      %115 = arith.mulf %114, %38 : vector<8x128xf32>
      %116 = arith.addf %112, %115 : vector<8x128xf32>
      %c1_81 = arith.constant 1 : index
      %c0_82 = arith.constant 0 : index
      %117 = memref.load %arg3[%c1_81, %c0_82] : memref<4x4xf32, #tpu.memory_space<smem>>
      %118 = vector.broadcast %117 : f32 to vector<8x128xf32>
      %119 = arith.mulf %118, %14 : vector<8x128xf32>
      %c1_83 = arith.constant 1 : index
      %c1_84 = arith.constant 1 : index
      %120 = memref.load %arg3[%c1_83, %c1_84] : memref<4x4xf32, #tpu.memory_space<smem>>
      %121 = vector.broadcast %120 : f32 to vector<8x128xf32>
      %122 = arith.mulf %121, %23 : vector<8x128xf32>
      %123 = arith.addf %119, %122 : vector<8x128xf32>
      %c1_85 = arith.constant 1 : index
      %c2_86 = arith.constant 2 : index
      %124 = memref.load %arg3[%c1_85, %c2_86] : memref<4x4xf32, #tpu.memory_space<smem>>
      %125 = vector.broadcast %124 : f32 to vector<8x128xf32>
      %126 = arith.mulf %125, %32 : vector<8x128xf32>
      %127 = arith.addf %123, %126 : vector<8x128xf32>
      %c1_87 = arith.constant 1 : index
      %c3_88 = arith.constant 3 : index
      %128 = memref.load %arg3[%c1_87, %c3_88] : memref<4x4xf32, #tpu.memory_space<smem>>
      %129 = vector.broadcast %128 : f32 to vector<8x128xf32>
      %130 = arith.mulf %129, %41 : vector<8x128xf32>
      %131 = arith.addf %127, %130 : vector<8x128xf32>
      %c2_89 = arith.constant 2 : index
      %c0_90 = arith.constant 0 : index
      %132 = memref.load %arg3[%c2_89, %c0_90] : memref<4x4xf32, #tpu.memory_space<smem>>
      %133 = vector.broadcast %132 : f32 to vector<8x128xf32>
      %134 = arith.mulf %133, %8 : vector<8x128xf32>
      %c2_91 = arith.constant 2 : index
      %c1_92 = arith.constant 1 : index
      %135 = memref.load %arg3[%c2_91, %c1_92] : memref<4x4xf32, #tpu.memory_space<smem>>
      %136 = vector.broadcast %135 : f32 to vector<8x128xf32>
      %137 = arith.mulf %136, %17 : vector<8x128xf32>
      %138 = arith.addf %134, %137 : vector<8x128xf32>
      %c2_93 = arith.constant 2 : index
      %c2_94 = arith.constant 2 : index
      %139 = memref.load %arg3[%c2_93, %c2_94] : memref<4x4xf32, #tpu.memory_space<smem>>
      %140 = vector.broadcast %139 : f32 to vector<8x128xf32>
      %141 = arith.mulf %140, %26 : vector<8x128xf32>
      %142 = arith.addf %138, %141 : vector<8x128xf32>
      %c2_95 = arith.constant 2 : index
      %c3_96 = arith.constant 3 : index
      %143 = memref.load %arg3[%c2_95, %c3_96] : memref<4x4xf32, #tpu.memory_space<smem>>
      %144 = vector.broadcast %143 : f32 to vector<8x128xf32>
      %145 = arith.mulf %144, %35 : vector<8x128xf32>
      %146 = arith.addf %142, %145 : vector<8x128xf32>
      %c2_97 = arith.constant 2 : index
      %c0_98 = arith.constant 0 : index
      %147 = memref.load %arg3[%c2_97, %c0_98] : memref<4x4xf32, #tpu.memory_space<smem>>
      %148 = vector.broadcast %147 : f32 to vector<8x128xf32>
      %149 = arith.mulf %148, %11 : vector<8x128xf32>
      %c2_99 = arith.constant 2 : index
      %c1_100 = arith.constant 1 : index
      %150 = memref.load %arg3[%c2_99, %c1_100] : memref<4x4xf32, #tpu.memory_space<smem>>
      %151 = vector.broadcast %150 : f32 to vector<8x128xf32>
      %152 = arith.mulf %151, %20 : vector<8x128xf32>
      %153 = arith.addf %149, %152 : vector<8x128xf32>
      %c2_101 = arith.constant 2 : index
      %c2_102 = arith.constant 2 : index
      %154 = memref.load %arg3[%c2_101, %c2_102] : memref<4x4xf32, #tpu.memory_space<smem>>
      %155 = vector.broadcast %154 : f32 to vector<8x128xf32>
      %156 = arith.mulf %155, %29 : vector<8x128xf32>
      %157 = arith.addf %153, %156 : vector<8x128xf32>
      %c2_103 = arith.constant 2 : index
      %c3_104 = arith.constant 3 : index
      %158 = memref.load %arg3[%c2_103, %c3_104] : memref<4x4xf32, #tpu.memory_space<smem>>
      %159 = vector.broadcast %158 : f32 to vector<8x128xf32>
      %160 = arith.mulf %159, %38 : vector<8x128xf32>
      %161 = arith.addf %157, %160 : vector<8x128xf32>
      %c2_105 = arith.constant 2 : index
      %c0_106 = arith.constant 0 : index
      %162 = memref.load %arg3[%c2_105, %c0_106] : memref<4x4xf32, #tpu.memory_space<smem>>
      %163 = vector.broadcast %162 : f32 to vector<8x128xf32>
      %164 = arith.mulf %163, %14 : vector<8x128xf32>
      %c2_107 = arith.constant 2 : index
      %c1_108 = arith.constant 1 : index
      %165 = memref.load %arg3[%c2_107, %c1_108] : memref<4x4xf32, #tpu.memory_space<smem>>
      %166 = vector.broadcast %165 : f32 to vector<8x128xf32>
      %167 = arith.mulf %166, %23 : vector<8x128xf32>
      %168 = arith.addf %164, %167 : vector<8x128xf32>
      %c2_109 = arith.constant 2 : index
      %c2_110 = arith.constant 2 : index
      %169 = memref.load %arg3[%c2_109, %c2_110] : memref<4x4xf32, #tpu.memory_space<smem>>
      %170 = vector.broadcast %169 : f32 to vector<8x128xf32>
      %171 = arith.mulf %170, %32 : vector<8x128xf32>
      %172 = arith.addf %168, %171 : vector<8x128xf32>
      %c2_111 = arith.constant 2 : index
      %c3_112 = arith.constant 3 : index
      %173 = memref.load %arg3[%c2_111, %c3_112] : memref<4x4xf32, #tpu.memory_space<smem>>
      %174 = vector.broadcast %173 : f32 to vector<8x128xf32>
      %175 = arith.mulf %174, %41 : vector<8x128xf32>
      %176 = arith.addf %172, %175 : vector<8x128xf32>
      %c3_113 = arith.constant 3 : index
      %c0_114 = arith.constant 0 : index
      %177 = memref.load %arg3[%c3_113, %c0_114] : memref<4x4xf32, #tpu.memory_space<smem>>
      %178 = vector.broadcast %177 : f32 to vector<8x128xf32>
      %179 = arith.mulf %178, %8 : vector<8x128xf32>
      %c3_115 = arith.constant 3 : index
      %c1_116 = arith.constant 1 : index
      %180 = memref.load %arg3[%c3_115, %c1_116] : memref<4x4xf32, #tpu.memory_space<smem>>
      %181 = vector.broadcast %180 : f32 to vector<8x128xf32>
      %182 = arith.mulf %181, %17 : vector<8x128xf32>
      %183 = arith.addf %179, %182 : vector<8x128xf32>
      %c3_117 = arith.constant 3 : index
      %c2_118 = arith.constant 2 : index
      %184 = memref.load %arg3[%c3_117, %c2_118] : memref<4x4xf32, #tpu.memory_space<smem>>
      %185 = vector.broadcast %184 : f32 to vector<8x128xf32>
      %186 = arith.mulf %185, %26 : vector<8x128xf32>
      %187 = arith.addf %183, %186 : vector<8x128xf32>
      %c3_119 = arith.constant 3 : index
      %c3_120 = arith.constant 3 : index
      %188 = memref.load %arg3[%c3_119, %c3_120] : memref<4x4xf32, #tpu.memory_space<smem>>
      %189 = vector.broadcast %188 : f32 to vector<8x128xf32>
      %190 = arith.mulf %189, %35 : vector<8x128xf32>
      %191 = arith.addf %187, %190 : vector<8x128xf32>
      %c3_121 = arith.constant 3 : index
      %c0_122 = arith.constant 0 : index
      %192 = memref.load %arg3[%c3_121, %c0_122] : memref<4x4xf32, #tpu.memory_space<smem>>
      %193 = vector.broadcast %192 : f32 to vector<8x128xf32>
      %194 = arith.mulf %193, %11 : vector<8x128xf32>
      %c3_123 = arith.constant 3 : index
      %c1_124 = arith.constant 1 : index
      %195 = memref.load %arg3[%c3_123, %c1_124] : memref<4x4xf32, #tpu.memory_space<smem>>
      %196 = vector.broadcast %195 : f32 to vector<8x128xf32>
      %197 = arith.mulf %196, %20 : vector<8x128xf32>
      %198 = arith.addf %194, %197 : vector<8x128xf32>
      %c3_125 = arith.constant 3 : index
      %c2_126 = arith.constant 2 : index
      %199 = memref.load %arg3[%c3_125, %c2_126] : memref<4x4xf32, #tpu.memory_space<smem>>
      %200 = vector.broadcast %199 : f32 to vector<8x128xf32>
      %201 = arith.mulf %200, %29 : vector<8x128xf32>
      %202 = arith.addf %198, %201 : vector<8x128xf32>
      %c3_127 = arith.constant 3 : index
      %c3_128 = arith.constant 3 : index
      %203 = memref.load %arg3[%c3_127, %c3_128] : memref<4x4xf32, #tpu.memory_space<smem>>
      %204 = vector.broadcast %203 : f32 to vector<8x128xf32>
      %205 = arith.mulf %204, %38 : vector<8x128xf32>
      %206 = arith.addf %202, %205 : vector<8x128xf32>
      %c3_129 = arith.constant 3 : index
      %c0_130 = arith.constant 0 : index
      %207 = memref.load %arg3[%c3_129, %c0_130] : memref<4x4xf32, #tpu.memory_space<smem>>
      %208 = vector.broadcast %207 : f32 to vector<8x128xf32>
      %209 = arith.mulf %208, %14 : vector<8x128xf32>
      %c3_131 = arith.constant 3 : index
      %c1_132 = arith.constant 1 : index
      %210 = memref.load %arg3[%c3_131, %c1_132] : memref<4x4xf32, #tpu.memory_space<smem>>
      %211 = vector.broadcast %210 : f32 to vector<8x128xf32>
      %212 = arith.mulf %211, %23 : vector<8x128xf32>
      %213 = arith.addf %209, %212 : vector<8x128xf32>
      %c3_133 = arith.constant 3 : index
      %c2_134 = arith.constant 2 : index
      %214 = memref.load %arg3[%c3_133, %c2_134] : memref<4x4xf32, #tpu.memory_space<smem>>
      %215 = vector.broadcast %214 : f32 to vector<8x128xf32>
      %216 = arith.mulf %215, %32 : vector<8x128xf32>
      %217 = arith.addf %213, %216 : vector<8x128xf32>
      %c3_135 = arith.constant 3 : index
      %c3_136 = arith.constant 3 : index
      %218 = memref.load %arg3[%c3_135, %c3_136] : memref<4x4xf32, #tpu.memory_space<smem>>
      %219 = vector.broadcast %218 : f32 to vector<8x128xf32>
      %220 = arith.mulf %219, %41 : vector<8x128xf32>
      %221 = arith.addf %217, %220 : vector<8x128xf32>
      %222 = arith.mulf %56, %56 : vector<8x128xf32>
      %223 = arith.mulf %71, %71 : vector<8x128xf32>
      %224 = arith.addf %222, %223 : vector<8x128xf32>
      %225 = arith.mulf %86, %86 : vector<8x128xf32>
      %226 = arith.addf %224, %225 : vector<8x128xf32>
      %227 = math.sqrt %226 : vector<8x128xf32>
      %cst = arith.constant 9.99999997E-7 : f32
      %228 = vector.broadcast %cst : f32 to vector<8x128xf32>
      %229 = arith.addf %227, %228 : vector<8x128xf32>
      %230 = arith.mulf %101, %101 : vector<8x128xf32>
      %231 = arith.mulf %116, %116 : vector<8x128xf32>
      %232 = arith.addf %230, %231 : vector<8x128xf32>
      %233 = arith.mulf %131, %131 : vector<8x128xf32>
      %234 = arith.addf %232, %233 : vector<8x128xf32>
      %235 = math.sqrt %234 : vector<8x128xf32>
      %cst_137 = arith.constant 9.99999997E-7 : f32
      %236 = vector.broadcast %cst_137 : f32 to vector<8x128xf32>
      %237 = arith.addf %235, %236 : vector<8x128xf32>
      %238 = arith.mulf %146, %146 : vector<8x128xf32>
      %239 = arith.mulf %161, %161 : vector<8x128xf32>
      %240 = arith.addf %238, %239 : vector<8x128xf32>
      %241 = arith.mulf %176, %176 : vector<8x128xf32>
      %242 = arith.addf %240, %241 : vector<8x128xf32>
      %243 = math.sqrt %242 : vector<8x128xf32>
      %cst_138 = arith.constant 9.99999997E-7 : f32
      %244 = vector.broadcast %cst_138 : f32 to vector<8x128xf32>
      %245 = arith.addf %243, %244 : vector<8x128xf32>
      %246 = arith.mulf %191, %191 : vector<8x128xf32>
      %247 = arith.mulf %206, %206 : vector<8x128xf32>
      %248 = arith.addf %246, %247 : vector<8x128xf32>
      %249 = arith.mulf %221, %221 : vector<8x128xf32>
      %250 = arith.addf %248, %249 : vector<8x128xf32>
      %251 = math.sqrt %250 : vector<8x128xf32>
      %cst_139 = arith.constant 9.99999997E-7 : f32
      %252 = vector.broadcast %cst_139 : f32 to vector<8x128xf32>
      %253 = arith.addf %251, %252 : vector<8x128xf32>
      %254 = arith.mulf %229, %229 : vector<8x128xf32>
      %255 = arith.mulf %237, %237 : vector<8x128xf32>
      %256 = arith.mulf %245, %245 : vector<8x128xf32>
      %257 = arith.mulf %253, %253 : vector<8x128xf32>
      %258 = vector.shape_cast %229 : vector<8x128xf32> to vector<1x8x128xf32>
      %259 = vector.shape_cast %237 : vector<8x128xf32> to vector<1x8x128xf32>
      %260 = vector.shape_cast %245 : vector<8x128xf32> to vector<1x8x128xf32>
      %261 = vector.shape_cast %253 : vector<8x128xf32> to vector<1x8x128xf32>
      %262 = vector.shape_cast %254 : vector<8x128xf32> to vector<1x8x128xf32>
      %263 = vector.shape_cast %255 : vector<8x128xf32> to vector<1x8x128xf32>
      %264 = vector.shape_cast %256 : vector<8x128xf32> to vector<1x8x128xf32>
      %265 = vector.shape_cast %257 : vector<8x128xf32> to vector<1x8x128xf32>
      %266 = tpu.concatenate %258, %259, %260, %261, %262, %263, %264, %265 in 0 : vector<1x8x128xf32>, vector<1x8x128xf32>, vector<1x8x128xf32>, vector<1x8x128xf32>, vector<1x8x128xf32>, vector<1x8x128xf32>, vector<1x8x128xf32>, vector<1x8x128xf32> -> vector<8x8x128xf32>
      %c0_140 = arith.constant 0 : index
      %c0_141 = arith.constant 0 : index
      %c0_142 = arith.constant 0 : index
      %c0_143 = arith.constant 0 : index
      %267 = vector.load %arg4[%c0_140, %c0_141, %c0_142, %c0_143] : memref<1x8x8x128xf32, #tpu.memory_space<vmem>>, vector<1x8x8x128xf32>
      %268 = vector.shape_cast %267 : vector<1x8x8x128xf32> to vector<8x8x128xf32>
      %269 = arith.addf %268, %266 : vector<8x8x128xf32>
      %c0_144 = arith.constant 0 : index
      %c0_145 = arith.constant 0 : index
      %c0_146 = arith.constant 0 : index
      %c0_147 = arith.constant 0 : index
      %270 = vector.load %arg4[%c0_144, %c0_145, %c0_146, %c0_147] : memref<1x8x8x128xf32, #tpu.memory_space<vmem>>, vector<1x8x8x128xf32>
      %271 = vector.shape_cast %270 : vector<1x8x8x128xf32> to vector<8x8x128xf32>
      %272 = vector.shape_cast %269 : vector<8x8x128xf32> to vector<1x8x8x128xf32>
      tpu.vector_store %arg4[%c0_144, %c0_145, %c0_146, %c0_147], %272 {strides = array<i32>} : memref<1x8x8x128xf32, #tpu.memory_space<vmem>>, vector<1x8x8x128xf32>,
    }
    %c8_i32_2 = arith.constant 8 : i32
    return
  }
  func.func @transform_0(%arg0: i32, %arg1: i32) -> (i32, i32, i32, i32, i32) {
    %c0_i32 = arith.constant 0 : i32
    %c0_i32_0 = arith.constant 0 : i32
    %c0_i32_1 = arith.constant 0 : i32
    %c0_i32_2 = arith.constant 0 : i32
    return %arg0, %c0_i32, %arg1, %c0_i32_0, %c0_i32_1 : i32, i32, i32, i32, i32
  }
  func.func @transform_1(%arg0: i32, %arg1: i32) -> (i32, i32) {
    %c0_i32 = arith.constant 0 : i32
    %c0_i32_0 = arith.constant 0 : i32
    %c0_i32_1 = arith.constant 0 : i32
    return %c0_i32, %c0_i32_0 : i32, i32
  }
  func.func @transform_2(%arg0: i32, %arg1: i32) -> (i32, i32, i32, i32) {
    %c0_i32 = arith.constant 0 : i32
    %c0_i32_0 = arith.constant 0 : i32
    %c0_i32_1 = arith.constant 0 : i32
    %c0_i32_2 = arith.constant 0 : i32
    return %arg0, %c0_i32, %c0_i32_0, %c0_i32_1 : i32, i32, i32, i32
  }
}

module attributes {stable_mosaic.version = 11 : i64} {
  func.func @_stats2_kernel(%arg0: i32, %arg1: i32, %arg2: memref<1x12x8x8x128xf32, #tpu.memory_space<vmem>>, %arg3: memref<4x4xf32, #tpu.memory_space<smem>>, %arg4: memref<4x4xf32, #tpu.memory_space<smem>>, %arg5: memref<4x4xf32, #tpu.memory_space<smem>>, %arg6: memref<4xf32, #tpu.memory_space<smem>>, %arg7: memref<4xf32, #tpu.memory_space<smem>>, %arg8: memref<1x8x8x128xf32, #tpu.memory_space<vmem>>) attributes {dimension_semantics = [#tpu.dimension_semantics<parallel>, #tpu.dimension_semantics<arbitrary>], iteration_bounds = array<i64: 2, 2>, scalar_prefetch = 0 : i64, scratch_operands = 0 : i64, tpu.core_type = #tpu.core_type<tc>, window_params = [{transform_indices = @transform_0, window_bounds = array<i64: 1, 12, 8, 8, 128>}, {transform_indices = @transform_1, window_bounds = array<i64: 4, 4>}, {transform_indices = @transform_2, window_bounds = array<i64: 4, 4>}, {transform_indices = @transform_3, window_bounds = array<i64: 4, 4>}, {transform_indices = @transform_4, window_bounds = array<i64: 4>}, {transform_indices = @transform_5, window_bounds = array<i64: 4>}, {transform_indices = @transform_6, window_bounds = array<i64: 1, 8, 8, 128>}]} {
    %c0_i32 = arith.constant 0 : i32
    %0 = arith.cmpi eq, %arg1, %c0_i32 : i32
    %1 = arith.extui %0 : i1 to i32
    %c0_i32_0 = arith.constant 0 : i32
    %2 = arith.cmpi ne, %1, %c0_i32_0 : i32
    scf.if %2 {
      %cst = arith.constant 0.000000e+00 : f32
      %4 = vector.broadcast %cst : f32 to vector<8x8x128xf32>
      %c0 = arith.constant 0 : index
      %c0_3 = arith.constant 0 : index
      %c0_4 = arith.constant 0 : index
      %c0_5 = arith.constant 0 : index
      %5 = vector.load %arg8[%c0, %c0_3, %c0_4, %c0_5] : memref<1x8x8x128xf32, #tpu.memory_space<vmem>>, vector<1x8x8x128xf32>
      %6 = vector.shape_cast %5 : vector<1x8x8x128xf32> to vector<8x8x128xf32>
      %7 = vector.shape_cast %4 : vector<8x8x128xf32> to vector<1x8x8x128xf32>
      tpu.vector_store %arg8[%c0, %c0_3, %c0_4, %c0_5], %7 {strides = array<i32>} : memref<1x8x8x128xf32, #tpu.memory_space<vmem>>, vector<1x8x8x128xf32>,
    } else {
    }
    %c0_i32_1 = arith.constant 0 : i32
    %c8_i32 = arith.constant 8 : i32
    %3 = arith.addi %c0_i32_1, %c8_i32 : i32
    %c1_i32 = arith.constant 1 : i32
    scf.for %arg9 = %c0_i32_1 to %3 step %c1_i32  : i32 {
      %c1_i32_3 = arith.constant 1 : i32
      %4 = arith.muli %arg9, %c1_i32_3 : i32
      %c0_i32_4 = arith.constant 0 : i32
      %5 = arith.addi %c0_i32_4, %4 : i32
      %c0 = arith.constant 0 : index
      %c0_5 = arith.constant 0 : index
      %6 = arith.index_cast %5 : i32 to index
      %c0_6 = arith.constant 0 : index
      %c0_7 = arith.constant 0 : index
      %7 = vector.load %arg2[%c0, %c0_5, %6, %c0_6, %c0_7] : memref<1x12x8x8x128xf32, #tpu.memory_space<vmem>>, vector<1x1x1x8x128xf32>
      %8 = vector.shape_cast %7 : vector<1x1x1x8x128xf32> to vector<8x128xf32>
      %c0_8 = arith.constant 0 : index
      %c1 = arith.constant 1 : index
      %9 = arith.index_cast %5 : i32 to index
      %c0_9 = arith.constant 0 : index
      %c0_10 = arith.constant 0 : index
      %10 = vector.load %arg2[%c0_8, %c1, %9, %c0_9, %c0_10] : memref<1x12x8x8x128xf32, #tpu.memory_space<vmem>>, vector<1x1x1x8x128xf32>
      %11 = vector.shape_cast %10 : vector<1x1x1x8x128xf32> to vector<8x128xf32>
      %c0_11 = arith.constant 0 : index
      %c2 = arith.constant 2 : index
      %12 = arith.index_cast %5 : i32 to index
      %c0_12 = arith.constant 0 : index
      %c0_13 = arith.constant 0 : index
      %13 = vector.load %arg2[%c0_11, %c2, %12, %c0_12, %c0_13] : memref<1x12x8x8x128xf32, #tpu.memory_space<vmem>>, vector<1x1x1x8x128xf32>
      %14 = vector.shape_cast %13 : vector<1x1x1x8x128xf32> to vector<8x128xf32>
      %c0_14 = arith.constant 0 : index
      %c3 = arith.constant 3 : index
      %15 = arith.index_cast %5 : i32 to index
      %c0_15 = arith.constant 0 : index
      %c0_16 = arith.constant 0 : index
      %16 = vector.load %arg2[%c0_14, %c3, %15, %c0_15, %c0_16] : memref<1x12x8x8x128xf32, #tpu.memory_space<vmem>>, vector<1x1x1x8x128xf32>
      %17 = vector.shape_cast %16 : vector<1x1x1x8x128xf32> to vector<8x128xf32>
      %c0_17 = arith.constant 0 : index
      %c4 = arith.constant 4 : index
      %18 = arith.index_cast %5 : i32 to index
      %c0_18 = arith.constant 0 : index
      %c0_19 = arith.constant 0 : index
      %19 = vector.load %arg2[%c0_17, %c4, %18, %c0_18, %c0_19] : memref<1x12x8x8x128xf32, #tpu.memory_space<vmem>>, vector<1x1x1x8x128xf32>
      %20 = vector.shape_cast %19 : vector<1x1x1x8x128xf32> to vector<8x128xf32>
      %c0_20 = arith.constant 0 : index
      %c5 = arith.constant 5 : index
      %21 = arith.index_cast %5 : i32 to index
      %c0_21 = arith.constant 0 : index
      %c0_22 = arith.constant 0 : index
      %22 = vector.load %arg2[%c0_20, %c5, %21, %c0_21, %c0_22] : memref<1x12x8x8x128xf32, #tpu.memory_space<vmem>>, vector<1x1x1x8x128xf32>
      %23 = vector.shape_cast %22 : vector<1x1x1x8x128xf32> to vector<8x128xf32>
      %c0_23 = arith.constant 0 : index
      %c6 = arith.constant 6 : index
      %24 = arith.index_cast %5 : i32 to index
      %c0_24 = arith.constant 0 : index
      %c0_25 = arith.constant 0 : index
      %25 = vector.load %arg2[%c0_23, %c6, %24, %c0_24, %c0_25] : memref<1x12x8x8x128xf32, #tpu.memory_space<vmem>>, vector<1x1x1x8x128xf32>
      %26 = vector.shape_cast %25 : vector<1x1x1x8x128xf32> to vector<8x128xf32>
      %c0_26 = arith.constant 0 : index
      %c7 = arith.constant 7 : index
      %27 = arith.index_cast %5 : i32 to index
      %c0_27 = arith.constant 0 : index
      %c0_28 = arith.constant 0 : index
      %28 = vector.load %arg2[%c0_26, %c7, %27, %c0_27, %c0_28] : memref<1x12x8x8x128xf32, #tpu.memory_space<vmem>>, vector<1x1x1x8x128xf32>
      %29 = vector.shape_cast %28 : vector<1x1x1x8x128xf32> to vector<8x128xf32>
      %c0_29 = arith.constant 0 : index
      %c8 = arith.constant 8 : index
      %30 = arith.index_cast %5 : i32 to index
      %c0_30 = arith.constant 0 : index
      %c0_31 = arith.constant 0 : index
      %31 = vector.load %arg2[%c0_29, %c8, %30, %c0_30, %c0_31] : memref<1x12x8x8x128xf32, #tpu.memory_space<vmem>>, vector<1x1x1x8x128xf32>
      %32 = vector.shape_cast %31 : vector<1x1x1x8x128xf32> to vector<8x128xf32>
      %c0_32 = arith.constant 0 : index
      %c9 = arith.constant 9 : index
      %33 = arith.index_cast %5 : i32 to index
      %c0_33 = arith.constant 0 : index
      %c0_34 = arith.constant 0 : index
      %34 = vector.load %arg2[%c0_32, %c9, %33, %c0_33, %c0_34] : memref<1x12x8x8x128xf32, #tpu.memory_space<vmem>>, vector<1x1x1x8x128xf32>
      %35 = vector.shape_cast %34 : vector<1x1x1x8x128xf32> to vector<8x128xf32>
      %c0_35 = arith.constant 0 : index
      %c10 = arith.constant 10 : index
      %36 = arith.index_cast %5 : i32 to index
      %c0_36 = arith.constant 0 : index
      %c0_37 = arith.constant 0 : index
      %37 = vector.load %arg2[%c0_35, %c10, %36, %c0_36, %c0_37] : memref<1x12x8x8x128xf32, #tpu.memory_space<vmem>>, vector<1x1x1x8x128xf32>
      %38 = vector.shape_cast %37 : vector<1x1x1x8x128xf32> to vector<8x128xf32>
      %c0_38 = arith.constant 0 : index
      %c11 = arith.constant 11 : index
      %39 = arith.index_cast %5 : i32 to index
      %c0_39 = arith.constant 0 : index
      %c0_40 = arith.constant 0 : index
      %40 = vector.load %arg2[%c0_38, %c11, %39, %c0_39, %c0_40] : memref<1x12x8x8x128xf32, #tpu.memory_space<vmem>>, vector<1x1x1x8x128xf32>
      %41 = vector.shape_cast %40 : vector<1x1x1x8x128xf32> to vector<8x128xf32>
      %c0_41 = arith.constant 0 : index
      %c0_42 = arith.constant 0 : index
      %42 = memref.load %arg3[%c0_41, %c0_42] : memref<4x4xf32, #tpu.memory_space<smem>>
      %43 = vector.broadcast %42 : f32 to vector<8x128xf32>
      %44 = arith.mulf %43, %8 : vector<8x128xf32>
      %c0_43 = arith.constant 0 : index
      %c1_44 = arith.constant 1 : index
      %45 = memref.load %arg3[%c0_43, %c1_44] : memref<4x4xf32, #tpu.memory_space<smem>>
      %46 = vector.broadcast %45 : f32 to vector<8x128xf32>
      %47 = arith.mulf %46, %17 : vector<8x128xf32>
      %48 = arith.addf %44, %47 : vector<8x128xf32>
      %c0_45 = arith.constant 0 : index
      %c2_46 = arith.constant 2 : index
      %49 = memref.load %arg3[%c0_45, %c2_46] : memref<4x4xf32, #tpu.memory_space<smem>>
      %50 = vector.broadcast %49 : f32 to vector<8x128xf32>
      %51 = arith.mulf %50, %26 : vector<8x128xf32>
      %52 = arith.addf %48, %51 : vector<8x128xf32>
      %c0_47 = arith.constant 0 : index
      %c3_48 = arith.constant 3 : index
      %53 = memref.load %arg3[%c0_47, %c3_48] : memref<4x4xf32, #tpu.memory_space<smem>>
      %54 = vector.broadcast %53 : f32 to vector<8x128xf32>
      %55 = arith.mulf %54, %35 : vector<8x128xf32>
      %56 = arith.addf %52, %55 : vector<8x128xf32>
      %c0_49 = arith.constant 0 : index
      %c0_50 = arith.constant 0 : index
      %57 = memref.load %arg3[%c0_49, %c0_50] : memref<4x4xf32, #tpu.memory_space<smem>>
      %58 = vector.broadcast %57 : f32 to vector<8x128xf32>
      %59 = arith.mulf %58, %11 : vector<8x128xf32>
      %c0_51 = arith.constant 0 : index
      %c1_52 = arith.constant 1 : index
      %60 = memref.load %arg3[%c0_51, %c1_52] : memref<4x4xf32, #tpu.memory_space<smem>>
      %61 = vector.broadcast %60 : f32 to vector<8x128xf32>
      %62 = arith.mulf %61, %20 : vector<8x128xf32>
      %63 = arith.addf %59, %62 : vector<8x128xf32>
      %c0_53 = arith.constant 0 : index
      %c2_54 = arith.constant 2 : index
      %64 = memref.load %arg3[%c0_53, %c2_54] : memref<4x4xf32, #tpu.memory_space<smem>>
      %65 = vector.broadcast %64 : f32 to vector<8x128xf32>
      %66 = arith.mulf %65, %29 : vector<8x128xf32>
      %67 = arith.addf %63, %66 : vector<8x128xf32>
      %c0_55 = arith.constant 0 : index
      %c3_56 = arith.constant 3 : index
      %68 = memref.load %arg3[%c0_55, %c3_56] : memref<4x4xf32, #tpu.memory_space<smem>>
      %69 = vector.broadcast %68 : f32 to vector<8x128xf32>
      %70 = arith.mulf %69, %38 : vector<8x128xf32>
      %71 = arith.addf %67, %70 : vector<8x128xf32>
      %c0_57 = arith.constant 0 : index
      %c0_58 = arith.constant 0 : index
      %72 = memref.load %arg3[%c0_57, %c0_58] : memref<4x4xf32, #tpu.memory_space<smem>>
      %73 = vector.broadcast %72 : f32 to vector<8x128xf32>
      %74 = arith.mulf %73, %14 : vector<8x128xf32>
      %c0_59 = arith.constant 0 : index
      %c1_60 = arith.constant 1 : index
      %75 = memref.load %arg3[%c0_59, %c1_60] : memref<4x4xf32, #tpu.memory_space<smem>>
      %76 = vector.broadcast %75 : f32 to vector<8x128xf32>
      %77 = arith.mulf %76, %23 : vector<8x128xf32>
      %78 = arith.addf %74, %77 : vector<8x128xf32>
      %c0_61 = arith.constant 0 : index
      %c2_62 = arith.constant 2 : index
      %79 = memref.load %arg3[%c0_61, %c2_62] : memref<4x4xf32, #tpu.memory_space<smem>>
      %80 = vector.broadcast %79 : f32 to vector<8x128xf32>
      %81 = arith.mulf %80, %32 : vector<8x128xf32>
      %82 = arith.addf %78, %81 : vector<8x128xf32>
      %c0_63 = arith.constant 0 : index
      %c3_64 = arith.constant 3 : index
      %83 = memref.load %arg3[%c0_63, %c3_64] : memref<4x4xf32, #tpu.memory_space<smem>>
      %84 = vector.broadcast %83 : f32 to vector<8x128xf32>
      %85 = arith.mulf %84, %41 : vector<8x128xf32>
      %86 = arith.addf %82, %85 : vector<8x128xf32>
      %c1_65 = arith.constant 1 : index
      %c0_66 = arith.constant 0 : index
      %87 = memref.load %arg3[%c1_65, %c0_66] : memref<4x4xf32, #tpu.memory_space<smem>>
      %88 = vector.broadcast %87 : f32 to vector<8x128xf32>
      %89 = arith.mulf %88, %8 : vector<8x128xf32>
      %c1_67 = arith.constant 1 : index
      %c1_68 = arith.constant 1 : index
      %90 = memref.load %arg3[%c1_67, %c1_68] : memref<4x4xf32, #tpu.memory_space<smem>>
      %91 = vector.broadcast %90 : f32 to vector<8x128xf32>
      %92 = arith.mulf %91, %17 : vector<8x128xf32>
      %93 = arith.addf %89, %92 : vector<8x128xf32>
      %c1_69 = arith.constant 1 : index
      %c2_70 = arith.constant 2 : index
      %94 = memref.load %arg3[%c1_69, %c2_70] : memref<4x4xf32, #tpu.memory_space<smem>>
      %95 = vector.broadcast %94 : f32 to vector<8x128xf32>
      %96 = arith.mulf %95, %26 : vector<8x128xf32>
      %97 = arith.addf %93, %96 : vector<8x128xf32>
      %c1_71 = arith.constant 1 : index
      %c3_72 = arith.constant 3 : index
      %98 = memref.load %arg3[%c1_71, %c3_72] : memref<4x4xf32, #tpu.memory_space<smem>>
      %99 = vector.broadcast %98 : f32 to vector<8x128xf32>
      %100 = arith.mulf %99, %35 : vector<8x128xf32>
      %101 = arith.addf %97, %100 : vector<8x128xf32>
      %c1_73 = arith.constant 1 : index
      %c0_74 = arith.constant 0 : index
      %102 = memref.load %arg3[%c1_73, %c0_74] : memref<4x4xf32, #tpu.memory_space<smem>>
      %103 = vector.broadcast %102 : f32 to vector<8x128xf32>
      %104 = arith.mulf %103, %11 : vector<8x128xf32>
      %c1_75 = arith.constant 1 : index
      %c1_76 = arith.constant 1 : index
      %105 = memref.load %arg3[%c1_75, %c1_76] : memref<4x4xf32, #tpu.memory_space<smem>>
      %106 = vector.broadcast %105 : f32 to vector<8x128xf32>
      %107 = arith.mulf %106, %20 : vector<8x128xf32>
      %108 = arith.addf %104, %107 : vector<8x128xf32>
      %c1_77 = arith.constant 1 : index
      %c2_78 = arith.constant 2 : index
      %109 = memref.load %arg3[%c1_77, %c2_78] : memref<4x4xf32, #tpu.memory_space<smem>>
      %110 = vector.broadcast %109 : f32 to vector<8x128xf32>
      %111 = arith.mulf %110, %29 : vector<8x128xf32>
      %112 = arith.addf %108, %111 : vector<8x128xf32>
      %c1_79 = arith.constant 1 : index
      %c3_80 = arith.constant 3 : index
      %113 = memref.load %arg3[%c1_79, %c3_80] : memref<4x4xf32, #tpu.memory_space<smem>>
      %114 = vector.broadcast %113 : f32 to vector<8x128xf32>
      %115 = arith.mulf %114, %38 : vector<8x128xf32>
      %116 = arith.addf %112, %115 : vector<8x128xf32>
      %c1_81 = arith.constant 1 : index
      %c0_82 = arith.constant 0 : index
      %117 = memref.load %arg3[%c1_81, %c0_82] : memref<4x4xf32, #tpu.memory_space<smem>>
      %118 = vector.broadcast %117 : f32 to vector<8x128xf32>
      %119 = arith.mulf %118, %14 : vector<8x128xf32>
      %c1_83 = arith.constant 1 : index
      %c1_84 = arith.constant 1 : index
      %120 = memref.load %arg3[%c1_83, %c1_84] : memref<4x4xf32, #tpu.memory_space<smem>>
      %121 = vector.broadcast %120 : f32 to vector<8x128xf32>
      %122 = arith.mulf %121, %23 : vector<8x128xf32>
      %123 = arith.addf %119, %122 : vector<8x128xf32>
      %c1_85 = arith.constant 1 : index
      %c2_86 = arith.constant 2 : index
      %124 = memref.load %arg3[%c1_85, %c2_86] : memref<4x4xf32, #tpu.memory_space<smem>>
      %125 = vector.broadcast %124 : f32 to vector<8x128xf32>
      %126 = arith.mulf %125, %32 : vector<8x128xf32>
      %127 = arith.addf %123, %126 : vector<8x128xf32>
      %c1_87 = arith.constant 1 : index
      %c3_88 = arith.constant 3 : index
      %128 = memref.load %arg3[%c1_87, %c3_88] : memref<4x4xf32, #tpu.memory_space<smem>>
      %129 = vector.broadcast %128 : f32 to vector<8x128xf32>
      %130 = arith.mulf %129, %41 : vector<8x128xf32>
      %131 = arith.addf %127, %130 : vector<8x128xf32>
      %c2_89 = arith.constant 2 : index
      %c0_90 = arith.constant 0 : index
      %132 = memref.load %arg3[%c2_89, %c0_90] : memref<4x4xf32, #tpu.memory_space<smem>>
      %133 = vector.broadcast %132 : f32 to vector<8x128xf32>
      %134 = arith.mulf %133, %8 : vector<8x128xf32>
      %c2_91 = arith.constant 2 : index
      %c1_92 = arith.constant 1 : index
      %135 = memref.load %arg3[%c2_91, %c1_92] : memref<4x4xf32, #tpu.memory_space<smem>>
      %136 = vector.broadcast %135 : f32 to vector<8x128xf32>
      %137 = arith.mulf %136, %17 : vector<8x128xf32>
      %138 = arith.addf %134, %137 : vector<8x128xf32>
      %c2_93 = arith.constant 2 : index
      %c2_94 = arith.constant 2 : index
      %139 = memref.load %arg3[%c2_93, %c2_94] : memref<4x4xf32, #tpu.memory_space<smem>>
      %140 = vector.broadcast %139 : f32 to vector<8x128xf32>
      %141 = arith.mulf %140, %26 : vector<8x128xf32>
      %142 = arith.addf %138, %141 : vector<8x128xf32>
      %c2_95 = arith.constant 2 : index
      %c3_96 = arith.constant 3 : index
      %143 = memref.load %arg3[%c2_95, %c3_96] : memref<4x4xf32, #tpu.memory_space<smem>>
      %144 = vector.broadcast %143 : f32 to vector<8x128xf32>
      %145 = arith.mulf %144, %35 : vector<8x128xf32>
      %146 = arith.addf %142, %145 : vector<8x128xf32>
      %c2_97 = arith.constant 2 : index
      %c0_98 = arith.constant 0 : index
      %147 = memref.load %arg3[%c2_97, %c0_98] : memref<4x4xf32, #tpu.memory_space<smem>>
      %148 = vector.broadcast %147 : f32 to vector<8x128xf32>
      %149 = arith.mulf %148, %11 : vector<8x128xf32>
      %c2_99 = arith.constant 2 : index
      %c1_100 = arith.constant 1 : index
      %150 = memref.load %arg3[%c2_99, %c1_100] : memref<4x4xf32, #tpu.memory_space<smem>>
      %151 = vector.broadcast %150 : f32 to vector<8x128xf32>
      %152 = arith.mulf %151, %20 : vector<8x128xf32>
      %153 = arith.addf %149, %152 : vector<8x128xf32>
      %c2_101 = arith.constant 2 : index
      %c2_102 = arith.constant 2 : index
      %154 = memref.load %arg3[%c2_101, %c2_102] : memref<4x4xf32, #tpu.memory_space<smem>>
      %155 = vector.broadcast %154 : f32 to vector<8x128xf32>
      %156 = arith.mulf %155, %29 : vector<8x128xf32>
      %157 = arith.addf %153, %156 : vector<8x128xf32>
      %c2_103 = arith.constant 2 : index
      %c3_104 = arith.constant 3 : index
      %158 = memref.load %arg3[%c2_103, %c3_104] : memref<4x4xf32, #tpu.memory_space<smem>>
      %159 = vector.broadcast %158 : f32 to vector<8x128xf32>
      %160 = arith.mulf %159, %38 : vector<8x128xf32>
      %161 = arith.addf %157, %160 : vector<8x128xf32>
      %c2_105 = arith.constant 2 : index
      %c0_106 = arith.constant 0 : index
      %162 = memref.load %arg3[%c2_105, %c0_106] : memref<4x4xf32, #tpu.memory_space<smem>>
      %163 = vector.broadcast %162 : f32 to vector<8x128xf32>
      %164 = arith.mulf %163, %14 : vector<8x128xf32>
      %c2_107 = arith.constant 2 : index
      %c1_108 = arith.constant 1 : index
      %165 = memref.load %arg3[%c2_107, %c1_108] : memref<4x4xf32, #tpu.memory_space<smem>>
      %166 = vector.broadcast %165 : f32 to vector<8x128xf32>
      %167 = arith.mulf %166, %23 : vector<8x128xf32>
      %168 = arith.addf %164, %167 : vector<8x128xf32>
      %c2_109 = arith.constant 2 : index
      %c2_110 = arith.constant 2 : index
      %169 = memref.load %arg3[%c2_109, %c2_110] : memref<4x4xf32, #tpu.memory_space<smem>>
      %170 = vector.broadcast %169 : f32 to vector<8x128xf32>
      %171 = arith.mulf %170, %32 : vector<8x128xf32>
      %172 = arith.addf %168, %171 : vector<8x128xf32>
      %c2_111 = arith.constant 2 : index
      %c3_112 = arith.constant 3 : index
      %173 = memref.load %arg3[%c2_111, %c3_112] : memref<4x4xf32, #tpu.memory_space<smem>>
      %174 = vector.broadcast %173 : f32 to vector<8x128xf32>
      %175 = arith.mulf %174, %41 : vector<8x128xf32>
      %176 = arith.addf %172, %175 : vector<8x128xf32>
      %c3_113 = arith.constant 3 : index
      %c0_114 = arith.constant 0 : index
      %177 = memref.load %arg3[%c3_113, %c0_114] : memref<4x4xf32, #tpu.memory_space<smem>>
      %178 = vector.broadcast %177 : f32 to vector<8x128xf32>
      %179 = arith.mulf %178, %8 : vector<8x128xf32>
      %c3_115 = arith.constant 3 : index
      %c1_116 = arith.constant 1 : index
      %180 = memref.load %arg3[%c3_115, %c1_116] : memref<4x4xf32, #tpu.memory_space<smem>>
      %181 = vector.broadcast %180 : f32 to vector<8x128xf32>
      %182 = arith.mulf %181, %17 : vector<8x128xf32>
      %183 = arith.addf %179, %182 : vector<8x128xf32>
      %c3_117 = arith.constant 3 : index
      %c2_118 = arith.constant 2 : index
      %184 = memref.load %arg3[%c3_117, %c2_118] : memref<4x4xf32, #tpu.memory_space<smem>>
      %185 = vector.broadcast %184 : f32 to vector<8x128xf32>
      %186 = arith.mulf %185, %26 : vector<8x128xf32>
      %187 = arith.addf %183, %186 : vector<8x128xf32>
      %c3_119 = arith.constant 3 : index
      %c3_120 = arith.constant 3 : index
      %188 = memref.load %arg3[%c3_119, %c3_120] : memref<4x4xf32, #tpu.memory_space<smem>>
      %189 = vector.broadcast %188 : f32 to vector<8x128xf32>
      %190 = arith.mulf %189, %35 : vector<8x128xf32>
      %191 = arith.addf %187, %190 : vector<8x128xf32>
      %c3_121 = arith.constant 3 : index
      %c0_122 = arith.constant 0 : index
      %192 = memref.load %arg3[%c3_121, %c0_122] : memref<4x4xf32, #tpu.memory_space<smem>>
      %193 = vector.broadcast %192 : f32 to vector<8x128xf32>
      %194 = arith.mulf %193, %11 : vector<8x128xf32>
      %c3_123 = arith.constant 3 : index
      %c1_124 = arith.constant 1 : index
      %195 = memref.load %arg3[%c3_123, %c1_124] : memref<4x4xf32, #tpu.memory_space<smem>>
      %196 = vector.broadcast %195 : f32 to vector<8x128xf32>
      %197 = arith.mulf %196, %20 : vector<8x128xf32>
      %198 = arith.addf %194, %197 : vector<8x128xf32>
      %c3_125 = arith.constant 3 : index
      %c2_126 = arith.constant 2 : index
      %199 = memref.load %arg3[%c3_125, %c2_126] : memref<4x4xf32, #tpu.memory_space<smem>>
      %200 = vector.broadcast %199 : f32 to vector<8x128xf32>
      %201 = arith.mulf %200, %29 : vector<8x128xf32>
      %202 = arith.addf %198, %201 : vector<8x128xf32>
      %c3_127 = arith.constant 3 : index
      %c3_128 = arith.constant 3 : index
      %203 = memref.load %arg3[%c3_127, %c3_128] : memref<4x4xf32, #tpu.memory_space<smem>>
      %204 = vector.broadcast %203 : f32 to vector<8x128xf32>
      %205 = arith.mulf %204, %38 : vector<8x128xf32>
      %206 = arith.addf %202, %205 : vector<8x128xf32>
      %c3_129 = arith.constant 3 : index
      %c0_130 = arith.constant 0 : index
      %207 = memref.load %arg3[%c3_129, %c0_130] : memref<4x4xf32, #tpu.memory_space<smem>>
      %208 = vector.broadcast %207 : f32 to vector<8x128xf32>
      %209 = arith.mulf %208, %14 : vector<8x128xf32>
      %c3_131 = arith.constant 3 : index
      %c1_132 = arith.constant 1 : index
      %210 = memref.load %arg3[%c3_131, %c1_132] : memref<4x4xf32, #tpu.memory_space<smem>>
      %211 = vector.broadcast %210 : f32 to vector<8x128xf32>
      %212 = arith.mulf %211, %23 : vector<8x128xf32>
      %213 = arith.addf %209, %212 : vector<8x128xf32>
      %c3_133 = arith.constant 3 : index
      %c2_134 = arith.constant 2 : index
      %214 = memref.load %arg3[%c3_133, %c2_134] : memref<4x4xf32, #tpu.memory_space<smem>>
      %215 = vector.broadcast %214 : f32 to vector<8x128xf32>
      %216 = arith.mulf %215, %32 : vector<8x128xf32>
      %217 = arith.addf %213, %216 : vector<8x128xf32>
      %c3_135 = arith.constant 3 : index
      %c3_136 = arith.constant 3 : index
      %218 = memref.load %arg3[%c3_135, %c3_136] : memref<4x4xf32, #tpu.memory_space<smem>>
      %219 = vector.broadcast %218 : f32 to vector<8x128xf32>
      %220 = arith.mulf %219, %41 : vector<8x128xf32>
      %221 = arith.addf %217, %220 : vector<8x128xf32>
      %222 = arith.mulf %56, %56 : vector<8x128xf32>
      %223 = arith.mulf %71, %71 : vector<8x128xf32>
      %224 = arith.addf %222, %223 : vector<8x128xf32>
      %225 = arith.mulf %86, %86 : vector<8x128xf32>
      %226 = arith.addf %224, %225 : vector<8x128xf32>
      %227 = math.sqrt %226 : vector<8x128xf32>
      %cst = arith.constant 9.99999997E-7 : f32
      %228 = vector.broadcast %cst : f32 to vector<8x128xf32>
      %229 = arith.addf %227, %228 : vector<8x128xf32>
      %230 = tpu.reciprocal %229 : vector<8x128xf32> -> vector<8x128xf32>
      %c0_137 = arith.constant 0 : index
      %231 = memref.load %arg6[%c0_137] : memref<4xf32, #tpu.memory_space<smem>>
      %c0_138 = arith.constant 0 : index
      %232 = memref.load %arg7[%c0_138] : memref<4xf32, #tpu.memory_space<smem>>
      %233 = vector.broadcast %232 : f32 to vector<8x128xf32>
      %234 = arith.mulf %233, %230 : vector<8x128xf32>
      %235 = vector.broadcast %231 : f32 to vector<8x128xf32>
      %236 = arith.addf %235, %234 : vector<8x128xf32>
      %237 = arith.mulf %56, %236 : vector<8x128xf32>
      %238 = arith.mulf %71, %236 : vector<8x128xf32>
      %239 = arith.mulf %86, %236 : vector<8x128xf32>
      %240 = arith.mulf %101, %101 : vector<8x128xf32>
      %241 = arith.mulf %116, %116 : vector<8x128xf32>
      %242 = arith.addf %240, %241 : vector<8x128xf32>
      %243 = arith.mulf %131, %131 : vector<8x128xf32>
      %244 = arith.addf %242, %243 : vector<8x128xf32>
      %245 = math.sqrt %244 : vector<8x128xf32>
      %cst_139 = arith.constant 9.99999997E-7 : f32
      %246 = vector.broadcast %cst_139 : f32 to vector<8x128xf32>
      %247 = arith.addf %245, %246 : vector<8x128xf32>
      %248 = tpu.reciprocal %247 : vector<8x128xf32> -> vector<8x128xf32>
      %c1_140 = arith.constant 1 : index
      %249 = memref.load %arg6[%c1_140] : memref<4xf32, #tpu.memory_space<smem>>
      %c1_141 = arith.constant 1 : index
      %250 = memref.load %arg7[%c1_141] : memref<4xf32, #tpu.memory_space<smem>>
      %251 = vector.broadcast %250 : f32 to vector<8x128xf32>
      %252 = arith.mulf %251, %248 : vector<8x128xf32>
      %253 = vector.broadcast %249 : f32 to vector<8x128xf32>
      %254 = arith.addf %253, %252 : vector<8x128xf32>
      %255 = arith.mulf %101, %254 : vector<8x128xf32>
      %256 = arith.mulf %116, %254 : vector<8x128xf32>
      %257 = arith.mulf %131, %254 : vector<8x128xf32>
      %258 = arith.mulf %146, %146 : vector<8x128xf32>
      %259 = arith.mulf %161, %161 : vector<8x128xf32>
      %260 = arith.addf %258, %259 : vector<8x128xf32>
      %261 = arith.mulf %176, %176 : vector<8x128xf32>
      %262 = arith.addf %260, %261 : vector<8x128xf32>
      %263 = math.sqrt %262 : vector<8x128xf32>
      %cst_142 = arith.constant 9.99999997E-7 : f32
      %264 = vector.broadcast %cst_142 : f32 to vector<8x128xf32>
      %265 = arith.addf %263, %264 : vector<8x128xf32>
      %266 = tpu.reciprocal %265 : vector<8x128xf32> -> vector<8x128xf32>
      %c2_143 = arith.constant 2 : index
      %267 = memref.load %arg6[%c2_143] : memref<4xf32, #tpu.memory_space<smem>>
      %c2_144 = arith.constant 2 : index
      %268 = memref.load %arg7[%c2_144] : memref<4xf32, #tpu.memory_space<smem>>
      %269 = vector.broadcast %268 : f32 to vector<8x128xf32>
      %270 = arith.mulf %269, %266 : vector<8x128xf32>
      %271 = vector.broadcast %267 : f32 to vector<8x128xf32>
      %272 = arith.addf %271, %270 : vector<8x128xf32>
      %273 = arith.mulf %146, %272 : vector<8x128xf32>
      %274 = arith.mulf %161, %272 : vector<8x128xf32>
      %275 = arith.mulf %176, %272 : vector<8x128xf32>
      %276 = arith.mulf %191, %191 : vector<8x128xf32>
      %277 = arith.mulf %206, %206 : vector<8x128xf32>
      %278 = arith.addf %276, %277 : vector<8x128xf32>
      %279 = arith.mulf %221, %221 : vector<8x128xf32>
      %280 = arith.addf %278, %279 : vector<8x128xf32>
      %281 = math.sqrt %280 : vector<8x128xf32>
      %cst_145 = arith.constant 9.99999997E-7 : f32
      %282 = vector.broadcast %cst_145 : f32 to vector<8x128xf32>
      %283 = arith.addf %281, %282 : vector<8x128xf32>
      %284 = tpu.reciprocal %283 : vector<8x128xf32> -> vector<8x128xf32>
      %c3_146 = arith.constant 3 : index
      %285 = memref.load %arg6[%c3_146] : memref<4xf32, #tpu.memory_space<smem>>
      %c3_147 = arith.constant 3 : index
      %286 = memref.load %arg7[%c3_147] : memref<4xf32, #tpu.memory_space<smem>>
      %287 = vector.broadcast %286 : f32 to vector<8x128xf32>
      %288 = arith.mulf %287, %284 : vector<8x128xf32>
      %289 = vector.broadcast %285 : f32 to vector<8x128xf32>
      %290 = arith.addf %289, %288 : vector<8x128xf32>
      %291 = arith.mulf %191, %290 : vector<8x128xf32>
      %292 = arith.mulf %206, %290 : vector<8x128xf32>
      %293 = arith.mulf %221, %290 : vector<8x128xf32>
      %c0_148 = arith.constant 0 : index
      %c0_149 = arith.constant 0 : index
      %294 = memref.load %arg4[%c0_148, %c0_149] : memref<4x4xf32, #tpu.memory_space<smem>>
      %295 = vector.broadcast %294 : f32 to vector<8x128xf32>
      %296 = arith.mulf %295, %237 : vector<8x128xf32>
      %c0_150 = arith.constant 0 : index
      %c1_151 = arith.constant 1 : index
      %297 = memref.load %arg4[%c0_150, %c1_151] : memref<4x4xf32, #tpu.memory_space<smem>>
      %298 = vector.broadcast %297 : f32 to vector<8x128xf32>
      %299 = arith.mulf %298, %255 : vector<8x128xf32>
      %300 = arith.addf %296, %299 : vector<8x128xf32>
      %c0_152 = arith.constant 0 : index
      %c2_153 = arith.constant 2 : index
      %301 = memref.load %arg4[%c0_152, %c2_153] : memref<4x4xf32, #tpu.memory_space<smem>>
      %302 = vector.broadcast %301 : f32 to vector<8x128xf32>
      %303 = arith.mulf %302, %273 : vector<8x128xf32>
      %304 = arith.addf %300, %303 : vector<8x128xf32>
      %c0_154 = arith.constant 0 : index
      %c3_155 = arith.constant 3 : index
      %305 = memref.load %arg4[%c0_154, %c3_155] : memref<4x4xf32, #tpu.memory_space<smem>>
      %306 = vector.broadcast %305 : f32 to vector<8x128xf32>
      %307 = arith.mulf %306, %291 : vector<8x128xf32>
      %308 = arith.addf %304, %307 : vector<8x128xf32>
      %c0_156 = arith.constant 0 : index
      %c0_157 = arith.constant 0 : index
      %309 = memref.load %arg4[%c0_156, %c0_157] : memref<4x4xf32, #tpu.memory_space<smem>>
      %310 = vector.broadcast %309 : f32 to vector<8x128xf32>
      %311 = arith.mulf %310, %238 : vector<8x128xf32>
      %c0_158 = arith.constant 0 : index
      %c1_159 = arith.constant 1 : index
      %312 = memref.load %arg4[%c0_158, %c1_159] : memref<4x4xf32, #tpu.memory_space<smem>>
      %313 = vector.broadcast %312 : f32 to vector<8x128xf32>
      %314 = arith.mulf %313, %256 : vector<8x128xf32>
      %315 = arith.addf %311, %314 : vector<8x128xf32>
      %c0_160 = arith.constant 0 : index
      %c2_161 = arith.constant 2 : index
      %316 = memref.load %arg4[%c0_160, %c2_161] : memref<4x4xf32, #tpu.memory_space<smem>>
      %317 = vector.broadcast %316 : f32 to vector<8x128xf32>
      %318 = arith.mulf %317, %274 : vector<8x128xf32>
      %319 = arith.addf %315, %318 : vector<8x128xf32>
      %c0_162 = arith.constant 0 : index
      %c3_163 = arith.constant 3 : index
      %320 = memref.load %arg4[%c0_162, %c3_163] : memref<4x4xf32, #tpu.memory_space<smem>>
      %321 = vector.broadcast %320 : f32 to vector<8x128xf32>
      %322 = arith.mulf %321, %292 : vector<8x128xf32>
      %323 = arith.addf %319, %322 : vector<8x128xf32>
      %c0_164 = arith.constant 0 : index
      %c0_165 = arith.constant 0 : index
      %324 = memref.load %arg4[%c0_164, %c0_165] : memref<4x4xf32, #tpu.memory_space<smem>>
      %325 = vector.broadcast %324 : f32 to vector<8x128xf32>
      %326 = arith.mulf %325, %239 : vector<8x128xf32>
      %c0_166 = arith.constant 0 : index
      %c1_167 = arith.constant 1 : index
      %327 = memref.load %arg4[%c0_166, %c1_167] : memref<4x4xf32, #tpu.memory_space<smem>>
      %328 = vector.broadcast %327 : f32 to vector<8x128xf32>
      %329 = arith.mulf %328, %257 : vector<8x128xf32>
      %330 = arith.addf %326, %329 : vector<8x128xf32>
      %c0_168 = arith.constant 0 : index
      %c2_169 = arith.constant 2 : index
      %331 = memref.load %arg4[%c0_168, %c2_169] : memref<4x4xf32, #tpu.memory_space<smem>>
      %332 = vector.broadcast %331 : f32 to vector<8x128xf32>
      %333 = arith.mulf %332, %275 : vector<8x128xf32>
      %334 = arith.addf %330, %333 : vector<8x128xf32>
      %c0_170 = arith.constant 0 : index
      %c3_171 = arith.constant 3 : index
      %335 = memref.load %arg4[%c0_170, %c3_171] : memref<4x4xf32, #tpu.memory_space<smem>>
      %336 = vector.broadcast %335 : f32 to vector<8x128xf32>
      %337 = arith.mulf %336, %293 : vector<8x128xf32>
      %338 = arith.addf %334, %337 : vector<8x128xf32>
      %c1_172 = arith.constant 1 : index
      %c0_173 = arith.constant 0 : index
      %339 = memref.load %arg4[%c1_172, %c0_173] : memref<4x4xf32, #tpu.memory_space<smem>>
      %340 = vector.broadcast %339 : f32 to vector<8x128xf32>
      %341 = arith.mulf %340, %237 : vector<8x128xf32>
      %c1_174 = arith.constant 1 : index
      %c1_175 = arith.constant 1 : index
      %342 = memref.load %arg4[%c1_174, %c1_175] : memref<4x4xf32, #tpu.memory_space<smem>>
      %343 = vector.broadcast %342 : f32 to vector<8x128xf32>
      %344 = arith.mulf %343, %255 : vector<8x128xf32>
      %345 = arith.addf %341, %344 : vector<8x128xf32>
      %c1_176 = arith.constant 1 : index
      %c2_177 = arith.constant 2 : index
      %346 = memref.load %arg4[%c1_176, %c2_177] : memref<4x4xf32, #tpu.memory_space<smem>>
      %347 = vector.broadcast %346 : f32 to vector<8x128xf32>
      %348 = arith.mulf %347, %273 : vector<8x128xf32>
      %349 = arith.addf %345, %348 : vector<8x128xf32>
      %c1_178 = arith.constant 1 : index
      %c3_179 = arith.constant 3 : index
      %350 = memref.load %arg4[%c1_178, %c3_179] : memref<4x4xf32, #tpu.memory_space<smem>>
      %351 = vector.broadcast %350 : f32 to vector<8x128xf32>
      %352 = arith.mulf %351, %291 : vector<8x128xf32>
      %353 = arith.addf %349, %352 : vector<8x128xf32>
      %c1_180 = arith.constant 1 : index
      %c0_181 = arith.constant 0 : index
      %354 = memref.load %arg4[%c1_180, %c0_181] : memref<4x4xf32, #tpu.memory_space<smem>>
      %355 = vector.broadcast %354 : f32 to vector<8x128xf32>
      %356 = arith.mulf %355, %238 : vector<8x128xf32>
      %c1_182 = arith.constant 1 : index
      %c1_183 = arith.constant 1 : index
      %357 = memref.load %arg4[%c1_182, %c1_183] : memref<4x4xf32, #tpu.memory_space<smem>>
      %358 = vector.broadcast %357 : f32 to vector<8x128xf32>
      %359 = arith.mulf %358, %256 : vector<8x128xf32>
      %360 = arith.addf %356, %359 : vector<8x128xf32>
      %c1_184 = arith.constant 1 : index
      %c2_185 = arith.constant 2 : index
      %361 = memref.load %arg4[%c1_184, %c2_185] : memref<4x4xf32, #tpu.memory_space<smem>>
      %362 = vector.broadcast %361 : f32 to vector<8x128xf32>
      %363 = arith.mulf %362, %274 : vector<8x128xf32>
      %364 = arith.addf %360, %363 : vector<8x128xf32>
      %c1_186 = arith.constant 1 : index
      %c3_187 = arith.constant 3 : index
      %365 = memref.load %arg4[%c1_186, %c3_187] : memref<4x4xf32, #tpu.memory_space<smem>>
      %366 = vector.broadcast %365 : f32 to vector<8x128xf32>
      %367 = arith.mulf %366, %292 : vector<8x128xf32>
      %368 = arith.addf %364, %367 : vector<8x128xf32>
      %c1_188 = arith.constant 1 : index
      %c0_189 = arith.constant 0 : index
      %369 = memref.load %arg4[%c1_188, %c0_189] : memref<4x4xf32, #tpu.memory_space<smem>>
      %370 = vector.broadcast %369 : f32 to vector<8x128xf32>
      %371 = arith.mulf %370, %239 : vector<8x128xf32>
      %c1_190 = arith.constant 1 : index
      %c1_191 = arith.constant 1 : index
      %372 = memref.load %arg4[%c1_190, %c1_191] : memref<4x4xf32, #tpu.memory_space<smem>>
      %373 = vector.broadcast %372 : f32 to vector<8x128xf32>
      %374 = arith.mulf %373, %257 : vector<8x128xf32>
      %375 = arith.addf %371, %374 : vector<8x128xf32>
      %c1_192 = arith.constant 1 : index
      %c2_193 = arith.constant 2 : index
      %376 = memref.load %arg4[%c1_192, %c2_193] : memref<4x4xf32, #tpu.memory_space<smem>>
      %377 = vector.broadcast %376 : f32 to vector<8x128xf32>
      %378 = arith.mulf %377, %275 : vector<8x128xf32>
      %379 = arith.addf %375, %378 : vector<8x128xf32>
      %c1_194 = arith.constant 1 : index
      %c3_195 = arith.constant 3 : index
      %380 = memref.load %arg4[%c1_194, %c3_195] : memref<4x4xf32, #tpu.memory_space<smem>>
      %381 = vector.broadcast %380 : f32 to vector<8x128xf32>
      %382 = arith.mulf %381, %293 : vector<8x128xf32>
      %383 = arith.addf %379, %382 : vector<8x128xf32>
      %c2_196 = arith.constant 2 : index
      %c0_197 = arith.constant 0 : index
      %384 = memref.load %arg4[%c2_196, %c0_197] : memref<4x4xf32, #tpu.memory_space<smem>>
      %385 = vector.broadcast %384 : f32 to vector<8x128xf32>
      %386 = arith.mulf %385, %237 : vector<8x128xf32>
      %c2_198 = arith.constant 2 : index
      %c1_199 = arith.constant 1 : index
      %387 = memref.load %arg4[%c2_198, %c1_199] : memref<4x4xf32, #tpu.memory_space<smem>>
      %388 = vector.broadcast %387 : f32 to vector<8x128xf32>
      %389 = arith.mulf %388, %255 : vector<8x128xf32>
      %390 = arith.addf %386, %389 : vector<8x128xf32>
      %c2_200 = arith.constant 2 : index
      %c2_201 = arith.constant 2 : index
      %391 = memref.load %arg4[%c2_200, %c2_201] : memref<4x4xf32, #tpu.memory_space<smem>>
      %392 = vector.broadcast %391 : f32 to vector<8x128xf32>
      %393 = arith.mulf %392, %273 : vector<8x128xf32>
      %394 = arith.addf %390, %393 : vector<8x128xf32>
      %c2_202 = arith.constant 2 : index
      %c3_203 = arith.constant 3 : index
      %395 = memref.load %arg4[%c2_202, %c3_203] : memref<4x4xf32, #tpu.memory_space<smem>>
      %396 = vector.broadcast %395 : f32 to vector<8x128xf32>
      %397 = arith.mulf %396, %291 : vector<8x128xf32>
      %398 = arith.addf %394, %397 : vector<8x128xf32>
      %c2_204 = arith.constant 2 : index
      %c0_205 = arith.constant 0 : index
      %399 = memref.load %arg4[%c2_204, %c0_205] : memref<4x4xf32, #tpu.memory_space<smem>>
      %400 = vector.broadcast %399 : f32 to vector<8x128xf32>
      %401 = arith.mulf %400, %238 : vector<8x128xf32>
      %c2_206 = arith.constant 2 : index
      %c1_207 = arith.constant 1 : index
      %402 = memref.load %arg4[%c2_206, %c1_207] : memref<4x4xf32, #tpu.memory_space<smem>>
      %403 = vector.broadcast %402 : f32 to vector<8x128xf32>
      %404 = arith.mulf %403, %256 : vector<8x128xf32>
      %405 = arith.addf %401, %404 : vector<8x128xf32>
      %c2_208 = arith.constant 2 : index
      %c2_209 = arith.constant 2 : index
      %406 = memref.load %arg4[%c2_208, %c2_209] : memref<4x4xf32, #tpu.memory_space<smem>>
      %407 = vector.broadcast %406 : f32 to vector<8x128xf32>
      %408 = arith.mulf %407, %274 : vector<8x128xf32>
      %409 = arith.addf %405, %408 : vector<8x128xf32>
      %c2_210 = arith.constant 2 : index
      %c3_211 = arith.constant 3 : index
      %410 = memref.load %arg4[%c2_210, %c3_211] : memref<4x4xf32, #tpu.memory_space<smem>>
      %411 = vector.broadcast %410 : f32 to vector<8x128xf32>
      %412 = arith.mulf %411, %292 : vector<8x128xf32>
      %413 = arith.addf %409, %412 : vector<8x128xf32>
      %c2_212 = arith.constant 2 : index
      %c0_213 = arith.constant 0 : index
      %414 = memref.load %arg4[%c2_212, %c0_213] : memref<4x4xf32, #tpu.memory_space<smem>>
      %415 = vector.broadcast %414 : f32 to vector<8x128xf32>
      %416 = arith.mulf %415, %239 : vector<8x128xf32>
      %c2_214 = arith.constant 2 : index
      %c1_215 = arith.constant 1 : index
      %417 = memref.load %arg4[%c2_214, %c1_215] : memref<4x4xf32, #tpu.memory_space<smem>>
      %418 = vector.broadcast %417 : f32 to vector<8x128xf32>
      %419 = arith.mulf %418, %257 : vector<8x128xf32>
      %420 = arith.addf %416, %419 : vector<8x128xf32>
      %c2_216 = arith.constant 2 : index
      %c2_217 = arith.constant 2 : index
      %421 = memref.load %arg4[%c2_216, %c2_217] : memref<4x4xf32, #tpu.memory_space<smem>>
      %422 = vector.broadcast %421 : f32 to vector<8x128xf32>
      %423 = arith.mulf %422, %275 : vector<8x128xf32>
      %424 = arith.addf %420, %423 : vector<8x128xf32>
      %c2_218 = arith.constant 2 : index
      %c3_219 = arith.constant 3 : index
      %425 = memref.load %arg4[%c2_218, %c3_219] : memref<4x4xf32, #tpu.memory_space<smem>>
      %426 = vector.broadcast %425 : f32 to vector<8x128xf32>
      %427 = arith.mulf %426, %293 : vector<8x128xf32>
      %428 = arith.addf %424, %427 : vector<8x128xf32>
      %c3_220 = arith.constant 3 : index
      %c0_221 = arith.constant 0 : index
      %429 = memref.load %arg4[%c3_220, %c0_221] : memref<4x4xf32, #tpu.memory_space<smem>>
      %430 = vector.broadcast %429 : f32 to vector<8x128xf32>
      %431 = arith.mulf %430, %237 : vector<8x128xf32>
      %c3_222 = arith.constant 3 : index
      %c1_223 = arith.constant 1 : index
      %432 = memref.load %arg4[%c3_222, %c1_223] : memref<4x4xf32, #tpu.memory_space<smem>>
      %433 = vector.broadcast %432 : f32 to vector<8x128xf32>
      %434 = arith.mulf %433, %255 : vector<8x128xf32>
      %435 = arith.addf %431, %434 : vector<8x128xf32>
      %c3_224 = arith.constant 3 : index
      %c2_225 = arith.constant 2 : index
      %436 = memref.load %arg4[%c3_224, %c2_225] : memref<4x4xf32, #tpu.memory_space<smem>>
      %437 = vector.broadcast %436 : f32 to vector<8x128xf32>
      %438 = arith.mulf %437, %273 : vector<8x128xf32>
      %439 = arith.addf %435, %438 : vector<8x128xf32>
      %c3_226 = arith.constant 3 : index
      %c3_227 = arith.constant 3 : index
      %440 = memref.load %arg4[%c3_226, %c3_227] : memref<4x4xf32, #tpu.memory_space<smem>>
      %441 = vector.broadcast %440 : f32 to vector<8x128xf32>
      %442 = arith.mulf %441, %291 : vector<8x128xf32>
      %443 = arith.addf %439, %442 : vector<8x128xf32>
      %c3_228 = arith.constant 3 : index
      %c0_229 = arith.constant 0 : index
      %444 = memref.load %arg4[%c3_228, %c0_229] : memref<4x4xf32, #tpu.memory_space<smem>>
      %445 = vector.broadcast %444 : f32 to vector<8x128xf32>
      %446 = arith.mulf %445, %238 : vector<8x128xf32>
      %c3_230 = arith.constant 3 : index
      %c1_231 = arith.constant 1 : index
      %447 = memref.load %arg4[%c3_230, %c1_231] : memref<4x4xf32, #tpu.memory_space<smem>>
      %448 = vector.broadcast %447 : f32 to vector<8x128xf32>
      %449 = arith.mulf %448, %256 : vector<8x128xf32>
      %450 = arith.addf %446, %449 : vector<8x128xf32>
      %c3_232 = arith.constant 3 : index
      %c2_233 = arith.constant 2 : index
      %451 = memref.load %arg4[%c3_232, %c2_233] : memref<4x4xf32, #tpu.memory_space<smem>>
      %452 = vector.broadcast %451 : f32 to vector<8x128xf32>
      %453 = arith.mulf %452, %274 : vector<8x128xf32>
      %454 = arith.addf %450, %453 : vector<8x128xf32>
      %c3_234 = arith.constant 3 : index
      %c3_235 = arith.constant 3 : index
      %455 = memref.load %arg4[%c3_234, %c3_235] : memref<4x4xf32, #tpu.memory_space<smem>>
      %456 = vector.broadcast %455 : f32 to vector<8x128xf32>
      %457 = arith.mulf %456, %292 : vector<8x128xf32>
      %458 = arith.addf %454, %457 : vector<8x128xf32>
      %c3_236 = arith.constant 3 : index
      %c0_237 = arith.constant 0 : index
      %459 = memref.load %arg4[%c3_236, %c0_237] : memref<4x4xf32, #tpu.memory_space<smem>>
      %460 = vector.broadcast %459 : f32 to vector<8x128xf32>
      %461 = arith.mulf %460, %239 : vector<8x128xf32>
      %c3_238 = arith.constant 3 : index
      %c1_239 = arith.constant 1 : index
      %462 = memref.load %arg4[%c3_238, %c1_239] : memref<4x4xf32, #tpu.memory_space<smem>>
      %463 = vector.broadcast %462 : f32 to vector<8x128xf32>
      %464 = arith.mulf %463, %257 : vector<8x128xf32>
      %465 = arith.addf %461, %464 : vector<8x128xf32>
      %c3_240 = arith.constant 3 : index
      %c2_241 = arith.constant 2 : index
      %466 = memref.load %arg4[%c3_240, %c2_241] : memref<4x4xf32, #tpu.memory_space<smem>>
      %467 = vector.broadcast %466 : f32 to vector<8x128xf32>
      %468 = arith.mulf %467, %275 : vector<8x128xf32>
      %469 = arith.addf %465, %468 : vector<8x128xf32>
      %c3_242 = arith.constant 3 : index
      %c3_243 = arith.constant 3 : index
      %470 = memref.load %arg4[%c3_242, %c3_243] : memref<4x4xf32, #tpu.memory_space<smem>>
      %471 = vector.broadcast %470 : f32 to vector<8x128xf32>
      %472 = arith.mulf %471, %293 : vector<8x128xf32>
      %473 = arith.addf %469, %472 : vector<8x128xf32>
      %474 = arith.mulf %237, %308 : vector<8x128xf32>
      %475 = arith.mulf %238, %323 : vector<8x128xf32>
      %476 = arith.addf %474, %475 : vector<8x128xf32>
      %477 = arith.mulf %239, %338 : vector<8x128xf32>
      %478 = arith.addf %476, %477 : vector<8x128xf32>
      %479 = arith.mulf %308, %308 : vector<8x128xf32>
      %480 = arith.mulf %323, %323 : vector<8x128xf32>
      %481 = arith.addf %479, %480 : vector<8x128xf32>
      %482 = arith.mulf %338, %338 : vector<8x128xf32>
      %483 = arith.addf %481, %482 : vector<8x128xf32>
      %cst_244 = arith.constant 0.000000e+00 : f32
      %484 = vector.broadcast %cst_244 : f32 to vector<8x128xf32>
      %485 = arith.cmpf oge, %478, %484 : vector<8x128xf32>
      %cst_245 = arith.constant 9.99999997E-7 : f32
      %486 = vector.broadcast %cst_245 : f32 to vector<8x128xf32>
      %487 = arith.addf %483, %486 : vector<8x128xf32>
      %488 = tpu.reciprocal %487 : vector<8x128xf32> -> vector<8x128xf32>
      %489 = arith.mulf %478, %488 : vector<8x128xf32>
      %cst_246 = arith.constant 0.000000e+00 : f32
      %490 = vector.broadcast %cst_246 : f32 to vector<8x128xf32>
      %491 = arith.select %485, %490, %489 : vector<8x128xi1>, vector<8x128xf32>
      %492 = arith.mulf %491, %308 : vector<8x128xf32>
      %493 = arith.subf %237, %492 : vector<8x128xf32>
      %494 = arith.mulf %491, %323 : vector<8x128xf32>
      %495 = arith.subf %238, %494 : vector<8x128xf32>
      %496 = arith.mulf %491, %338 : vector<8x128xf32>
      %497 = arith.subf %239, %496 : vector<8x128xf32>
      %498 = arith.mulf %255, %353 : vector<8x128xf32>
      %499 = arith.mulf %256, %368 : vector<8x128xf32>
      %500 = arith.addf %498, %499 : vector<8x128xf32>
      %501 = arith.mulf %257, %383 : vector<8x128xf32>
      %502 = arith.addf %500, %501 : vector<8x128xf32>
      %503 = arith.mulf %353, %353 : vector<8x128xf32>
      %504 = arith.mulf %368, %368 : vector<8x128xf32>
      %505 = arith.addf %503, %504 : vector<8x128xf32>
      %506 = arith.mulf %383, %383 : vector<8x128xf32>
      %507 = arith.addf %505, %506 : vector<8x128xf32>
      %cst_247 = arith.constant 0.000000e+00 : f32
      %508 = vector.broadcast %cst_247 : f32 to vector<8x128xf32>
      %509 = arith.cmpf oge, %502, %508 : vector<8x128xf32>
      %cst_248 = arith.constant 9.99999997E-7 : f32
      %510 = vector.broadcast %cst_248 : f32 to vector<8x128xf32>
      %511 = arith.addf %507, %510 : vector<8x128xf32>
      %512 = tpu.reciprocal %511 : vector<8x128xf32> -> vector<8x128xf32>
      %513 = arith.mulf %502, %512 : vector<8x128xf32>
      %cst_249 = arith.constant 0.000000e+00 : f32
      %514 = vector.broadcast %cst_249 : f32 to vector<8x128xf32>
      %515 = arith.select %509, %514, %513 : vector<8x128xi1>, vector<8x128xf32>
      %516 = arith.mulf %515, %353 : vector<8x128xf32>
      %517 = arith.subf %255, %516 : vector<8x128xf32>
      %518 = arith.mulf %515, %368 : vector<8x128xf32>
      %519 = arith.subf %256, %518 : vector<8x128xf32>
      %520 = arith.mulf %515, %383 : vector<8x128xf32>
      %521 = arith.subf %257, %520 : vector<8x128xf32>
      %522 = arith.mulf %273, %398 : vector<8x128xf32>
      %523 = arith.mulf %274, %413 : vector<8x128xf32>
      %524 = arith.addf %522, %523 : vector<8x128xf32>
      %525 = arith.mulf %275, %428 : vector<8x128xf32>
      %526 = arith.addf %524, %525 : vector<8x128xf32>
      %527 = arith.mulf %398, %398 : vector<8x128xf32>
      %528 = arith.mulf %413, %413 : vector<8x128xf32>
      %529 = arith.addf %527, %528 : vector<8x128xf32>
      %530 = arith.mulf %428, %428 : vector<8x128xf32>
      %531 = arith.addf %529, %530 : vector<8x128xf32>
      %cst_250 = arith.constant 0.000000e+00 : f32
      %532 = vector.broadcast %cst_250 : f32 to vector<8x128xf32>
      %533 = arith.cmpf oge, %526, %532 : vector<8x128xf32>
      %cst_251 = arith.constant 9.99999997E-7 : f32
      %534 = vector.broadcast %cst_251 : f32 to vector<8x128xf32>
      %535 = arith.addf %531, %534 : vector<8x128xf32>
      %536 = tpu.reciprocal %535 : vector<8x128xf32> -> vector<8x128xf32>
      %537 = arith.mulf %526, %536 : vector<8x128xf32>
      %cst_252 = arith.constant 0.000000e+00 : f32
      %538 = vector.broadcast %cst_252 : f32 to vector<8x128xf32>
      %539 = arith.select %533, %538, %537 : vector<8x128xi1>, vector<8x128xf32>
      %540 = arith.mulf %539, %398 : vector<8x128xf32>
      %541 = arith.subf %273, %540 : vector<8x128xf32>
      %542 = arith.mulf %539, %413 : vector<8x128xf32>
      %543 = arith.subf %274, %542 : vector<8x128xf32>
      %544 = arith.mulf %539, %428 : vector<8x128xf32>
      %545 = arith.subf %275, %544 : vector<8x128xf32>
      %546 = arith.mulf %291, %443 : vector<8x128xf32>
      %547 = arith.mulf %292, %458 : vector<8x128xf32>
      %548 = arith.addf %546, %547 : vector<8x128xf32>
      %549 = arith.mulf %293, %473 : vector<8x128xf32>
      %550 = arith.addf %548, %549 : vector<8x128xf32>
      %551 = arith.mulf %443, %443 : vector<8x128xf32>
      %552 = arith.mulf %458, %458 : vector<8x128xf32>
      %553 = arith.addf %551, %552 : vector<8x128xf32>
      %554 = arith.mulf %473, %473 : vector<8x128xf32>
      %555 = arith.addf %553, %554 : vector<8x128xf32>
      %cst_253 = arith.constant 0.000000e+00 : f32
      %556 = vector.broadcast %cst_253 : f32 to vector<8x128xf32>
      %557 = arith.cmpf oge, %550, %556 : vector<8x128xf32>
      %cst_254 = arith.constant 9.99999997E-7 : f32
      %558 = vector.broadcast %cst_254 : f32 to vector<8x128xf32>
      %559 = arith.addf %555, %558 : vector<8x128xf32>
      %560 = tpu.reciprocal %559 : vector<8x128xf32> -> vector<8x128xf32>
      %561 = arith.mulf %550, %560 : vector<8x128xf32>
      %cst_255 = arith.constant 0.000000e+00 : f32
      %562 = vector.broadcast %cst_255 : f32 to vector<8x128xf32>
      %563 = arith.select %557, %562, %561 : vector<8x128xi1>, vector<8x128xf32>
      %564 = arith.mulf %563, %443 : vector<8x128xf32>
      %565 = arith.subf %291, %564 : vector<8x128xf32>
      %566 = arith.mulf %563, %458 : vector<8x128xf32>
      %567 = arith.subf %292, %566 : vector<8x128xf32>
      %568 = arith.mulf %563, %473 : vector<8x128xf32>
      %569 = arith.subf %293, %568 : vector<8x128xf32>
      %c0_256 = arith.constant 0 : index
      %c0_257 = arith.constant 0 : index
      %570 = memref.load %arg5[%c0_256, %c0_257] : memref<4x4xf32, #tpu.memory_space<smem>>
      %571 = vector.broadcast %570 : f32 to vector<8x128xf32>
      %572 = arith.mulf %571, %493 : vector<8x128xf32>
      %c0_258 = arith.constant 0 : index
      %c1_259 = arith.constant 1 : index
      %573 = memref.load %arg5[%c0_258, %c1_259] : memref<4x4xf32, #tpu.memory_space<smem>>
      %574 = vector.broadcast %573 : f32 to vector<8x128xf32>
      %575 = arith.mulf %574, %517 : vector<8x128xf32>
      %576 = arith.addf %572, %575 : vector<8x128xf32>
      %c0_260 = arith.constant 0 : index
      %c2_261 = arith.constant 2 : index
      %577 = memref.load %arg5[%c0_260, %c2_261] : memref<4x4xf32, #tpu.memory_space<smem>>
      %578 = vector.broadcast %577 : f32 to vector<8x128xf32>
      %579 = arith.mulf %578, %541 : vector<8x128xf32>
      %580 = arith.addf %576, %579 : vector<8x128xf32>
      %c0_262 = arith.constant 0 : index
      %c3_263 = arith.constant 3 : index
      %581 = memref.load %arg5[%c0_262, %c3_263] : memref<4x4xf32, #tpu.memory_space<smem>>
      %582 = vector.broadcast %581 : f32 to vector<8x128xf32>
      %583 = arith.mulf %582, %565 : vector<8x128xf32>
      %584 = arith.addf %580, %583 : vector<8x128xf32>
      %c0_264 = arith.constant 0 : index
      %c0_265 = arith.constant 0 : index
      %585 = memref.load %arg5[%c0_264, %c0_265] : memref<4x4xf32, #tpu.memory_space<smem>>
      %586 = vector.broadcast %585 : f32 to vector<8x128xf32>
      %587 = arith.mulf %586, %495 : vector<8x128xf32>
      %c0_266 = arith.constant 0 : index
      %c1_267 = arith.constant 1 : index
      %588 = memref.load %arg5[%c0_266, %c1_267] : memref<4x4xf32, #tpu.memory_space<smem>>
      %589 = vector.broadcast %588 : f32 to vector<8x128xf32>
      %590 = arith.mulf %589, %519 : vector<8x128xf32>
      %591 = arith.addf %587, %590 : vector<8x128xf32>
      %c0_268 = arith.constant 0 : index
      %c2_269 = arith.constant 2 : index
      %592 = memref.load %arg5[%c0_268, %c2_269] : memref<4x4xf32, #tpu.memory_space<smem>>
      %593 = vector.broadcast %592 : f32 to vector<8x128xf32>
      %594 = arith.mulf %593, %543 : vector<8x128xf32>
      %595 = arith.addf %591, %594 : vector<8x128xf32>
      %c0_270 = arith.constant 0 : index
      %c3_271 = arith.constant 3 : index
      %596 = memref.load %arg5[%c0_270, %c3_271] : memref<4x4xf32, #tpu.memory_space<smem>>
      %597 = vector.broadcast %596 : f32 to vector<8x128xf32>
      %598 = arith.mulf %597, %567 : vector<8x128xf32>
      %599 = arith.addf %595, %598 : vector<8x128xf32>
      %c0_272 = arith.constant 0 : index
      %c0_273 = arith.constant 0 : index
      %600 = memref.load %arg5[%c0_272, %c0_273] : memref<4x4xf32, #tpu.memory_space<smem>>
      %601 = vector.broadcast %600 : f32 to vector<8x128xf32>
      %602 = arith.mulf %601, %497 : vector<8x128xf32>
      %c0_274 = arith.constant 0 : index
      %c1_275 = arith.constant 1 : index
      %603 = memref.load %arg5[%c0_274, %c1_275] : memref<4x4xf32, #tpu.memory_space<smem>>
      %604 = vector.broadcast %603 : f32 to vector<8x128xf32>
      %605 = arith.mulf %604, %521 : vector<8x128xf32>
      %606 = arith.addf %602, %605 : vector<8x128xf32>
      %c0_276 = arith.constant 0 : index
      %c2_277 = arith.constant 2 : index
      %607 = memref.load %arg5[%c0_276, %c2_277] : memref<4x4xf32, #tpu.memory_space<smem>>
      %608 = vector.broadcast %607 : f32 to vector<8x128xf32>
      %609 = arith.mulf %608, %545 : vector<8x128xf32>
      %610 = arith.addf %606, %609 : vector<8x128xf32>
      %c0_278 = arith.constant 0 : index
      %c3_279 = arith.constant 3 : index
      %611 = memref.load %arg5[%c0_278, %c3_279] : memref<4x4xf32, #tpu.memory_space<smem>>
      %612 = vector.broadcast %611 : f32 to vector<8x128xf32>
      %613 = arith.mulf %612, %569 : vector<8x128xf32>
      %614 = arith.addf %610, %613 : vector<8x128xf32>
      %c1_280 = arith.constant 1 : index
      %c0_281 = arith.constant 0 : index
      %615 = memref.load %arg5[%c1_280, %c0_281] : memref<4x4xf32, #tpu.memory_space<smem>>
      %616 = vector.broadcast %615 : f32 to vector<8x128xf32>
      %617 = arith.mulf %616, %493 : vector<8x128xf32>
      %c1_282 = arith.constant 1 : index
      %c1_283 = arith.constant 1 : index
      %618 = memref.load %arg5[%c1_282, %c1_283] : memref<4x4xf32, #tpu.memory_space<smem>>
      %619 = vector.broadcast %618 : f32 to vector<8x128xf32>
      %620 = arith.mulf %619, %517 : vector<8x128xf32>
      %621 = arith.addf %617, %620 : vector<8x128xf32>
      %c1_284 = arith.constant 1 : index
      %c2_285 = arith.constant 2 : index
      %622 = memref.load %arg5[%c1_284, %c2_285] : memref<4x4xf32, #tpu.memory_space<smem>>
      %623 = vector.broadcast %622 : f32 to vector<8x128xf32>
      %624 = arith.mulf %623, %541 : vector<8x128xf32>
      %625 = arith.addf %621, %624 : vector<8x128xf32>
      %c1_286 = arith.constant 1 : index
      %c3_287 = arith.constant 3 : index
      %626 = memref.load %arg5[%c1_286, %c3_287] : memref<4x4xf32, #tpu.memory_space<smem>>
      %627 = vector.broadcast %626 : f32 to vector<8x128xf32>
      %628 = arith.mulf %627, %565 : vector<8x128xf32>
      %629 = arith.addf %625, %628 : vector<8x128xf32>
      %c1_288 = arith.constant 1 : index
      %c0_289 = arith.constant 0 : index
      %630 = memref.load %arg5[%c1_288, %c0_289] : memref<4x4xf32, #tpu.memory_space<smem>>
      %631 = vector.broadcast %630 : f32 to vector<8x128xf32>
      %632 = arith.mulf %631, %495 : vector<8x128xf32>
      %c1_290 = arith.constant 1 : index
      %c1_291 = arith.constant 1 : index
      %633 = memref.load %arg5[%c1_290, %c1_291] : memref<4x4xf32, #tpu.memory_space<smem>>
      %634 = vector.broadcast %633 : f32 to vector<8x128xf32>
      %635 = arith.mulf %634, %519 : vector<8x128xf32>
      %636 = arith.addf %632, %635 : vector<8x128xf32>
      %c1_292 = arith.constant 1 : index
      %c2_293 = arith.constant 2 : index
      %637 = memref.load %arg5[%c1_292, %c2_293] : memref<4x4xf32, #tpu.memory_space<smem>>
      %638 = vector.broadcast %637 : f32 to vector<8x128xf32>
      %639 = arith.mulf %638, %543 : vector<8x128xf32>
      %640 = arith.addf %636, %639 : vector<8x128xf32>
      %c1_294 = arith.constant 1 : index
      %c3_295 = arith.constant 3 : index
      %641 = memref.load %arg5[%c1_294, %c3_295] : memref<4x4xf32, #tpu.memory_space<smem>>
      %642 = vector.broadcast %641 : f32 to vector<8x128xf32>
      %643 = arith.mulf %642, %567 : vector<8x128xf32>
      %644 = arith.addf %640, %643 : vector<8x128xf32>
      %c1_296 = arith.constant 1 : index
      %c0_297 = arith.constant 0 : index
      %645 = memref.load %arg5[%c1_296, %c0_297] : memref<4x4xf32, #tpu.memory_space<smem>>
      %646 = vector.broadcast %645 : f32 to vector<8x128xf32>
      %647 = arith.mulf %646, %497 : vector<8x128xf32>
      %c1_298 = arith.constant 1 : index
      %c1_299 = arith.constant 1 : index
      %648 = memref.load %arg5[%c1_298, %c1_299] : memref<4x4xf32, #tpu.memory_space<smem>>
      %649 = vector.broadcast %648 : f32 to vector<8x128xf32>
      %650 = arith.mulf %649, %521 : vector<8x128xf32>
      %651 = arith.addf %647, %650 : vector<8x128xf32>
      %c1_300 = arith.constant 1 : index
      %c2_301 = arith.constant 2 : index
      %652 = memref.load %arg5[%c1_300, %c2_301] : memref<4x4xf32, #tpu.memory_space<smem>>
      %653 = vector.broadcast %652 : f32 to vector<8x128xf32>
      %654 = arith.mulf %653, %545 : vector<8x128xf32>
      %655 = arith.addf %651, %654 : vector<8x128xf32>
      %c1_302 = arith.constant 1 : index
      %c3_303 = arith.constant 3 : index
      %656 = memref.load %arg5[%c1_302, %c3_303] : memref<4x4xf32, #tpu.memory_space<smem>>
      %657 = vector.broadcast %656 : f32 to vector<8x128xf32>
      %658 = arith.mulf %657, %569 : vector<8x128xf32>
      %659 = arith.addf %655, %658 : vector<8x128xf32>
      %c2_304 = arith.constant 2 : index
      %c0_305 = arith.constant 0 : index
      %660 = memref.load %arg5[%c2_304, %c0_305] : memref<4x4xf32, #tpu.memory_space<smem>>
      %661 = vector.broadcast %660 : f32 to vector<8x128xf32>
      %662 = arith.mulf %661, %493 : vector<8x128xf32>
      %c2_306 = arith.constant 2 : index
      %c1_307 = arith.constant 1 : index
      %663 = memref.load %arg5[%c2_306, %c1_307] : memref<4x4xf32, #tpu.memory_space<smem>>
      %664 = vector.broadcast %663 : f32 to vector<8x128xf32>
      %665 = arith.mulf %664, %517 : vector<8x128xf32>
      %666 = arith.addf %662, %665 : vector<8x128xf32>
      %c2_308 = arith.constant 2 : index
      %c2_309 = arith.constant 2 : index
      %667 = memref.load %arg5[%c2_308, %c2_309] : memref<4x4xf32, #tpu.memory_space<smem>>
      %668 = vector.broadcast %667 : f32 to vector<8x128xf32>
      %669 = arith.mulf %668, %541 : vector<8x128xf32>
      %670 = arith.addf %666, %669 : vector<8x128xf32>
      %c2_310 = arith.constant 2 : index
      %c3_311 = arith.constant 3 : index
      %671 = memref.load %arg5[%c2_310, %c3_311] : memref<4x4xf32, #tpu.memory_space<smem>>
      %672 = vector.broadcast %671 : f32 to vector<8x128xf32>
      %673 = arith.mulf %672, %565 : vector<8x128xf32>
      %674 = arith.addf %670, %673 : vector<8x128xf32>
      %c2_312 = arith.constant 2 : index
      %c0_313 = arith.constant 0 : index
      %675 = memref.load %arg5[%c2_312, %c0_313] : memref<4x4xf32, #tpu.memory_space<smem>>
      %676 = vector.broadcast %675 : f32 to vector<8x128xf32>
      %677 = arith.mulf %676, %495 : vector<8x128xf32>
      %c2_314 = arith.constant 2 : index
      %c1_315 = arith.constant 1 : index
      %678 = memref.load %arg5[%c2_314, %c1_315] : memref<4x4xf32, #tpu.memory_space<smem>>
      %679 = vector.broadcast %678 : f32 to vector<8x128xf32>
      %680 = arith.mulf %679, %519 : vector<8x128xf32>
      %681 = arith.addf %677, %680 : vector<8x128xf32>
      %c2_316 = arith.constant 2 : index
      %c2_317 = arith.constant 2 : index
      %682 = memref.load %arg5[%c2_316, %c2_317] : memref<4x4xf32, #tpu.memory_space<smem>>
      %683 = vector.broadcast %682 : f32 to vector<8x128xf32>
      %684 = arith.mulf %683, %543 : vector<8x128xf32>
      %685 = arith.addf %681, %684 : vector<8x128xf32>
      %c2_318 = arith.constant 2 : index
      %c3_319 = arith.constant 3 : index
      %686 = memref.load %arg5[%c2_318, %c3_319] : memref<4x4xf32, #tpu.memory_space<smem>>
      %687 = vector.broadcast %686 : f32 to vector<8x128xf32>
      %688 = arith.mulf %687, %567 : vector<8x128xf32>
      %689 = arith.addf %685, %688 : vector<8x128xf32>
      %c2_320 = arith.constant 2 : index
      %c0_321 = arith.constant 0 : index
      %690 = memref.load %arg5[%c2_320, %c0_321] : memref<4x4xf32, #tpu.memory_space<smem>>
      %691 = vector.broadcast %690 : f32 to vector<8x128xf32>
      %692 = arith.mulf %691, %497 : vector<8x128xf32>
      %c2_322 = arith.constant 2 : index
      %c1_323 = arith.constant 1 : index
      %693 = memref.load %arg5[%c2_322, %c1_323] : memref<4x4xf32, #tpu.memory_space<smem>>
      %694 = vector.broadcast %693 : f32 to vector<8x128xf32>
      %695 = arith.mulf %694, %521 : vector<8x128xf32>
      %696 = arith.addf %692, %695 : vector<8x128xf32>
      %c2_324 = arith.constant 2 : index
      %c2_325 = arith.constant 2 : index
      %697 = memref.load %arg5[%c2_324, %c2_325] : memref<4x4xf32, #tpu.memory_space<smem>>
      %698 = vector.broadcast %697 : f32 to vector<8x128xf32>
      %699 = arith.mulf %698, %545 : vector<8x128xf32>
      %700 = arith.addf %696, %699 : vector<8x128xf32>
      %c2_326 = arith.constant 2 : index
      %c3_327 = arith.constant 3 : index
      %701 = memref.load %arg5[%c2_326, %c3_327] : memref<4x4xf32, #tpu.memory_space<smem>>
      %702 = vector.broadcast %701 : f32 to vector<8x128xf32>
      %703 = arith.mulf %702, %569 : vector<8x128xf32>
      %704 = arith.addf %700, %703 : vector<8x128xf32>
      %c3_328 = arith.constant 3 : index
      %c0_329 = arith.constant 0 : index
      %705 = memref.load %arg5[%c3_328, %c0_329] : memref<4x4xf32, #tpu.memory_space<smem>>
      %706 = vector.broadcast %705 : f32 to vector<8x128xf32>
      %707 = arith.mulf %706, %493 : vector<8x128xf32>
      %c3_330 = arith.constant 3 : index
      %c1_331 = arith.constant 1 : index
      %708 = memref.load %arg5[%c3_330, %c1_331] : memref<4x4xf32, #tpu.memory_space<smem>>
      %709 = vector.broadcast %708 : f32 to vector<8x128xf32>
      %710 = arith.mulf %709, %517 : vector<8x128xf32>
      %711 = arith.addf %707, %710 : vector<8x128xf32>
      %c3_332 = arith.constant 3 : index
      %c2_333 = arith.constant 2 : index
      %712 = memref.load %arg5[%c3_332, %c2_333] : memref<4x4xf32, #tpu.memory_space<smem>>
      %713 = vector.broadcast %712 : f32 to vector<8x128xf32>
      %714 = arith.mulf %713, %541 : vector<8x128xf32>
      %715 = arith.addf %711, %714 : vector<8x128xf32>
      %c3_334 = arith.constant 3 : index
      %c3_335 = arith.constant 3 : index
      %716 = memref.load %arg5[%c3_334, %c3_335] : memref<4x4xf32, #tpu.memory_space<smem>>
      %717 = vector.broadcast %716 : f32 to vector<8x128xf32>
      %718 = arith.mulf %717, %565 : vector<8x128xf32>
      %719 = arith.addf %715, %718 : vector<8x128xf32>
      %c3_336 = arith.constant 3 : index
      %c0_337 = arith.constant 0 : index
      %720 = memref.load %arg5[%c3_336, %c0_337] : memref<4x4xf32, #tpu.memory_space<smem>>
      %721 = vector.broadcast %720 : f32 to vector<8x128xf32>
      %722 = arith.mulf %721, %495 : vector<8x128xf32>
      %c3_338 = arith.constant 3 : index
      %c1_339 = arith.constant 1 : index
      %723 = memref.load %arg5[%c3_338, %c1_339] : memref<4x4xf32, #tpu.memory_space<smem>>
      %724 = vector.broadcast %723 : f32 to vector<8x128xf32>
      %725 = arith.mulf %724, %519 : vector<8x128xf32>
      %726 = arith.addf %722, %725 : vector<8x128xf32>
      %c3_340 = arith.constant 3 : index
      %c2_341 = arith.constant 2 : index
      %727 = memref.load %arg5[%c3_340, %c2_341] : memref<4x4xf32, #tpu.memory_space<smem>>
      %728 = vector.broadcast %727 : f32 to vector<8x128xf32>
      %729 = arith.mulf %728, %543 : vector<8x128xf32>
      %730 = arith.addf %726, %729 : vector<8x128xf32>
      %c3_342 = arith.constant 3 : index
      %c3_343 = arith.constant 3 : index
      %731 = memref.load %arg5[%c3_342, %c3_343] : memref<4x4xf32, #tpu.memory_space<smem>>
      %732 = vector.broadcast %731 : f32 to vector<8x128xf32>
      %733 = arith.mulf %732, %567 : vector<8x128xf32>
      %734 = arith.addf %730, %733 : vector<8x128xf32>
      %c3_344 = arith.constant 3 : index
      %c0_345 = arith.constant 0 : index
      %735 = memref.load %arg5[%c3_344, %c0_345] : memref<4x4xf32, #tpu.memory_space<smem>>
      %736 = vector.broadcast %735 : f32 to vector<8x128xf32>
      %737 = arith.mulf %736, %497 : vector<8x128xf32>
      %c3_346 = arith.constant 3 : index
      %c1_347 = arith.constant 1 : index
      %738 = memref.load %arg5[%c3_346, %c1_347] : memref<4x4xf32, #tpu.memory_space<smem>>
      %739 = vector.broadcast %738 : f32 to vector<8x128xf32>
      %740 = arith.mulf %739, %521 : vector<8x128xf32>
      %741 = arith.addf %737, %740 : vector<8x128xf32>
      %c3_348 = arith.constant 3 : index
      %c2_349 = arith.constant 2 : index
      %742 = memref.load %arg5[%c3_348, %c2_349] : memref<4x4xf32, #tpu.memory_space<smem>>
      %743 = vector.broadcast %742 : f32 to vector<8x128xf32>
      %744 = arith.mulf %743, %545 : vector<8x128xf32>
      %745 = arith.addf %741, %744 : vector<8x128xf32>
      %c3_350 = arith.constant 3 : index
      %c3_351 = arith.constant 3 : index
      %746 = memref.load %arg5[%c3_350, %c3_351] : memref<4x4xf32, #tpu.memory_space<smem>>
      %747 = vector.broadcast %746 : f32 to vector<8x128xf32>
      %748 = arith.mulf %747, %569 : vector<8x128xf32>
      %749 = arith.addf %745, %748 : vector<8x128xf32>
      %750 = arith.mulf %584, %584 : vector<8x128xf32>
      %751 = arith.mulf %599, %599 : vector<8x128xf32>
      %752 = arith.addf %750, %751 : vector<8x128xf32>
      %753 = arith.mulf %614, %614 : vector<8x128xf32>
      %754 = arith.addf %752, %753 : vector<8x128xf32>
      %755 = math.sqrt %754 : vector<8x128xf32>
      %cst_352 = arith.constant 9.99999997E-7 : f32
      %756 = vector.broadcast %cst_352 : f32 to vector<8x128xf32>
      %757 = arith.addf %755, %756 : vector<8x128xf32>
      %758 = arith.mulf %629, %629 : vector<8x128xf32>
      %759 = arith.mulf %644, %644 : vector<8x128xf32>
      %760 = arith.addf %758, %759 : vector<8x128xf32>
      %761 = arith.mulf %659, %659 : vector<8x128xf32>
      %762 = arith.addf %760, %761 : vector<8x128xf32>
      %763 = math.sqrt %762 : vector<8x128xf32>
      %cst_353 = arith.constant 9.99999997E-7 : f32
      %764 = vector.broadcast %cst_353 : f32 to vector<8x128xf32>
      %765 = arith.addf %763, %764 : vector<8x128xf32>
      %766 = arith.mulf %674, %674 : vector<8x128xf32>
      %767 = arith.mulf %689, %689 : vector<8x128xf32>
      %768 = arith.addf %766, %767 : vector<8x128xf32>
      %769 = arith.mulf %704, %704 : vector<8x128xf32>
      %770 = arith.addf %768, %769 : vector<8x128xf32>
      %771 = math.sqrt %770 : vector<8x128xf32>
      %cst_354 = arith.constant 9.99999997E-7 : f32
      %772 = vector.broadcast %cst_354 : f32 to vector<8x128xf32>
      %773 = arith.addf %771, %772 : vector<8x128xf32>
      %774 = arith.mulf %719, %719 : vector<8x128xf32>
      %775 = arith.mulf %734, %734 : vector<8x128xf32>
      %776 = arith.addf %774, %775 : vector<8x128xf32>
      %777 = arith.mulf %749, %749 : vector<8x128xf32>
      %778 = arith.addf %776, %777 : vector<8x128xf32>
      %779 = math.sqrt %778 : vector<8x128xf32>
      %cst_355 = arith.constant 9.99999997E-7 : f32
      %780 = vector.broadcast %cst_355 : f32 to vector<8x128xf32>
      %781 = arith.addf %779, %780 : vector<8x128xf32>
      %782 = arith.mulf %757, %757 : vector<8x128xf32>
      %783 = arith.mulf %765, %765 : vector<8x128xf32>
      %784 = arith.mulf %773, %773 : vector<8x128xf32>
      %785 = arith.mulf %781, %781 : vector<8x128xf32>
      %786 = vector.shape_cast %757 : vector<8x128xf32> to vector<1x8x128xf32>
      %787 = vector.shape_cast %765 : vector<8x128xf32> to vector<1x8x128xf32>
      %788 = vector.shape_cast %773 : vector<8x128xf32> to vector<1x8x128xf32>
      %789 = vector.shape_cast %781 : vector<8x128xf32> to vector<1x8x128xf32>
      %790 = vector.shape_cast %782 : vector<8x128xf32> to vector<1x8x128xf32>
      %791 = vector.shape_cast %783 : vector<8x128xf32> to vector<1x8x128xf32>
      %792 = vector.shape_cast %784 : vector<8x128xf32> to vector<1x8x128xf32>
      %793 = vector.shape_cast %785 : vector<8x128xf32> to vector<1x8x128xf32>
      %794 = tpu.concatenate %786, %787, %788, %789, %790, %791, %792, %793 in 0 : vector<1x8x128xf32>, vector<1x8x128xf32>, vector<1x8x128xf32>, vector<1x8x128xf32>, vector<1x8x128xf32>, vector<1x8x128xf32>, vector<1x8x128xf32>, vector<1x8x128xf32> -> vector<8x8x128xf32>
      %c0_356 = arith.constant 0 : index
      %c0_357 = arith.constant 0 : index
      %c0_358 = arith.constant 0 : index
      %c0_359 = arith.constant 0 : index
      %795 = vector.load %arg8[%c0_356, %c0_357, %c0_358, %c0_359] : memref<1x8x8x128xf32, #tpu.memory_space<vmem>>, vector<1x8x8x128xf32>
      %796 = vector.shape_cast %795 : vector<1x8x8x128xf32> to vector<8x8x128xf32>
      %797 = arith.addf %796, %794 : vector<8x8x128xf32>
      %c0_360 = arith.constant 0 : index
      %c0_361 = arith.constant 0 : index
      %c0_362 = arith.constant 0 : index
      %c0_363 = arith.constant 0 : index
      %798 = vector.load %arg8[%c0_360, %c0_361, %c0_362, %c0_363] : memref<1x8x8x128xf32, #tpu.memory_space<vmem>>, vector<1x8x8x128xf32>
      %799 = vector.shape_cast %798 : vector<1x8x8x128xf32> to vector<8x8x128xf32>
      %800 = vector.shape_cast %797 : vector<8x8x128xf32> to vector<1x8x8x128xf32>
      tpu.vector_store %arg8[%c0_360, %c0_361, %c0_362, %c0_363], %800 {strides = array<i32>} : memref<1x8x8x128xf32, #tpu.memory_space<vmem>>, vector<1x8x8x128xf32>,
    }
    %c8_i32_2 = arith.constant 8 : i32
    return
  }
  func.func @transform_0(%arg0: i32, %arg1: i32) -> (i32, i32, i32, i32, i32) {
    %c0_i32 = arith.constant 0 : i32
    %c0_i32_0 = arith.constant 0 : i32
    %c0_i32_1 = arith.constant 0 : i32
    %c0_i32_2 = arith.constant 0 : i32
    return %arg0, %c0_i32, %arg1, %c0_i32_0, %c0_i32_1 : i32, i32, i32, i32, i32
  }
  func.func @transform_1(%arg0: i32, %arg1: i32) -> (i32, i32) {
    %c0_i32 = arith.constant 0 : i32
    %c0_i32_0 = arith.constant 0 : i32
    %c0_i32_1 = arith.constant 0 : i32
    return %c0_i32, %c0_i32_0 : i32, i32
  }
  func.func @transform_2(%arg0: i32, %arg1: i32) -> (i32, i32) {
    %c0_i32 = arith.constant 0 : i32
    %c0_i32_0 = arith.constant 0 : i32
    %c0_i32_1 = arith.constant 0 : i32
    return %c0_i32, %c0_i32_0 : i32, i32
  }
  func.func @transform_3(%arg0: i32, %arg1: i32) -> (i32, i32) {
    %c0_i32 = arith.constant 0 : i32
    %c0_i32_0 = arith.constant 0 : i32
    %c0_i32_1 = arith.constant 0 : i32
    return %c0_i32, %c0_i32_0 : i32, i32
  }
  func.func @transform_4(%arg0: i32, %arg1: i32) -> i32 {
    %c0_i32 = arith.constant 0 : i32
    %c0_i32_0 = arith.constant 0 : i32
    return %c0_i32 : i32
  }
  func.func @transform_5(%arg0: i32, %arg1: i32) -> i32 {
    %c0_i32 = arith.constant 0 : i32
    %c0_i32_0 = arith.constant 0 : i32
    return %c0_i32 : i32
  }
  func.func @transform_6(%arg0: i32, %arg1: i32) -> (i32, i32, i32, i32) {
    %c0_i32 = arith.constant 0 : i32
    %c0_i32_0 = arith.constant 0 : i32
    %c0_i32_1 = arith.constant 0 : i32
    %c0_i32_2 = arith.constant 0 : i32
    return %arg0, %c0_i32, %c0_i32_0, %c0_i32_1 : i32, i32, i32, i32
  }
}

module attributes {stable_mosaic.version = 11 : i64} {
  func.func @_apply_kernel(%arg0: i32, %arg1: i32, %arg2: memref<1x12x8x8x128xf32, #tpu.memory_space<vmem>>, %arg3: memref<4x4xf32, #tpu.memory_space<smem>>, %arg4: memref<4x4xf32, #tpu.memory_space<smem>>, %arg5: memref<4x4xf32, #tpu.memory_space<smem>>, %arg6: memref<4xf32, #tpu.memory_space<smem>>, %arg7: memref<4xf32, #tpu.memory_space<smem>>, %arg8: memref<4xf32, #tpu.memory_space<smem>>, %arg9: memref<4xf32, #tpu.memory_space<smem>>, %arg10: memref<1x12x8x8x128xf32, #tpu.memory_space<vmem>>) attributes {dimension_semantics = [#tpu.dimension_semantics<parallel>, #tpu.dimension_semantics<parallel>], iteration_bounds = array<i64: 2, 2>, scalar_prefetch = 0 : i64, scratch_operands = 0 : i64, tpu.core_type = #tpu.core_type<tc>, window_params = [{transform_indices = @transform_0, window_bounds = array<i64: 1, 12, 8, 8, 128>}, {transform_indices = @transform_1, window_bounds = array<i64: 4, 4>}, {transform_indices = @transform_2, window_bounds = array<i64: 4, 4>}, {transform_indices = @transform_3, window_bounds = array<i64: 4, 4>}, {transform_indices = @transform_4, window_bounds = array<i64: 4>}, {transform_indices = @transform_5, window_bounds = array<i64: 4>}, {transform_indices = @transform_6, window_bounds = array<i64: 4>}, {transform_indices = @transform_7, window_bounds = array<i64: 4>}, {transform_indices = @transform_8, window_bounds = array<i64: 1, 12, 8, 8, 128>}]} {
    %c0_i32 = arith.constant 0 : i32
    %c8_i32 = arith.constant 8 : i32
    %0 = arith.addi %c0_i32, %c8_i32 : i32
    %c1_i32 = arith.constant 1 : i32
    scf.for %arg11 = %c0_i32 to %0 step %c1_i32  : i32 {
      %c1_i32_1 = arith.constant 1 : i32
      %1 = arith.muli %arg11, %c1_i32_1 : i32
      %c0_i32_2 = arith.constant 0 : i32
      %2 = arith.addi %c0_i32_2, %1 : i32
      %c0 = arith.constant 0 : index
      %c0_3 = arith.constant 0 : index
      %3 = arith.index_cast %2 : i32 to index
      %c0_4 = arith.constant 0 : index
      %c0_5 = arith.constant 0 : index
      %4 = vector.load %arg2[%c0, %c0_3, %3, %c0_4, %c0_5] : memref<1x12x8x8x128xf32, #tpu.memory_space<vmem>>, vector<1x1x1x8x128xf32>
      %5 = vector.shape_cast %4 : vector<1x1x1x8x128xf32> to vector<8x128xf32>
      %c0_6 = arith.constant 0 : index
      %c1 = arith.constant 1 : index
      %6 = arith.index_cast %2 : i32 to index
      %c0_7 = arith.constant 0 : index
      %c0_8 = arith.constant 0 : index
      %7 = vector.load %arg2[%c0_6, %c1, %6, %c0_7, %c0_8] : memref<1x12x8x8x128xf32, #tpu.memory_space<vmem>>, vector<1x1x1x8x128xf32>
      %8 = vector.shape_cast %7 : vector<1x1x1x8x128xf32> to vector<8x128xf32>
      %c0_9 = arith.constant 0 : index
      %c2 = arith.constant 2 : index
      %9 = arith.index_cast %2 : i32 to index
      %c0_10 = arith.constant 0 : index
      %c0_11 = arith.constant 0 : index
      %10 = vector.load %arg2[%c0_9, %c2, %9, %c0_10, %c0_11] : memref<1x12x8x8x128xf32, #tpu.memory_space<vmem>>, vector<1x1x1x8x128xf32>
      %11 = vector.shape_cast %10 : vector<1x1x1x8x128xf32> to vector<8x128xf32>
      %c0_12 = arith.constant 0 : index
      %c3 = arith.constant 3 : index
      %12 = arith.index_cast %2 : i32 to index
      %c0_13 = arith.constant 0 : index
      %c0_14 = arith.constant 0 : index
      %13 = vector.load %arg2[%c0_12, %c3, %12, %c0_13, %c0_14] : memref<1x12x8x8x128xf32, #tpu.memory_space<vmem>>, vector<1x1x1x8x128xf32>
      %14 = vector.shape_cast %13 : vector<1x1x1x8x128xf32> to vector<8x128xf32>
      %c0_15 = arith.constant 0 : index
      %c4 = arith.constant 4 : index
      %15 = arith.index_cast %2 : i32 to index
      %c0_16 = arith.constant 0 : index
      %c0_17 = arith.constant 0 : index
      %16 = vector.load %arg2[%c0_15, %c4, %15, %c0_16, %c0_17] : memref<1x12x8x8x128xf32, #tpu.memory_space<vmem>>, vector<1x1x1x8x128xf32>
      %17 = vector.shape_cast %16 : vector<1x1x1x8x128xf32> to vector<8x128xf32>
      %c0_18 = arith.constant 0 : index
      %c5 = arith.constant 5 : index
      %18 = arith.index_cast %2 : i32 to index
      %c0_19 = arith.constant 0 : index
      %c0_20 = arith.constant 0 : index
      %19 = vector.load %arg2[%c0_18, %c5, %18, %c0_19, %c0_20] : memref<1x12x8x8x128xf32, #tpu.memory_space<vmem>>, vector<1x1x1x8x128xf32>
      %20 = vector.shape_cast %19 : vector<1x1x1x8x128xf32> to vector<8x128xf32>
      %c0_21 = arith.constant 0 : index
      %c6 = arith.constant 6 : index
      %21 = arith.index_cast %2 : i32 to index
      %c0_22 = arith.constant 0 : index
      %c0_23 = arith.constant 0 : index
      %22 = vector.load %arg2[%c0_21, %c6, %21, %c0_22, %c0_23] : memref<1x12x8x8x128xf32, #tpu.memory_space<vmem>>, vector<1x1x1x8x128xf32>
      %23 = vector.shape_cast %22 : vector<1x1x1x8x128xf32> to vector<8x128xf32>
      %c0_24 = arith.constant 0 : index
      %c7 = arith.constant 7 : index
      %24 = arith.index_cast %2 : i32 to index
      %c0_25 = arith.constant 0 : index
      %c0_26 = arith.constant 0 : index
      %25 = vector.load %arg2[%c0_24, %c7, %24, %c0_25, %c0_26] : memref<1x12x8x8x128xf32, #tpu.memory_space<vmem>>, vector<1x1x1x8x128xf32>
      %26 = vector.shape_cast %25 : vector<1x1x1x8x128xf32> to vector<8x128xf32>
      %c0_27 = arith.constant 0 : index
      %c8 = arith.constant 8 : index
      %27 = arith.index_cast %2 : i32 to index
      %c0_28 = arith.constant 0 : index
      %c0_29 = arith.constant 0 : index
      %28 = vector.load %arg2[%c0_27, %c8, %27, %c0_28, %c0_29] : memref<1x12x8x8x128xf32, #tpu.memory_space<vmem>>, vector<1x1x1x8x128xf32>
      %29 = vector.shape_cast %28 : vector<1x1x1x8x128xf32> to vector<8x128xf32>
      %c0_30 = arith.constant 0 : index
      %c9 = arith.constant 9 : index
      %30 = arith.index_cast %2 : i32 to index
      %c0_31 = arith.constant 0 : index
      %c0_32 = arith.constant 0 : index
      %31 = vector.load %arg2[%c0_30, %c9, %30, %c0_31, %c0_32] : memref<1x12x8x8x128xf32, #tpu.memory_space<vmem>>, vector<1x1x1x8x128xf32>
      %32 = vector.shape_cast %31 : vector<1x1x1x8x128xf32> to vector<8x128xf32>
      %c0_33 = arith.constant 0 : index
      %c10 = arith.constant 10 : index
      %33 = arith.index_cast %2 : i32 to index
      %c0_34 = arith.constant 0 : index
      %c0_35 = arith.constant 0 : index
      %34 = vector.load %arg2[%c0_33, %c10, %33, %c0_34, %c0_35] : memref<1x12x8x8x128xf32, #tpu.memory_space<vmem>>, vector<1x1x1x8x128xf32>
      %35 = vector.shape_cast %34 : vector<1x1x1x8x128xf32> to vector<8x128xf32>
      %c0_36 = arith.constant 0 : index
      %c11 = arith.constant 11 : index
      %36 = arith.index_cast %2 : i32 to index
      %c0_37 = arith.constant 0 : index
      %c0_38 = arith.constant 0 : index
      %37 = vector.load %arg2[%c0_36, %c11, %36, %c0_37, %c0_38] : memref<1x12x8x8x128xf32, #tpu.memory_space<vmem>>, vector<1x1x1x8x128xf32>
      %38 = vector.shape_cast %37 : vector<1x1x1x8x128xf32> to vector<8x128xf32>
      %c0_39 = arith.constant 0 : index
      %c0_40 = arith.constant 0 : index
      %39 = memref.load %arg3[%c0_39, %c0_40] : memref<4x4xf32, #tpu.memory_space<smem>>
      %40 = vector.broadcast %39 : f32 to vector<8x128xf32>
      %41 = arith.mulf %40, %5 : vector<8x128xf32>
      %c0_41 = arith.constant 0 : index
      %c1_42 = arith.constant 1 : index
      %42 = memref.load %arg3[%c0_41, %c1_42] : memref<4x4xf32, #tpu.memory_space<smem>>
      %43 = vector.broadcast %42 : f32 to vector<8x128xf32>
      %44 = arith.mulf %43, %14 : vector<8x128xf32>
      %45 = arith.addf %41, %44 : vector<8x128xf32>
      %c0_43 = arith.constant 0 : index
      %c2_44 = arith.constant 2 : index
      %46 = memref.load %arg3[%c0_43, %c2_44] : memref<4x4xf32, #tpu.memory_space<smem>>
      %47 = vector.broadcast %46 : f32 to vector<8x128xf32>
      %48 = arith.mulf %47, %23 : vector<8x128xf32>
      %49 = arith.addf %45, %48 : vector<8x128xf32>
      %c0_45 = arith.constant 0 : index
      %c3_46 = arith.constant 3 : index
      %50 = memref.load %arg3[%c0_45, %c3_46] : memref<4x4xf32, #tpu.memory_space<smem>>
      %51 = vector.broadcast %50 : f32 to vector<8x128xf32>
      %52 = arith.mulf %51, %32 : vector<8x128xf32>
      %53 = arith.addf %49, %52 : vector<8x128xf32>
      %c0_47 = arith.constant 0 : index
      %c0_48 = arith.constant 0 : index
      %54 = memref.load %arg3[%c0_47, %c0_48] : memref<4x4xf32, #tpu.memory_space<smem>>
      %55 = vector.broadcast %54 : f32 to vector<8x128xf32>
      %56 = arith.mulf %55, %8 : vector<8x128xf32>
      %c0_49 = arith.constant 0 : index
      %c1_50 = arith.constant 1 : index
      %57 = memref.load %arg3[%c0_49, %c1_50] : memref<4x4xf32, #tpu.memory_space<smem>>
      %58 = vector.broadcast %57 : f32 to vector<8x128xf32>
      %59 = arith.mulf %58, %17 : vector<8x128xf32>
      %60 = arith.addf %56, %59 : vector<8x128xf32>
      %c0_51 = arith.constant 0 : index
      %c2_52 = arith.constant 2 : index
      %61 = memref.load %arg3[%c0_51, %c2_52] : memref<4x4xf32, #tpu.memory_space<smem>>
      %62 = vector.broadcast %61 : f32 to vector<8x128xf32>
      %63 = arith.mulf %62, %26 : vector<8x128xf32>
      %64 = arith.addf %60, %63 : vector<8x128xf32>
      %c0_53 = arith.constant 0 : index
      %c3_54 = arith.constant 3 : index
      %65 = memref.load %arg3[%c0_53, %c3_54] : memref<4x4xf32, #tpu.memory_space<smem>>
      %66 = vector.broadcast %65 : f32 to vector<8x128xf32>
      %67 = arith.mulf %66, %35 : vector<8x128xf32>
      %68 = arith.addf %64, %67 : vector<8x128xf32>
      %c0_55 = arith.constant 0 : index
      %c0_56 = arith.constant 0 : index
      %69 = memref.load %arg3[%c0_55, %c0_56] : memref<4x4xf32, #tpu.memory_space<smem>>
      %70 = vector.broadcast %69 : f32 to vector<8x128xf32>
      %71 = arith.mulf %70, %11 : vector<8x128xf32>
      %c0_57 = arith.constant 0 : index
      %c1_58 = arith.constant 1 : index
      %72 = memref.load %arg3[%c0_57, %c1_58] : memref<4x4xf32, #tpu.memory_space<smem>>
      %73 = vector.broadcast %72 : f32 to vector<8x128xf32>
      %74 = arith.mulf %73, %20 : vector<8x128xf32>
      %75 = arith.addf %71, %74 : vector<8x128xf32>
      %c0_59 = arith.constant 0 : index
      %c2_60 = arith.constant 2 : index
      %76 = memref.load %arg3[%c0_59, %c2_60] : memref<4x4xf32, #tpu.memory_space<smem>>
      %77 = vector.broadcast %76 : f32 to vector<8x128xf32>
      %78 = arith.mulf %77, %29 : vector<8x128xf32>
      %79 = arith.addf %75, %78 : vector<8x128xf32>
      %c0_61 = arith.constant 0 : index
      %c3_62 = arith.constant 3 : index
      %80 = memref.load %arg3[%c0_61, %c3_62] : memref<4x4xf32, #tpu.memory_space<smem>>
      %81 = vector.broadcast %80 : f32 to vector<8x128xf32>
      %82 = arith.mulf %81, %38 : vector<8x128xf32>
      %83 = arith.addf %79, %82 : vector<8x128xf32>
      %c1_63 = arith.constant 1 : index
      %c0_64 = arith.constant 0 : index
      %84 = memref.load %arg3[%c1_63, %c0_64] : memref<4x4xf32, #tpu.memory_space<smem>>
      %85 = vector.broadcast %84 : f32 to vector<8x128xf32>
      %86 = arith.mulf %85, %5 : vector<8x128xf32>
      %c1_65 = arith.constant 1 : index
      %c1_66 = arith.constant 1 : index
      %87 = memref.load %arg3[%c1_65, %c1_66] : memref<4x4xf32, #tpu.memory_space<smem>>
      %88 = vector.broadcast %87 : f32 to vector<8x128xf32>
      %89 = arith.mulf %88, %14 : vector<8x128xf32>
      %90 = arith.addf %86, %89 : vector<8x128xf32>
      %c1_67 = arith.constant 1 : index
      %c2_68 = arith.constant 2 : index
      %91 = memref.load %arg3[%c1_67, %c2_68] : memref<4x4xf32, #tpu.memory_space<smem>>
      %92 = vector.broadcast %91 : f32 to vector<8x128xf32>
      %93 = arith.mulf %92, %23 : vector<8x128xf32>
      %94 = arith.addf %90, %93 : vector<8x128xf32>
      %c1_69 = arith.constant 1 : index
      %c3_70 = arith.constant 3 : index
      %95 = memref.load %arg3[%c1_69, %c3_70] : memref<4x4xf32, #tpu.memory_space<smem>>
      %96 = vector.broadcast %95 : f32 to vector<8x128xf32>
      %97 = arith.mulf %96, %32 : vector<8x128xf32>
      %98 = arith.addf %94, %97 : vector<8x128xf32>
      %c1_71 = arith.constant 1 : index
      %c0_72 = arith.constant 0 : index
      %99 = memref.load %arg3[%c1_71, %c0_72] : memref<4x4xf32, #tpu.memory_space<smem>>
      %100 = vector.broadcast %99 : f32 to vector<8x128xf32>
      %101 = arith.mulf %100, %8 : vector<8x128xf32>
      %c1_73 = arith.constant 1 : index
      %c1_74 = arith.constant 1 : index
      %102 = memref.load %arg3[%c1_73, %c1_74] : memref<4x4xf32, #tpu.memory_space<smem>>
      %103 = vector.broadcast %102 : f32 to vector<8x128xf32>
      %104 = arith.mulf %103, %17 : vector<8x128xf32>
      %105 = arith.addf %101, %104 : vector<8x128xf32>
      %c1_75 = arith.constant 1 : index
      %c2_76 = arith.constant 2 : index
      %106 = memref.load %arg3[%c1_75, %c2_76] : memref<4x4xf32, #tpu.memory_space<smem>>
      %107 = vector.broadcast %106 : f32 to vector<8x128xf32>
      %108 = arith.mulf %107, %26 : vector<8x128xf32>
      %109 = arith.addf %105, %108 : vector<8x128xf32>
      %c1_77 = arith.constant 1 : index
      %c3_78 = arith.constant 3 : index
      %110 = memref.load %arg3[%c1_77, %c3_78] : memref<4x4xf32, #tpu.memory_space<smem>>
      %111 = vector.broadcast %110 : f32 to vector<8x128xf32>
      %112 = arith.mulf %111, %35 : vector<8x128xf32>
      %113 = arith.addf %109, %112 : vector<8x128xf32>
      %c1_79 = arith.constant 1 : index
      %c0_80 = arith.constant 0 : index
      %114 = memref.load %arg3[%c1_79, %c0_80] : memref<4x4xf32, #tpu.memory_space<smem>>
      %115 = vector.broadcast %114 : f32 to vector<8x128xf32>
      %116 = arith.mulf %115, %11 : vector<8x128xf32>
      %c1_81 = arith.constant 1 : index
      %c1_82 = arith.constant 1 : index
      %117 = memref.load %arg3[%c1_81, %c1_82] : memref<4x4xf32, #tpu.memory_space<smem>>
      %118 = vector.broadcast %117 : f32 to vector<8x128xf32>
      %119 = arith.mulf %118, %20 : vector<8x128xf32>
      %120 = arith.addf %116, %119 : vector<8x128xf32>
      %c1_83 = arith.constant 1 : index
      %c2_84 = arith.constant 2 : index
      %121 = memref.load %arg3[%c1_83, %c2_84] : memref<4x4xf32, #tpu.memory_space<smem>>
      %122 = vector.broadcast %121 : f32 to vector<8x128xf32>
      %123 = arith.mulf %122, %29 : vector<8x128xf32>
      %124 = arith.addf %120, %123 : vector<8x128xf32>
      %c1_85 = arith.constant 1 : index
      %c3_86 = arith.constant 3 : index
      %125 = memref.load %arg3[%c1_85, %c3_86] : memref<4x4xf32, #tpu.memory_space<smem>>
      %126 = vector.broadcast %125 : f32 to vector<8x128xf32>
      %127 = arith.mulf %126, %38 : vector<8x128xf32>
      %128 = arith.addf %124, %127 : vector<8x128xf32>
      %c2_87 = arith.constant 2 : index
      %c0_88 = arith.constant 0 : index
      %129 = memref.load %arg3[%c2_87, %c0_88] : memref<4x4xf32, #tpu.memory_space<smem>>
      %130 = vector.broadcast %129 : f32 to vector<8x128xf32>
      %131 = arith.mulf %130, %5 : vector<8x128xf32>
      %c2_89 = arith.constant 2 : index
      %c1_90 = arith.constant 1 : index
      %132 = memref.load %arg3[%c2_89, %c1_90] : memref<4x4xf32, #tpu.memory_space<smem>>
      %133 = vector.broadcast %132 : f32 to vector<8x128xf32>
      %134 = arith.mulf %133, %14 : vector<8x128xf32>
      %135 = arith.addf %131, %134 : vector<8x128xf32>
      %c2_91 = arith.constant 2 : index
      %c2_92 = arith.constant 2 : index
      %136 = memref.load %arg3[%c2_91, %c2_92] : memref<4x4xf32, #tpu.memory_space<smem>>
      %137 = vector.broadcast %136 : f32 to vector<8x128xf32>
      %138 = arith.mulf %137, %23 : vector<8x128xf32>
      %139 = arith.addf %135, %138 : vector<8x128xf32>
      %c2_93 = arith.constant 2 : index
      %c3_94 = arith.constant 3 : index
      %140 = memref.load %arg3[%c2_93, %c3_94] : memref<4x4xf32, #tpu.memory_space<smem>>
      %141 = vector.broadcast %140 : f32 to vector<8x128xf32>
      %142 = arith.mulf %141, %32 : vector<8x128xf32>
      %143 = arith.addf %139, %142 : vector<8x128xf32>
      %c2_95 = arith.constant 2 : index
      %c0_96 = arith.constant 0 : index
      %144 = memref.load %arg3[%c2_95, %c0_96] : memref<4x4xf32, #tpu.memory_space<smem>>
      %145 = vector.broadcast %144 : f32 to vector<8x128xf32>
      %146 = arith.mulf %145, %8 : vector<8x128xf32>
      %c2_97 = arith.constant 2 : index
      %c1_98 = arith.constant 1 : index
      %147 = memref.load %arg3[%c2_97, %c1_98] : memref<4x4xf32, #tpu.memory_space<smem>>
      %148 = vector.broadcast %147 : f32 to vector<8x128xf32>
      %149 = arith.mulf %148, %17 : vector<8x128xf32>
      %150 = arith.addf %146, %149 : vector<8x128xf32>
      %c2_99 = arith.constant 2 : index
      %c2_100 = arith.constant 2 : index
      %151 = memref.load %arg3[%c2_99, %c2_100] : memref<4x4xf32, #tpu.memory_space<smem>>
      %152 = vector.broadcast %151 : f32 to vector<8x128xf32>
      %153 = arith.mulf %152, %26 : vector<8x128xf32>
      %154 = arith.addf %150, %153 : vector<8x128xf32>
      %c2_101 = arith.constant 2 : index
      %c3_102 = arith.constant 3 : index
      %155 = memref.load %arg3[%c2_101, %c3_102] : memref<4x4xf32, #tpu.memory_space<smem>>
      %156 = vector.broadcast %155 : f32 to vector<8x128xf32>
      %157 = arith.mulf %156, %35 : vector<8x128xf32>
      %158 = arith.addf %154, %157 : vector<8x128xf32>
      %c2_103 = arith.constant 2 : index
      %c0_104 = arith.constant 0 : index
      %159 = memref.load %arg3[%c2_103, %c0_104] : memref<4x4xf32, #tpu.memory_space<smem>>
      %160 = vector.broadcast %159 : f32 to vector<8x128xf32>
      %161 = arith.mulf %160, %11 : vector<8x128xf32>
      %c2_105 = arith.constant 2 : index
      %c1_106 = arith.constant 1 : index
      %162 = memref.load %arg3[%c2_105, %c1_106] : memref<4x4xf32, #tpu.memory_space<smem>>
      %163 = vector.broadcast %162 : f32 to vector<8x128xf32>
      %164 = arith.mulf %163, %20 : vector<8x128xf32>
      %165 = arith.addf %161, %164 : vector<8x128xf32>
      %c2_107 = arith.constant 2 : index
      %c2_108 = arith.constant 2 : index
      %166 = memref.load %arg3[%c2_107, %c2_108] : memref<4x4xf32, #tpu.memory_space<smem>>
      %167 = vector.broadcast %166 : f32 to vector<8x128xf32>
      %168 = arith.mulf %167, %29 : vector<8x128xf32>
      %169 = arith.addf %165, %168 : vector<8x128xf32>
      %c2_109 = arith.constant 2 : index
      %c3_110 = arith.constant 3 : index
      %170 = memref.load %arg3[%c2_109, %c3_110] : memref<4x4xf32, #tpu.memory_space<smem>>
      %171 = vector.broadcast %170 : f32 to vector<8x128xf32>
      %172 = arith.mulf %171, %38 : vector<8x128xf32>
      %173 = arith.addf %169, %172 : vector<8x128xf32>
      %c3_111 = arith.constant 3 : index
      %c0_112 = arith.constant 0 : index
      %174 = memref.load %arg3[%c3_111, %c0_112] : memref<4x4xf32, #tpu.memory_space<smem>>
      %175 = vector.broadcast %174 : f32 to vector<8x128xf32>
      %176 = arith.mulf %175, %5 : vector<8x128xf32>
      %c3_113 = arith.constant 3 : index
      %c1_114 = arith.constant 1 : index
      %177 = memref.load %arg3[%c3_113, %c1_114] : memref<4x4xf32, #tpu.memory_space<smem>>
      %178 = vector.broadcast %177 : f32 to vector<8x128xf32>
      %179 = arith.mulf %178, %14 : vector<8x128xf32>
      %180 = arith.addf %176, %179 : vector<8x128xf32>
      %c3_115 = arith.constant 3 : index
      %c2_116 = arith.constant 2 : index
      %181 = memref.load %arg3[%c3_115, %c2_116] : memref<4x4xf32, #tpu.memory_space<smem>>
      %182 = vector.broadcast %181 : f32 to vector<8x128xf32>
      %183 = arith.mulf %182, %23 : vector<8x128xf32>
      %184 = arith.addf %180, %183 : vector<8x128xf32>
      %c3_117 = arith.constant 3 : index
      %c3_118 = arith.constant 3 : index
      %185 = memref.load %arg3[%c3_117, %c3_118] : memref<4x4xf32, #tpu.memory_space<smem>>
      %186 = vector.broadcast %185 : f32 to vector<8x128xf32>
      %187 = arith.mulf %186, %32 : vector<8x128xf32>
      %188 = arith.addf %184, %187 : vector<8x128xf32>
      %c3_119 = arith.constant 3 : index
      %c0_120 = arith.constant 0 : index
      %189 = memref.load %arg3[%c3_119, %c0_120] : memref<4x4xf32, #tpu.memory_space<smem>>
      %190 = vector.broadcast %189 : f32 to vector<8x128xf32>
      %191 = arith.mulf %190, %8 : vector<8x128xf32>
      %c3_121 = arith.constant 3 : index
      %c1_122 = arith.constant 1 : index
      %192 = memref.load %arg3[%c3_121, %c1_122] : memref<4x4xf32, #tpu.memory_space<smem>>
      %193 = vector.broadcast %192 : f32 to vector<8x128xf32>
      %194 = arith.mulf %193, %17 : vector<8x128xf32>
      %195 = arith.addf %191, %194 : vector<8x128xf32>
      %c3_123 = arith.constant 3 : index
      %c2_124 = arith.constant 2 : index
      %196 = memref.load %arg3[%c3_123, %c2_124] : memref<4x4xf32, #tpu.memory_space<smem>>
      %197 = vector.broadcast %196 : f32 to vector<8x128xf32>
      %198 = arith.mulf %197, %26 : vector<8x128xf32>
      %199 = arith.addf %195, %198 : vector<8x128xf32>
      %c3_125 = arith.constant 3 : index
      %c3_126 = arith.constant 3 : index
      %200 = memref.load %arg3[%c3_125, %c3_126] : memref<4x4xf32, #tpu.memory_space<smem>>
      %201 = vector.broadcast %200 : f32 to vector<8x128xf32>
      %202 = arith.mulf %201, %35 : vector<8x128xf32>
      %203 = arith.addf %199, %202 : vector<8x128xf32>
      %c3_127 = arith.constant 3 : index
      %c0_128 = arith.constant 0 : index
      %204 = memref.load %arg3[%c3_127, %c0_128] : memref<4x4xf32, #tpu.memory_space<smem>>
      %205 = vector.broadcast %204 : f32 to vector<8x128xf32>
      %206 = arith.mulf %205, %11 : vector<8x128xf32>
      %c3_129 = arith.constant 3 : index
      %c1_130 = arith.constant 1 : index
      %207 = memref.load %arg3[%c3_129, %c1_130] : memref<4x4xf32, #tpu.memory_space<smem>>
      %208 = vector.broadcast %207 : f32 to vector<8x128xf32>
      %209 = arith.mulf %208, %20 : vector<8x128xf32>
      %210 = arith.addf %206, %209 : vector<8x128xf32>
      %c3_131 = arith.constant 3 : index
      %c2_132 = arith.constant 2 : index
      %211 = memref.load %arg3[%c3_131, %c2_132] : memref<4x4xf32, #tpu.memory_space<smem>>
      %212 = vector.broadcast %211 : f32 to vector<8x128xf32>
      %213 = arith.mulf %212, %29 : vector<8x128xf32>
      %214 = arith.addf %210, %213 : vector<8x128xf32>
      %c3_133 = arith.constant 3 : index
      %c3_134 = arith.constant 3 : index
      %215 = memref.load %arg3[%c3_133, %c3_134] : memref<4x4xf32, #tpu.memory_space<smem>>
      %216 = vector.broadcast %215 : f32 to vector<8x128xf32>
      %217 = arith.mulf %216, %38 : vector<8x128xf32>
      %218 = arith.addf %214, %217 : vector<8x128xf32>
      %219 = arith.mulf %53, %53 : vector<8x128xf32>
      %220 = arith.mulf %68, %68 : vector<8x128xf32>
      %221 = arith.addf %219, %220 : vector<8x128xf32>
      %222 = arith.mulf %83, %83 : vector<8x128xf32>
      %223 = arith.addf %221, %222 : vector<8x128xf32>
      %224 = math.sqrt %223 : vector<8x128xf32>
      %cst = arith.constant 9.99999997E-7 : f32
      %225 = vector.broadcast %cst : f32 to vector<8x128xf32>
      %226 = arith.addf %224, %225 : vector<8x128xf32>
      %227 = tpu.reciprocal %226 : vector<8x128xf32> -> vector<8x128xf32>
      %c0_135 = arith.constant 0 : index
      %228 = memref.load %arg6[%c0_135] : memref<4xf32, #tpu.memory_space<smem>>
      %c0_136 = arith.constant 0 : index
      %229 = memref.load %arg7[%c0_136] : memref<4xf32, #tpu.memory_space<smem>>
      %230 = vector.broadcast %229 : f32 to vector<8x128xf32>
      %231 = arith.mulf %230, %227 : vector<8x128xf32>
      %232 = vector.broadcast %228 : f32 to vector<8x128xf32>
      %233 = arith.addf %232, %231 : vector<8x128xf32>
      %234 = arith.mulf %53, %233 : vector<8x128xf32>
      %235 = arith.mulf %68, %233 : vector<8x128xf32>
      %236 = arith.mulf %83, %233 : vector<8x128xf32>
      %237 = arith.mulf %98, %98 : vector<8x128xf32>
      %238 = arith.mulf %113, %113 : vector<8x128xf32>
      %239 = arith.addf %237, %238 : vector<8x128xf32>
      %240 = arith.mulf %128, %128 : vector<8x128xf32>
      %241 = arith.addf %239, %240 : vector<8x128xf32>
      %242 = math.sqrt %241 : vector<8x128xf32>
      %cst_137 = arith.constant 9.99999997E-7 : f32
      %243 = vector.broadcast %cst_137 : f32 to vector<8x128xf32>
      %244 = arith.addf %242, %243 : vector<8x128xf32>
      %245 = tpu.reciprocal %244 : vector<8x128xf32> -> vector<8x128xf32>
      %c1_138 = arith.constant 1 : index
      %246 = memref.load %arg6[%c1_138] : memref<4xf32, #tpu.memory_space<smem>>
      %c1_139 = arith.constant 1 : index
      %247 = memref.load %arg7[%c1_139] : memref<4xf32, #tpu.memory_space<smem>>
      %248 = vector.broadcast %247 : f32 to vector<8x128xf32>
      %249 = arith.mulf %248, %245 : vector<8x128xf32>
      %250 = vector.broadcast %246 : f32 to vector<8x128xf32>
      %251 = arith.addf %250, %249 : vector<8x128xf32>
      %252 = arith.mulf %98, %251 : vector<8x128xf32>
      %253 = arith.mulf %113, %251 : vector<8x128xf32>
      %254 = arith.mulf %128, %251 : vector<8x128xf32>
      %255 = arith.mulf %143, %143 : vector<8x128xf32>
      %256 = arith.mulf %158, %158 : vector<8x128xf32>
      %257 = arith.addf %255, %256 : vector<8x128xf32>
      %258 = arith.mulf %173, %173 : vector<8x128xf32>
      %259 = arith.addf %257, %258 : vector<8x128xf32>
      %260 = math.sqrt %259 : vector<8x128xf32>
      %cst_140 = arith.constant 9.99999997E-7 : f32
      %261 = vector.broadcast %cst_140 : f32 to vector<8x128xf32>
      %262 = arith.addf %260, %261 : vector<8x128xf32>
      %263 = tpu.reciprocal %262 : vector<8x128xf32> -> vector<8x128xf32>
      %c2_141 = arith.constant 2 : index
      %264 = memref.load %arg6[%c2_141] : memref<4xf32, #tpu.memory_space<smem>>
      %c2_142 = arith.constant 2 : index
      %265 = memref.load %arg7[%c2_142] : memref<4xf32, #tpu.memory_space<smem>>
      %266 = vector.broadcast %265 : f32 to vector<8x128xf32>
      %267 = arith.mulf %266, %263 : vector<8x128xf32>
      %268 = vector.broadcast %264 : f32 to vector<8x128xf32>
      %269 = arith.addf %268, %267 : vector<8x128xf32>
      %270 = arith.mulf %143, %269 : vector<8x128xf32>
      %271 = arith.mulf %158, %269 : vector<8x128xf32>
      %272 = arith.mulf %173, %269 : vector<8x128xf32>
      %273 = arith.mulf %188, %188 : vector<8x128xf32>
      %274 = arith.mulf %203, %203 : vector<8x128xf32>
      %275 = arith.addf %273, %274 : vector<8x128xf32>
      %276 = arith.mulf %218, %218 : vector<8x128xf32>
      %277 = arith.addf %275, %276 : vector<8x128xf32>
      %278 = math.sqrt %277 : vector<8x128xf32>
      %cst_143 = arith.constant 9.99999997E-7 : f32
      %279 = vector.broadcast %cst_143 : f32 to vector<8x128xf32>
      %280 = arith.addf %278, %279 : vector<8x128xf32>
      %281 = tpu.reciprocal %280 : vector<8x128xf32> -> vector<8x128xf32>
      %c3_144 = arith.constant 3 : index
      %282 = memref.load %arg6[%c3_144] : memref<4xf32, #tpu.memory_space<smem>>
      %c3_145 = arith.constant 3 : index
      %283 = memref.load %arg7[%c3_145] : memref<4xf32, #tpu.memory_space<smem>>
      %284 = vector.broadcast %283 : f32 to vector<8x128xf32>
      %285 = arith.mulf %284, %281 : vector<8x128xf32>
      %286 = vector.broadcast %282 : f32 to vector<8x128xf32>
      %287 = arith.addf %286, %285 : vector<8x128xf32>
      %288 = arith.mulf %188, %287 : vector<8x128xf32>
      %289 = arith.mulf %203, %287 : vector<8x128xf32>
      %290 = arith.mulf %218, %287 : vector<8x128xf32>
      %c0_146 = arith.constant 0 : index
      %c0_147 = arith.constant 0 : index
      %291 = memref.load %arg4[%c0_146, %c0_147] : memref<4x4xf32, #tpu.memory_space<smem>>
      %292 = vector.broadcast %291 : f32 to vector<8x128xf32>
      %293 = arith.mulf %292, %234 : vector<8x128xf32>
      %c0_148 = arith.constant 0 : index
      %c1_149 = arith.constant 1 : index
      %294 = memref.load %arg4[%c0_148, %c1_149] : memref<4x4xf32, #tpu.memory_space<smem>>
      %295 = vector.broadcast %294 : f32 to vector<8x128xf32>
      %296 = arith.mulf %295, %252 : vector<8x128xf32>
      %297 = arith.addf %293, %296 : vector<8x128xf32>
      %c0_150 = arith.constant 0 : index
      %c2_151 = arith.constant 2 : index
      %298 = memref.load %arg4[%c0_150, %c2_151] : memref<4x4xf32, #tpu.memory_space<smem>>
      %299 = vector.broadcast %298 : f32 to vector<8x128xf32>
      %300 = arith.mulf %299, %270 : vector<8x128xf32>
      %301 = arith.addf %297, %300 : vector<8x128xf32>
      %c0_152 = arith.constant 0 : index
      %c3_153 = arith.constant 3 : index
      %302 = memref.load %arg4[%c0_152, %c3_153] : memref<4x4xf32, #tpu.memory_space<smem>>
      %303 = vector.broadcast %302 : f32 to vector<8x128xf32>
      %304 = arith.mulf %303, %288 : vector<8x128xf32>
      %305 = arith.addf %301, %304 : vector<8x128xf32>
      %c0_154 = arith.constant 0 : index
      %c0_155 = arith.constant 0 : index
      %306 = memref.load %arg4[%c0_154, %c0_155] : memref<4x4xf32, #tpu.memory_space<smem>>
      %307 = vector.broadcast %306 : f32 to vector<8x128xf32>
      %308 = arith.mulf %307, %235 : vector<8x128xf32>
      %c0_156 = arith.constant 0 : index
      %c1_157 = arith.constant 1 : index
      %309 = memref.load %arg4[%c0_156, %c1_157] : memref<4x4xf32, #tpu.memory_space<smem>>
      %310 = vector.broadcast %309 : f32 to vector<8x128xf32>
      %311 = arith.mulf %310, %253 : vector<8x128xf32>
      %312 = arith.addf %308, %311 : vector<8x128xf32>
      %c0_158 = arith.constant 0 : index
      %c2_159 = arith.constant 2 : index
      %313 = memref.load %arg4[%c0_158, %c2_159] : memref<4x4xf32, #tpu.memory_space<smem>>
      %314 = vector.broadcast %313 : f32 to vector<8x128xf32>
      %315 = arith.mulf %314, %271 : vector<8x128xf32>
      %316 = arith.addf %312, %315 : vector<8x128xf32>
      %c0_160 = arith.constant 0 : index
      %c3_161 = arith.constant 3 : index
      %317 = memref.load %arg4[%c0_160, %c3_161] : memref<4x4xf32, #tpu.memory_space<smem>>
      %318 = vector.broadcast %317 : f32 to vector<8x128xf32>
      %319 = arith.mulf %318, %289 : vector<8x128xf32>
      %320 = arith.addf %316, %319 : vector<8x128xf32>
      %c0_162 = arith.constant 0 : index
      %c0_163 = arith.constant 0 : index
      %321 = memref.load %arg4[%c0_162, %c0_163] : memref<4x4xf32, #tpu.memory_space<smem>>
      %322 = vector.broadcast %321 : f32 to vector<8x128xf32>
      %323 = arith.mulf %322, %236 : vector<8x128xf32>
      %c0_164 = arith.constant 0 : index
      %c1_165 = arith.constant 1 : index
      %324 = memref.load %arg4[%c0_164, %c1_165] : memref<4x4xf32, #tpu.memory_space<smem>>
      %325 = vector.broadcast %324 : f32 to vector<8x128xf32>
      %326 = arith.mulf %325, %254 : vector<8x128xf32>
      %327 = arith.addf %323, %326 : vector<8x128xf32>
      %c0_166 = arith.constant 0 : index
      %c2_167 = arith.constant 2 : index
      %328 = memref.load %arg4[%c0_166, %c2_167] : memref<4x4xf32, #tpu.memory_space<smem>>
      %329 = vector.broadcast %328 : f32 to vector<8x128xf32>
      %330 = arith.mulf %329, %272 : vector<8x128xf32>
      %331 = arith.addf %327, %330 : vector<8x128xf32>
      %c0_168 = arith.constant 0 : index
      %c3_169 = arith.constant 3 : index
      %332 = memref.load %arg4[%c0_168, %c3_169] : memref<4x4xf32, #tpu.memory_space<smem>>
      %333 = vector.broadcast %332 : f32 to vector<8x128xf32>
      %334 = arith.mulf %333, %290 : vector<8x128xf32>
      %335 = arith.addf %331, %334 : vector<8x128xf32>
      %c1_170 = arith.constant 1 : index
      %c0_171 = arith.constant 0 : index
      %336 = memref.load %arg4[%c1_170, %c0_171] : memref<4x4xf32, #tpu.memory_space<smem>>
      %337 = vector.broadcast %336 : f32 to vector<8x128xf32>
      %338 = arith.mulf %337, %234 : vector<8x128xf32>
      %c1_172 = arith.constant 1 : index
      %c1_173 = arith.constant 1 : index
      %339 = memref.load %arg4[%c1_172, %c1_173] : memref<4x4xf32, #tpu.memory_space<smem>>
      %340 = vector.broadcast %339 : f32 to vector<8x128xf32>
      %341 = arith.mulf %340, %252 : vector<8x128xf32>
      %342 = arith.addf %338, %341 : vector<8x128xf32>
      %c1_174 = arith.constant 1 : index
      %c2_175 = arith.constant 2 : index
      %343 = memref.load %arg4[%c1_174, %c2_175] : memref<4x4xf32, #tpu.memory_space<smem>>
      %344 = vector.broadcast %343 : f32 to vector<8x128xf32>
      %345 = arith.mulf %344, %270 : vector<8x128xf32>
      %346 = arith.addf %342, %345 : vector<8x128xf32>
      %c1_176 = arith.constant 1 : index
      %c3_177 = arith.constant 3 : index
      %347 = memref.load %arg4[%c1_176, %c3_177] : memref<4x4xf32, #tpu.memory_space<smem>>
      %348 = vector.broadcast %347 : f32 to vector<8x128xf32>
      %349 = arith.mulf %348, %288 : vector<8x128xf32>
      %350 = arith.addf %346, %349 : vector<8x128xf32>
      %c1_178 = arith.constant 1 : index
      %c0_179 = arith.constant 0 : index
      %351 = memref.load %arg4[%c1_178, %c0_179] : memref<4x4xf32, #tpu.memory_space<smem>>
      %352 = vector.broadcast %351 : f32 to vector<8x128xf32>
      %353 = arith.mulf %352, %235 : vector<8x128xf32>
      %c1_180 = arith.constant 1 : index
      %c1_181 = arith.constant 1 : index
      %354 = memref.load %arg4[%c1_180, %c1_181] : memref<4x4xf32, #tpu.memory_space<smem>>
      %355 = vector.broadcast %354 : f32 to vector<8x128xf32>
      %356 = arith.mulf %355, %253 : vector<8x128xf32>
      %357 = arith.addf %353, %356 : vector<8x128xf32>
      %c1_182 = arith.constant 1 : index
      %c2_183 = arith.constant 2 : index
      %358 = memref.load %arg4[%c1_182, %c2_183] : memref<4x4xf32, #tpu.memory_space<smem>>
      %359 = vector.broadcast %358 : f32 to vector<8x128xf32>
      %360 = arith.mulf %359, %271 : vector<8x128xf32>
      %361 = arith.addf %357, %360 : vector<8x128xf32>
      %c1_184 = arith.constant 1 : index
      %c3_185 = arith.constant 3 : index
      %362 = memref.load %arg4[%c1_184, %c3_185] : memref<4x4xf32, #tpu.memory_space<smem>>
      %363 = vector.broadcast %362 : f32 to vector<8x128xf32>
      %364 = arith.mulf %363, %289 : vector<8x128xf32>
      %365 = arith.addf %361, %364 : vector<8x128xf32>
      %c1_186 = arith.constant 1 : index
      %c0_187 = arith.constant 0 : index
      %366 = memref.load %arg4[%c1_186, %c0_187] : memref<4x4xf32, #tpu.memory_space<smem>>
      %367 = vector.broadcast %366 : f32 to vector<8x128xf32>
      %368 = arith.mulf %367, %236 : vector<8x128xf32>
      %c1_188 = arith.constant 1 : index
      %c1_189 = arith.constant 1 : index
      %369 = memref.load %arg4[%c1_188, %c1_189] : memref<4x4xf32, #tpu.memory_space<smem>>
      %370 = vector.broadcast %369 : f32 to vector<8x128xf32>
      %371 = arith.mulf %370, %254 : vector<8x128xf32>
      %372 = arith.addf %368, %371 : vector<8x128xf32>
      %c1_190 = arith.constant 1 : index
      %c2_191 = arith.constant 2 : index
      %373 = memref.load %arg4[%c1_190, %c2_191] : memref<4x4xf32, #tpu.memory_space<smem>>
      %374 = vector.broadcast %373 : f32 to vector<8x128xf32>
      %375 = arith.mulf %374, %272 : vector<8x128xf32>
      %376 = arith.addf %372, %375 : vector<8x128xf32>
      %c1_192 = arith.constant 1 : index
      %c3_193 = arith.constant 3 : index
      %377 = memref.load %arg4[%c1_192, %c3_193] : memref<4x4xf32, #tpu.memory_space<smem>>
      %378 = vector.broadcast %377 : f32 to vector<8x128xf32>
      %379 = arith.mulf %378, %290 : vector<8x128xf32>
      %380 = arith.addf %376, %379 : vector<8x128xf32>
      %c2_194 = arith.constant 2 : index
      %c0_195 = arith.constant 0 : index
      %381 = memref.load %arg4[%c2_194, %c0_195] : memref<4x4xf32, #tpu.memory_space<smem>>
      %382 = vector.broadcast %381 : f32 to vector<8x128xf32>
      %383 = arith.mulf %382, %234 : vector<8x128xf32>
      %c2_196 = arith.constant 2 : index
      %c1_197 = arith.constant 1 : index
      %384 = memref.load %arg4[%c2_196, %c1_197] : memref<4x4xf32, #tpu.memory_space<smem>>
      %385 = vector.broadcast %384 : f32 to vector<8x128xf32>
      %386 = arith.mulf %385, %252 : vector<8x128xf32>
      %387 = arith.addf %383, %386 : vector<8x128xf32>
      %c2_198 = arith.constant 2 : index
      %c2_199 = arith.constant 2 : index
      %388 = memref.load %arg4[%c2_198, %c2_199] : memref<4x4xf32, #tpu.memory_space<smem>>
      %389 = vector.broadcast %388 : f32 to vector<8x128xf32>
      %390 = arith.mulf %389, %270 : vector<8x128xf32>
      %391 = arith.addf %387, %390 : vector<8x128xf32>
      %c2_200 = arith.constant 2 : index
      %c3_201 = arith.constant 3 : index
      %392 = memref.load %arg4[%c2_200, %c3_201] : memref<4x4xf32, #tpu.memory_space<smem>>
      %393 = vector.broadcast %392 : f32 to vector<8x128xf32>
      %394 = arith.mulf %393, %288 : vector<8x128xf32>
      %395 = arith.addf %391, %394 : vector<8x128xf32>
      %c2_202 = arith.constant 2 : index
      %c0_203 = arith.constant 0 : index
      %396 = memref.load %arg4[%c2_202, %c0_203] : memref<4x4xf32, #tpu.memory_space<smem>>
      %397 = vector.broadcast %396 : f32 to vector<8x128xf32>
      %398 = arith.mulf %397, %235 : vector<8x128xf32>
      %c2_204 = arith.constant 2 : index
      %c1_205 = arith.constant 1 : index
      %399 = memref.load %arg4[%c2_204, %c1_205] : memref<4x4xf32, #tpu.memory_space<smem>>
      %400 = vector.broadcast %399 : f32 to vector<8x128xf32>
      %401 = arith.mulf %400, %253 : vector<8x128xf32>
      %402 = arith.addf %398, %401 : vector<8x128xf32>
      %c2_206 = arith.constant 2 : index
      %c2_207 = arith.constant 2 : index
      %403 = memref.load %arg4[%c2_206, %c2_207] : memref<4x4xf32, #tpu.memory_space<smem>>
      %404 = vector.broadcast %403 : f32 to vector<8x128xf32>
      %405 = arith.mulf %404, %271 : vector<8x128xf32>
      %406 = arith.addf %402, %405 : vector<8x128xf32>
      %c2_208 = arith.constant 2 : index
      %c3_209 = arith.constant 3 : index
      %407 = memref.load %arg4[%c2_208, %c3_209] : memref<4x4xf32, #tpu.memory_space<smem>>
      %408 = vector.broadcast %407 : f32 to vector<8x128xf32>
      %409 = arith.mulf %408, %289 : vector<8x128xf32>
      %410 = arith.addf %406, %409 : vector<8x128xf32>
      %c2_210 = arith.constant 2 : index
      %c0_211 = arith.constant 0 : index
      %411 = memref.load %arg4[%c2_210, %c0_211] : memref<4x4xf32, #tpu.memory_space<smem>>
      %412 = vector.broadcast %411 : f32 to vector<8x128xf32>
      %413 = arith.mulf %412, %236 : vector<8x128xf32>
      %c2_212 = arith.constant 2 : index
      %c1_213 = arith.constant 1 : index
      %414 = memref.load %arg4[%c2_212, %c1_213] : memref<4x4xf32, #tpu.memory_space<smem>>
      %415 = vector.broadcast %414 : f32 to vector<8x128xf32>
      %416 = arith.mulf %415, %254 : vector<8x128xf32>
      %417 = arith.addf %413, %416 : vector<8x128xf32>
      %c2_214 = arith.constant 2 : index
      %c2_215 = arith.constant 2 : index
      %418 = memref.load %arg4[%c2_214, %c2_215] : memref<4x4xf32, #tpu.memory_space<smem>>
      %419 = vector.broadcast %418 : f32 to vector<8x128xf32>
      %420 = arith.mulf %419, %272 : vector<8x128xf32>
      %421 = arith.addf %417, %420 : vector<8x128xf32>
      %c2_216 = arith.constant 2 : index
      %c3_217 = arith.constant 3 : index
      %422 = memref.load %arg4[%c2_216, %c3_217] : memref<4x4xf32, #tpu.memory_space<smem>>
      %423 = vector.broadcast %422 : f32 to vector<8x128xf32>
      %424 = arith.mulf %423, %290 : vector<8x128xf32>
      %425 = arith.addf %421, %424 : vector<8x128xf32>
      %c3_218 = arith.constant 3 : index
      %c0_219 = arith.constant 0 : index
      %426 = memref.load %arg4[%c3_218, %c0_219] : memref<4x4xf32, #tpu.memory_space<smem>>
      %427 = vector.broadcast %426 : f32 to vector<8x128xf32>
      %428 = arith.mulf %427, %234 : vector<8x128xf32>
      %c3_220 = arith.constant 3 : index
      %c1_221 = arith.constant 1 : index
      %429 = memref.load %arg4[%c3_220, %c1_221] : memref<4x4xf32, #tpu.memory_space<smem>>
      %430 = vector.broadcast %429 : f32 to vector<8x128xf32>
      %431 = arith.mulf %430, %252 : vector<8x128xf32>
      %432 = arith.addf %428, %431 : vector<8x128xf32>
      %c3_222 = arith.constant 3 : index
      %c2_223 = arith.constant 2 : index
      %433 = memref.load %arg4[%c3_222, %c2_223] : memref<4x4xf32, #tpu.memory_space<smem>>
      %434 = vector.broadcast %433 : f32 to vector<8x128xf32>
      %435 = arith.mulf %434, %270 : vector<8x128xf32>
      %436 = arith.addf %432, %435 : vector<8x128xf32>
      %c3_224 = arith.constant 3 : index
      %c3_225 = arith.constant 3 : index
      %437 = memref.load %arg4[%c3_224, %c3_225] : memref<4x4xf32, #tpu.memory_space<smem>>
      %438 = vector.broadcast %437 : f32 to vector<8x128xf32>
      %439 = arith.mulf %438, %288 : vector<8x128xf32>
      %440 = arith.addf %436, %439 : vector<8x128xf32>
      %c3_226 = arith.constant 3 : index
      %c0_227 = arith.constant 0 : index
      %441 = memref.load %arg4[%c3_226, %c0_227] : memref<4x4xf32, #tpu.memory_space<smem>>
      %442 = vector.broadcast %441 : f32 to vector<8x128xf32>
      %443 = arith.mulf %442, %235 : vector<8x128xf32>
      %c3_228 = arith.constant 3 : index
      %c1_229 = arith.constant 1 : index
      %444 = memref.load %arg4[%c3_228, %c1_229] : memref<4x4xf32, #tpu.memory_space<smem>>
      %445 = vector.broadcast %444 : f32 to vector<8x128xf32>
      %446 = arith.mulf %445, %253 : vector<8x128xf32>
      %447 = arith.addf %443, %446 : vector<8x128xf32>
      %c3_230 = arith.constant 3 : index
      %c2_231 = arith.constant 2 : index
      %448 = memref.load %arg4[%c3_230, %c2_231] : memref<4x4xf32, #tpu.memory_space<smem>>
      %449 = vector.broadcast %448 : f32 to vector<8x128xf32>
      %450 = arith.mulf %449, %271 : vector<8x128xf32>
      %451 = arith.addf %447, %450 : vector<8x128xf32>
      %c3_232 = arith.constant 3 : index
      %c3_233 = arith.constant 3 : index
      %452 = memref.load %arg4[%c3_232, %c3_233] : memref<4x4xf32, #tpu.memory_space<smem>>
      %453 = vector.broadcast %452 : f32 to vector<8x128xf32>
      %454 = arith.mulf %453, %289 : vector<8x128xf32>
      %455 = arith.addf %451, %454 : vector<8x128xf32>
      %c3_234 = arith.constant 3 : index
      %c0_235 = arith.constant 0 : index
      %456 = memref.load %arg4[%c3_234, %c0_235] : memref<4x4xf32, #tpu.memory_space<smem>>
      %457 = vector.broadcast %456 : f32 to vector<8x128xf32>
      %458 = arith.mulf %457, %236 : vector<8x128xf32>
      %c3_236 = arith.constant 3 : index
      %c1_237 = arith.constant 1 : index
      %459 = memref.load %arg4[%c3_236, %c1_237] : memref<4x4xf32, #tpu.memory_space<smem>>
      %460 = vector.broadcast %459 : f32 to vector<8x128xf32>
      %461 = arith.mulf %460, %254 : vector<8x128xf32>
      %462 = arith.addf %458, %461 : vector<8x128xf32>
      %c3_238 = arith.constant 3 : index
      %c2_239 = arith.constant 2 : index
      %463 = memref.load %arg4[%c3_238, %c2_239] : memref<4x4xf32, #tpu.memory_space<smem>>
      %464 = vector.broadcast %463 : f32 to vector<8x128xf32>
      %465 = arith.mulf %464, %272 : vector<8x128xf32>
      %466 = arith.addf %462, %465 : vector<8x128xf32>
      %c3_240 = arith.constant 3 : index
      %c3_241 = arith.constant 3 : index
      %467 = memref.load %arg4[%c3_240, %c3_241] : memref<4x4xf32, #tpu.memory_space<smem>>
      %468 = vector.broadcast %467 : f32 to vector<8x128xf32>
      %469 = arith.mulf %468, %290 : vector<8x128xf32>
      %470 = arith.addf %466, %469 : vector<8x128xf32>
      %471 = arith.mulf %234, %305 : vector<8x128xf32>
      %472 = arith.mulf %235, %320 : vector<8x128xf32>
      %473 = arith.addf %471, %472 : vector<8x128xf32>
      %474 = arith.mulf %236, %335 : vector<8x128xf32>
      %475 = arith.addf %473, %474 : vector<8x128xf32>
      %476 = arith.mulf %305, %305 : vector<8x128xf32>
      %477 = arith.mulf %320, %320 : vector<8x128xf32>
      %478 = arith.addf %476, %477 : vector<8x128xf32>
      %479 = arith.mulf %335, %335 : vector<8x128xf32>
      %480 = arith.addf %478, %479 : vector<8x128xf32>
      %cst_242 = arith.constant 0.000000e+00 : f32
      %481 = vector.broadcast %cst_242 : f32 to vector<8x128xf32>
      %482 = arith.cmpf oge, %475, %481 : vector<8x128xf32>
      %cst_243 = arith.constant 9.99999997E-7 : f32
      %483 = vector.broadcast %cst_243 : f32 to vector<8x128xf32>
      %484 = arith.addf %480, %483 : vector<8x128xf32>
      %485 = tpu.reciprocal %484 : vector<8x128xf32> -> vector<8x128xf32>
      %486 = arith.mulf %475, %485 : vector<8x128xf32>
      %cst_244 = arith.constant 0.000000e+00 : f32
      %487 = vector.broadcast %cst_244 : f32 to vector<8x128xf32>
      %488 = arith.select %482, %487, %486 : vector<8x128xi1>, vector<8x128xf32>
      %489 = arith.mulf %488, %305 : vector<8x128xf32>
      %490 = arith.subf %234, %489 : vector<8x128xf32>
      %491 = arith.mulf %488, %320 : vector<8x128xf32>
      %492 = arith.subf %235, %491 : vector<8x128xf32>
      %493 = arith.mulf %488, %335 : vector<8x128xf32>
      %494 = arith.subf %236, %493 : vector<8x128xf32>
      %495 = arith.mulf %252, %350 : vector<8x128xf32>
      %496 = arith.mulf %253, %365 : vector<8x128xf32>
      %497 = arith.addf %495, %496 : vector<8x128xf32>
      %498 = arith.mulf %254, %380 : vector<8x128xf32>
      %499 = arith.addf %497, %498 : vector<8x128xf32>
      %500 = arith.mulf %350, %350 : vector<8x128xf32>
      %501 = arith.mulf %365, %365 : vector<8x128xf32>
      %502 = arith.addf %500, %501 : vector<8x128xf32>
      %503 = arith.mulf %380, %380 : vector<8x128xf32>
      %504 = arith.addf %502, %503 : vector<8x128xf32>
      %cst_245 = arith.constant 0.000000e+00 : f32
      %505 = vector.broadcast %cst_245 : f32 to vector<8x128xf32>
      %506 = arith.cmpf oge, %499, %505 : vector<8x128xf32>
      %cst_246 = arith.constant 9.99999997E-7 : f32
      %507 = vector.broadcast %cst_246 : f32 to vector<8x128xf32>
      %508 = arith.addf %504, %507 : vector<8x128xf32>
      %509 = tpu.reciprocal %508 : vector<8x128xf32> -> vector<8x128xf32>
      %510 = arith.mulf %499, %509 : vector<8x128xf32>
      %cst_247 = arith.constant 0.000000e+00 : f32
      %511 = vector.broadcast %cst_247 : f32 to vector<8x128xf32>
      %512 = arith.select %506, %511, %510 : vector<8x128xi1>, vector<8x128xf32>
      %513 = arith.mulf %512, %350 : vector<8x128xf32>
      %514 = arith.subf %252, %513 : vector<8x128xf32>
      %515 = arith.mulf %512, %365 : vector<8x128xf32>
      %516 = arith.subf %253, %515 : vector<8x128xf32>
      %517 = arith.mulf %512, %380 : vector<8x128xf32>
      %518 = arith.subf %254, %517 : vector<8x128xf32>
      %519 = arith.mulf %270, %395 : vector<8x128xf32>
      %520 = arith.mulf %271, %410 : vector<8x128xf32>
      %521 = arith.addf %519, %520 : vector<8x128xf32>
      %522 = arith.mulf %272, %425 : vector<8x128xf32>
      %523 = arith.addf %521, %522 : vector<8x128xf32>
      %524 = arith.mulf %395, %395 : vector<8x128xf32>
      %525 = arith.mulf %410, %410 : vector<8x128xf32>
      %526 = arith.addf %524, %525 : vector<8x128xf32>
      %527 = arith.mulf %425, %425 : vector<8x128xf32>
      %528 = arith.addf %526, %527 : vector<8x128xf32>
      %cst_248 = arith.constant 0.000000e+00 : f32
      %529 = vector.broadcast %cst_248 : f32 to vector<8x128xf32>
      %530 = arith.cmpf oge, %523, %529 : vector<8x128xf32>
      %cst_249 = arith.constant 9.99999997E-7 : f32
      %531 = vector.broadcast %cst_249 : f32 to vector<8x128xf32>
      %532 = arith.addf %528, %531 : vector<8x128xf32>
      %533 = tpu.reciprocal %532 : vector<8x128xf32> -> vector<8x128xf32>
      %534 = arith.mulf %523, %533 : vector<8x128xf32>
      %cst_250 = arith.constant 0.000000e+00 : f32
      %535 = vector.broadcast %cst_250 : f32 to vector<8x128xf32>
      %536 = arith.select %530, %535, %534 : vector<8x128xi1>, vector<8x128xf32>
      %537 = arith.mulf %536, %395 : vector<8x128xf32>
      %538 = arith.subf %270, %537 : vector<8x128xf32>
      %539 = arith.mulf %536, %410 : vector<8x128xf32>
      %540 = arith.subf %271, %539 : vector<8x128xf32>
      %541 = arith.mulf %536, %425 : vector<8x128xf32>
      %542 = arith.subf %272, %541 : vector<8x128xf32>
      %543 = arith.mulf %288, %440 : vector<8x128xf32>
      %544 = arith.mulf %289, %455 : vector<8x128xf32>
      %545 = arith.addf %543, %544 : vector<8x128xf32>
      %546 = arith.mulf %290, %470 : vector<8x128xf32>
      %547 = arith.addf %545, %546 : vector<8x128xf32>
      %548 = arith.mulf %440, %440 : vector<8x128xf32>
      %549 = arith.mulf %455, %455 : vector<8x128xf32>
      %550 = arith.addf %548, %549 : vector<8x128xf32>
      %551 = arith.mulf %470, %470 : vector<8x128xf32>
      %552 = arith.addf %550, %551 : vector<8x128xf32>
      %cst_251 = arith.constant 0.000000e+00 : f32
      %553 = vector.broadcast %cst_251 : f32 to vector<8x128xf32>
      %554 = arith.cmpf oge, %547, %553 : vector<8x128xf32>
      %cst_252 = arith.constant 9.99999997E-7 : f32
      %555 = vector.broadcast %cst_252 : f32 to vector<8x128xf32>
      %556 = arith.addf %552, %555 : vector<8x128xf32>
      %557 = tpu.reciprocal %556 : vector<8x128xf32> -> vector<8x128xf32>
      %558 = arith.mulf %547, %557 : vector<8x128xf32>
      %cst_253 = arith.constant 0.000000e+00 : f32
      %559 = vector.broadcast %cst_253 : f32 to vector<8x128xf32>
      %560 = arith.select %554, %559, %558 : vector<8x128xi1>, vector<8x128xf32>
      %561 = arith.mulf %560, %440 : vector<8x128xf32>
      %562 = arith.subf %288, %561 : vector<8x128xf32>
      %563 = arith.mulf %560, %455 : vector<8x128xf32>
      %564 = arith.subf %289, %563 : vector<8x128xf32>
      %565 = arith.mulf %560, %470 : vector<8x128xf32>
      %566 = arith.subf %290, %565 : vector<8x128xf32>
      %c0_254 = arith.constant 0 : index
      %c0_255 = arith.constant 0 : index
      %567 = memref.load %arg5[%c0_254, %c0_255] : memref<4x4xf32, #tpu.memory_space<smem>>
      %568 = vector.broadcast %567 : f32 to vector<8x128xf32>
      %569 = arith.mulf %568, %490 : vector<8x128xf32>
      %c0_256 = arith.constant 0 : index
      %c1_257 = arith.constant 1 : index
      %570 = memref.load %arg5[%c0_256, %c1_257] : memref<4x4xf32, #tpu.memory_space<smem>>
      %571 = vector.broadcast %570 : f32 to vector<8x128xf32>
      %572 = arith.mulf %571, %514 : vector<8x128xf32>
      %573 = arith.addf %569, %572 : vector<8x128xf32>
      %c0_258 = arith.constant 0 : index
      %c2_259 = arith.constant 2 : index
      %574 = memref.load %arg5[%c0_258, %c2_259] : memref<4x4xf32, #tpu.memory_space<smem>>
      %575 = vector.broadcast %574 : f32 to vector<8x128xf32>
      %576 = arith.mulf %575, %538 : vector<8x128xf32>
      %577 = arith.addf %573, %576 : vector<8x128xf32>
      %c0_260 = arith.constant 0 : index
      %c3_261 = arith.constant 3 : index
      %578 = memref.load %arg5[%c0_260, %c3_261] : memref<4x4xf32, #tpu.memory_space<smem>>
      %579 = vector.broadcast %578 : f32 to vector<8x128xf32>
      %580 = arith.mulf %579, %562 : vector<8x128xf32>
      %581 = arith.addf %577, %580 : vector<8x128xf32>
      %c0_262 = arith.constant 0 : index
      %c0_263 = arith.constant 0 : index
      %582 = memref.load %arg5[%c0_262, %c0_263] : memref<4x4xf32, #tpu.memory_space<smem>>
      %583 = vector.broadcast %582 : f32 to vector<8x128xf32>
      %584 = arith.mulf %583, %492 : vector<8x128xf32>
      %c0_264 = arith.constant 0 : index
      %c1_265 = arith.constant 1 : index
      %585 = memref.load %arg5[%c0_264, %c1_265] : memref<4x4xf32, #tpu.memory_space<smem>>
      %586 = vector.broadcast %585 : f32 to vector<8x128xf32>
      %587 = arith.mulf %586, %516 : vector<8x128xf32>
      %588 = arith.addf %584, %587 : vector<8x128xf32>
      %c0_266 = arith.constant 0 : index
      %c2_267 = arith.constant 2 : index
      %589 = memref.load %arg5[%c0_266, %c2_267] : memref<4x4xf32, #tpu.memory_space<smem>>
      %590 = vector.broadcast %589 : f32 to vector<8x128xf32>
      %591 = arith.mulf %590, %540 : vector<8x128xf32>
      %592 = arith.addf %588, %591 : vector<8x128xf32>
      %c0_268 = arith.constant 0 : index
      %c3_269 = arith.constant 3 : index
      %593 = memref.load %arg5[%c0_268, %c3_269] : memref<4x4xf32, #tpu.memory_space<smem>>
      %594 = vector.broadcast %593 : f32 to vector<8x128xf32>
      %595 = arith.mulf %594, %564 : vector<8x128xf32>
      %596 = arith.addf %592, %595 : vector<8x128xf32>
      %c0_270 = arith.constant 0 : index
      %c0_271 = arith.constant 0 : index
      %597 = memref.load %arg5[%c0_270, %c0_271] : memref<4x4xf32, #tpu.memory_space<smem>>
      %598 = vector.broadcast %597 : f32 to vector<8x128xf32>
      %599 = arith.mulf %598, %494 : vector<8x128xf32>
      %c0_272 = arith.constant 0 : index
      %c1_273 = arith.constant 1 : index
      %600 = memref.load %arg5[%c0_272, %c1_273] : memref<4x4xf32, #tpu.memory_space<smem>>
      %601 = vector.broadcast %600 : f32 to vector<8x128xf32>
      %602 = arith.mulf %601, %518 : vector<8x128xf32>
      %603 = arith.addf %599, %602 : vector<8x128xf32>
      %c0_274 = arith.constant 0 : index
      %c2_275 = arith.constant 2 : index
      %604 = memref.load %arg5[%c0_274, %c2_275] : memref<4x4xf32, #tpu.memory_space<smem>>
      %605 = vector.broadcast %604 : f32 to vector<8x128xf32>
      %606 = arith.mulf %605, %542 : vector<8x128xf32>
      %607 = arith.addf %603, %606 : vector<8x128xf32>
      %c0_276 = arith.constant 0 : index
      %c3_277 = arith.constant 3 : index
      %608 = memref.load %arg5[%c0_276, %c3_277] : memref<4x4xf32, #tpu.memory_space<smem>>
      %609 = vector.broadcast %608 : f32 to vector<8x128xf32>
      %610 = arith.mulf %609, %566 : vector<8x128xf32>
      %611 = arith.addf %607, %610 : vector<8x128xf32>
      %c1_278 = arith.constant 1 : index
      %c0_279 = arith.constant 0 : index
      %612 = memref.load %arg5[%c1_278, %c0_279] : memref<4x4xf32, #tpu.memory_space<smem>>
      %613 = vector.broadcast %612 : f32 to vector<8x128xf32>
      %614 = arith.mulf %613, %490 : vector<8x128xf32>
      %c1_280 = arith.constant 1 : index
      %c1_281 = arith.constant 1 : index
      %615 = memref.load %arg5[%c1_280, %c1_281] : memref<4x4xf32, #tpu.memory_space<smem>>
      %616 = vector.broadcast %615 : f32 to vector<8x128xf32>
      %617 = arith.mulf %616, %514 : vector<8x128xf32>
      %618 = arith.addf %614, %617 : vector<8x128xf32>
      %c1_282 = arith.constant 1 : index
      %c2_283 = arith.constant 2 : index
      %619 = memref.load %arg5[%c1_282, %c2_283] : memref<4x4xf32, #tpu.memory_space<smem>>
      %620 = vector.broadcast %619 : f32 to vector<8x128xf32>
      %621 = arith.mulf %620, %538 : vector<8x128xf32>
      %622 = arith.addf %618, %621 : vector<8x128xf32>
      %c1_284 = arith.constant 1 : index
      %c3_285 = arith.constant 3 : index
      %623 = memref.load %arg5[%c1_284, %c3_285] : memref<4x4xf32, #tpu.memory_space<smem>>
      %624 = vector.broadcast %623 : f32 to vector<8x128xf32>
      %625 = arith.mulf %624, %562 : vector<8x128xf32>
      %626 = arith.addf %622, %625 : vector<8x128xf32>
      %c1_286 = arith.constant 1 : index
      %c0_287 = arith.constant 0 : index
      %627 = memref.load %arg5[%c1_286, %c0_287] : memref<4x4xf32, #tpu.memory_space<smem>>
      %628 = vector.broadcast %627 : f32 to vector<8x128xf32>
      %629 = arith.mulf %628, %492 : vector<8x128xf32>
      %c1_288 = arith.constant 1 : index
      %c1_289 = arith.constant 1 : index
      %630 = memref.load %arg5[%c1_288, %c1_289] : memref<4x4xf32, #tpu.memory_space<smem>>
      %631 = vector.broadcast %630 : f32 to vector<8x128xf32>
      %632 = arith.mulf %631, %516 : vector<8x128xf32>
      %633 = arith.addf %629, %632 : vector<8x128xf32>
      %c1_290 = arith.constant 1 : index
      %c2_291 = arith.constant 2 : index
      %634 = memref.load %arg5[%c1_290, %c2_291] : memref<4x4xf32, #tpu.memory_space<smem>>
      %635 = vector.broadcast %634 : f32 to vector<8x128xf32>
      %636 = arith.mulf %635, %540 : vector<8x128xf32>
      %637 = arith.addf %633, %636 : vector<8x128xf32>
      %c1_292 = arith.constant 1 : index
      %c3_293 = arith.constant 3 : index
      %638 = memref.load %arg5[%c1_292, %c3_293] : memref<4x4xf32, #tpu.memory_space<smem>>
      %639 = vector.broadcast %638 : f32 to vector<8x128xf32>
      %640 = arith.mulf %639, %564 : vector<8x128xf32>
      %641 = arith.addf %637, %640 : vector<8x128xf32>
      %c1_294 = arith.constant 1 : index
      %c0_295 = arith.constant 0 : index
      %642 = memref.load %arg5[%c1_294, %c0_295] : memref<4x4xf32, #tpu.memory_space<smem>>
      %643 = vector.broadcast %642 : f32 to vector<8x128xf32>
      %644 = arith.mulf %643, %494 : vector<8x128xf32>
      %c1_296 = arith.constant 1 : index
      %c1_297 = arith.constant 1 : index
      %645 = memref.load %arg5[%c1_296, %c1_297] : memref<4x4xf32, #tpu.memory_space<smem>>
      %646 = vector.broadcast %645 : f32 to vector<8x128xf32>
      %647 = arith.mulf %646, %518 : vector<8x128xf32>
      %648 = arith.addf %644, %647 : vector<8x128xf32>
      %c1_298 = arith.constant 1 : index
      %c2_299 = arith.constant 2 : index
      %649 = memref.load %arg5[%c1_298, %c2_299] : memref<4x4xf32, #tpu.memory_space<smem>>
      %650 = vector.broadcast %649 : f32 to vector<8x128xf32>
      %651 = arith.mulf %650, %542 : vector<8x128xf32>
      %652 = arith.addf %648, %651 : vector<8x128xf32>
      %c1_300 = arith.constant 1 : index
      %c3_301 = arith.constant 3 : index
      %653 = memref.load %arg5[%c1_300, %c3_301] : memref<4x4xf32, #tpu.memory_space<smem>>
      %654 = vector.broadcast %653 : f32 to vector<8x128xf32>
      %655 = arith.mulf %654, %566 : vector<8x128xf32>
      %656 = arith.addf %652, %655 : vector<8x128xf32>
      %c2_302 = arith.constant 2 : index
      %c0_303 = arith.constant 0 : index
      %657 = memref.load %arg5[%c2_302, %c0_303] : memref<4x4xf32, #tpu.memory_space<smem>>
      %658 = vector.broadcast %657 : f32 to vector<8x128xf32>
      %659 = arith.mulf %658, %490 : vector<8x128xf32>
      %c2_304 = arith.constant 2 : index
      %c1_305 = arith.constant 1 : index
      %660 = memref.load %arg5[%c2_304, %c1_305] : memref<4x4xf32, #tpu.memory_space<smem>>
      %661 = vector.broadcast %660 : f32 to vector<8x128xf32>
      %662 = arith.mulf %661, %514 : vector<8x128xf32>
      %663 = arith.addf %659, %662 : vector<8x128xf32>
      %c2_306 = arith.constant 2 : index
      %c2_307 = arith.constant 2 : index
      %664 = memref.load %arg5[%c2_306, %c2_307] : memref<4x4xf32, #tpu.memory_space<smem>>
      %665 = vector.broadcast %664 : f32 to vector<8x128xf32>
      %666 = arith.mulf %665, %538 : vector<8x128xf32>
      %667 = arith.addf %663, %666 : vector<8x128xf32>
      %c2_308 = arith.constant 2 : index
      %c3_309 = arith.constant 3 : index
      %668 = memref.load %arg5[%c2_308, %c3_309] : memref<4x4xf32, #tpu.memory_space<smem>>
      %669 = vector.broadcast %668 : f32 to vector<8x128xf32>
      %670 = arith.mulf %669, %562 : vector<8x128xf32>
      %671 = arith.addf %667, %670 : vector<8x128xf32>
      %c2_310 = arith.constant 2 : index
      %c0_311 = arith.constant 0 : index
      %672 = memref.load %arg5[%c2_310, %c0_311] : memref<4x4xf32, #tpu.memory_space<smem>>
      %673 = vector.broadcast %672 : f32 to vector<8x128xf32>
      %674 = arith.mulf %673, %492 : vector<8x128xf32>
      %c2_312 = arith.constant 2 : index
      %c1_313 = arith.constant 1 : index
      %675 = memref.load %arg5[%c2_312, %c1_313] : memref<4x4xf32, #tpu.memory_space<smem>>
      %676 = vector.broadcast %675 : f32 to vector<8x128xf32>
      %677 = arith.mulf %676, %516 : vector<8x128xf32>
      %678 = arith.addf %674, %677 : vector<8x128xf32>
      %c2_314 = arith.constant 2 : index
      %c2_315 = arith.constant 2 : index
      %679 = memref.load %arg5[%c2_314, %c2_315] : memref<4x4xf32, #tpu.memory_space<smem>>
      %680 = vector.broadcast %679 : f32 to vector<8x128xf32>
      %681 = arith.mulf %680, %540 : vector<8x128xf32>
      %682 = arith.addf %678, %681 : vector<8x128xf32>
      %c2_316 = arith.constant 2 : index
      %c3_317 = arith.constant 3 : index
      %683 = memref.load %arg5[%c2_316, %c3_317] : memref<4x4xf32, #tpu.memory_space<smem>>
      %684 = vector.broadcast %683 : f32 to vector<8x128xf32>
      %685 = arith.mulf %684, %564 : vector<8x128xf32>
      %686 = arith.addf %682, %685 : vector<8x128xf32>
      %c2_318 = arith.constant 2 : index
      %c0_319 = arith.constant 0 : index
      %687 = memref.load %arg5[%c2_318, %c0_319] : memref<4x4xf32, #tpu.memory_space<smem>>
      %688 = vector.broadcast %687 : f32 to vector<8x128xf32>
      %689 = arith.mulf %688, %494 : vector<8x128xf32>
      %c2_320 = arith.constant 2 : index
      %c1_321 = arith.constant 1 : index
      %690 = memref.load %arg5[%c2_320, %c1_321] : memref<4x4xf32, #tpu.memory_space<smem>>
      %691 = vector.broadcast %690 : f32 to vector<8x128xf32>
      %692 = arith.mulf %691, %518 : vector<8x128xf32>
      %693 = arith.addf %689, %692 : vector<8x128xf32>
      %c2_322 = arith.constant 2 : index
      %c2_323 = arith.constant 2 : index
      %694 = memref.load %arg5[%c2_322, %c2_323] : memref<4x4xf32, #tpu.memory_space<smem>>
      %695 = vector.broadcast %694 : f32 to vector<8x128xf32>
      %696 = arith.mulf %695, %542 : vector<8x128xf32>
      %697 = arith.addf %693, %696 : vector<8x128xf32>
      %c2_324 = arith.constant 2 : index
      %c3_325 = arith.constant 3 : index
      %698 = memref.load %arg5[%c2_324, %c3_325] : memref<4x4xf32, #tpu.memory_space<smem>>
      %699 = vector.broadcast %698 : f32 to vector<8x128xf32>
      %700 = arith.mulf %699, %566 : vector<8x128xf32>
      %701 = arith.addf %697, %700 : vector<8x128xf32>
      %c3_326 = arith.constant 3 : index
      %c0_327 = arith.constant 0 : index
      %702 = memref.load %arg5[%c3_326, %c0_327] : memref<4x4xf32, #tpu.memory_space<smem>>
      %703 = vector.broadcast %702 : f32 to vector<8x128xf32>
      %704 = arith.mulf %703, %490 : vector<8x128xf32>
      %c3_328 = arith.constant 3 : index
      %c1_329 = arith.constant 1 : index
      %705 = memref.load %arg5[%c3_328, %c1_329] : memref<4x4xf32, #tpu.memory_space<smem>>
      %706 = vector.broadcast %705 : f32 to vector<8x128xf32>
      %707 = arith.mulf %706, %514 : vector<8x128xf32>
      %708 = arith.addf %704, %707 : vector<8x128xf32>
      %c3_330 = arith.constant 3 : index
      %c2_331 = arith.constant 2 : index
      %709 = memref.load %arg5[%c3_330, %c2_331] : memref<4x4xf32, #tpu.memory_space<smem>>
      %710 = vector.broadcast %709 : f32 to vector<8x128xf32>
      %711 = arith.mulf %710, %538 : vector<8x128xf32>
      %712 = arith.addf %708, %711 : vector<8x128xf32>
      %c3_332 = arith.constant 3 : index
      %c3_333 = arith.constant 3 : index
      %713 = memref.load %arg5[%c3_332, %c3_333] : memref<4x4xf32, #tpu.memory_space<smem>>
      %714 = vector.broadcast %713 : f32 to vector<8x128xf32>
      %715 = arith.mulf %714, %562 : vector<8x128xf32>
      %716 = arith.addf %712, %715 : vector<8x128xf32>
      %c3_334 = arith.constant 3 : index
      %c0_335 = arith.constant 0 : index
      %717 = memref.load %arg5[%c3_334, %c0_335] : memref<4x4xf32, #tpu.memory_space<smem>>
      %718 = vector.broadcast %717 : f32 to vector<8x128xf32>
      %719 = arith.mulf %718, %492 : vector<8x128xf32>
      %c3_336 = arith.constant 3 : index
      %c1_337 = arith.constant 1 : index
      %720 = memref.load %arg5[%c3_336, %c1_337] : memref<4x4xf32, #tpu.memory_space<smem>>
      %721 = vector.broadcast %720 : f32 to vector<8x128xf32>
      %722 = arith.mulf %721, %516 : vector<8x128xf32>
      %723 = arith.addf %719, %722 : vector<8x128xf32>
      %c3_338 = arith.constant 3 : index
      %c2_339 = arith.constant 2 : index
      %724 = memref.load %arg5[%c3_338, %c2_339] : memref<4x4xf32, #tpu.memory_space<smem>>
      %725 = vector.broadcast %724 : f32 to vector<8x128xf32>
      %726 = arith.mulf %725, %540 : vector<8x128xf32>
      %727 = arith.addf %723, %726 : vector<8x128xf32>
      %c3_340 = arith.constant 3 : index
      %c3_341 = arith.constant 3 : index
      %728 = memref.load %arg5[%c3_340, %c3_341] : memref<4x4xf32, #tpu.memory_space<smem>>
      %729 = vector.broadcast %728 : f32 to vector<8x128xf32>
      %730 = arith.mulf %729, %564 : vector<8x128xf32>
      %731 = arith.addf %727, %730 : vector<8x128xf32>
      %c3_342 = arith.constant 3 : index
      %c0_343 = arith.constant 0 : index
      %732 = memref.load %arg5[%c3_342, %c0_343] : memref<4x4xf32, #tpu.memory_space<smem>>
      %733 = vector.broadcast %732 : f32 to vector<8x128xf32>
      %734 = arith.mulf %733, %494 : vector<8x128xf32>
      %c3_344 = arith.constant 3 : index
      %c1_345 = arith.constant 1 : index
      %735 = memref.load %arg5[%c3_344, %c1_345] : memref<4x4xf32, #tpu.memory_space<smem>>
      %736 = vector.broadcast %735 : f32 to vector<8x128xf32>
      %737 = arith.mulf %736, %518 : vector<8x128xf32>
      %738 = arith.addf %734, %737 : vector<8x128xf32>
      %c3_346 = arith.constant 3 : index
      %c2_347 = arith.constant 2 : index
      %739 = memref.load %arg5[%c3_346, %c2_347] : memref<4x4xf32, #tpu.memory_space<smem>>
      %740 = vector.broadcast %739 : f32 to vector<8x128xf32>
      %741 = arith.mulf %740, %542 : vector<8x128xf32>
      %742 = arith.addf %738, %741 : vector<8x128xf32>
      %c3_348 = arith.constant 3 : index
      %c3_349 = arith.constant 3 : index
      %743 = memref.load %arg5[%c3_348, %c3_349] : memref<4x4xf32, #tpu.memory_space<smem>>
      %744 = vector.broadcast %743 : f32 to vector<8x128xf32>
      %745 = arith.mulf %744, %566 : vector<8x128xf32>
      %746 = arith.addf %742, %745 : vector<8x128xf32>
      %747 = arith.mulf %581, %581 : vector<8x128xf32>
      %748 = arith.mulf %596, %596 : vector<8x128xf32>
      %749 = arith.addf %747, %748 : vector<8x128xf32>
      %750 = arith.mulf %611, %611 : vector<8x128xf32>
      %751 = arith.addf %749, %750 : vector<8x128xf32>
      %752 = math.sqrt %751 : vector<8x128xf32>
      %cst_350 = arith.constant 9.99999997E-7 : f32
      %753 = vector.broadcast %cst_350 : f32 to vector<8x128xf32>
      %754 = arith.addf %752, %753 : vector<8x128xf32>
      %755 = tpu.reciprocal %754 : vector<8x128xf32> -> vector<8x128xf32>
      %c0_351 = arith.constant 0 : index
      %756 = memref.load %arg8[%c0_351] : memref<4xf32, #tpu.memory_space<smem>>
      %c0_352 = arith.constant 0 : index
      %757 = memref.load %arg9[%c0_352] : memref<4xf32, #tpu.memory_space<smem>>
      %758 = vector.broadcast %757 : f32 to vector<8x128xf32>
      %759 = arith.mulf %758, %755 : vector<8x128xf32>
      %760 = vector.broadcast %756 : f32 to vector<8x128xf32>
      %761 = arith.addf %760, %759 : vector<8x128xf32>
      %762 = arith.mulf %581, %761 : vector<8x128xf32>
      %763 = arith.mulf %596, %761 : vector<8x128xf32>
      %764 = arith.mulf %611, %761 : vector<8x128xf32>
      %765 = arith.mulf %626, %626 : vector<8x128xf32>
      %766 = arith.mulf %641, %641 : vector<8x128xf32>
      %767 = arith.addf %765, %766 : vector<8x128xf32>
      %768 = arith.mulf %656, %656 : vector<8x128xf32>
      %769 = arith.addf %767, %768 : vector<8x128xf32>
      %770 = math.sqrt %769 : vector<8x128xf32>
      %cst_353 = arith.constant 9.99999997E-7 : f32
      %771 = vector.broadcast %cst_353 : f32 to vector<8x128xf32>
      %772 = arith.addf %770, %771 : vector<8x128xf32>
      %773 = tpu.reciprocal %772 : vector<8x128xf32> -> vector<8x128xf32>
      %c1_354 = arith.constant 1 : index
      %774 = memref.load %arg8[%c1_354] : memref<4xf32, #tpu.memory_space<smem>>
      %c1_355 = arith.constant 1 : index
      %775 = memref.load %arg9[%c1_355] : memref<4xf32, #tpu.memory_space<smem>>
      %776 = vector.broadcast %775 : f32 to vector<8x128xf32>
      %777 = arith.mulf %776, %773 : vector<8x128xf32>
      %778 = vector.broadcast %774 : f32 to vector<8x128xf32>
      %779 = arith.addf %778, %777 : vector<8x128xf32>
      %780 = arith.mulf %626, %779 : vector<8x128xf32>
      %781 = arith.mulf %641, %779 : vector<8x128xf32>
      %782 = arith.mulf %656, %779 : vector<8x128xf32>
      %783 = arith.mulf %671, %671 : vector<8x128xf32>
      %784 = arith.mulf %686, %686 : vector<8x128xf32>
      %785 = arith.addf %783, %784 : vector<8x128xf32>
      %786 = arith.mulf %701, %701 : vector<8x128xf32>
      %787 = arith.addf %785, %786 : vector<8x128xf32>
      %788 = math.sqrt %787 : vector<8x128xf32>
      %cst_356 = arith.constant 9.99999997E-7 : f32
      %789 = vector.broadcast %cst_356 : f32 to vector<8x128xf32>
      %790 = arith.addf %788, %789 : vector<8x128xf32>
      %791 = tpu.reciprocal %790 : vector<8x128xf32> -> vector<8x128xf32>
      %c2_357 = arith.constant 2 : index
      %792 = memref.load %arg8[%c2_357] : memref<4xf32, #tpu.memory_space<smem>>
      %c2_358 = arith.constant 2 : index
      %793 = memref.load %arg9[%c2_358] : memref<4xf32, #tpu.memory_space<smem>>
      %794 = vector.broadcast %793 : f32 to vector<8x128xf32>
      %795 = arith.mulf %794, %791 : vector<8x128xf32>
      %796 = vector.broadcast %792 : f32 to vector<8x128xf32>
      %797 = arith.addf %796, %795 : vector<8x128xf32>
      %798 = arith.mulf %671, %797 : vector<8x128xf32>
      %799 = arith.mulf %686, %797 : vector<8x128xf32>
      %800 = arith.mulf %701, %797 : vector<8x128xf32>
      %801 = arith.mulf %716, %716 : vector<8x128xf32>
      %802 = arith.mulf %731, %731 : vector<8x128xf32>
      %803 = arith.addf %801, %802 : vector<8x128xf32>
      %804 = arith.mulf %746, %746 : vector<8x128xf32>
      %805 = arith.addf %803, %804 : vector<8x128xf32>
      %806 = math.sqrt %805 : vector<8x128xf32>
      %cst_359 = arith.constant 9.99999997E-7 : f32
      %807 = vector.broadcast %cst_359 : f32 to vector<8x128xf32>
      %808 = arith.addf %806, %807 : vector<8x128xf32>
      %809 = tpu.reciprocal %808 : vector<8x128xf32> -> vector<8x128xf32>
      %c3_360 = arith.constant 3 : index
      %810 = memref.load %arg8[%c3_360] : memref<4xf32, #tpu.memory_space<smem>>
      %c3_361 = arith.constant 3 : index
      %811 = memref.load %arg9[%c3_361] : memref<4xf32, #tpu.memory_space<smem>>
      %812 = vector.broadcast %811 : f32 to vector<8x128xf32>
      %813 = arith.mulf %812, %809 : vector<8x128xf32>
      %814 = vector.broadcast %810 : f32 to vector<8x128xf32>
      %815 = arith.addf %814, %813 : vector<8x128xf32>
      %816 = arith.mulf %716, %815 : vector<8x128xf32>
      %817 = arith.mulf %731, %815 : vector<8x128xf32>
      %818 = arith.mulf %746, %815 : vector<8x128xf32>
      %819 = arith.addf %762, %5 : vector<8x128xf32>
      %820 = arith.addf %763, %8 : vector<8x128xf32>
      %821 = arith.addf %764, %11 : vector<8x128xf32>
      %822 = arith.addf %780, %14 : vector<8x128xf32>
      %823 = arith.addf %781, %17 : vector<8x128xf32>
      %824 = arith.addf %782, %20 : vector<8x128xf32>
      %825 = arith.addf %798, %23 : vector<8x128xf32>
      %826 = arith.addf %799, %26 : vector<8x128xf32>
      %827 = arith.addf %800, %29 : vector<8x128xf32>
      %828 = arith.addf %816, %32 : vector<8x128xf32>
      %829 = arith.addf %817, %35 : vector<8x128xf32>
      %830 = arith.addf %818, %38 : vector<8x128xf32>
      %c0_362 = arith.constant 0 : index
      %c0_363 = arith.constant 0 : index
      %831 = memref.load %arg4[%c0_362, %c0_363] : memref<4x4xf32, #tpu.memory_space<smem>>
      %832 = vector.broadcast %831 : f32 to vector<8x128xf32>
      %833 = arith.mulf %832, %819 : vector<8x128xf32>
      %c0_364 = arith.constant 0 : index
      %c1_365 = arith.constant 1 : index
      %834 = memref.load %arg4[%c0_364, %c1_365] : memref<4x4xf32, #tpu.memory_space<smem>>
      %835 = vector.broadcast %834 : f32 to vector<8x128xf32>
      %836 = arith.mulf %835, %822 : vector<8x128xf32>
      %837 = arith.addf %833, %836 : vector<8x128xf32>
      %c0_366 = arith.constant 0 : index
      %c2_367 = arith.constant 2 : index
      %838 = memref.load %arg4[%c0_366, %c2_367] : memref<4x4xf32, #tpu.memory_space<smem>>
      %839 = vector.broadcast %838 : f32 to vector<8x128xf32>
      %840 = arith.mulf %839, %825 : vector<8x128xf32>
      %841 = arith.addf %837, %840 : vector<8x128xf32>
      %c0_368 = arith.constant 0 : index
      %c3_369 = arith.constant 3 : index
      %842 = memref.load %arg4[%c0_368, %c3_369] : memref<4x4xf32, #tpu.memory_space<smem>>
      %843 = vector.broadcast %842 : f32 to vector<8x128xf32>
      %844 = arith.mulf %843, %828 : vector<8x128xf32>
      %845 = arith.addf %841, %844 : vector<8x128xf32>
      %c0_370 = arith.constant 0 : index
      %c0_371 = arith.constant 0 : index
      %846 = memref.load %arg4[%c0_370, %c0_371] : memref<4x4xf32, #tpu.memory_space<smem>>
      %847 = vector.broadcast %846 : f32 to vector<8x128xf32>
      %848 = arith.mulf %847, %820 : vector<8x128xf32>
      %c0_372 = arith.constant 0 : index
      %c1_373 = arith.constant 1 : index
      %849 = memref.load %arg4[%c0_372, %c1_373] : memref<4x4xf32, #tpu.memory_space<smem>>
      %850 = vector.broadcast %849 : f32 to vector<8x128xf32>
      %851 = arith.mulf %850, %823 : vector<8x128xf32>
      %852 = arith.addf %848, %851 : vector<8x128xf32>
      %c0_374 = arith.constant 0 : index
      %c2_375 = arith.constant 2 : index
      %853 = memref.load %arg4[%c0_374, %c2_375] : memref<4x4xf32, #tpu.memory_space<smem>>
      %854 = vector.broadcast %853 : f32 to vector<8x128xf32>
      %855 = arith.mulf %854, %826 : vector<8x128xf32>
      %856 = arith.addf %852, %855 : vector<8x128xf32>
      %c0_376 = arith.constant 0 : index
      %c3_377 = arith.constant 3 : index
      %857 = memref.load %arg4[%c0_376, %c3_377] : memref<4x4xf32, #tpu.memory_space<smem>>
      %858 = vector.broadcast %857 : f32 to vector<8x128xf32>
      %859 = arith.mulf %858, %829 : vector<8x128xf32>
      %860 = arith.addf %856, %859 : vector<8x128xf32>
      %c0_378 = arith.constant 0 : index
      %c0_379 = arith.constant 0 : index
      %861 = memref.load %arg4[%c0_378, %c0_379] : memref<4x4xf32, #tpu.memory_space<smem>>
      %862 = vector.broadcast %861 : f32 to vector<8x128xf32>
      %863 = arith.mulf %862, %821 : vector<8x128xf32>
      %c0_380 = arith.constant 0 : index
      %c1_381 = arith.constant 1 : index
      %864 = memref.load %arg4[%c0_380, %c1_381] : memref<4x4xf32, #tpu.memory_space<smem>>
      %865 = vector.broadcast %864 : f32 to vector<8x128xf32>
      %866 = arith.mulf %865, %824 : vector<8x128xf32>
      %867 = arith.addf %863, %866 : vector<8x128xf32>
      %c0_382 = arith.constant 0 : index
      %c2_383 = arith.constant 2 : index
      %868 = memref.load %arg4[%c0_382, %c2_383] : memref<4x4xf32, #tpu.memory_space<smem>>
      %869 = vector.broadcast %868 : f32 to vector<8x128xf32>
      %870 = arith.mulf %869, %827 : vector<8x128xf32>
      %871 = arith.addf %867, %870 : vector<8x128xf32>
      %c0_384 = arith.constant 0 : index
      %c3_385 = arith.constant 3 : index
      %872 = memref.load %arg4[%c0_384, %c3_385] : memref<4x4xf32, #tpu.memory_space<smem>>
      %873 = vector.broadcast %872 : f32 to vector<8x128xf32>
      %874 = arith.mulf %873, %830 : vector<8x128xf32>
      %875 = arith.addf %871, %874 : vector<8x128xf32>
      %c1_386 = arith.constant 1 : index
      %c0_387 = arith.constant 0 : index
      %876 = memref.load %arg4[%c1_386, %c0_387] : memref<4x4xf32, #tpu.memory_space<smem>>
      %877 = vector.broadcast %876 : f32 to vector<8x128xf32>
      %878 = arith.mulf %877, %819 : vector<8x128xf32>
      %c1_388 = arith.constant 1 : index
      %c1_389 = arith.constant 1 : index
      %879 = memref.load %arg4[%c1_388, %c1_389] : memref<4x4xf32, #tpu.memory_space<smem>>
      %880 = vector.broadcast %879 : f32 to vector<8x128xf32>
      %881 = arith.mulf %880, %822 : vector<8x128xf32>
      %882 = arith.addf %878, %881 : vector<8x128xf32>
      %c1_390 = arith.constant 1 : index
      %c2_391 = arith.constant 2 : index
      %883 = memref.load %arg4[%c1_390, %c2_391] : memref<4x4xf32, #tpu.memory_space<smem>>
      %884 = vector.broadcast %883 : f32 to vector<8x128xf32>
      %885 = arith.mulf %884, %825 : vector<8x128xf32>
      %886 = arith.addf %882, %885 : vector<8x128xf32>
      %c1_392 = arith.constant 1 : index
      %c3_393 = arith.constant 3 : index
      %887 = memref.load %arg4[%c1_392, %c3_393] : memref<4x4xf32, #tpu.memory_space<smem>>
      %888 = vector.broadcast %887 : f32 to vector<8x128xf32>
      %889 = arith.mulf %888, %828 : vector<8x128xf32>
      %890 = arith.addf %886, %889 : vector<8x128xf32>
      %c1_394 = arith.constant 1 : index
      %c0_395 = arith.constant 0 : index
      %891 = memref.load %arg4[%c1_394, %c0_395] : memref<4x4xf32, #tpu.memory_space<smem>>
      %892 = vector.broadcast %891 : f32 to vector<8x128xf32>
      %893 = arith.mulf %892, %820 : vector<8x128xf32>
      %c1_396 = arith.constant 1 : index
      %c1_397 = arith.constant 1 : index
      %894 = memref.load %arg4[%c1_396, %c1_397] : memref<4x4xf32, #tpu.memory_space<smem>>
      %895 = vector.broadcast %894 : f32 to vector<8x128xf32>
      %896 = arith.mulf %895, %823 : vector<8x128xf32>
      %897 = arith.addf %893, %896 : vector<8x128xf32>
      %c1_398 = arith.constant 1 : index
      %c2_399 = arith.constant 2 : index
      %898 = memref.load %arg4[%c1_398, %c2_399] : memref<4x4xf32, #tpu.memory_space<smem>>
      %899 = vector.broadcast %898 : f32 to vector<8x128xf32>
      %900 = arith.mulf %899, %826 : vector<8x128xf32>
      %901 = arith.addf %897, %900 : vector<8x128xf32>
      %c1_400 = arith.constant 1 : index
      %c3_401 = arith.constant 3 : index
      %902 = memref.load %arg4[%c1_400, %c3_401] : memref<4x4xf32, #tpu.memory_space<smem>>
      %903 = vector.broadcast %902 : f32 to vector<8x128xf32>
      %904 = arith.mulf %903, %829 : vector<8x128xf32>
      %905 = arith.addf %901, %904 : vector<8x128xf32>
      %c1_402 = arith.constant 1 : index
      %c0_403 = arith.constant 0 : index
      %906 = memref.load %arg4[%c1_402, %c0_403] : memref<4x4xf32, #tpu.memory_space<smem>>
      %907 = vector.broadcast %906 : f32 to vector<8x128xf32>
      %908 = arith.mulf %907, %821 : vector<8x128xf32>
      %c1_404 = arith.constant 1 : index
      %c1_405 = arith.constant 1 : index
      %909 = memref.load %arg4[%c1_404, %c1_405] : memref<4x4xf32, #tpu.memory_space<smem>>
      %910 = vector.broadcast %909 : f32 to vector<8x128xf32>
      %911 = arith.mulf %910, %824 : vector<8x128xf32>
      %912 = arith.addf %908, %911 : vector<8x128xf32>
      %c1_406 = arith.constant 1 : index
      %c2_407 = arith.constant 2 : index
      %913 = memref.load %arg4[%c1_406, %c2_407] : memref<4x4xf32, #tpu.memory_space<smem>>
      %914 = vector.broadcast %913 : f32 to vector<8x128xf32>
      %915 = arith.mulf %914, %827 : vector<8x128xf32>
      %916 = arith.addf %912, %915 : vector<8x128xf32>
      %c1_408 = arith.constant 1 : index
      %c3_409 = arith.constant 3 : index
      %917 = memref.load %arg4[%c1_408, %c3_409] : memref<4x4xf32, #tpu.memory_space<smem>>
      %918 = vector.broadcast %917 : f32 to vector<8x128xf32>
      %919 = arith.mulf %918, %830 : vector<8x128xf32>
      %920 = arith.addf %916, %919 : vector<8x128xf32>
      %c2_410 = arith.constant 2 : index
      %c0_411 = arith.constant 0 : index
      %921 = memref.load %arg4[%c2_410, %c0_411] : memref<4x4xf32, #tpu.memory_space<smem>>
      %922 = vector.broadcast %921 : f32 to vector<8x128xf32>
      %923 = arith.mulf %922, %819 : vector<8x128xf32>
      %c2_412 = arith.constant 2 : index
      %c1_413 = arith.constant 1 : index
      %924 = memref.load %arg4[%c2_412, %c1_413] : memref<4x4xf32, #tpu.memory_space<smem>>
      %925 = vector.broadcast %924 : f32 to vector<8x128xf32>
      %926 = arith.mulf %925, %822 : vector<8x128xf32>
      %927 = arith.addf %923, %926 : vector<8x128xf32>
      %c2_414 = arith.constant 2 : index
      %c2_415 = arith.constant 2 : index
      %928 = memref.load %arg4[%c2_414, %c2_415] : memref<4x4xf32, #tpu.memory_space<smem>>
      %929 = vector.broadcast %928 : f32 to vector<8x128xf32>
      %930 = arith.mulf %929, %825 : vector<8x128xf32>
      %931 = arith.addf %927, %930 : vector<8x128xf32>
      %c2_416 = arith.constant 2 : index
      %c3_417 = arith.constant 3 : index
      %932 = memref.load %arg4[%c2_416, %c3_417] : memref<4x4xf32, #tpu.memory_space<smem>>
      %933 = vector.broadcast %932 : f32 to vector<8x128xf32>
      %934 = arith.mulf %933, %828 : vector<8x128xf32>
      %935 = arith.addf %931, %934 : vector<8x128xf32>
      %c2_418 = arith.constant 2 : index
      %c0_419 = arith.constant 0 : index
      %936 = memref.load %arg4[%c2_418, %c0_419] : memref<4x4xf32, #tpu.memory_space<smem>>
      %937 = vector.broadcast %936 : f32 to vector<8x128xf32>
      %938 = arith.mulf %937, %820 : vector<8x128xf32>
      %c2_420 = arith.constant 2 : index
      %c1_421 = arith.constant 1 : index
      %939 = memref.load %arg4[%c2_420, %c1_421] : memref<4x4xf32, #tpu.memory_space<smem>>
      %940 = vector.broadcast %939 : f32 to vector<8x128xf32>
      %941 = arith.mulf %940, %823 : vector<8x128xf32>
      %942 = arith.addf %938, %941 : vector<8x128xf32>
      %c2_422 = arith.constant 2 : index
      %c2_423 = arith.constant 2 : index
      %943 = memref.load %arg4[%c2_422, %c2_423] : memref<4x4xf32, #tpu.memory_space<smem>>
      %944 = vector.broadcast %943 : f32 to vector<8x128xf32>
      %945 = arith.mulf %944, %826 : vector<8x128xf32>
      %946 = arith.addf %942, %945 : vector<8x128xf32>
      %c2_424 = arith.constant 2 : index
      %c3_425 = arith.constant 3 : index
      %947 = memref.load %arg4[%c2_424, %c3_425] : memref<4x4xf32, #tpu.memory_space<smem>>
      %948 = vector.broadcast %947 : f32 to vector<8x128xf32>
      %949 = arith.mulf %948, %829 : vector<8x128xf32>
      %950 = arith.addf %946, %949 : vector<8x128xf32>
      %c2_426 = arith.constant 2 : index
      %c0_427 = arith.constant 0 : index
      %951 = memref.load %arg4[%c2_426, %c0_427] : memref<4x4xf32, #tpu.memory_space<smem>>
      %952 = vector.broadcast %951 : f32 to vector<8x128xf32>
      %953 = arith.mulf %952, %821 : vector<8x128xf32>
      %c2_428 = arith.constant 2 : index
      %c1_429 = arith.constant 1 : index
      %954 = memref.load %arg4[%c2_428, %c1_429] : memref<4x4xf32, #tpu.memory_space<smem>>
      %955 = vector.broadcast %954 : f32 to vector<8x128xf32>
      %956 = arith.mulf %955, %824 : vector<8x128xf32>
      %957 = arith.addf %953, %956 : vector<8x128xf32>
      %c2_430 = arith.constant 2 : index
      %c2_431 = arith.constant 2 : index
      %958 = memref.load %arg4[%c2_430, %c2_431] : memref<4x4xf32, #tpu.memory_space<smem>>
      %959 = vector.broadcast %958 : f32 to vector<8x128xf32>
      %960 = arith.mulf %959, %827 : vector<8x128xf32>
      %961 = arith.addf %957, %960 : vector<8x128xf32>
      %c2_432 = arith.constant 2 : index
      %c3_433 = arith.constant 3 : index
      %962 = memref.load %arg4[%c2_432, %c3_433] : memref<4x4xf32, #tpu.memory_space<smem>>
      %963 = vector.broadcast %962 : f32 to vector<8x128xf32>
      %964 = arith.mulf %963, %830 : vector<8x128xf32>
      %965 = arith.addf %961, %964 : vector<8x128xf32>
      %c3_434 = arith.constant 3 : index
      %c0_435 = arith.constant 0 : index
      %966 = memref.load %arg4[%c3_434, %c0_435] : memref<4x4xf32, #tpu.memory_space<smem>>
      %967 = vector.broadcast %966 : f32 to vector<8x128xf32>
      %968 = arith.mulf %967, %819 : vector<8x128xf32>
      %c3_436 = arith.constant 3 : index
      %c1_437 = arith.constant 1 : index
      %969 = memref.load %arg4[%c3_436, %c1_437] : memref<4x4xf32, #tpu.memory_space<smem>>
      %970 = vector.broadcast %969 : f32 to vector<8x128xf32>
      %971 = arith.mulf %970, %822 : vector<8x128xf32>
      %972 = arith.addf %968, %971 : vector<8x128xf32>
      %c3_438 = arith.constant 3 : index
      %c2_439 = arith.constant 2 : index
      %973 = memref.load %arg4[%c3_438, %c2_439] : memref<4x4xf32, #tpu.memory_space<smem>>
      %974 = vector.broadcast %973 : f32 to vector<8x128xf32>
      %975 = arith.mulf %974, %825 : vector<8x128xf32>
      %976 = arith.addf %972, %975 : vector<8x128xf32>
      %c3_440 = arith.constant 3 : index
      %c3_441 = arith.constant 3 : index
      %977 = memref.load %arg4[%c3_440, %c3_441] : memref<4x4xf32, #tpu.memory_space<smem>>
      %978 = vector.broadcast %977 : f32 to vector<8x128xf32>
      %979 = arith.mulf %978, %828 : vector<8x128xf32>
      %980 = arith.addf %976, %979 : vector<8x128xf32>
      %c3_442 = arith.constant 3 : index
      %c0_443 = arith.constant 0 : index
      %981 = memref.load %arg4[%c3_442, %c0_443] : memref<4x4xf32, #tpu.memory_space<smem>>
      %982 = vector.broadcast %981 : f32 to vector<8x128xf32>
      %983 = arith.mulf %982, %820 : vector<8x128xf32>
      %c3_444 = arith.constant 3 : index
      %c1_445 = arith.constant 1 : index
      %984 = memref.load %arg4[%c3_444, %c1_445] : memref<4x4xf32, #tpu.memory_space<smem>>
      %985 = vector.broadcast %984 : f32 to vector<8x128xf32>
      %986 = arith.mulf %985, %823 : vector<8x128xf32>
      %987 = arith.addf %983, %986 : vector<8x128xf32>
      %c3_446 = arith.constant 3 : index
      %c2_447 = arith.constant 2 : index
      %988 = memref.load %arg4[%c3_446, %c2_447] : memref<4x4xf32, #tpu.memory_space<smem>>
      %989 = vector.broadcast %988 : f32 to vector<8x128xf32>
      %990 = arith.mulf %989, %826 : vector<8x128xf32>
      %991 = arith.addf %987, %990 : vector<8x128xf32>
      %c3_448 = arith.constant 3 : index
      %c3_449 = arith.constant 3 : index
      %992 = memref.load %arg4[%c3_448, %c3_449] : memref<4x4xf32, #tpu.memory_space<smem>>
      %993 = vector.broadcast %992 : f32 to vector<8x128xf32>
      %994 = arith.mulf %993, %829 : vector<8x128xf32>
      %995 = arith.addf %991, %994 : vector<8x128xf32>
      %c3_450 = arith.constant 3 : index
      %c0_451 = arith.constant 0 : index
      %996 = memref.load %arg4[%c3_450, %c0_451] : memref<4x4xf32, #tpu.memory_space<smem>>
      %997 = vector.broadcast %996 : f32 to vector<8x128xf32>
      %998 = arith.mulf %997, %821 : vector<8x128xf32>
      %c3_452 = arith.constant 3 : index
      %c1_453 = arith.constant 1 : index
      %999 = memref.load %arg4[%c3_452, %c1_453] : memref<4x4xf32, #tpu.memory_space<smem>>
      %1000 = vector.broadcast %999 : f32 to vector<8x128xf32>
      %1001 = arith.mulf %1000, %824 : vector<8x128xf32>
      %1002 = arith.addf %998, %1001 : vector<8x128xf32>
      %c3_454 = arith.constant 3 : index
      %c2_455 = arith.constant 2 : index
      %1003 = memref.load %arg4[%c3_454, %c2_455] : memref<4x4xf32, #tpu.memory_space<smem>>
      %1004 = vector.broadcast %1003 : f32 to vector<8x128xf32>
      %1005 = arith.mulf %1004, %827 : vector<8x128xf32>
      %1006 = arith.addf %1002, %1005 : vector<8x128xf32>
      %c3_456 = arith.constant 3 : index
      %c3_457 = arith.constant 3 : index
      %1007 = memref.load %arg4[%c3_456, %c3_457] : memref<4x4xf32, #tpu.memory_space<smem>>
      %1008 = vector.broadcast %1007 : f32 to vector<8x128xf32>
      %1009 = arith.mulf %1008, %830 : vector<8x128xf32>
      %1010 = arith.addf %1006, %1009 : vector<8x128xf32>
      %1011 = arith.mulf %819, %845 : vector<8x128xf32>
      %1012 = arith.mulf %820, %860 : vector<8x128xf32>
      %1013 = arith.addf %1011, %1012 : vector<8x128xf32>
      %1014 = arith.mulf %821, %875 : vector<8x128xf32>
      %1015 = arith.addf %1013, %1014 : vector<8x128xf32>
      %1016 = arith.mulf %845, %845 : vector<8x128xf32>
      %1017 = arith.mulf %860, %860 : vector<8x128xf32>
      %1018 = arith.addf %1016, %1017 : vector<8x128xf32>
      %1019 = arith.mulf %875, %875 : vector<8x128xf32>
      %1020 = arith.addf %1018, %1019 : vector<8x128xf32>
      %cst_458 = arith.constant 0.000000e+00 : f32
      %1021 = vector.broadcast %cst_458 : f32 to vector<8x128xf32>
      %1022 = arith.cmpf oge, %1015, %1021 : vector<8x128xf32>
      %cst_459 = arith.constant 9.99999997E-7 : f32
      %1023 = vector.broadcast %cst_459 : f32 to vector<8x128xf32>
      %1024 = arith.addf %1020, %1023 : vector<8x128xf32>
      %1025 = tpu.reciprocal %1024 : vector<8x128xf32> -> vector<8x128xf32>
      %1026 = arith.mulf %1015, %1025 : vector<8x128xf32>
      %cst_460 = arith.constant 0.000000e+00 : f32
      %1027 = vector.broadcast %cst_460 : f32 to vector<8x128xf32>
      %1028 = arith.select %1022, %1027, %1026 : vector<8x128xi1>, vector<8x128xf32>
      %1029 = arith.mulf %1028, %845 : vector<8x128xf32>
      %1030 = arith.subf %819, %1029 : vector<8x128xf32>
      %1031 = arith.mulf %1028, %860 : vector<8x128xf32>
      %1032 = arith.subf %820, %1031 : vector<8x128xf32>
      %1033 = arith.mulf %1028, %875 : vector<8x128xf32>
      %1034 = arith.subf %821, %1033 : vector<8x128xf32>
      %1035 = arith.mulf %822, %890 : vector<8x128xf32>
      %1036 = arith.mulf %823, %905 : vector<8x128xf32>
      %1037 = arith.addf %1035, %1036 : vector<8x128xf32>
      %1038 = arith.mulf %824, %920 : vector<8x128xf32>
      %1039 = arith.addf %1037, %1038 : vector<8x128xf32>
      %1040 = arith.mulf %890, %890 : vector<8x128xf32>
      %1041 = arith.mulf %905, %905 : vector<8x128xf32>
      %1042 = arith.addf %1040, %1041 : vector<8x128xf32>
      %1043 = arith.mulf %920, %920 : vector<8x128xf32>
      %1044 = arith.addf %1042, %1043 : vector<8x128xf32>
      %cst_461 = arith.constant 0.000000e+00 : f32
      %1045 = vector.broadcast %cst_461 : f32 to vector<8x128xf32>
      %1046 = arith.cmpf oge, %1039, %1045 : vector<8x128xf32>
      %cst_462 = arith.constant 9.99999997E-7 : f32
      %1047 = vector.broadcast %cst_462 : f32 to vector<8x128xf32>
      %1048 = arith.addf %1044, %1047 : vector<8x128xf32>
      %1049 = tpu.reciprocal %1048 : vector<8x128xf32> -> vector<8x128xf32>
      %1050 = arith.mulf %1039, %1049 : vector<8x128xf32>
      %cst_463 = arith.constant 0.000000e+00 : f32
      %1051 = vector.broadcast %cst_463 : f32 to vector<8x128xf32>
      %1052 = arith.select %1046, %1051, %1050 : vector<8x128xi1>, vector<8x128xf32>
      %1053 = arith.mulf %1052, %890 : vector<8x128xf32>
      %1054 = arith.subf %822, %1053 : vector<8x128xf32>
      %1055 = arith.mulf %1052, %905 : vector<8x128xf32>
      %1056 = arith.subf %823, %1055 : vector<8x128xf32>
      %1057 = arith.mulf %1052, %920 : vector<8x128xf32>
      %1058 = arith.subf %824, %1057 : vector<8x128xf32>
      %1059 = arith.mulf %825, %935 : vector<8x128xf32>
      %1060 = arith.mulf %826, %950 : vector<8x128xf32>
      %1061 = arith.addf %1059, %1060 : vector<8x128xf32>
      %1062 = arith.mulf %827, %965 : vector<8x128xf32>
      %1063 = arith.addf %1061, %1062 : vector<8x128xf32>
      %1064 = arith.mulf %935, %935 : vector<8x128xf32>
      %1065 = arith.mulf %950, %950 : vector<8x128xf32>
      %1066 = arith.addf %1064, %1065 : vector<8x128xf32>
      %1067 = arith.mulf %965, %965 : vector<8x128xf32>
      %1068 = arith.addf %1066, %1067 : vector<8x128xf32>
      %cst_464 = arith.constant 0.000000e+00 : f32
      %1069 = vector.broadcast %cst_464 : f32 to vector<8x128xf32>
      %1070 = arith.cmpf oge, %1063, %1069 : vector<8x128xf32>
      %cst_465 = arith.constant 9.99999997E-7 : f32
      %1071 = vector.broadcast %cst_465 : f32 to vector<8x128xf32>
      %1072 = arith.addf %1068, %1071 : vector<8x128xf32>
      %1073 = tpu.reciprocal %1072 : vector<8x128xf32> -> vector<8x128xf32>
      %1074 = arith.mulf %1063, %1073 : vector<8x128xf32>
      %cst_466 = arith.constant 0.000000e+00 : f32
      %1075 = vector.broadcast %cst_466 : f32 to vector<8x128xf32>
      %1076 = arith.select %1070, %1075, %1074 : vector<8x128xi1>, vector<8x128xf32>
      %1077 = arith.mulf %1076, %935 : vector<8x128xf32>
      %1078 = arith.subf %825, %1077 : vector<8x128xf32>
      %1079 = arith.mulf %1076, %950 : vector<8x128xf32>
      %1080 = arith.subf %826, %1079 : vector<8x128xf32>
      %1081 = arith.mulf %1076, %965 : vector<8x128xf32>
      %1082 = arith.subf %827, %1081 : vector<8x128xf32>
      %1083 = arith.mulf %828, %980 : vector<8x128xf32>
      %1084 = arith.mulf %829, %995 : vector<8x128xf32>
      %1085 = arith.addf %1083, %1084 : vector<8x128xf32>
      %1086 = arith.mulf %830, %1010 : vector<8x128xf32>
      %1087 = arith.addf %1085, %1086 : vector<8x128xf32>
      %1088 = arith.mulf %980, %980 : vector<8x128xf32>
      %1089 = arith.mulf %995, %995 : vector<8x128xf32>
      %1090 = arith.addf %1088, %1089 : vector<8x128xf32>
      %1091 = arith.mulf %1010, %1010 : vector<8x128xf32>
      %1092 = arith.addf %1090, %1091 : vector<8x128xf32>
      %cst_467 = arith.constant 0.000000e+00 : f32
      %1093 = vector.broadcast %cst_467 : f32 to vector<8x128xf32>
      %1094 = arith.cmpf oge, %1087, %1093 : vector<8x128xf32>
      %cst_468 = arith.constant 9.99999997E-7 : f32
      %1095 = vector.broadcast %cst_468 : f32 to vector<8x128xf32>
      %1096 = arith.addf %1092, %1095 : vector<8x128xf32>
      %1097 = tpu.reciprocal %1096 : vector<8x128xf32> -> vector<8x128xf32>
      %1098 = arith.mulf %1087, %1097 : vector<8x128xf32>
      %cst_469 = arith.constant 0.000000e+00 : f32
      %1099 = vector.broadcast %cst_469 : f32 to vector<8x128xf32>
      %1100 = arith.select %1094, %1099, %1098 : vector<8x128xi1>, vector<8x128xf32>
      %1101 = arith.mulf %1100, %980 : vector<8x128xf32>
      %1102 = arith.subf %828, %1101 : vector<8x128xf32>
      %1103 = arith.mulf %1100, %995 : vector<8x128xf32>
      %1104 = arith.subf %829, %1103 : vector<8x128xf32>
      %1105 = arith.mulf %1100, %1010 : vector<8x128xf32>
      %1106 = arith.subf %830, %1105 : vector<8x128xf32>
      %c0_470 = arith.constant 0 : index
      %c0_471 = arith.constant 0 : index
      %1107 = arith.index_cast %2 : i32 to index
      %c0_472 = arith.constant 0 : index
      %c0_473 = arith.constant 0 : index
      %1108 = vector.load %arg10[%c0_470, %c0_471, %1107, %c0_472, %c0_473] : memref<1x12x8x8x128xf32, #tpu.memory_space<vmem>>, vector<1x1x1x8x128xf32>
      %1109 = vector.shape_cast %1108 : vector<1x1x1x8x128xf32> to vector<8x128xf32>
      %1110 = vector.shape_cast %1030 : vector<8x128xf32> to vector<1x1x1x8x128xf32>
      tpu.vector_store %arg10[%c0_470, %c0_471, %1107, %c0_472, %c0_473], %1110 {strides = array<i32>} : memref<1x12x8x8x128xf32, #tpu.memory_space<vmem>>, vector<1x1x1x8x128xf32>,
      %c0_474 = arith.constant 0 : index
      %c1_475 = arith.constant 1 : index
      %1111 = arith.index_cast %2 : i32 to index
      %c0_476 = arith.constant 0 : index
      %c0_477 = arith.constant 0 : index
      %1112 = vector.load %arg10[%c0_474, %c1_475, %1111, %c0_476, %c0_477] : memref<1x12x8x8x128xf32, #tpu.memory_space<vmem>>, vector<1x1x1x8x128xf32>
      %1113 = vector.shape_cast %1112 : vector<1x1x1x8x128xf32> to vector<8x128xf32>
      %1114 = vector.shape_cast %1032 : vector<8x128xf32> to vector<1x1x1x8x128xf32>
      tpu.vector_store %arg10[%c0_474, %c1_475, %1111, %c0_476, %c0_477], %1114 {strides = array<i32>} : memref<1x12x8x8x128xf32, #tpu.memory_space<vmem>>, vector<1x1x1x8x128xf32>,
      %c0_478 = arith.constant 0 : index
      %c2_479 = arith.constant 2 : index
      %1115 = arith.index_cast %2 : i32 to index
      %c0_480 = arith.constant 0 : index
      %c0_481 = arith.constant 0 : index
      %1116 = vector.load %arg10[%c0_478, %c2_479, %1115, %c0_480, %c0_481] : memref<1x12x8x8x128xf32, #tpu.memory_space<vmem>>, vector<1x1x1x8x128xf32>
      %1117 = vector.shape_cast %1116 : vector<1x1x1x8x128xf32> to vector<8x128xf32>
      %1118 = vector.shape_cast %1034 : vector<8x128xf32> to vector<1x1x1x8x128xf32>
      tpu.vector_store %arg10[%c0_478, %c2_479, %1115, %c0_480, %c0_481], %1118 {strides = array<i32>} : memref<1x12x8x8x128xf32, #tpu.memory_space<vmem>>, vector<1x1x1x8x128xf32>,
      %c0_482 = arith.constant 0 : index
      %c3_483 = arith.constant 3 : index
      %1119 = arith.index_cast %2 : i32 to index
      %c0_484 = arith.constant 0 : index
      %c0_485 = arith.constant 0 : index
      %1120 = vector.load %arg10[%c0_482, %c3_483, %1119, %c0_484, %c0_485] : memref<1x12x8x8x128xf32, #tpu.memory_space<vmem>>, vector<1x1x1x8x128xf32>
      %1121 = vector.shape_cast %1120 : vector<1x1x1x8x128xf32> to vector<8x128xf32>
      %1122 = vector.shape_cast %1054 : vector<8x128xf32> to vector<1x1x1x8x128xf32>
      tpu.vector_store %arg10[%c0_482, %c3_483, %1119, %c0_484, %c0_485], %1122 {strides = array<i32>} : memref<1x12x8x8x128xf32, #tpu.memory_space<vmem>>, vector<1x1x1x8x128xf32>,
      %c0_486 = arith.constant 0 : index
      %c4_487 = arith.constant 4 : index
      %1123 = arith.index_cast %2 : i32 to index
      %c0_488 = arith.constant 0 : index
      %c0_489 = arith.constant 0 : index
      %1124 = vector.load %arg10[%c0_486, %c4_487, %1123, %c0_488, %c0_489] : memref<1x12x8x8x128xf32, #tpu.memory_space<vmem>>, vector<1x1x1x8x128xf32>
      %1125 = vector.shape_cast %1124 : vector<1x1x1x8x128xf32> to vector<8x128xf32>
      %1126 = vector.shape_cast %1056 : vector<8x128xf32> to vector<1x1x1x8x128xf32>
      tpu.vector_store %arg10[%c0_486, %c4_487, %1123, %c0_488, %c0_489], %1126 {strides = array<i32>} : memref<1x12x8x8x128xf32, #tpu.memory_space<vmem>>, vector<1x1x1x8x128xf32>,
      %c0_490 = arith.constant 0 : index
      %c5_491 = arith.constant 5 : index
      %1127 = arith.index_cast %2 : i32 to index
      %c0_492 = arith.constant 0 : index
      %c0_493 = arith.constant 0 : index
      %1128 = vector.load %arg10[%c0_490, %c5_491, %1127, %c0_492, %c0_493] : memref<1x12x8x8x128xf32, #tpu.memory_space<vmem>>, vector<1x1x1x8x128xf32>
      %1129 = vector.shape_cast %1128 : vector<1x1x1x8x128xf32> to vector<8x128xf32>
      %1130 = vector.shape_cast %1058 : vector<8x128xf32> to vector<1x1x1x8x128xf32>
      tpu.vector_store %arg10[%c0_490, %c5_491, %1127, %c0_492, %c0_493], %1130 {strides = array<i32>} : memref<1x12x8x8x128xf32, #tpu.memory_space<vmem>>, vector<1x1x1x8x128xf32>,
      %c0_494 = arith.constant 0 : index
      %c6_495 = arith.constant 6 : index
      %1131 = arith.index_cast %2 : i32 to index
      %c0_496 = arith.constant 0 : index
      %c0_497 = arith.constant 0 : index
      %1132 = vector.load %arg10[%c0_494, %c6_495, %1131, %c0_496, %c0_497] : memref<1x12x8x8x128xf32, #tpu.memory_space<vmem>>, vector<1x1x1x8x128xf32>
      %1133 = vector.shape_cast %1132 : vector<1x1x1x8x128xf32> to vector<8x128xf32>
      %1134 = vector.shape_cast %1078 : vector<8x128xf32> to vector<1x1x1x8x128xf32>
      tpu.vector_store %arg10[%c0_494, %c6_495, %1131, %c0_496, %c0_497], %1134 {strides = array<i32>} : memref<1x12x8x8x128xf32, #tpu.memory_space<vmem>>, vector<1x1x1x8x128xf32>,
      %c0_498 = arith.constant 0 : index
      %c7_499 = arith.constant 7 : index
      %1135 = arith.index_cast %2 : i32 to index
      %c0_500 = arith.constant 0 : index
      %c0_501 = arith.constant 0 : index
      %1136 = vector.load %arg10[%c0_498, %c7_499, %1135, %c0_500, %c0_501] : memref<1x12x8x8x128xf32, #tpu.memory_space<vmem>>, vector<1x1x1x8x128xf32>
      %1137 = vector.shape_cast %1136 : vector<1x1x1x8x128xf32> to vector<8x128xf32>
      %1138 = vector.shape_cast %1080 : vector<8x128xf32> to vector<1x1x1x8x128xf32>
      tpu.vector_store %arg10[%c0_498, %c7_499, %1135, %c0_500, %c0_501], %1138 {strides = array<i32>} : memref<1x12x8x8x128xf32, #tpu.memory_space<vmem>>, vector<1x1x1x8x128xf32>,
      %c0_502 = arith.constant 0 : index
      %c8_503 = arith.constant 8 : index
      %1139 = arith.index_cast %2 : i32 to index
      %c0_504 = arith.constant 0 : index
      %c0_505 = arith.constant 0 : index
      %1140 = vector.load %arg10[%c0_502, %c8_503, %1139, %c0_504, %c0_505] : memref<1x12x8x8x128xf32, #tpu.memory_space<vmem>>, vector<1x1x1x8x128xf32>
      %1141 = vector.shape_cast %1140 : vector<1x1x1x8x128xf32> to vector<8x128xf32>
      %1142 = vector.shape_cast %1082 : vector<8x128xf32> to vector<1x1x1x8x128xf32>
      tpu.vector_store %arg10[%c0_502, %c8_503, %1139, %c0_504, %c0_505], %1142 {strides = array<i32>} : memref<1x12x8x8x128xf32, #tpu.memory_space<vmem>>, vector<1x1x1x8x128xf32>,
      %c0_506 = arith.constant 0 : index
      %c9_507 = arith.constant 9 : index
      %1143 = arith.index_cast %2 : i32 to index
      %c0_508 = arith.constant 0 : index
      %c0_509 = arith.constant 0 : index
      %1144 = vector.load %arg10[%c0_506, %c9_507, %1143, %c0_508, %c0_509] : memref<1x12x8x8x128xf32, #tpu.memory_space<vmem>>, vector<1x1x1x8x128xf32>
      %1145 = vector.shape_cast %1144 : vector<1x1x1x8x128xf32> to vector<8x128xf32>
      %1146 = vector.shape_cast %1102 : vector<8x128xf32> to vector<1x1x1x8x128xf32>
      tpu.vector_store %arg10[%c0_506, %c9_507, %1143, %c0_508, %c0_509], %1146 {strides = array<i32>} : memref<1x12x8x8x128xf32, #tpu.memory_space<vmem>>, vector<1x1x1x8x128xf32>,
      %c0_510 = arith.constant 0 : index
      %c10_511 = arith.constant 10 : index
      %1147 = arith.index_cast %2 : i32 to index
      %c0_512 = arith.constant 0 : index
      %c0_513 = arith.constant 0 : index
      %1148 = vector.load %arg10[%c0_510, %c10_511, %1147, %c0_512, %c0_513] : memref<1x12x8x8x128xf32, #tpu.memory_space<vmem>>, vector<1x1x1x8x128xf32>
      %1149 = vector.shape_cast %1148 : vector<1x1x1x8x128xf32> to vector<8x128xf32>
      %1150 = vector.shape_cast %1104 : vector<8x128xf32> to vector<1x1x1x8x128xf32>
      tpu.vector_store %arg10[%c0_510, %c10_511, %1147, %c0_512, %c0_513], %1150 {strides = array<i32>} : memref<1x12x8x8x128xf32, #tpu.memory_space<vmem>>, vector<1x1x1x8x128xf32>,
      %c0_514 = arith.constant 0 : index
      %c11_515 = arith.constant 11 : index
      %1151 = arith.index_cast %2 : i32 to index
      %c0_516 = arith.constant 0 : index
      %c0_517 = arith.constant 0 : index
      %1152 = vector.load %arg10[%c0_514, %c11_515, %1151, %c0_516, %c0_517] : memref<1x12x8x8x128xf32, #tpu.memory_space<vmem>>, vector<1x1x1x8x128xf32>
      %1153 = vector.shape_cast %1152 : vector<1x1x1x8x128xf32> to vector<8x128xf32>
      %1154 = vector.shape_cast %1106 : vector<8x128xf32> to vector<1x1x1x8x128xf32>
      tpu.vector_store %arg10[%c0_514, %c11_515, %1151, %c0_516, %c0_517], %1154 {strides = array<i32>} : memref<1x12x8x8x128xf32, #tpu.memory_space<vmem>>, vector<1x1x1x8x128xf32>,
    }
    %c8_i32_0 = arith.constant 8 : i32
    return
  }
  func.func @transform_0(%arg0: i32, %arg1: i32) -> (i32, i32, i32, i32, i32) {
    %c0_i32 = arith.constant 0 : i32
    %c0_i32_0 = arith.constant 0 : i32
    %c0_i32_1 = arith.constant 0 : i32
    %c0_i32_2 = arith.constant 0 : i32
    return %arg0, %c0_i32, %arg1, %c0_i32_0, %c0_i32_1 : i32, i32, i32, i32, i32
  }
  func.func @transform_1(%arg0: i32, %arg1: i32) -> (i32, i32) {
    %c0_i32 = arith.constant 0 : i32
    %c0_i32_0 = arith.constant 0 : i32
    %c0_i32_1 = arith.constant 0 : i32
    return %c0_i32, %c0_i32_0 : i32, i32
  }
  func.func @transform_2(%arg0: i32, %arg1: i32) -> (i32, i32) {
    %c0_i32 = arith.constant 0 : i32
    %c0_i32_0 = arith.constant 0 : i32
    %c0_i32_1 = arith.constant 0 : i32
    return %c0_i32, %c0_i32_0 : i32, i32
  }
  func.func @transform_3(%arg0: i32, %arg1: i32) -> (i32, i32) {
    %c0_i32 = arith.constant 0 : i32
    %c0_i32_0 = arith.constant 0 : i32
    %c0_i32_1 = arith.constant 0 : i32
    return %c0_i32, %c0_i32_0 : i32, i32
  }
  func.func @transform_4(%arg0: i32, %arg1: i32) -> i32 {
    %c0_i32 = arith.constant 0 : i32
    %c0_i32_0 = arith.constant 0 : i32
    return %c0_i32 : i32
  }
  func.func @transform_5(%arg0: i32, %arg1: i32) -> i32 {
    %c0_i32 = arith.constant 0 : i32
    %c0_i32_0 = arith.constant 0 : i32
    return %c0_i32 : i32
  }
  func.func @transform_6(%arg0: i32, %arg1: i32) -> i32 {
    %c0_i32 = arith.constant 0 : i32
    %c0_i32_0 = arith.constant 0 : i32
    return %c0_i32 : i32
  }
  func.func @transform_7(%arg0: i32, %arg1: i32) -> i32 {
    %c0_i32 = arith.constant 0 : i32
    %c0_i32_0 = arith.constant 0 : i32
    return %c0_i32 : i32
  }
  func.func @transform_8(%arg0: i32, %arg1: i32) -> (i32, i32, i32, i32, i32) {
    %c0_i32 = arith.constant 0 : i32
    %c0_i32_0 = arith.constant 0 : i32
    %c0_i32_1 = arith.constant 0 : i32
    %c0_i32_2 = arith.constant 0 : i32
    return %arg0, %c0_i32, %arg1, %c0_i32_0, %c0_i32_1 : i32, i32, i32, i32, i32
  }
}

</mosaic_0001>

<llo_original>
// kernel: vn_basic_block_1d.3
$region0: #{vn_basic_block_1d.3}
  #allocation0 [shape = 'u32[]', space=smem, size = 0x4, offset = 0x4, fixed_abs, tag = 'smem constant byte address 0x4 - core index']
  #allocation1 [shape = 'u32[144,128]{1,0:T(1,128)}', space=vmem, size = 0x12000, scoped, tag = 'internal scratch']
  %s0 = inlined_call_operand.vmem [shape: f32[2,12,16,8,128], index: 0, kind: input, shape index: {}]
  %s1 = inlined_call_operand.vmem [shape: f32[4,4], index: 1, kind: input, shape index: {}]
  %s2 = inlined_call_operand.vmem [shape: f32[2,8,8,128], index: 2, kind: output, shape index: {}]
  %s3 = sld [smem:[#allocation0]]
  $region94: #{vn_basic_block_1d.3} parent=0
    _
  %s5 = ssub.s32 1, %s3
  %s6 = scalar_select 0, %s5, %s3
  $region1: #{vn_basic_block_1d.3} parent=0
    #allocation2 [shape = 'u8[786432]{0}', space=vmem, size = 0xc0000, scoped, tag = 'input window, operand 0']
    #allocation3 [shape = 'u8[2048]{0}', space=smem, size = 0x800, scoped, tag = 'input window, operand 1, single buffered']
    #allocation4 [shape = 's32[2]{0}', space=sflag, size = 0x8, scoped, tag = 'scoped memory for vn_basic_block_1d.3']
    %7 = vsyncpa [#allocation4], 0
    loop: start=0, step=1, limit=6
    $region2: #{vn_basic_block_1d.3} parent=1 // loop_pre_header
      _
    $region3: #{vn_basic_block_1d.3} parent=1 // loop_header
      %s9 = sphi 0, %s13
      %p10 = scmp.ge.s32.totalorder %s9, 6
      %s16 = sphi 0, %s28
      %s17 = sphi 0, %s24
      %s18 = sphi 0, %s16
      %s19 = sphi 0, %s17
      %s20 = sphi 0, %s18
      %s21 = sphi 0, %s19
      %s33 = sphi 0, %s35
      %s36 = sphi 0, %s33
      %s37 = sphi 0, %s36
      %s53 = sphi 0, %s37
      %s57 = sphi 0, %s57
      %s59 = sphi 0, %s57
      %s60 = sphi 0, %s59
      %s74 = sphi 0, %s60
      %s80 = sphi 0, %s82
      %s83 = sphi 0, %s80
      %s84 = sphi 0, %s83
      %s100 = sphi 0, %s84
    $region4: #{vn_basic_block_1d.3} parent=1 // loop_header_branch
      %12 = sbr.rel (%p10) target = $region8
    $region5: #{vn_basic_block_1d.3} parent=1 // loop_body
      %s14 = ssub.s32 %s9, 1
      %s15 = ssub.s32 %s9, 2
      %s22 = sadd.s32 1, %s17
      %p23 = scmp.ge.s32.totalorder %s22, 2
      %s24 = scalar_select %p23, 0, %s22
      %s25 = sadd.s32 1, %s16
      %s26 = scalar_select %p23, %s25, %s16
      %p27 = scmp.ge.s32.totalorder %s26, 2
      %s28 = scalar_select %p27, 0, %s26
      %s29 = ssub.s32 %s16, %s28
      %s30 = ssub.s32 %s17, %s24
      %s31 = sor.u32 %s29, %s30
      %p32 = scmp.eq.s32.totalorder %s31, 0
      %s34 = sadd.s32 %s33, 1
      %s35 = scalar_select %p32, %s33, %s34
      %p38 = pneg %p32
      %p39 = scmp.eq.s32.totalorder %s9, 3
      %p40 = por %p38, %p39
      %p41 = scmp.ne.s32.totalorder %s33, %s36
      %p42 = scmp.eq.s32.totalorder %s9, 0
      %p43 = por %p41, %p42
      %p44 = scmp.ne.s32.totalorder %s33, %s36
      %p45 = scmp.eq.s32.totalorder %s14, 3
      %p46 = por %p44, %p45
      %p47 = scmp.ne.s32.totalorder %s36, %s37
      %p48 = scmp.eq.s32.totalorder %s14, 0
      %p49 = por %p47, %p48
      %p50 = scmp.ne.s32.totalorder %s36, %s37
      %p51 = scmp.eq.s32.totalorder %s15, 3
      %p52 = por %p50, %p51
      %p54 = scmp.ne.s32.totalorder %s37, %s53
      %p55 = scmp.eq.s32.totalorder %s15, 0
      %p56 = por %p54, %p55
      %s58 = sadd.s32 %s57, 1
      %p61 = scmp.eq.s32.totalorder %s9, 3
      %p62 = scmp.ne.s32.totalorder %s57, %s59
      %p63 = scmp.eq.s32.totalorder %s9, 0
      %p64 = por %p62, %p63
      %p65 = scmp.ne.s32.totalorder %s57, %s59
      %p66 = scmp.eq.s32.totalorder %s14, 3
      %p67 = por %p65, %p66
      %p68 = scmp.ne.s32.totalorder %s59, %s60
      %p69 = scmp.eq.s32.totalorder %s14, 0
      %p70 = por %p68, %p69
      %p71 = scmp.ne.s32.totalorder %s59, %s60
      %p72 = scmp.eq.s32.totalorder %s15, 3
      %p73 = por %p71, %p72
      %p75 = scmp.ne.s32.totalorder %s60, %s74
      %p76 = scmp.eq.s32.totalorder %s15, 0
      %p77 = por %p75, %p76
      %s78 = ssub.s32 %s16, %s28
      %p79 = scmp.eq.s32.totalorder %s78, 0
      %s81 = sadd.s32 %s80, 1
      %s82 = scalar_select %p79, %s80, %s81
      %p85 = pneg %p79
      %p86 = scmp.eq.s32.totalorder %s9, 3
      %p87 = por %p85, %p86
      %p88 = scmp.ne.s32.totalorder %s80, %s83
      %p89 = scmp.eq.s32.totalorder %s9, 0
      %p90 = por %p88, %p89
      %p91 = scmp.ne.s32.totalorder %s80, %s83
      %p92 = scmp.eq.s32.totalorder %s14, 3
      %p93 = por %p91, %p92
      %p94 = scmp.ne.s32.totalorder %s83, %s84
      %p95 = scmp.eq.s32.totalorder %s14, 0
      %p96 = por %p94, %p95
      %p97 = scmp.ne.s32.totalorder %s83, %s84
      %p98 = scmp.eq.s32.totalorder %s15, 3
      %p99 = por %p97, %p98
      %p101 = scmp.ne.s32.totalorder %s84, %s100
      %p102 = scmp.eq.s32.totalorder %s15, 0
      %p103 = por %p101, %p102
      %p104 = scmp.le.s32.totalorder 1, %s9
      %p105 = scmp.lt.s32.totalorder %s9, 5
      %p106 = pnand %p104, %p105
      %p107 = pneg %p106
      // Predicated region
      $region9: #{vn_basic_block_1d.3} parent=5 // pred_check
        _
      $region10: #{vn_basic_block_1d.3} parent=5 // pred_check_branch
        %109 = sbr.rel (%p106) target = $region12
      $region11: #{vn_basic_block_1d.3} parent=5 // pred_region
        %s110 = ssub.s32 %s9, 1
        // Predicated region
        $region13: #{vn_basic_block_1d.3} parent=11 // pred_check
          %p111 = pneg %p70
        $region14: #{vn_basic_block_1d.3} parent=11 // pred_check_branch
          %113 = sbr.rel (%p111) target = $region16
        $region15: #{vn_basic_block_1d.3} parent=11 // pred_region
          %s115 = ssub.s32 64, 64
          %116 = vsyncadd [#allocation4], %s115
          %s118 = sshll.u32 %s1, 4
          %s119 = int_to_ptr.vmem [resolvable:$true] %s118
          %121 = dma.vmem_to_smem %s119, 64, [#allocation3], [#allocation4]
        $region16: #{vn_basic_block_1d.3} parent=11 // pred_fallthru
          _
      $region12: #{vn_basic_block_1d.3} parent=5 // pred_fallthru
        _
      %p122 = scmp.lt.s32.totalorder %s9, 4
      // Predicated region
      $region17: #{vn_basic_block_1d.3} parent=5 // pred_check
        %p123 = pneg %p122
      $region18: #{vn_basic_block_1d.3} parent=5 // pred_check_branch
        %125 = sbr.rel (%p123) target = $region20
      $region19: #{vn_basic_block_1d.3} parent=5 // pred_region
        // Predicated region
        $region21: #{vn_basic_block_1d.3} parent=19 // pred_check
          %p126 = pneg %p43
        $region22: #{vn_basic_block_1d.3} parent=19 // pred_check_branch
          %128 = sbr.rel (%p126) target = $region24
        $region23: #{vn_basic_block_1d.3} parent=19 // pred_region
          %s129 = sand.u32 %s33, 1
          %s130 = sand.u32 %s33, 1
          %s131 = smul.addr %s130, 768
          %s132 = scalar_lea.vmem [#allocation2], %s131
          %s133 = smul.u32 8, %s17
          %s134 = smul.addr %s16, 192
          %s135 = sadd.s32 %s133, %s134
          %s136 = smul.addr %s135, 8
          %s137 = scalar_lea.vmem %s0, %s136
          // Predicated region
          $region25: #{vn_basic_block_1d.3} parent=23 // pred_check
            _
          $region26: #{vn_basic_block_1d.3} parent=23 // pred_check_branch
            %139 = sbr.rel (0) target = $region28
          $region27: #{vn_basic_block_1d.3} parent=23 // pred_region
            // Predicated region
            $region29: #{vn_basic_block_1d.3} parent=27 // pred_check
              _
            $region30: #{vn_basic_block_1d.3} parent=27 // pred_check_branch
              %141 = sbr.rel (0) target = $region32
            $region31: #{vn_basic_block_1d.3} parent=27 // pred_region
              // Predicated region
              $region44: #{vn_basic_block_1d.3} parent=31 // pred_check
                _
              $region45: #{vn_basic_block_1d.3} parent=31 // pred_check_branch
                %347 = sbr.rel (0) target = $region47
              $region46: #{vn_basic_block_1d.3} parent=31 // pred_region
                loop: start=0, step=1, limit=1
                $region48: #{vn_basic_block_1d.3} parent=46 // loop_pre_header
                  _
                $region49: #{vn_basic_block_1d.3} parent=46 // loop_header
                  %s349 = sphi 0, %s353
                  %p350 = scmp.ge.s32.totalorder %s349, 1
                  %s354 = sphi %s137, %s137
                  %s355 = sphi %s132, %s132
                $region50: #{vn_basic_block_1d.3} parent=46 // loop_header_branch
                  %352 = sbr.rel (%p350) target = $region54
                $region51: #{vn_basic_block_1d.3} parent=46 // loop_body
                  %v356 = vld [vmem:[%s354] sm:$0xff]
                  %357 = vst [vmem:[%s355] sm:$0xff] %v356
                  %v358 = vld [vmem:[%s354 + $0x8] sm:$0xff]
                  %359 = vst [vmem:[%s355 + $0x8] sm:$0xff] %v358
                  %v360 = vld [vmem:[%s354 + $0x10] sm:$0xff]
                  %361 = vst [vmem:[%s355 + $0x10] sm:$0xff] %v360
                  %v362 = vld [vmem:[%s354 + $0x18] sm:$0xff]
                  %363 = vst [vmem:[%s355 + $0x18] sm:$0xff] %v362
                  %v364 = vld [vmem:[%s354 + $0x20] sm:$0xff]
                  %365 = vst [vmem:[%s355 + $0x20] sm:$0xff] %v364
                  %v366 = vld [vmem:[%s354 + $0x28] sm:$0xff]
                  %367 = vst [vmem:[%s355 + $0x28] sm:$0xff] %v366
                  %v368 = vld [vmem:[%s354 + $0x30] sm:$0xff]
                  %369 = vst [vmem:[%s355 + $0x30] sm:$0xff] %v368
                  %v370 = vld [vmem:[%s354 + $0x38] sm:$0xff]
                  %371 = vst [vmem:[%s355 + $0x38] sm:$0xff] %v370
                  %v372 = vld [vmem:[%s354 + $0x80] sm:$0xff]
                  %373 = vst [vmem:[%s355 + $0x40] sm:$0xff] %v372
                  %v374 = vld [vmem:[%s354 + $0x88] sm:$0xff]
                  %375 = vst [vmem:[%s355 + $0x48] sm:$0xff] %v374
                  %v376 = vld [vmem:[%s354 + $0x90] sm:$0xff]
                  %377 = vst [vmem:[%s355 + $0x50] sm:$0xff] %v376
                  %v378 = vld [vmem:[%s354 + $0x98] sm:$0xff]
                  %379 = vst [vmem:[%s355 + $0x58] sm:$0xff] %v378
                  %v380 = vld [vmem:[%s354 + $0xa0] sm:$0xff]
                  %381 = vst [vmem:[%s355 + $0x60] sm:$0xff] %v380
                  %v382 = vld [vmem:[%s354 + $0xa8] sm:$0xff]
                  %383 = vst [vmem:[%s355 + $0x68] sm:$0xff] %v382
                  %v384 = vld [vmem:[%s354 + $0xb0] sm:$0xff]
                  %385 = vst [vmem:[%s355 + $0x70] sm:$0xff] %v384
                  %v386 = vld [vmem:[%s354 + $0xb8] sm:$0xff]
                  %387 = vst [vmem:[%s355 + $0x78] sm:$0xff] %v386
                  %v388 = vld [vmem:[%s354 + $0x100] sm:$0xff]
                  %389 = vst [vmem:[%s355 + $0x80] sm:$0xff] %v388
                  %v390 = vld [vmem:[%s354 + $0x108] sm:$0xff]
                  %391 = vst [vmem:[%s355 + $0x88] sm:$0xff] %v390
                  %v392 = vld [vmem:[%s354 + $0x110] sm:$0xff]
                  %393 = vst [vmem:[%s355 + $0x90] sm:$0xff] %v392
                  %v394 = vld [vmem:[%s354 + $0x118] sm:$0xff]
                  %395 = vst [vmem:[%s355 + $0x98] sm:$0xff] %v394
                  %v396 = vld [vmem:[%s354 + $0x120] sm:$0xff]
                  %397 = vst [vmem:[%s355 + $0xa0] sm:$0xff] %v396
                  %v398 = vld [vmem:[%s354 + $0x128] sm:$0xff]
                  %399 = vst [vmem:[%s355 + $0xa8] sm:$0xff] %v398
                  %v400 = vld [vmem:[%s354 + $0x130] sm:$0xff]
                  %401 = vst [vmem:[%s355 + $0xb0] sm:$0xff] %v400
                  %v402 = vld [vmem:[%s354 + $0x138] sm:$0xff]
                  %403 = vst [vmem:[%s355 + $0xb8] sm:$0xff] %v402
                  %v404 = vld [vmem:[%s354 + $0x180] sm:$0xff]
                  %405 = vst [vmem:[%s355 + $0xc0] sm:$0xff] %v404
                  %v406 = vld [vmem:[%s354 + $0x188] sm:$0xff]
                  %407 = vst [vmem:[%s355 + $0xc8] sm:$0xff] %v406
                  %v408 = vld [vmem:[%s354 + $0x190] sm:$0xff]
                  %409 = vst [vmem:[%s355 + $0xd0] sm:$0xff] %v408
                  %v410 = vld [vmem:[%s354 + $0x198] sm:$0xff]
                  %411 = vst [vmem:[%s355 + $0xd8] sm:$0xff] %v410
                  %v412 = vld [vmem:[%s354 + $0x1a0] sm:$0xff]
                  %413 = vst [vmem:[%s355 + $0xe0] sm:$0xff] %v412
                  %v414 = vld [vmem:[%s354 + $0x1a8] sm:$0xff]
                  %415 = vst [vmem:[%s355 + $0xe8] sm:$0xff] %v414
                  %v416 = vld [vmem:[%s354 + $0x1b0] sm:$0xff]
                  %417 = vst [vmem:[%s355 + $0xf0] sm:$0xff] %v416
                  %v418 = vld [vmem:[%s354 + $0x1b8] sm:$0xff]
                  %419 = vst [vmem:[%s355 + $0xf8] sm:$0xff] %v418
                  %v420 = vld [vmem:[%s354 + $0x200] sm:$0xff]
                  %421 = vst [vmem:[%s355 + $0x100] sm:$0xff] %v420
                  %v422 = vld [vmem:[%s354 + $0x208] sm:$0xff]
                  %423 = vst [vmem:[%s355 + $0x108] sm:$0xff] %v422
                  %v424 = vld [vmem:[%s354 + $0x210] sm:$0xff]
                  %425 = vst [vmem:[%s355 + $0x110] sm:$0xff] %v424
                  %v426 = vld [vmem:[%s354 + $0x218] sm:$0xff]
                  %427 = vst [vmem:[%s355 + $0x118] sm:$0xff] %v426
                  %v428 = vld [vmem:[%s354 + $0x220] sm:$0xff]
                  %429 = vst [vmem:[%s355 + $0x120] sm:$0xff] %v428
                  %v430 = vld [vmem:[%s354 + $0x228] sm:$0xff]
                  %431 = vst [vmem:[%s355 + $0x128] sm:$0xff] %v430
                  %v432 = vld [vmem:[%s354 + $0x230] sm:$0xff]
                  %433 = vst [vmem:[%s355 + $0x130] sm:$0xff] %v432
                  %v434 = vld [vmem:[%s354 + $0x238] sm:$0xff]
                  %435 = vst [vmem:[%s355 + $0x138] sm:$0xff] %v434
                  %v436 = vld [vmem:[%s354 + $0x280] sm:$0xff]
                  %437 = vst [vmem:[%s355 + $0x140] sm:$0xff] %v436
                  %v438 = vld [vmem:[%s354 + $0x288] sm:$0xff]
                  %439 = vst [vmem:[%s355 + $0x148] sm:$0xff] %v438
                  %v440 = vld [vmem:[%s354 + $0x290] sm:$0xff]
                  %441 = vst [vmem:[%s355 + $0x150] sm:$0xff] %v440
                  %v442 = vld [vmem:[%s354 + $0x298] sm:$0xff]
                  %443 = vst [vmem:[%s355 + $0x158] sm:$0xff] %v442
                  %v444 = vld [vmem:[%s354 + $0x2a0] sm:$0xff]
                  %445 = vst [vmem:[%s355 + $0x160] sm:$0xff] %v444
                  %v446 = vld [vmem:[%s354 + $0x2a8] sm:$0xff]
                  %447 = vst [vmem:[%s355 + $0x168] sm:$0xff] %v446
                  %v448 = vld [vmem:[%s354 + $0x2b0] sm:$0xff]
                  %449 = vst [vmem:[%s355 + $0x170] sm:$0xff] %v448
                  %v450 = vld [vmem:[%s354 + $0x2b8] sm:$0xff]
                  %451 = vst [vmem:[%s355 + $0x178] sm:$0xff] %v450
                  %v452 = vld [vmem:[%s354 + $0x300] sm:$0xff]
                  %453 = vst [vmem:[%s355 + $0x180] sm:$0xff] %v452
                  %v454 = vld [vmem:[%s354 + $0x308] sm:$0xff]
                  %455 = vst [vmem:[%s355 + $0x188] sm:$0xff] %v454
                  %v456 = vld [vmem:[%s354 + $0x310] sm:$0xff]
                  %457 = vst [vmem:[%s355 + $0x190] sm:$0xff] %v456
                  %v458 = vld [vmem:[%s354 + $0x318] sm:$0xff]
                  %459 = vst [vmem:[%s355 + $0x198] sm:$0xff] %v458
                  %v460 = vld [vmem:[%s354 + $0x320] sm:$0xff]
                  %461 = vst [vmem:[%s355 + $0x1a0] sm:$0xff] %v460
                  %v462 = vld [vmem:[%s354 + $0x328] sm:$0xff]
                  %463 = vst [vmem:[%s355 + $0x1a8] sm:$0xff] %v462
                  %v464 = vld [vmem:[%s354 + $0x330] sm:$0xff]
                  %465 = vst [vmem:[%s355 + $0x1b0] sm:$0xff] %v464
                  %v466 = vld [vmem:[%s354 + $0x338] sm:$0xff]
                  %467 = vst [vmem:[%s355 + $0x1b8] sm:$0xff] %v466
                  %v468 = vld [vmem:[%s354 + $0x380] sm:$0xff]
                  %469 = vst [vmem:[%s355 + $0x1c0] sm:$0xff] %v468
                  %v470 = vld [vmem:[%s354 + $0x388] sm:$0xff]
                  %471 = vst [vmem:[%s355 + $0x1c8] sm:$0xff] %v470
                  %v472 = vld [vmem:[%s354 + $0x390] sm:$0xff]
                  %473 = vst [vmem:[%s355 + $0x1d0] sm:$0xff] %v472
                  %v474 = vld [vmem:[%s354 + $0x398] sm:$0xff]
                  %475 = vst [vmem:[%s355 + $0x1d8] sm:$0xff] %v474
                  %v476 = vld [vmem:[%s354 + $0x3a0] sm:$0xff]
                  %477 = vst [vmem:[%s355 + $0x1e0] sm:$0xff] %v476
                  %v478 = vld [vmem:[%s354 + $0x3a8] sm:$0xff]
                  %479 = vst [vmem:[%s355 + $0x1e8] sm:$0xff] %v478
                  %v480 = vld [vmem:[%s354 + $0x3b0] sm:$0xff]
                  %481 = vst [vmem:[%s355 + $0x1f0] sm:$0xff] %v480
                  %v482 = vld [vmem:[%s354 + $0x3b8] sm:$0xff]
                  %483 = vst [vmem:[%s355 + $0x1f8] sm:$0xff] %v482
                  %v484 = vld [vmem:[%s354 + $0x400] sm:$0xff]
                  %485 = vst [vmem:[%s355 + $0x200] sm:$0xff] %v484
                  %v486 = vld [vmem:[%s354 + $0x408] sm:$0xff]
                  %487 = vst [vmem:[%s355 + $0x208] sm:$0xff] %v486
                  %v488 = vld [vmem:[%s354 + $0x410] sm:$0xff]
                  %489 = vst [vmem:[%s355 + $0x210] sm:$0xff] %v488
                  %v490 = vld [vmem:[%s354 + $0x418] sm:$0xff]
                  %491 = vst [vmem:[%s355 + $0x218] sm:$0xff] %v490
                  %v492 = vld [vmem:[%s354 + $0x420] sm:$0xff]
                  %493 = vst [vmem:[%s355 + $0x220] sm:$0xff] %v492
                  %v494 = vld [vmem:[%s354 + $0x428] sm:$0xff]
                  %495 = vst [vmem:[%s355 + $0x228] sm:$0xff] %v494
                  %v496 = vld [vmem:[%s354 + $0x430] sm:$0xff]
                  %497 = vst [vmem:[%s355 + $0x230] sm:$0xff] %v496
                  %v498 = vld [vmem:[%s354 + $0x438] sm:$0xff]
                  %499 = vst [vmem:[%s355 + $0x238] sm:$0xff] %v498
                  %v500 = vld [vmem:[%s354 + $0x480] sm:$0xff]
                  %501 = vst [vmem:[%s355 + $0x240] sm:$0xff] %v500
                  %v502 = vld [vmem:[%s354 + $0x488] sm:$0xff]
                  %503 = vst [vmem:[%s355 + $0x248] sm:$0xff] %v502
                  %v504 = vld [vmem:[%s354 + $0x490] sm:$0xff]
                  %505 = vst [vmem:[%s355 + $0x250] sm:$0xff] %v504
                  %v506 = vld [vmem:[%s354 + $0x498] sm:$0xff]
                  %507 = vst [vmem:[%s355 + $0x258] sm:$0xff] %v506
                  %v508 = vld [vmem:[%s354 + $0x4a0] sm:$0xff]
                  %509 = vst [vmem:[%s355 + $0x260] sm:$0xff] %v508
                  %v510 = vld [vmem:[%s354 + $0x4a8] sm:$0xff]
                  %511 = vst [vmem:[%s355 + $0x268] sm:$0xff] %v510
                  %v512 = vld [vmem:[%s354 + $0x4b0] sm:$0xff]
                  %513 = vst [vmem:[%s355 + $0x270] sm:$0xff] %v512
                  %v514 = vld [vmem:[%s354 + $0x4b8] sm:$0xff]
                  %515 = vst [vmem:[%s355 + $0x278] sm:$0xff] %v514
                  %v516 = vld [vmem:[%s354 + $0x500] sm:$0xff]
                  %517 = vst [vmem:[%s355 + $0x280] sm:$0xff] %v516
                  %v518 = vld [vmem:[%s354 + $0x508] sm:$0xff]
                  %519 = vst [vmem:[%s355 + $0x288] sm:$0xff] %v518
                  %v520 = vld [vmem:[%s354 + $0x510] sm:$0xff]
                  %521 = vst [vmem:[%s355 + $0x290] sm:$0xff] %v520
                  %v522 = vld [vmem:[%s354 + $0x518] sm:$0xff]
                  %523 = vst [vmem:[%s355 + $0x298] sm:$0xff] %v522
                  %v524 = vld [vmem:[%s354 + $0x520] sm:$0xff]
                  %525 = vst [vmem:[%s355 + $0x2a0] sm:$0xff] %v524
                  %v526 = vld [vmem:[%s354 + $0x528] sm:$0xff]
                  %527 = vst [vmem:[%s355 + $0x2a8] sm:$0xff] %v526
                  %v528 = vld [vmem:[%s354 + $0x530] sm:$0xff]
                  %529 = vst [vmem:[%s355 + $0x2b0] sm:$0xff] %v528
                  %v530 = vld [vmem:[%s354 + $0x538] sm:$0xff]
                  %531 = vst [vmem:[%s355 + $0x2b8] sm:$0xff] %v530
                  %v532 = vld [vmem:[%s354 + $0x580] sm:$0xff]
                  %533 = vst [vmem:[%s355 + $0x2c0] sm:$0xff] %v532
                  %v534 = vld [vmem:[%s354 + $0x588] sm:$0xff]
                  %535 = vst [vmem:[%s355 + $0x2c8] sm:$0xff] %v534
                  %v536 = vld [vmem:[%s354 + $0x590] sm:$0xff]
                  %537 = vst [vmem:[%s355 + $0x2d0] sm:$0xff] %v536
                  %v538 = vld [vmem:[%s354 + $0x598] sm:$0xff]
                  %539 = vst [vmem:[%s355 + $0x2d8] sm:$0xff] %v538
                  %v540 = vld [vmem:[%s354 + $0x5a0] sm:$0xff]
                  %541 = vst [vmem:[%s355 + $0x2e0] sm:$0xff] %v540
                  %v542 = vld [vmem:[%s354 + $0x5a8] sm:$0xff]
                  %543 = vst [vmem:[%s355 + $0x2e8] sm:$0xff] %v542
                  %v544 = vld [vmem:[%s354 + $0x5b0] sm:$0xff]
                  %545 = vst [vmem:[%s355 + $0x2f0] sm:$0xff] %v544
                  %v546 = vld [vmem:[%s354 + $0x5b8] sm:$0xff]
                  %547 = vst [vmem:[%s355 + $0x2f8] sm:$0xff] %v546
                $region52: #{vn_basic_block_1d.3} parent=46 // loop_footer
                  %s353 = sadd.s32 1, %s349
                $region53: #{vn_basic_block_1d.3} parent=46 // loop_footer_branch
                  %348 = sbr.rel target = $region49
                $region54: #{vn_basic_block_1d.3} parent=46 // loop_exit
                  _
              $region47: #{vn_basic_block_1d.3} parent=31 // pred_fallthru
                _
              // Predicated region
              $region55: #{vn_basic_block_1d.3} parent=31 // pred_check
                _
              $region56: #{vn_basic_block_1d.3} parent=31 // pred_check_branch
                %549 = sbr.rel target = $region58
              $region57: #{vn_basic_block_1d.3} parent=31 // pred_region
                _
              $region58: #{vn_basic_block_1d.3} parent=31 // pred_fallthru
                _
            $region32: #{vn_basic_block_1d.3} parent=27 // pred_fallthru
              _
            // Predicated region
            $region33: #{vn_basic_block_1d.3} parent=27 // pred_check
              _
            $region34: #{vn_basic_block_1d.3} parent=27 // pred_check_branch
              %143 = sbr.rel target = $region36
            $region35: #{vn_basic_block_1d.3} parent=27 // pred_region
              %s145 = ssub.s32 256, 1
              loop: start=0, step=1, limit=1
              $region37: #{vn_basic_block_1d.3} parent=35 // loop_pre_header
                _
              $region38: #{vn_basic_block_1d.3} parent=35 // loop_header
                %s147 = sphi 0, %s151
                %p148 = scmp.ge.s32.totalorder %s147, 1
                %s152 = sphi %s137, %s137
                %s153 = sphi %s132, %s132
              $region39: #{vn_basic_block_1d.3} parent=35 // loop_header_branch
                %150 = sbr.rel (%p148) target = $region43
              $region40: #{vn_basic_block_1d.3} parent=35 // loop_body
                %v154 = vld [vmem:[%s152] sm:%s145]
                %155 = vst [vmem:[%s153] sm:%s145] %v154
                %v156 = vld [vmem:[%s152 + $0x8] sm:%s145]
                %157 = vst [vmem:[%s153 + $0x8] sm:%s145] %v156
                %v158 = vld [vmem:[%s152 + $0x10] sm:%s145]
                %159 = vst [vmem:[%s153 + $0x10] sm:%s145] %v158
                %v160 = vld [vmem:[%s152 + $0x18] sm:%s145]
                %161 = vst [vmem:[%s153 + $0x18] sm:%s145] %v160
                %v162 = vld [vmem:[%s152 + $0x20] sm:%s145]
                %163 = vst [vmem:[%s153 + $0x20] sm:%s145] %v162
                %v164 = vld [vmem:[%s152 + $0x28] sm:%s145]
                %165 = vst [vmem:[%s153 + $0x28] sm:%s145] %v164
                %v166 = vld [vmem:[%s152 + $0x30] sm:%s145]
                %167 = vst [vmem:[%s153 + $0x30] sm:%s145] %v166
                %v168 = vld [vmem:[%s152 + $0x38] sm:%s145]
                %169 = vst [vmem:[%s153 + $0x38] sm:%s145] %v168
                %v170 = vld [vmem:[%s152 + $0x80] sm:%s145]
                %171 = vst [vmem:[%s153 + $0x40] sm:%s145] %v170
                %v172 = vld [vmem:[%s152 + $0x88] sm:%s145]
                %173 = vst [vmem:[%s153 + $0x48] sm:%s145] %v172
                %v174 = vld [vmem:[%s152 + $0x90] sm:%s145]
                %175 = vst [vmem:[%s153 + $0x50] sm:%s145] %v174
                %v176 = vld [vmem:[%s152 + $0x98] sm:%s145]
                %177 = vst [vmem:[%s153 + $0x58] sm:%s145] %v176
                %v178 = vld [vmem:[%s152 + $0xa0] sm:%s145]
                %179 = vst [vmem:[%s153 + $0x60] sm:%s145] %v178
                %v180 = vld [vmem:[%s152 + $0xa8] sm:%s145]
                %181 = vst [vmem:[%s153 + $0x68] sm:%s145] %v180
                %v182 = vld [vmem:[%s152 + $0xb0] sm:%s145]
                %183 = vst [vmem:[%s153 + $0x70] sm:%s145] %v182
                %v184 = vld [vmem:[%s152 + $0xb8] sm:%s145]
                %185 = vst [vmem:[%s153 + $0x78] sm:%s145] %v184
                %v186 = vld [vmem:[%s152 + $0x100] sm:%s145]
                %187 = vst [vmem:[%s153 + $0x80] sm:%s145] %v186
                %v188 = vld [vmem:[%s152 + $0x108] sm:%s145]
                %189 = vst [vmem:[%s153 + $0x88] sm:%s145] %v188
                %v190 = vld [vmem:[%s152 + $0x110] sm:%s145]
                %191 = vst [vmem:[%s153 + $0x90] sm:%s145] %v190
                %v192 = vld [vmem:[%s152 + $0x118] sm:%s145]
                %193 = vst [vmem:[%s153 + $0x98] sm:%s145] %v192
                %v194 = vld [vmem:[%s152 + $0x120] sm:%s145]
                %195 = vst [vmem:[%s153 + $0xa0] sm:%s145] %v194
                %v196 = vld [vmem:[%s152 + $0x128] sm:%s145]
                %197 = vst [vmem:[%s153 + $0xa8] sm:%s145] %v196
                %v198 = vld [vmem:[%s152 + $0x130] sm:%s145]
                %199 = vst [vmem:[%s153 + $0xb0] sm:%s145] %v198
                %v200 = vld [vmem:[%s152 + $0x138] sm:%s145]
                %201 = vst [vmem:[%s153 + $0xb8] sm:%s145] %v200
                %v202 = vld [vmem:[%s152 + $0x180] sm:%s145]
                %203 = vst [vmem:[%s153 + $0xc0] sm:%s145] %v202
                %v204 = vld [vmem:[%s152 + $0x188] sm:%s145]
                %205 = vst [vmem:[%s153 + $0xc8] sm:%s145] %v204
                %v206 = vld [vmem:[%s152 + $0x190] sm:%s145]
                %207 = vst [vmem:[%s153 + $0xd0] sm:%s145] %v206
                %v208 = vld [vmem:[%s152 + $0x198] sm:%s145]
                %209 = vst [vmem:[%s153 + $0xd8] sm:%s145] %v208
                %v210 = vld [vmem:[%s152 + $0x1a0] sm:%s145]
                %211 = vst [vmem:[%s153 + $0xe0] sm:%s145] %v210
                %v212 = vld [vmem:[%s152 + $0x1a8] sm:%s145]
                %213 = vst [vmem:[%s153 + $0xe8] sm:%s145] %v212
                %v214 = vld [vmem:[%s152 + $0x1b0] sm:%s145]
                %215 = vst [vmem:[%s153 + $0xf0] sm:%s145] %v214
                %v216 = vld [vmem:[%s152 + $0x1b8] sm:%s145]
                %217 = vst [vmem:[%s153 + $0xf8] sm:%s145] %v216
                %v218 = vld [vmem:[%s152 + $0x200] sm:%s145]
                %219 = vst [vmem:[%s153 + $0x100] sm:%s145] %v218
                %v220 = vld [vmem:[%s152 + $0x208] sm:%s145]
                %221 = vst [vmem:[%s153 + $0x108] sm:%s145] %v220
                %v222 = vld [vmem:[%s152 + $0x210] sm:%s145]
                %223 = vst [vmem:[%s153 + $0x110] sm:%s145] %v222
                %v224 = vld [vmem:[%s152 + $0x218] sm:%s145]
                %225 = vst [vmem:[%s153 + $0x118] sm:%s145] %v224
                %v226 = vld [vmem:[%s152 + $0x220] sm:%s145]
                %227 = vst [vmem:[%s153 + $0x120] sm:%s145] %v226
                %v228 = vld [vmem:[%s152 + $0x228] sm:%s145]
                %229 = vst [vmem:[%s153 + $0x128] sm:%s145] %v228
                %v230 = vld [vmem:[%s152 + $0x230] sm:%s145]
                %231 = vst [vmem:[%s153 + $0x130] sm:%s145] %v230
                %v232 = vld [vmem:[%s152 + $0x238] sm:%s145]
                %233 = vst [vmem:[%s153 + $0x138] sm:%s145] %v232
                %v234 = vld [vmem:[%s152 + $0x280] sm:%s145]
                %235 = vst [vmem:[%s153 + $0x140] sm:%s145] %v234
                %v236 = vld [vmem:[%s152 + $0x288] sm:%s145]
                %237 = vst [vmem:[%s153 + $0x148] sm:%s145] %v236
                %v238 = vld [vmem:[%s152 + $0x290] sm:%s145]
                %239 = vst [vmem:[%s153 + $0x150] sm:%s145] %v238
                %v240 = vld [vmem:[%s152 + $0x298] sm:%s145]
                %241 = vst [vmem:[%s153 + $0x158] sm:%s145] %v240
                %v242 = vld [vmem:[%s152 + $0x2a0] sm:%s145]
                %243 = vst [vmem:[%s153 + $0x160] sm:%s145] %v242
                %v244 = vld [vmem:[%s152 + $0x2a8] sm:%s145]
                %245 = vst [vmem:[%s153 + $0x168] sm:%s145] %v244
                %v246 = vld [vmem:[%s152 + $0x2b0] sm:%s145]
                %247 = vst [vmem:[%s153 + $0x170] sm:%s145] %v246
                %v248 = vld [vmem:[%s152 + $0x2b8] sm:%s145]
                %249 = vst [vmem:[%s153 + $0x178] sm:%s145] %v248
                %v250 = vld [vmem:[%s152 + $0x300] sm:%s145]
                %251 = vst [vmem:[%s153 + $0x180] sm:%s145] %v250
                %v252 = vld [vmem:[%s152 + $0x308] sm:%s145]
                %253 = vst [vmem:[%s153 + $0x188] sm:%s145] %v252
                %v254 = vld [vmem:[%s152 + $0x310] sm:%s145]
                %255 = vst [vmem:[%s153 + $0x190] sm:%s145] %v254
                %v256 = vld [vmem:[%s152 + $0x318] sm:%s145]
                %257 = vst [vmem:[%s153 + $0x198] sm:%s145] %v256
                %v258 = vld [vmem:[%s152 + $0x320] sm:%s145]
                %259 = vst [vmem:[%s153 + $0x1a0] sm:%s145] %v258
                %v260 = vld [vmem:[%s152 + $0x328] sm:%s145]
                %261 = vst [vmem:[%s153 + $0x1a8] sm:%s145] %v260
                %v262 = vld [vmem:[%s152 + $0x330] sm:%s145]
                %263 = vst [vmem:[%s153 + $0x1b0] sm:%s145] %v262
                %v264 = vld [vmem:[%s152 + $0x338] sm:%s145]
                %265 = vst [vmem:[%s153 + $0x1b8] sm:%s145] %v264
                %v266 = vld [vmem:[%s152 + $0x380] sm:%s145]
                %267 = vst [vmem:[%s153 + $0x1c0] sm:%s145] %v266
                %v268 = vld [vmem:[%s152 + $0x388] sm:%s145]
                %269 = vst [vmem:[%s153 + $0x1c8] sm:%s145] %v268
                %v270 = vld [vmem:[%s152 + $0x390] sm:%s145]
                %271 = vst [vmem:[%s153 + $0x1d0] sm:%s145] %v270
                %v272 = vld [vmem:[%s152 + $0x398] sm:%s145]
                %273 = vst [vmem:[%s153 + $0x1d8] sm:%s145] %v272
                %v274 = vld [vmem:[%s152 + $0x3a0] sm:%s145]
                %275 = vst [vmem:[%s153 + $0x1e0] sm:%s145] %v274
                %v276 = vld [vmem:[%s152 + $0x3a8] sm:%s145]
                %277 = vst [vmem:[%s153 + $0x1e8] sm:%s145] %v276
                %v278 = vld [vmem:[%s152 + $0x3b0] sm:%s145]
                %279 = vst [vmem:[%s153 + $0x1f0] sm:%s145] %v278
                %v280 = vld [vmem:[%s152 + $0x3b8] sm:%s145]
                %281 = vst [vmem:[%s153 + $0x1f8] sm:%s145] %v280
                %v282 = vld [vmem:[%s152 + $0x400] sm:%s145]
                %283 = vst [vmem:[%s153 + $0x200] sm:%s145] %v282
                %v284 = vld [vmem:[%s152 + $0x408] sm:%s145]
                %285 = vst [vmem:[%s153 + $0x208] sm:%s145] %v284
                %v286 = vld [vmem:[%s152 + $0x410] sm:%s145]
                %287 = vst [vmem:[%s153 + $0x210] sm:%s145] %v286
                %v288 = vld [vmem:[%s152 + $0x418] sm:%s145]
                %289 = vst [vmem:[%s153 + $0x218] sm:%s145] %v288
                %v290 = vld [vmem:[%s152 + $0x420] sm:%s145]
                %291 = vst [vmem:[%s153 + $0x220] sm:%s145] %v290
                %v292 = vld [vmem:[%s152 + $0x428] sm:%s145]
                %293 = vst [vmem:[%s153 + $0x228] sm:%s145] %v292
                %v294 = vld [vmem:[%s152 + $0x430] sm:%s145]
                %295 = vst [vmem:[%s153 + $0x230] sm:%s145] %v294
                %v296 = vld [vmem:[%s152 + $0x438] sm:%s145]
                %297 = vst [vmem:[%s153 + $0x238] sm:%s145] %v296
                %v298 = vld [vmem:[%s152 + $0x480] sm:%s145]
                %299 = vst [vmem:[%s153 + $0x240] sm:%s145] %v298
                %v300 = vld [vmem:[%s152 + $0x488] sm:%s145]
                %301 = vst [vmem:[%s153 + $0x248] sm:%s145] %v300
                %v302 = vld [vmem:[%s152 + $0x490] sm:%s145]
                %303 = vst [vmem:[%s153 + $0x250] sm:%s145] %v302
                %v304 = vld [vmem:[%s152 + $0x498] sm:%s145]
                %305 = vst [vmem:[%s153 + $0x258] sm:%s145] %v304
                %v306 = vld [vmem:[%s152 + $0x4a0] sm:%s145]
                %307 = vst [vmem:[%s153 + $0x260] sm:%s145] %v306
                %v308 = vld [vmem:[%s152 + $0x4a8] sm:%s145]
                %309 = vst [vmem:[%s153 + $0x268] sm:%s145] %v308
                %v310 = vld [vmem:[%s152 + $0x4b0] sm:%s145]
                %311 = vst [vmem:[%s153 + $0x270] sm:%s145] %v310
                %v312 = vld [vmem:[%s152 + $0x4b8] sm:%s145]
                %313 = vst [vmem:[%s153 + $0x278] sm:%s145] %v312
                %v314 = vld [vmem:[%s152 + $0x500] sm:%s145]
                %315 = vst [vmem:[%s153 + $0x280] sm:%s145] %v314
                %v316 = vld [vmem:[%s152 + $0x508] sm:%s145]
                %317 = vst [vmem:[%s153 + $0x288] sm:%s145] %v316
                %v318 = vld [vmem:[%s152 + $0x510] sm:%s145]
                %319 = vst [vmem:[%s153 + $0x290] sm:%s145] %v318
                %v320 = vld [vmem:[%s152 + $0x518] sm:%s145]
                %321 = vst [vmem:[%s153 + $0x298] sm:%s145] %v320
                %v322 = vld [vmem:[%s152 + $0x520] sm:%s145]
                %323 = vst [vmem:[%s153 + $0x2a0] sm:%s145] %v322
                %v324 = vld [vmem:[%s152 + $0x528] sm:%s145]
                %325 = vst [vmem:[%s153 + $0x2a8] sm:%s145] %v324
                %v326 = vld [vmem:[%s152 + $0x530] sm:%s145]
                %327 = vst [vmem:[%s153 + $0x2b0] sm:%s145] %v326
                %v328 = vld [vmem:[%s152 + $0x538] sm:%s145]
                %329 = vst [vmem:[%s153 + $0x2b8] sm:%s145] %v328
                %v330 = vld [vmem:[%s152 + $0x580] sm:%s145]
                %331 = vst [vmem:[%s153 + $0x2c0] sm:%s145] %v330
                %v332 = vld [vmem:[%s152 + $0x588] sm:%s145]
                %333 = vst [vmem:[%s153 + $0x2c8] sm:%s145] %v332
                %v334 = vld [vmem:[%s152 + $0x590] sm:%s145]
                %335 = vst [vmem:[%s153 + $0x2d0] sm:%s145] %v334
                %v336 = vld [vmem:[%s152 + $0x598] sm:%s145]
                %337 = vst [vmem:[%s153 + $0x2d8] sm:%s145] %v336
                %v338 = vld [vmem:[%s152 + $0x5a0] sm:%s145]
                %339 = vst [vmem:[%s153 + $0x2e0] sm:%s145] %v338
                %v340 = vld [vmem:[%s152 + $0x5a8] sm:%s145]
                %341 = vst [vmem:[%s153 + $0x2e8] sm:%s145] %v340
                %v342 = vld [vmem:[%s152 + $0x5b0] sm:%s145]
                %343 = vst [vmem:[%s153 + $0x2f0] sm:%s145] %v342
                %v344 = vld [vmem:[%s152 + $0x5b8] sm:%s145]
                %345 = vst [vmem:[%s153 + $0x2f8] sm:%s145] %v344
              $region41: #{vn_basic_block_1d.3} parent=35 // loop_footer
                %s151 = sadd.s32 1, %s147
              $region42: #{vn_basic_block_1d.3} parent=35 // loop_footer_branch
                %146 = sbr.rel target = $region38
              $region43: #{vn_basic_block_1d.3} parent=35 // loop_exit
                _
            $region36: #{vn_basic_block_1d.3} parent=27 // pred_fallthru
              _
          $region28: #{vn_basic_block_1d.3} parent=23 // pred_fallthru
            _
          %550 = vnop
        $region24: #{vn_basic_block_1d.3} parent=19 // pred_fallthru
          _
      $region20: #{vn_basic_block_1d.3} parent=5 // pred_fallthru
        _
      %p551 = scmp.le.s32.totalorder 1, %s9
      %p552 = scmp.lt.s32.totalorder %s9, 5
      %p553 = pnand %p551, %p552
      %p554 = pneg %p553
      // Predicated region
      $region59: #{vn_basic_block_1d.3} parent=5 // pred_check
        _
      $region60: #{vn_basic_block_1d.3} parent=5 // pred_check_branch
        %556 = sbr.rel (%p553) target = $region62
      $region61: #{vn_basic_block_1d.3} parent=5 // pred_region
        %s557 = ssub.s32 %s9, 1
        %s558 = sand.u32 %s36, 1
        %s559 = sand.u32 %s36, 1
        %s560 = smul.addr %s559, 768
        %s561 = scalar_lea.vmem [#allocation2], %s560
        // Predicated region
        $region63: #{vn_basic_block_1d.3} parent=61 // pred_check
          %p562 = pneg %p49
        $region64: #{vn_basic_block_1d.3} parent=61 // pred_check_branch
          %564 = sbr.rel (%p562) target = $region66
        $region65: #{vn_basic_block_1d.3} parent=61 // pred_region
          _
        $region66: #{vn_basic_block_1d.3} parent=61 // pred_fallthru
          _
        // Predicated region
        $region67: #{vn_basic_block_1d.3} parent=61 // pred_check
          %p565 = pneg %p70
        $region68: #{vn_basic_block_1d.3} parent=61 // pred_check_branch
          %567 = sbr.rel (%p565) target = $region70
        $region69: #{vn_basic_block_1d.3} parent=61 // pred_region
          %568 = dma.done [#allocation4], 64
        $region70: #{vn_basic_block_1d.3} parent=61 // pred_fallthru
          _
        %569 = sfence
        %s570 = sand.u32 %s36, 1
        %s571 = sand.u32 %s36, 1
        %s572 = smul.addr %s571, 768
        %s573 = scalar_lea.vmem [#allocation2], %s572
        %p574 = pneg %p49
        %p575 = pneg %p46
        %p576 = pneg %p70
        %p577 = pneg %p67
        %p578 = pneg %p96
        %p579 = pneg %p93
        %p580 = scmp.lt.s32.totalorder %s18, 1
        %s581 = scalar_select %p580, %s18, 1
        %s582 = smul.addr %s581, 8
        %s583 = smul.addr %s582, 8
        %s584 = scalar_lea.vmem %s2, %s583
        %s585 = smul.u32 8, %s19
        %p586 = scmp.lt.s32.totalorder %s18, 1
        %s587 = scalar_select %p586, %s18, 1
        %s588 = smul.addr %s587, 8
        %s589 = smul.addr %s588, 8
        %s590 = scalar_lea.vmem %s2, %s589
        %p591 = scmp.eq.s32.totalorder %s19, 0
        // Predicated region
        $region71: #{vn_basic_block_1d.3} parent=61 // pred_check
          %p592 = pneg %p591
        $region72: #{vn_basic_block_1d.3} parent=61 // pred_check_branch
          %594 = sbr.rel (%p592) target = $region74
        $region73: #{vn_basic_block_1d.3} parent=61 // pred_region
          %595 = vst [vmem:[%s590] sm:$0xff] 0.0
          %596 = vst [vmem:[%s590 + $0x8] sm:$0xff] 0.0
          %597 = vst [vmem:[%s590 + $0x10] sm:$0xff] 0.0
          %598 = vst [vmem:[%s590 + $0x18] sm:$0xff] 0.0
          %599 = vst [vmem:[%s590 + $0x20] sm:$0xff] 0.0
          %600 = vst [vmem:[%s590 + $0x28] sm:$0xff] 0.0
          %601 = vst [vmem:[%s590 + $0x30] sm:$0xff] 0.0
          %602 = vst [vmem:[%s590 + $0x38] sm:$0xff] 0.0
        $region74: #{vn_basic_block_1d.3} parent=61 // pred_fallthru
          _
        loop: start=0, step=1, limit=8
        $region75: #{vn_basic_block_1d.3} parent=61 // loop_pre_header
          _
        $region76: #{vn_basic_block_1d.3} parent=61 // loop_header
          %s604 = sphi 0, %s608
          %p605 = scmp.ge.s32.totalorder %s604, 8
        $region77: #{vn_basic_block_1d.3} parent=61 // loop_header_branch
          %607 = sbr.rel (%p605) target = $region81
        $region78: #{vn_basic_block_1d.3} parent=61 // loop_body
          %s609 = smul.u32 %s604, 8
          %s610 = scalar_lea.vmem %s561, %s609 [#allocation2]
          %v611 = vld [vmem:[%s610] sm:$0xff]
          %s612 = sadd.s32 %s609, 64
          %s613 = scalar_lea.vmem %s561, %s612 [#allocation2]
          %v614 = vld [vmem:[%s613] sm:$0xff]
          %s615 = sadd.s32 %s609, 128
          %s616 = scalar_lea.vmem %s561, %s615 [#allocation2]
          %v617 = vld [vmem:[%s616] sm:$0xff]
          %s618 = sadd.s32 %s609, 192
          %s619 = scalar_lea.vmem %s561, %s618 [#allocation2]
          %v620 = vld [vmem:[%s619] sm:$0xff]
          %s621 = sadd.s32 %s609, 256
          %s622 = scalar_lea.vmem %s561, %s621 [#allocation2]
          %v623 = vld [vmem:[%s622] sm:$0xff]
          %s624 = sadd.s32 %s609, 320
          %s625 = scalar_lea.vmem %s561, %s624 [#allocation2]
          %v626 = vld [vmem:[%s625] sm:$0xff]
          %s627 = sadd.s32 %s609, 384
          %s628 = scalar_lea.vmem %s561, %s627 [#allocation2]
          %v629 = vld [vmem:[%s628] sm:$0xff]
          %s630 = sadd.s32 %s609, 448
          %s631 = scalar_lea.vmem %s561, %s630 [#allocation2]
          %v632 = vld [vmem:[%s631] sm:$0xff]
          %s633 = sadd.s32 %s609, 512
          %s634 = scalar_lea.vmem %s561, %s633 [#allocation2]
          %v635 = vld [vmem:[%s634] sm:$0xff]
          %s636 = sadd.s32 %s609, 576
          %s637 = scalar_lea.vmem %s561, %s636 [#allocation2]
          %v638 = vld [vmem:[%s637] sm:$0xff]
          %s639 = sadd.s32 %s609, 640
          %s640 = scalar_lea.vmem %s561, %s639 [#allocation2]
          %v641 = vld [vmem:[%s640] sm:$0xff]
          %s642 = sadd.s32 %s609, 704
          %s643 = scalar_lea.vmem %s561, %s642 [#allocation2]
          %v644 = vld [vmem:[%s643] sm:$0xff]
          %s645 = sld [smem:[#allocation3]]
          %v646 = vstv %s645
          %v647 = vmul.f32 %v646, %v611
          %s648 = sld [smem:[#allocation3 + $0x1]]
          %v649 = vstv %s648
          %v650 = vmul.f32 %v649, %v620
          %v651 = vadd.f32 %v647, %v650
          %s652 = sld [smem:[#allocation3 + $0x2]]
          %v653 = vstv %s652
          %v654 = vmul.f32 %v653, %v629
          %v655 = vadd.f32 %v651, %v654
          %s656 = sld [smem:[#allocation3 + $0x3]]
          %v657 = vstv %s656
          %v658 = vmul.f32 %v657, %v638
          %v659 = vadd.f32 %v655, %v658
          %v660 = vmul.f32 %v646, %v614
          %v661 = vmul.f32 %v649, %v623
          %v662 = vadd.f32 %v660, %v661
          %v663 = vmul.f32 %v653, %v632
          %v664 = vadd.f32 %v662, %v663
          %v665 = vmul.f32 %v657, %v641
          %v666 = vadd.f32 %v664, %v665
          %v667 = vmul.f32 %v646, %v617
          %v668 = vmul.f32 %v649, %v626
          %v669 = vadd.f32 %v667, %v668
          %v670 = vmul.f32 %v653, %v635
          %v671 = vadd.f32 %v669, %v670
          %v672 = vmul.f32 %v657, %v644
          %v673 = vadd.f32 %v671, %v672
          %s674 = sld [smem:[#allocation3 + $0x80]]
          %v675 = vstv %s674
          %v676 = vmul.f32 %v675, %v611
          %s677 = sld [smem:[#allocation3 + $0x81]]
          %v678 = vstv %s677
          %v679 = vmul.f32 %v678, %v620
          %v680 = vadd.f32 %v676, %v679
          %s681 = sld [smem:[#allocation3 + $0x82]]
          %v682 = vstv %s681
          %v683 = vmul.f32 %v682, %v629
          %v684 = vadd.f32 %v680, %v683
          %s685 = sld [smem:[#allocation3 + $0x83]]
          %v686 = vstv %s685
          %v687 = vmul.f32 %v686, %v638
          %v688 = vadd.f32 %v684, %v687
          %v689 = vmul.f32 %v675, %v614
          %v690 = vmul.f32 %v678, %v623
          %v691 = vadd.f32 %v689, %v690
          %v692 = vmul.f32 %v682, %v632
          %v693 = vadd.f32 %v691, %v692
          %v694 = vmul.f32 %v686, %v641
          %v695 = vadd.f32 %v693, %v694
          %v696 = vmul.f32 %v675, %v617
          %v697 = vmul.f32 %v678, %v626
          %v698 = vadd.f32 %v696, %v697
          %v699 = vmul.f32 %v682, %v635
          %v700 = vadd.f32 %v698, %v699
          %v701 = vmul.f32 %v686, %v644
          %v702 = vadd.f32 %v700, %v701
          %s703 = sld [smem:[#allocation3 + $0x100]]
          %v704 = vstv %s703
          %v705 = vmul.f32 %v704, %v611
          %s706 = sld [smem:[#allocation3 + $0x101]]
          %v707 = vstv %s706
          %v708 = vmul.f32 %v707, %v620
          %v709 = vadd.f32 %v705, %v708
          %s710 = sld [smem:[#allocation3 + $0x102]]
          %v711 = vstv %s710
          %v712 = vmul.f32 %v711, %v629
          %v713 = vadd.f32 %v709, %v712
          %s714 = sld [smem:[#allocation3 + $0x103]]
          %v715 = vstv %s714
          %v716 = vmul.f32 %v715, %v638
          %v717 = vadd.f32 %v713, %v716
          %v718 = vmul.f32 %v704, %v614
          %v719 = vmul.f32 %v707, %v623
          %v720 = vadd.f32 %v718, %v719
          %v721 = vmul.f32 %v711, %v632
          %v722 = vadd.f32 %v720, %v721
          %v723 = vmul.f32 %v715, %v641
          %v724 = vadd.f32 %v722, %v723
          %v725 = vmul.f32 %v704, %v617
          %v726 = vmul.f32 %v707, %v626
          %v727 = vadd.f32 %v725, %v726
          %v728 = vmul.f32 %v711, %v635
          %v729 = vadd.f32 %v727, %v728
          %v730 = vmul.f32 %v715, %v644
          %v731 = vadd.f32 %v729, %v730
          %s732 = sld [smem:[#allocation3 + $0x180]]
          %v733 = vstv %s732
          %v734 = vmul.f32 %v733, %v611
          %s735 = sld [smem:[#allocation3 + $0x181]]
          %v736 = vstv %s735
          %v737 = vmul.f32 %v736, %v620
          %v738 = vadd.f32 %v734, %v737
          %s739 = sld [smem:[#allocation3 + $0x182]]
          %v740 = vstv %s739
          %v741 = vmul.f32 %v740, %v629
          %v742 = vadd.f32 %v738, %v741
          %s743 = sld [smem:[#allocation3 + $0x183]]
          %v744 = vstv %s743
          %v745 = vmul.f32 %v744, %v638
          %v746 = vadd.f32 %v742, %v745
          %v747 = vmul.f32 %v733, %v614
          %v748 = vmul.f32 %v736, %v623
          %v749 = vadd.f32 %v747, %v748
          %v750 = vmul.f32 %v740, %v632
          %v751 = vadd.f32 %v749, %v750
          %v752 = vmul.f32 %v744, %v641
          %v753 = vadd.f32 %v751, %v752
          %v754 = vmul.f32 %v733, %v617
          %v755 = vmul.f32 %v736, %v626
          %v756 = vadd.f32 %v754, %v755
          %v757 = vmul.f32 %v740, %v635
          %v758 = vadd.f32 %v756, %v757
          %v759 = vmul.f32 %v744, %v644
          %v760 = vadd.f32 %v758, %v759
          %v761 = vmul.f32 %v659, %v659
          %v762 = vmul.f32 %v666, %v666
          %v763 = vadd.f32 %v761, %v762
          %v764 = vmul.f32 %v673, %v673
          %v765 = vadd.f32 %v763, %v764
          %v766 = vrsqrt.pop %v765
          %v767 = vmul.f32 %v765, %v766
          %vm768 = vcmp.eq.f32.partialorder %v765, inf
          %v769 = vsel %vm768, %v765, %v767
          %vm770 = vcmp.eq.f32.partialorder %v765, 0.0
          %v771 = vand.u32 %v765, 2147483648
          %v772 = vsel %vm770, %v771, %v769
          %v773 = vadd.f32 %v772, 1e-06
          %v774 = vmul.f32 %v688, %v688
          %v775 = vmul.f32 %v695, %v695
          %v776 = vadd.f32 %v774, %v775
          %v777 = vmul.f32 %v702, %v702
          %v778 = vadd.f32 %v776, %v777
          %v779 = vrsqrt.pop %v778
          %v780 = vmul.f32 %v778, %v779
          %vm781 = vcmp.eq.f32.partialorder %v778, inf
          %v782 = vsel %vm781, %v778, %v780
          %vm783 = vcmp.eq.f32.partialorder %v778, 0.0
          %v784 = vand.u32 %v778, 2147483648
          %v785 = vsel %vm783, %v784, %v782
          %v786 = vadd.f32 %v785, 1e-06
          %v787 = vmul.f32 %v717, %v717
          %v788 = vmul.f32 %v724, %v724
          %v789 = vadd.f32 %v787, %v788
          %v790 = vmul.f32 %v731, %v731
          %v791 = vadd.f32 %v789, %v790
          %v792 = vrsqrt.pop %v791
          %v793 = vmul.f32 %v791, %v792
          %vm794 = vcmp.eq.f32.partialorder %v791, inf
          %v795 = vsel %vm794, %v791, %v793
          %vm796 = vcmp.eq.f32.partialorder %v791, 0.0
          %v797 = vand.u32 %v791, 2147483648
          %v798 = vsel %vm796, %v797, %v795
          %v799 = vadd.f32 %v798, 1e-06
          %v800 = vmul.f32 %v746, %v746
          %v801 = vmul.f32 %v753, %v753
          %v802 = vadd.f32 %v800, %v801
          %v803 = vmul.f32 %v760, %v760
          %v804 = vadd.f32 %v802, %v803
          %v805 = vrsqrt.pop %v804
          %v806 = vmul.f32 %v804, %v805
          %vm807 = vcmp.eq.f32.partialorder %v804, inf
          %v808 = vsel %vm807, %v804, %v806
          %vm809 = vcmp.eq.f32.partialorder %v804, 0.0
          %v810 = vand.u32 %v804, 2147483648
          %v811 = vsel %vm809, %v810, %v808
          %v812 = vadd.f32 %v811, 1e-06
          %v813 = vmul.f32 %v773, %v773
          %v814 = vmul.f32 %v786, %v786
          %v815 = vmul.f32 %v799, %v799
          %v816 = vmul.f32 %v812, %v812
          %v817 = vld [vmem:[%s590] sm:$0xff]
          %v818 = vld [vmem:[%s590 + $0x8] sm:$0xff]
          %v819 = vld [vmem:[%s590 + $0x10] sm:$0xff]
          %v820 = vld [vmem:[%s590 + $0x18] sm:$0xff]
          %v821 = vld [vmem:[%s590 + $0x20] sm:$0xff]
          %v822 = vld [vmem:[%s590 + $0x28] sm:$0xff]
          %v823 = vld [vmem:[%s590 + $0x30] sm:$0xff]
          %v824 = vld [vmem:[%s590 + $0x38] sm:$0xff]
          %v825 = vadd.f32 %v817, %v773
          %v826 = vadd.f32 %v818, %v786
          %v827 = vadd.f32 %v819, %v799
          %v828 = vadd.f32 %v820, %v812
          %v829 = vadd.f32 %v821, %v813
          %v830 = vadd.f32 %v822, %v814
          %v831 = vadd.f32 %v823, %v815
          %v832 = vadd.f32 %v824, %v816
          %833 = vst [vmem:[%s590] sm:$0xff] %v825
          %834 = vst [vmem:[%s590 + $0x8] sm:$0xff] %v826
          %835 = vst [vmem:[%s590 + $0x10] sm:$0xff] %v827
          %836 = vst [vmem:[%s590 + $0x18] sm:$0xff] %v828
          %837 = vst [vmem:[%s590 + $0x20] sm:$0xff] %v829
          %838 = vst [vmem:[%s590 + $0x28] sm:$0xff] %v830
          %839 = vst [vmem:[%s590 + $0x30] sm:$0xff] %v831
          %840 = vst [vmem:[%s590 + $0x38] sm:$0xff] %v832
        $region79: #{vn_basic_block_1d.3} parent=61 // loop_footer
          %s608 = sadd.s32 1, %s604
        $region80: #{vn_basic_block_1d.3} parent=61 // loop_footer_branch
          %603 = sbr.rel target = $region76
        $region81: #{vn_basic_block_1d.3} parent=61 // loop_exit
          _
        %p841 = scmp.lt.s32.totalorder %s18, 1
        %s842 = scalar_select %p841, %s18, 1
        %s843 = smul.addr %s842, 8
        %s844 = smul.addr %s843, 8
        %s845 = scalar_lea.vmem %s2, %s844
        // Predicated region
        $region82: #{vn_basic_block_1d.3} parent=61 // pred_check
          %p846 = pneg %p93
        $region83: #{vn_basic_block_1d.3} parent=61 // pred_check_branch
          %848 = sbr.rel (%p846) target = $region85
        $region84: #{vn_basic_block_1d.3} parent=61 // pred_region
          _
        $region85: #{vn_basic_block_1d.3} parent=61 // pred_fallthru
          _
      $region62: #{vn_basic_block_1d.3} parent=5 // pred_fallthru
        _
      %p849 = scmp.le.s32.totalorder 2, %s9
      // Predicated region
      $region86: #{vn_basic_block_1d.3} parent=5 // pred_check
        %p850 = pneg %p849
      $region87: #{vn_basic_block_1d.3} parent=5 // pred_check_branch
        %852 = sbr.rel (%p850) target = $region89
      $region88: #{vn_basic_block_1d.3} parent=5 // pred_region
        %s853 = ssub.s32 %s9, 2
        // Predicated region
        $region90: #{vn_basic_block_1d.3} parent=88 // pred_check
          %p854 = pneg %p99
        $region91: #{vn_basic_block_1d.3} parent=88 // pred_check_branch
          %856 = sbr.rel (%p854) target = $region93
        $region92: #{vn_basic_block_1d.3} parent=88 // pred_region
          %p857 = scmp.lt.s32.totalorder %s20, 1
          %s858 = scalar_select %p857, %s20, 1
          %s859 = smul.addr %s858, 8
          %s860 = smul.addr %s859, 8
          %s861 = scalar_lea.vmem %s2, %s860
        $region93: #{vn_basic_block_1d.3} parent=88 // pred_fallthru
          _
      $region89: #{vn_basic_block_1d.3} parent=5 // pred_fallthru
        _
    $region6: #{vn_basic_block_1d.3} parent=1 // loop_footer
      %s13 = sadd.s32 1, %s9
    $region7: #{vn_basic_block_1d.3} parent=1 // loop_footer_branch
      %8 = sbr.rel target = $region3
    $region8: #{vn_basic_block_1d.3} parent=1 // loop_exit
      _
    %862 = vsyncpa [#allocation4], 1
    %s863 = scalar_lea.sflag [#allocation4], 1
    %864 = vsyncpa %s863, 1

// kernel: vn_basic_block_1d.4
$region0: #{vn_basic_block_1d.4}
  #allocation0 [shape = 'u32[]', space=smem, size = 0x4, offset = 0x4, fixed_abs, tag = 'smem constant byte address 0x4 - core index']
  #allocation1 [shape = 'u32[144,128]{1,0:T(1,128)}', space=vmem, size = 0x12000, scoped, tag = 'internal scratch']
  %s0 = inlined_call_operand.vmem [shape: f32[2,12,16,8,128], index: 0, kind: input, shape index: {}]
  %s1 = inlined_call_operand.vmem [shape: f32[4,4], index: 1, kind: input, shape index: {}]
  %s2 = inlined_call_operand.vmem [shape: f32[4,4], index: 2, kind: input, shape index: {}]
  %s3 = inlined_call_operand.vmem [shape: f32[4,4], index: 3, kind: input, shape index: {}]
  %s4 = inlined_call_operand.vmem [shape: f32[4], index: 4, kind: input, shape index: {}]
  %s5 = inlined_call_operand.vmem [shape: f32[4], index: 5, kind: input, shape index: {}]
  %s6 = inlined_call_operand.vmem [shape: f32[2,8,8,128], index: 6, kind: output, shape index: {}]
  %s7 = sld [smem:[#allocation0]]
  $region126: #{vn_basic_block_1d.4} parent=0
    _
  %s9 = ssub.s32 1, %s7
  %s10 = scalar_select 0, %s9, %s7
  $region1: #{vn_basic_block_1d.4} parent=0
    #allocation2 [shape = 'u8[786432]{0}', space=vmem, size = 0xc0000, scoped, tag = 'input window, operand 0']
    #allocation3 [shape = 'u8[2048]{0}', space=smem, size = 0x800, scoped, tag = 'input window, operand 1, single buffered']
    #allocation4 [shape = 's32[2]{0}', space=sflag, size = 0x8, scoped, tag = 'scoped memory for vn_basic_block_1d.4']
    #allocation5 [shape = 'u8[2048]{0}', space=smem, size = 0x800, scoped, tag = 'input window, operand 2, single buffered']
    #allocation6 [shape = 's32[1]{0}', space=sflag, size = 0x4, scoped, tag = 'scoped memory for vn_basic_block_1d.4']
    #allocation7 [shape = 'u8[2048]{0}', space=smem, size = 0x800, scoped, tag = 'input window, operand 3, single buffered']
    #allocation8 [shape = 'u8[512]{0}', space=smem, size = 0x200, scoped, tag = 'input window, operand 4, single buffered']
    #allocation9 [shape = 's32[1]{0}', space=sflag, size = 0x4, scoped, tag = 'scoped memory for vn_basic_block_1d.4']
    #allocation10 [shape = 'u8[512]{0}', space=smem, size = 0x200, scoped, tag = 'input window, operand 5, single buffered']
    %11 = vsyncpa [#allocation4], 0
    %12 = vsyncpa [#allocation6], 0
    %13 = vsyncpa [#allocation9], 0
    loop: start=0, step=1, limit=6
    $region2: #{vn_basic_block_1d.4} parent=1 // loop_pre_header
      _
    $region3: #{vn_basic_block_1d.4} parent=1 // loop_header
      %s15 = sphi 0, %s19
      %p16 = scmp.ge.s32.totalorder %s15, 6
      %s22 = sphi 0, %s34
      %s23 = sphi 0, %s30
      %s24 = sphi 0, %s22
      %s25 = sphi 0, %s23
      %s26 = sphi 0, %s24
      %s27 = sphi 0, %s25
      %s39 = sphi 0, %s41
      %s42 = sphi 0, %s39
      %s43 = sphi 0, %s42
      %s59 = sphi 0, %s43
      %s63 = sphi 0, %s63
      %s65 = sphi 0, %s63
      %s66 = sphi 0, %s65
      %s80 = sphi 0, %s66
      %s84 = sphi 0, %s84
      %s86 = sphi 0, %s84
      %s87 = sphi 0, %s86
      %s101 = sphi 0, %s87
      %s105 = sphi 0, %s105
      %s107 = sphi 0, %s105
      %s108 = sphi 0, %s107
      %s122 = sphi 0, %s108
      %s126 = sphi 0, %s126
      %s128 = sphi 0, %s126
      %s129 = sphi 0, %s128
      %s143 = sphi 0, %s129
      %s147 = sphi 0, %s147
      %s149 = sphi 0, %s147
      %s150 = sphi 0, %s149
      %s164 = sphi 0, %s150
      %s170 = sphi 0, %s172
      %s173 = sphi 0, %s170
      %s174 = sphi 0, %s173
      %s190 = sphi 0, %s174
    $region4: #{vn_basic_block_1d.4} parent=1 // loop_header_branch
      %18 = sbr.rel (%p16) target = $region8
    $region5: #{vn_basic_block_1d.4} parent=1 // loop_body
      %s20 = ssub.s32 %s15, 1
      %s21 = ssub.s32 %s15, 2
      %s28 = sadd.s32 1, %s23
      %p29 = scmp.ge.s32.totalorder %s28, 2
      %s30 = scalar_select %p29, 0, %s28
      %s31 = sadd.s32 1, %s22
      %s32 = scalar_select %p29, %s31, %s22
      %p33 = scmp.ge.s32.totalorder %s32, 2
      %s34 = scalar_select %p33, 0, %s32
      %s35 = ssub.s32 %s22, %s34
      %s36 = ssub.s32 %s23, %s30
      %s37 = sor.u32 %s35, %s36
      %p38 = scmp.eq.s32.totalorder %s37, 0
      %s40 = sadd.s32 %s39, 1
      %s41 = scalar_select %p38, %s39, %s40
      %p44 = pneg %p38
      %p45 = scmp.eq.s32.totalorder %s15, 3
      %p46 = por %p44, %p45
      %p47 = scmp.ne.s32.totalorder %s39, %s42
      %p48 = scmp.eq.s32.totalorder %s15, 0
      %p49 = por %p47, %p48
      %p50 = scmp.ne.s32.totalorder %s39, %s42
      %p51 = scmp.eq.s32.totalorder %s20, 3
      %p52 = por %p50, %p51
      %p53 = scmp.ne.s32.totalorder %s42, %s43
      %p54 = scmp.eq.s32.totalorder %s20, 0
      %p55 = por %p53, %p54
      %p56 = scmp.ne.s32.totalorder %s42, %s43
      %p57 = scmp.eq.s32.totalorder %s21, 3
      %p58 = por %p56, %p57
      %p60 = scmp.ne.s32.totalorder %s43, %s59
      %p61 = scmp.eq.s32.totalorder %s21, 0
      %p62 = por %p60, %p61
      %s64 = sadd.s32 %s63, 1
      %p67 = scmp.eq.s32.totalorder %s15, 3
      %p68 = scmp.ne.s32.totalorder %s63, %s65
      %p69 = scmp.eq.s32.totalorder %s15, 0
      %p70 = por %p68, %p69
      %p71 = scmp.ne.s32.totalorder %s63, %s65
      %p72 = scmp.eq.s32.totalorder %s20, 3
      %p73 = por %p71, %p72
      %p74 = scmp.ne.s32.totalorder %s65, %s66
      %p75 = scmp.eq.s32.totalorder %s20, 0
      %p76 = por %p74, %p75
      %p77 = scmp.ne.s32.totalorder %s65, %s66
      %p78 = scmp.eq.s32.totalorder %s21, 3
      %p79 = por %p77, %p78
      %p81 = scmp.ne.s32.totalorder %s66, %s80
      %p82 = scmp.eq.s32.totalorder %s21, 0
      %p83 = por %p81, %p82
      %s85 = sadd.s32 %s84, 1
      %p88 = scmp.eq.s32.totalorder %s15, 3
      %p89 = scmp.ne.s32.totalorder %s84, %s86
      %p90 = scmp.eq.s32.totalorder %s15, 0
      %p91 = por %p89, %p90
      %p92 = scmp.ne.s32.totalorder %s84, %s86
      %p93 = scmp.eq.s32.totalorder %s20, 3
      %p94 = por %p92, %p93
      %p95 = scmp.ne.s32.totalorder %s86, %s87
      %p96 = scmp.eq.s32.totalorder %s20, 0
      %p97 = por %p95, %p96
      %p98 = scmp.ne.s32.totalorder %s86, %s87
      %p99 = scmp.eq.s32.totalorder %s21, 3
      %p100 = por %p98, %p99
      %p102 = scmp.ne.s32.totalorder %s87, %s101
      %p103 = scmp.eq.s32.totalorder %s21, 0
      %p104 = por %p102, %p103
      %s106 = sadd.s32 %s105, 1
      %p109 = scmp.eq.s32.totalorder %s15, 3
      %p110 = scmp.ne.s32.totalorder %s105, %s107
      %p111 = scmp.eq.s32.totalorder %s15, 0
      %p112 = por %p110, %p111
      %p113 = scmp.ne.s32.totalorder %s105, %s107
      %p114 = scmp.eq.s32.totalorder %s20, 3
      %p115 = por %p113, %p114
      %p116 = scmp.ne.s32.totalorder %s107, %s108
      %p117 = scmp.eq.s32.totalorder %s20, 0
      %p118 = por %p116, %p117
      %p119 = scmp.ne.s32.totalorder %s107, %s108
      %p120 = scmp.eq.s32.totalorder %s21, 3
      %p121 = por %p119, %p120
      %p123 = scmp.ne.s32.totalorder %s108, %s122
      %p124 = scmp.eq.s32.totalorder %s21, 0
      %p125 = por %p123, %p124
      %s127 = sadd.s32 %s126, 1
      %p130 = scmp.eq.s32.totalorder %s15, 3
      %p131 = scmp.ne.s32.totalorder %s126, %s128
      %p132 = scmp.eq.s32.totalorder %s15, 0
      %p133 = por %p131, %p132
      %p134 = scmp.ne.s32.totalorder %s126, %s128
      %p135 = scmp.eq.s32.totalorder %s20, 3
      %p136 = por %p134, %p135
      %p137 = scmp.ne.s32.totalorder %s128, %s129
      %p138 = scmp.eq.s32.totalorder %s20, 0
      %p139 = por %p137, %p138
      %p140 = scmp.ne.s32.totalorder %s128, %s129
      %p141 = scmp.eq.s32.totalorder %s21, 3
      %p142 = por %p140, %p141
      %p144 = scmp.ne.s32.totalorder %s129, %s143
      %p145 = scmp.eq.s32.totalorder %s21, 0
      %p146 = por %p144, %p145
      %s148 = sadd.s32 %s147, 1
      %p151 = scmp.eq.s32.totalorder %s15, 3
      %p152 = scmp.ne.s32.totalorder %s147, %s149
      %p153 = scmp.eq.s32.totalorder %s15, 0
      %p154 = por %p152, %p153
      %p155 = scmp.ne.s32.totalorder %s147, %s149
      %p156 = scmp.eq.s32.totalorder %s20, 3
      %p157 = por %p155, %p156
      %p158 = scmp.ne.s32.totalorder %s149, %s150
      %p159 = scmp.eq.s32.totalorder %s20, 0
      %p160 = por %p158, %p159
      %p161 = scmp.ne.s32.totalorder %s149, %s150
      %p162 = scmp.eq.s32.totalorder %s21, 3
      %p163 = por %p161, %p162
      %p165 = scmp.ne.s32.totalorder %s150, %s164
      %p166 = scmp.eq.s32.totalorder %s21, 0
      %p167 = por %p165, %p166
      %s168 = ssub.s32 %s22, %s34
      %p169 = scmp.eq.s32.totalorder %s168, 0
      %s171 = sadd.s32 %s170, 1
      %s172 = scalar_select %p169, %s170, %s171
      %p175 = pneg %p169
      %p176 = scmp.eq.s32.totalorder %s15, 3
      %p177 = por %p175, %p176
      %p178 = scmp.ne.s32.totalorder %s170, %s173
      %p179 = scmp.eq.s32.totalorder %s15, 0
      %p180 = por %p178, %p179
      %p181 = scmp.ne.s32.totalorder %s170, %s173
      %p182 = scmp.eq.s32.totalorder %s20, 3
      %p183 = por %p181, %p182
      %p184 = scmp.ne.s32.totalorder %s173, %s174
      %p185 = scmp.eq.s32.totalorder %s20, 0
      %p186 = por %p184, %p185
      %p187 = scmp.ne.s32.totalorder %s173, %s174
      %p188 = scmp.eq.s32.totalorder %s21, 3
      %p189 = por %p187, %p188
      %p191 = scmp.ne.s32.totalorder %s174, %s190
      %p192 = scmp.eq.s32.totalorder %s21, 0
      %p193 = por %p191, %p192
      %p194 = scmp.le.s32.totalorder 1, %s15
      %p195 = scmp.lt.s32.totalorder %s15, 5
      %p196 = pnand %p194, %p195
      %p197 = pneg %p196
      // Predicated region
      $region9: #{vn_basic_block_1d.4} parent=5 // pred_check
        _
      $region10: #{vn_basic_block_1d.4} parent=5 // pred_check_branch
        %199 = sbr.rel (%p196) target = $region12
      $region11: #{vn_basic_block_1d.4} parent=5 // pred_region
        %s200 = ssub.s32 %s15, 1
        // Predicated region
        $region13: #{vn_basic_block_1d.4} parent=11 // pred_check
          %p201 = pneg %p76
        $region14: #{vn_basic_block_1d.4} parent=11 // pred_check_branch
          %203 = sbr.rel (%p201) target = $region16
        $region15: #{vn_basic_block_1d.4} parent=11 // pred_region
          %s205 = ssub.s32 64, 64
          %206 = vsyncadd [#allocation4], %s205
          %s208 = sshll.u32 %s1, 4
          %s209 = int_to_ptr.vmem [resolvable:$true] %s208
          %211 = dma.vmem_to_smem %s209, 64, [#allocation3], [#allocation4]
        $region16: #{vn_basic_block_1d.4} parent=11 // pred_fallthru
          _
        // Predicated region
        $region17: #{vn_basic_block_1d.4} parent=11 // pred_check
          %p212 = pneg %p97
        $region18: #{vn_basic_block_1d.4} parent=11 // pred_check_branch
          %214 = sbr.rel (%p212) target = $region20
        $region19: #{vn_basic_block_1d.4} parent=11 // pred_region
          %s216 = ssub.s32 64, 64
          %217 = vsyncadd [#allocation6], %s216
          %s219 = sshll.u32 %s2, 4
          %s220 = int_to_ptr.vmem [resolvable:$true] %s219
          %222 = dma.vmem_to_smem %s220, 64, [#allocation5], [#allocation6]
        $region20: #{vn_basic_block_1d.4} parent=11 // pred_fallthru
          _
        // Predicated region
        $region21: #{vn_basic_block_1d.4} parent=11 // pred_check
          %p223 = pneg %p118
        $region22: #{vn_basic_block_1d.4} parent=11 // pred_check_branch
          %225 = sbr.rel (%p223) target = $region24
        $region23: #{vn_basic_block_1d.4} parent=11 // pred_region
          %s227 = ssub.s32 64, 64
          %228 = vsyncadd [#allocation6], %s227
          %s230 = sshll.u32 %s3, 4
          %s231 = int_to_ptr.vmem [resolvable:$true] %s230
          %233 = dma.vmem_to_smem %s231, 64, [#allocation7], [#allocation6]
        $region24: #{vn_basic_block_1d.4} parent=11 // pred_fallthru
          _
        // Predicated region
        $region25: #{vn_basic_block_1d.4} parent=11 // pred_check
          %p234 = pneg %p139
        $region26: #{vn_basic_block_1d.4} parent=11 // pred_check_branch
          %236 = sbr.rel (%p234) target = $region28
        $region27: #{vn_basic_block_1d.4} parent=11 // pred_region
          %s238 = ssub.s32 16, 16
          %239 = vsyncadd [#allocation9], %s238
          %s241 = sshll.u32 %s4, 4
          %s242 = int_to_ptr.vmem [resolvable:$true] %s241
          %244 = dma.vmem_to_smem %s242, 16, [#allocation8], [#allocation9]
        $region28: #{vn_basic_block_1d.4} parent=11 // pred_fallthru
          _
        // Predicated region
        $region29: #{vn_basic_block_1d.4} parent=11 // pred_check
          %p245 = pneg %p160
        $region30: #{vn_basic_block_1d.4} parent=11 // pred_check_branch
          %247 = sbr.rel (%p245) target = $region32
        $region31: #{vn_basic_block_1d.4} parent=11 // pred_region
          %s249 = ssub.s32 16, 16
          %250 = vsyncadd [#allocation9], %s249
          %s252 = sshll.u32 %s5, 4
          %s253 = int_to_ptr.vmem [resolvable:$true] %s252
          %255 = dma.vmem_to_smem %s253, 16, [#allocation10], [#allocation9]
        $region32: #{vn_basic_block_1d.4} parent=11 // pred_fallthru
          _
      $region12: #{vn_basic_block_1d.4} parent=5 // pred_fallthru
        _
      %p256 = scmp.lt.s32.totalorder %s15, 4
      // Predicated region
      $region33: #{vn_basic_block_1d.4} parent=5 // pred_check
        %p257 = pneg %p256
      $region34: #{vn_basic_block_1d.4} parent=5 // pred_check_branch
        %259 = sbr.rel (%p257) target = $region36
      $region35: #{vn_basic_block_1d.4} parent=5 // pred_region
        // Predicated region
        $region37: #{vn_basic_block_1d.4} parent=35 // pred_check
          %p260 = pneg %p49
        $region38: #{vn_basic_block_1d.4} parent=35 // pred_check_branch
          %262 = sbr.rel (%p260) target = $region40
        $region39: #{vn_basic_block_1d.4} parent=35 // pred_region
          %s263 = sand.u32 %s39, 1
          %s264 = sand.u32 %s39, 1
          %s265 = smul.addr %s264, 768
          %s266 = scalar_lea.vmem [#allocation2], %s265
          %s267 = smul.u32 8, %s23
          %s268 = smul.addr %s22, 192
          %s269 = sadd.s32 %s267, %s268
          %s270 = smul.addr %s269, 8
          %s271 = scalar_lea.vmem %s0, %s270
          // Predicated region
          $region41: #{vn_basic_block_1d.4} parent=39 // pred_check
            _
          $region42: #{vn_basic_block_1d.4} parent=39 // pred_check_branch
            %273 = sbr.rel (0) target = $region44
          $region43: #{vn_basic_block_1d.4} parent=39 // pred_region
            // Predicated region
            $region45: #{vn_basic_block_1d.4} parent=43 // pred_check
              _
            $region46: #{vn_basic_block_1d.4} parent=43 // pred_check_branch
              %275 = sbr.rel (0) target = $region48
            $region47: #{vn_basic_block_1d.4} parent=43 // pred_region
              // Predicated region
              $region60: #{vn_basic_block_1d.4} parent=47 // pred_check
                _
              $region61: #{vn_basic_block_1d.4} parent=47 // pred_check_branch
                %481 = sbr.rel (0) target = $region63
              $region62: #{vn_basic_block_1d.4} parent=47 // pred_region
                loop: start=0, step=1, limit=1
                $region64: #{vn_basic_block_1d.4} parent=62 // loop_pre_header
                  _
                $region65: #{vn_basic_block_1d.4} parent=62 // loop_header
                  %s483 = sphi 0, %s487
                  %p484 = scmp.ge.s32.totalorder %s483, 1
                  %s488 = sphi %s271, %s271
                  %s489 = sphi %s266, %s266
                $region66: #{vn_basic_block_1d.4} parent=62 // loop_header_branch
                  %486 = sbr.rel (%p484) target = $region70
                $region67: #{vn_basic_block_1d.4} parent=62 // loop_body
                  %v490 = vld [vmem:[%s488] sm:$0xff]
                  %491 = vst [vmem:[%s489] sm:$0xff] %v490
                  %v492 = vld [vmem:[%s488 + $0x8] sm:$0xff]
                  %493 = vst [vmem:[%s489 + $0x8] sm:$0xff] %v492
                  %v494 = vld [vmem:[%s488 + $0x10] sm:$0xff]
                  %495 = vst [vmem:[%s489 + $0x10] sm:$0xff] %v494
                  %v496 = vld [vmem:[%s488 + $0x18] sm:$0xff]
                  %497 = vst [vmem:[%s489 + $0x18] sm:$0xff] %v496
                  %v498 = vld [vmem:[%s488 + $0x20] sm:$0xff]
                  %499 = vst [vmem:[%s489 + $0x20] sm:$0xff] %v498
                  %v500 = vld [vmem:[%s488 + $0x28] sm:$0xff]
                  %501 = vst [vmem:[%s489 + $0x28] sm:$0xff] %v500
                  %v502 = vld [vmem:[%s488 + $0x30] sm:$0xff]
                  %503 = vst [vmem:[%s489 + $0x30] sm:$0xff] %v502
                  %v504 = vld [vmem:[%s488 + $0x38] sm:$0xff]
                  %505 = vst [vmem:[%s489 + $0x38] sm:$0xff] %v504
                  %v506 = vld [vmem:[%s488 + $0x80] sm:$0xff]
                  %507 = vst [vmem:[%s489 + $0x40] sm:$0xff] %v506
                  %v508 = vld [vmem:[%s488 + $0x88] sm:$0xff]
                  %509 = vst [vmem:[%s489 + $0x48] sm:$0xff] %v508
                  %v510 = vld [vmem:[%s488 + $0x90] sm:$0xff]
                  %511 = vst [vmem:[%s489 + $0x50] sm:$0xff] %v510
                  %v512 = vld [vmem:[%s488 + $0x98] sm:$0xff]
                  %513 = vst [vmem:[%s489 + $0x58] sm:$0xff] %v512
                  %v514 = vld [vmem:[%s488 + $0xa0] sm:$0xff]
                  %515 = vst [vmem:[%s489 + $0x60] sm:$0xff] %v514
                  %v516 = vld [vmem:[%s488 + $0xa8] sm:$0xff]
                  %517 = vst [vmem:[%s489 + $0x68] sm:$0xff] %v516
                  %v518 = vld [vmem:[%s488 + $0xb0] sm:$0xff]
                  %519 = vst [vmem:[%s489 + $0x70] sm:$0xff] %v518
                  %v520 = vld [vmem:[%s488 + $0xb8] sm:$0xff]
                  %521 = vst [vmem:[%s489 + $0x78] sm:$0xff] %v520
                  %v522 = vld [vmem:[%s488 + $0x100] sm:$0xff]
                  %523 = vst [vmem:[%s489 + $0x80] sm:$0xff] %v522
                  %v524 = vld [vmem:[%s488 + $0x108] sm:$0xff]
                  %525 = vst [vmem:[%s489 + $0x88] sm:$0xff] %v524
                  %v526 = vld [vmem:[%s488 + $0x110] sm:$0xff]
                  %527 = vst [vmem:[%s489 + $0x90] sm:$0xff] %v526
                  %v528 = vld [vmem:[%s488 + $0x118] sm:$0xff]
                  %529 = vst [vmem:[%s489 + $0x98] sm:$0xff] %v528
                  %v530 = vld [vmem:[%s488 + $0x120] sm:$0xff]
                  %531 = vst [vmem:[%s489 + $0xa0] sm:$0xff] %v530
                  %v532 = vld [vmem:[%s488 + $0x128] sm:$0xff]
                  %533 = vst [vmem:[%s489 + $0xa8] sm:$0xff] %v532
                  %v534 = vld [vmem:[%s488 + $0x130] sm:$0xff]
                  %535 = vst [vmem:[%s489 + $0xb0] sm:$0xff] %v534
                  %v536 = vld [vmem:[%s488 + $0x138] sm:$0xff]
                  %537 = vst [vmem:[%s489 + $0xb8] sm:$0xff] %v536
                  %v538 = vld [vmem:[%s488 + $0x180] sm:$0xff]
                  %539 = vst [vmem:[%s489 + $0xc0] sm:$0xff] %v538
                  %v540 = vld [vmem:[%s488 + $0x188] sm:$0xff]
                  %541 = vst [vmem:[%s489 + $0xc8] sm:$0xff] %v540
                  %v542 = vld [vmem:[%s488 + $0x190] sm:$0xff]
                  %543 = vst [vmem:[%s489 + $0xd0] sm:$0xff] %v542
                  %v544 = vld [vmem:[%s488 + $0x198] sm:$0xff]
                  %545 = vst [vmem:[%s489 + $0xd8] sm:$0xff] %v544
                  %v546 = vld [vmem:[%s488 + $0x1a0] sm:$0xff]
                  %547 = vst [vmem:[%s489 + $0xe0] sm:$0xff] %v546
                  %v548 = vld [vmem:[%s488 + $0x1a8] sm:$0xff]
                  %549 = vst [vmem:[%s489 + $0xe8] sm:$0xff] %v548
                  %v550 = vld [vmem:[%s488 + $0x1b0] sm:$0xff]
                  %551 = vst [vmem:[%s489 + $0xf0] sm:$0xff] %v550
                  %v552 = vld [vmem:[%s488 + $0x1b8] sm:$0xff]
                  %553 = vst [vmem:[%s489 + $0xf8] sm:$0xff] %v552
                  %v554 = vld [vmem:[%s488 + $0x200] sm:$0xff]
                  %555 = vst [vmem:[%s489 + $0x100] sm:$0xff] %v554
                  %v556 = vld [vmem:[%s488 + $0x208] sm:$0xff]
                  %557 = vst [vmem:[%s489 + $0x108] sm:$0xff] %v556
                  %v558 = vld [vmem:[%s488 + $0x210] sm:$0xff]
                  %559 = vst [vmem:[%s489 + $0x110] sm:$0xff] %v558
                  %v560 = vld [vmem:[%s488 + $0x218] sm:$0xff]
                  %561 = vst [vmem:[%s489 + $0x118] sm:$0xff] %v560
                  %v562 = vld [vmem:[%s488 + $0x220] sm:$0xff]
                  %563 = vst [vmem:[%s489 + $0x120] sm:$0xff] %v562
                  %v564 = vld [vmem:[%s488 + $0x228] sm:$0xff]
                  %565 = vst [vmem:[%s489 + $0x128] sm:$0xff] %v564
                  %v566 = vld [vmem:[%s488 + $0x230] sm:$0xff]
                  %567 = vst [vmem:[%s489 + $0x130] sm:$0xff] %v566
                  %v568 = vld [vmem:[%s488 + $0x238] sm:$0xff]
                  %569 = vst [vmem:[%s489 + $0x138] sm:$0xff] %v568
                  %v570 = vld [vmem:[%s488 + $0x280] sm:$0xff]
                  %571 = vst [vmem:[%s489 + $0x140] sm:$0xff] %v570
                  %v572 = vld [vmem:[%s488 + $0x288] sm:$0xff]
                  %573 = vst [vmem:[%s489 + $0x148] sm:$0xff] %v572
                  %v574 = vld [vmem:[%s488 + $0x290] sm:$0xff]
                  %575 = vst [vmem:[%s489 + $0x150] sm:$0xff] %v574
                  %v576 = vld [vmem:[%s488 + $0x298] sm:$0xff]
                  %577 = vst [vmem:[%s489 + $0x158] sm:$0xff] %v576
                  %v578 = vld [vmem:[%s488 + $0x2a0] sm:$0xff]
                  %579 = vst [vmem:[%s489 + $0x160] sm:$0xff] %v578
                  %v580 = vld [vmem:[%s488 + $0x2a8] sm:$0xff]
                  %581 = vst [vmem:[%s489 + $0x168] sm:$0xff] %v580
                  %v582 = vld [vmem:[%s488 + $0x2b0] sm:$0xff]
                  %583 = vst [vmem:[%s489 + $0x170] sm:$0xff] %v582
                  %v584 = vld [vmem:[%s488 + $0x2b8] sm:$0xff]
                  %585 = vst [vmem:[%s489 + $0x178] sm:$0xff] %v584
                  %v586 = vld [vmem:[%s488 + $0x300] sm:$0xff]
                  %587 = vst [vmem:[%s489 + $0x180] sm:$0xff] %v586
                  %v588 = vld [vmem:[%s488 + $0x308] sm:$0xff]
                  %589 = vst [vmem:[%s489 + $0x188] sm:$0xff] %v588
                  %v590 = vld [vmem:[%s488 + $0x310] sm:$0xff]
                  %591 = vst [vmem:[%s489 + $0x190] sm:$0xff] %v590
                  %v592 = vld [vmem:[%s488 + $0x318] sm:$0xff]
                  %593 = vst [vmem:[%s489 + $0x198] sm:$0xff] %v592
                  %v594 = vld [vmem:[%s488 + $0x320] sm:$0xff]
                  %595 = vst [vmem:[%s489 + $0x1a0] sm:$0xff] %v594
                  %v596 = vld [vmem:[%s488 + $0x328] sm:$0xff]
                  %597 = vst [vmem:[%s489 + $0x1a8] sm:$0xff] %v596
                  %v598 = vld [vmem:[%s488 + $0x330] sm:$0xff]
                  %599 = vst [vmem:[%s489 + $0x1b0] sm:$0xff] %v598
                  %v600 = vld [vmem:[%s488 + $0x338] sm:$0xff]
                  %601 = vst [vmem:[%s489 + $0x1b8] sm:$0xff] %v600
                  %v602 = vld [vmem:[%s488 + $0x380] sm:$0xff]
                  %603 = vst [vmem:[%s489 + $0x1c0] sm:$0xff] %v602
                  %v604 = vld [vmem:[%s488 + $0x388] sm:$0xff]
                  %605 = vst [vmem:[%s489 + $0x1c8] sm:$0xff] %v604
                  %v606 = vld [vmem:[%s488 + $0x390] sm:$0xff]
                  %607 = vst [vmem:[%s489 + $0x1d0] sm:$0xff] %v606
                  %v608 = vld [vmem:[%s488 + $0x398] sm:$0xff]
                  %609 = vst [vmem:[%s489 + $0x1d8] sm:$0xff] %v608
                  %v610 = vld [vmem:[%s488 + $0x3a0] sm:$0xff]
                  %611 = vst [vmem:[%s489 + $0x1e0] sm:$0xff] %v610
                  %v612 = vld [vmem:[%s488 + $0x3a8] sm:$0xff]
                  %613 = vst [vmem:[%s489 + $0x1e8] sm:$0xff] %v612
                  %v614 = vld [vmem:[%s488 + $0x3b0] sm:$0xff]
                  %615 = vst [vmem:[%s489 + $0x1f0] sm:$0xff] %v614
                  %v616 = vld [vmem:[%s488 + $0x3b8] sm:$0xff]
                  %617 = vst [vmem:[%s489 + $0x1f8] sm:$0xff] %v616
                  %v618 = vld [vmem:[%s488 + $0x400] sm:$0xff]
                  %619 = vst [vmem:[%s489 + $0x200] sm:$0xff] %v618
                  %v620 = vld [vmem:[%s488 + $0x408] sm:$0xff]
                  %621 = vst [vmem:[%s489 + $0x208] sm:$0xff] %v620
                  %v622 = vld [vmem:[%s488 + $0x410] sm:$0xff]
                  %623 = vst [vmem:[%s489 + $0x210] sm:$0xff] %v622
                  %v624 = vld [vmem:[%s488 + $0x418] sm:$0xff]
                  %625 = vst [vmem:[%s489 + $0x218] sm:$0xff] %v624
                  %v626 = vld [vmem:[%s488 + $0x420] sm:$0xff]
                  %627 = vst [vmem:[%s489 + $0x220] sm:$0xff] %v626
                  %v628 = vld [vmem:[%s488 + $0x428] sm:$0xff]
                  %629 = vst [vmem:[%s489 + $0x228] sm:$0xff] %v628
                  %v630 = vld [vmem:[%s488 + $0x430] sm:$0xff]
                  %631 = vst [vmem:[%s489 + $0x230] sm:$0xff] %v630
                  %v632 = vld [vmem:[%s488 + $0x438] sm:$0xff]
                  %633 = vst [vmem:[%s489 + $0x238] sm:$0xff] %v632
                  %v634 = vld [vmem:[%s488 + $0x480] sm:$0xff]
                  %635 = vst [vmem:[%s489 + $0x240] sm:$0xff] %v634
                  %v636 = vld [vmem:[%s488 + $0x488] sm:$0xff]
                  %637 = vst [vmem:[%s489 + $0x248] sm:$0xff] %v636
                  %v638 = vld [vmem:[%s488 + $0x490] sm:$0xff]
                  %639 = vst [vmem:[%s489 + $0x250] sm:$0xff] %v638
                  %v640 = vld [vmem:[%s488 + $0x498] sm:$0xff]
                  %641 = vst [vmem:[%s489 + $0x258] sm:$0xff] %v640
                  %v642 = vld [vmem:[%s488 + $0x4a0] sm:$0xff]
                  %643 = vst [vmem:[%s489 + $0x260] sm:$0xff] %v642
                  %v644 = vld [vmem:[%s488 + $0x4a8] sm:$0xff]
                  %645 = vst [vmem:[%s489 + $0x268] sm:$0xff] %v644
                  %v646 = vld [vmem:[%s488 + $0x4b0] sm:$0xff]
                  %647 = vst [vmem:[%s489 + $0x270] sm:$0xff] %v646
                  %v648 = vld [vmem:[%s488 + $0x4b8] sm:$0xff]
                  %649 = vst [vmem:[%s489 + $0x278] sm:$0xff] %v648
                  %v650 = vld [vmem:[%s488 + $0x500] sm:$0xff]
                  %651 = vst [vmem:[%s489 + $0x280] sm:$0xff] %v650
                  %v652 = vld [vmem:[%s488 + $0x508] sm:$0xff]
                  %653 = vst [vmem:[%s489 + $0x288] sm:$0xff] %v652
                  %v654 = vld [vmem:[%s488 + $0x510] sm:$0xff]
                  %655 = vst [vmem:[%s489 + $0x290] sm:$0xff] %v654
                  %v656 = vld [vmem:[%s488 + $0x518] sm:$0xff]
                  %657 = vst [vmem:[%s489 + $0x298] sm:$0xff] %v656
                  %v658 = vld [vmem:[%s488 + $0x520] sm:$0xff]
                  %659 = vst [vmem:[%s489 + $0x2a0] sm:$0xff] %v658
                  %v660 = vld [vmem:[%s488 + $0x528] sm:$0xff]
                  %661 = vst [vmem:[%s489 + $0x2a8] sm:$0xff] %v660
                  %v662 = vld [vmem:[%s488 + $0x530] sm:$0xff]
                  %663 = vst [vmem:[%s489 + $0x2b0] sm:$0xff] %v662
                  %v664 = vld [vmem:[%s488 + $0x538] sm:$0xff]
                  %665 = vst [vmem:[%s489 + $0x2b8] sm:$0xff] %v664
                  %v666 = vld [vmem:[%s488 + $0x580] sm:$0xff]
                  %667 = vst [vmem:[%s489 + $0x2c0] sm:$0xff] %v666
                  %v668 = vld [vmem:[%s488 + $0x588] sm:$0xff]
                  %669 = vst [vmem:[%s489 + $0x2c8] sm:$0xff] %v668
                  %v670 = vld [vmem:[%s488 + $0x590] sm:$0xff]
                  %671 = vst [vmem:[%s489 + $0x2d0] sm:$0xff] %v670
                  %v672 = vld [vmem:[%s488 + $0x598] sm:$0xff]
                  %673 = vst [vmem:[%s489 + $0x2d8] sm:$0xff] %v672
                  %v674 = vld [vmem:[%s488 + $0x5a0] sm:$0xff]
                  %675 = vst [vmem:[%s489 + $0x2e0] sm:$0xff] %v674
                  %v676 = vld [vmem:[%s488 + $0x5a8] sm:$0xff]
                  %677 = vst [vmem:[%s489 + $0x2e8] sm:$0xff] %v676
                  %v678 = vld [vmem:[%s488 + $0x5b0] sm:$0xff]
                  %679 = vst [vmem:[%s489 + $0x2f0] sm:$0xff] %v678
                  %v680 = vld [vmem:[%s488 + $0x5b8] sm:$0xff]
                  %681 = vst [vmem:[%s489 + $0x2f8] sm:$0xff] %v680
                $region68: #{vn_basic_block_1d.4} parent=62 // loop_footer
                  %s487 = sadd.s32 1, %s483
                $region69: #{vn_basic_block_1d.4} parent=62 // loop_footer_branch
                  %482 = sbr.rel target = $region65
                $region70: #{vn_basic_block_1d.4} parent=62 // loop_exit
                  _
              $region63: #{vn_basic_block_1d.4} parent=47 // pred_fallthru
                _
              // Predicated region
              $region71: #{vn_basic_block_1d.4} parent=47 // pred_check
                _
              $region72: #{vn_basic_block_1d.4} parent=47 // pred_check_branch
                %683 = sbr.rel target = $region74
              $region73: #{vn_basic_block_1d.4} parent=47 // pred_region
                _
              $region74: #{vn_basic_block_1d.4} parent=47 // pred_fallthru
                _
            $region48: #{vn_basic_block_1d.4} parent=43 // pred_fallthru
              _
            // Predicated region
            $region49: #{vn_basic_block_1d.4} parent=43 // pred_check
              _
            $region50: #{vn_basic_block_1d.4} parent=43 // pred_check_branch
              %277 = sbr.rel target = $region52
            $region51: #{vn_basic_block_1d.4} parent=43 // pred_region
              %s279 = ssub.s32 256, 1
              loop: start=0, step=1, limit=1
              $region53: #{vn_basic_block_1d.4} parent=51 // loop_pre_header
                _
              $region54: #{vn_basic_block_1d.4} parent=51 // loop_header
                %s281 = sphi 0, %s285
                %p282 = scmp.ge.s32.totalorder %s281, 1
                %s286 = sphi %s271, %s271
                %s287 = sphi %s266, %s266
              $region55: #{vn_basic_block_1d.4} parent=51 // loop_header_branch
                %284 = sbr.rel (%p282) target = $region59
              $region56: #{vn_basic_block_1d.4} parent=51 // loop_body
                %v288 = vld [vmem:[%s286] sm:%s279]
                %289 = vst [vmem:[%s287] sm:%s279] %v288
                %v290 = vld [vmem:[%s286 + $0x8] sm:%s279]
                %291 = vst [vmem:[%s287 + $0x8] sm:%s279] %v290
                %v292 = vld [vmem:[%s286 + $0x10] sm:%s279]
                %293 = vst [vmem:[%s287 + $0x10] sm:%s279] %v292
                %v294 = vld [vmem:[%s286 + $0x18] sm:%s279]
                %295 = vst [vmem:[%s287 + $0x18] sm:%s279] %v294
                %v296 = vld [vmem:[%s286 + $0x20] sm:%s279]
                %297 = vst [vmem:[%s287 + $0x20] sm:%s279] %v296
                %v298 = vld [vmem:[%s286 + $0x28] sm:%s279]
                %299 = vst [vmem:[%s287 + $0x28] sm:%s279] %v298
                %v300 = vld [vmem:[%s286 + $0x30] sm:%s279]
                %301 = vst [vmem:[%s287 + $0x30] sm:%s279] %v300
                %v302 = vld [vmem:[%s286 + $0x38] sm:%s279]
                %303 = vst [vmem:[%s287 + $0x38] sm:%s279] %v302
                %v304 = vld [vmem:[%s286 + $0x80] sm:%s279]
                %305 = vst [vmem:[%s287 + $0x40] sm:%s279] %v304
                %v306 = vld [vmem:[%s286 + $0x88] sm:%s279]
                %307 = vst [vmem:[%s287 + $0x48] sm:%s279] %v306
                %v308 = vld [vmem:[%s286 + $0x90] sm:%s279]
                %309 = vst [vmem:[%s287 + $0x50] sm:%s279] %v308
                %v310 = vld [vmem:[%s286 + $0x98] sm:%s279]
                %311 = vst [vmem:[%s287 + $0x58] sm:%s279] %v310
                %v312 = vld [vmem:[%s286 + $0xa0] sm:%s279]
                %313 = vst [vmem:[%s287 + $0x60] sm:%s279] %v312
                %v314 = vld [vmem:[%s286 + $0xa8] sm:%s279]
                %315 = vst [vmem:[%s287 + $0x68] sm:%s279] %v314
                %v316 = vld [vmem:[%s286 + $0xb0] sm:%s279]
                %317 = vst [vmem:[%s287 + $0x70] sm:%s279] %v316
                %v318 = vld [vmem:[%s286 + $0xb8] sm:%s279]
                %319 = vst [vmem:[%s287 + $0x78] sm:%s279] %v318
                %v320 = vld [vmem:[%s286 + $0x100] sm:%s279]
                %321 = vst [vmem:[%s287 + $0x80] sm:%s279] %v320
                %v322 = vld [vmem:[%s286 + $0x108] sm:%s279]
                %323 = vst [vmem:[%s287 + $0x88] sm:%s279] %v322
                %v324 = vld [vmem:[%s286 + $0x110] sm:%s279]
                %325 = vst [vmem:[%s287 + $0x90] sm:%s279] %v324
                %v326 = vld [vmem:[%s286 + $0x118] sm:%s279]
                %327 = vst [vmem:[%s287 + $0x98] sm:%s279] %v326
                %v328 = vld [vmem:[%s286 + $0x120] sm:%s279]
                %329 = vst [vmem:[%s287 + $0xa0] sm:%s279] %v328
                %v330 = vld [vmem:[%s286 + $0x128] sm:%s279]
                %331 = vst [vmem:[%s287 + $0xa8] sm:%s279] %v330
                %v332 = vld [vmem:[%s286 + $0x130] sm:%s279]
                %333 = vst [vmem:[%s287 + $0xb0] sm:%s279] %v332
                %v334 = vld [vmem:[%s286 + $0x138] sm:%s279]
                %335 = vst [vmem:[%s287 + $0xb8] sm:%s279] %v334
                %v336 = vld [vmem:[%s286 + $0x180] sm:%s279]
                %337 = vst [vmem:[%s287 + $0xc0] sm:%s279] %v336
                %v338 = vld [vmem:[%s286 + $0x188] sm:%s279]
                %339 = vst [vmem:[%s287 + $0xc8] sm:%s279] %v338
                %v340 = vld [vmem:[%s286 + $0x190] sm:%s279]
                %341 = vst [vmem:[%s287 + $0xd0] sm:%s279] %v340
                %v342 = vld [vmem:[%s286 + $0x198] sm:%s279]
                %343 = vst [vmem:[%s287 + $0xd8] sm:%s279] %v342
                %v344 = vld [vmem:[%s286 + $0x1a0] sm:%s279]
                %345 = vst [vmem:[%s287 + $0xe0] sm:%s279] %v344
                %v346 = vld [vmem:[%s286 + $0x1a8] sm:%s279]
                %347 = vst [vmem:[%s287 + $0xe8] sm:%s279] %v346
                %v348 = vld [vmem:[%s286 + $0x1b0] sm:%s279]
                %349 = vst [vmem:[%s287 + $0xf0] sm:%s279] %v348
                %v350 = vld [vmem:[%s286 + $0x1b8] sm:%s279]
                %351 = vst [vmem:[%s287 + $0xf8] sm:%s279] %v350
                %v352 = vld [vmem:[%s286 + $0x200] sm:%s279]
                %353 = vst [vmem:[%s287 + $0x100] sm:%s279] %v352
                %v354 = vld [vmem:[%s286 + $0x208] sm:%s279]
                %355 = vst [vmem:[%s287 + $0x108] sm:%s279] %v354
                %v356 = vld [vmem:[%s286 + $0x210] sm:%s279]
                %357 = vst [vmem:[%s287 + $0x110] sm:%s279] %v356
                %v358 = vld [vmem:[%s286 + $0x218] sm:%s279]
                %359 = vst [vmem:[%s287 + $0x118] sm:%s279] %v358
                %v360 = vld [vmem:[%s286 + $0x220] sm:%s279]
                %361 = vst [vmem:[%s287 + $0x120] sm:%s279] %v360
                %v362 = vld [vmem:[%s286 + $0x228] sm:%s279]
                %363 = vst [vmem:[%s287 + $0x128] sm:%s279] %v362
                %v364 = vld [vmem:[%s286 + $0x230] sm:%s279]
                %365 = vst [vmem:[%s287 + $0x130] sm:%s279] %v364
                %v366 = vld [vmem:[%s286 + $0x238] sm:%s279]
                %367 = vst [vmem:[%s287 + $0x138] sm:%s279] %v366
                %v368 = vld [vmem:[%s286 + $0x280] sm:%s279]
                %369 = vst [vmem:[%s287 + $0x140] sm:%s279] %v368
                %v370 = vld [vmem:[%s286 + $0x288] sm:%s279]
                %371 = vst [vmem:[%s287 + $0x148] sm:%s279] %v370
                %v372 = vld [vmem:[%s286 + $0x290] sm:%s279]
                %373 = vst [vmem:[%s287 + $0x150] sm:%s279] %v372
                %v374 = vld [vmem:[%s286 + $0x298] sm:%s279]
                %375 = vst [vmem:[%s287 + $0x158] sm:%s279] %v374
                %v376 = vld [vmem:[%s286 + $0x2a0] sm:%s279]
                %377 = vst [vmem:[%s287 + $0x160] sm:%s279] %v376
                %v378 = vld [vmem:[%s286 + $0x2a8] sm:%s279]
                %379 = vst [vmem:[%s287 + $0x168] sm:%s279] %v378
                %v380 = vld [vmem:[%s286 + $0x2b0] sm:%s279]
                %381 = vst [vmem:[%s287 + $0x170] sm:%s279] %v380
                %v382 = vld [vmem:[%s286 + $0x2b8] sm:%s279]
                %383 = vst [vmem:[%s287 + $0x178] sm:%s279] %v382
                %v384 = vld [vmem:[%s286 + $0x300] sm:%s279]
                %385 = vst [vmem:[%s287 + $0x180] sm:%s279] %v384
                %v386 = vld [vmem:[%s286 + $0x308] sm:%s279]
                %387 = vst [vmem:[%s287 + $0x188] sm:%s279] %v386
                %v388 = vld [vmem:[%s286 + $0x310] sm:%s279]
                %389 = vst [vmem:[%s287 + $0x190] sm:%s279] %v388
                %v390 = vld [vmem:[%s286 + $0x318] sm:%s279]
                %391 = vst [vmem:[%s287 + $0x198] sm:%s279] %v390
                %v392 = vld [vmem:[%s286 + $0x320] sm:%s279]
                %393 = vst [vmem:[%s287 + $0x1a0] sm:%s279] %v392
                %v394 = vld [vmem:[%s286 + $0x328] sm:%s279]
                %395 = vst [vmem:[%s287 + $0x1a8] sm:%s279] %v394
                %v396 = vld [vmem:[%s286 + $0x330] sm:%s279]
                %397 = vst [vmem:[%s287 + $0x1b0] sm:%s279] %v396
                %v398 = vld [vmem:[%s286 + $0x338] sm:%s279]
                %399 = vst [vmem:[%s287 + $0x1b8] sm:%s279] %v398
                %v400 = vld [vmem:[%s286 + $0x380] sm:%s279]
                %401 = vst [vmem:[%s287 + $0x1c0] sm:%s279] %v400
                %v402 = vld [vmem:[%s286 + $0x388] sm:%s279]
                %403 = vst [vmem:[%s287 + $0x1c8] sm:%s279] %v402
                %v404 = vld [vmem:[%s286 + $0x390] sm:%s279]
                %405 = vst [vmem:[%s287 + $0x1d0] sm:%s279] %v404
                %v406 = vld [vmem:[%s286 + $0x398] sm:%s279]
                %407 = vst [vmem:[%s287 + $0x1d8] sm:%s279] %v406
                %v408 = vld [vmem:[%s286 + $0x3a0] sm:%s279]
                %409 = vst [vmem:[%s287 + $0x1e0] sm:%s279] %v408
                %v410 = vld [vmem:[%s286 + $0x3a8] sm:%s279]
                %411 = vst [vmem:[%s287 + $0x1e8] sm:%s279] %v410
                %v412 = vld [vmem:[%s286 + $0x3b0] sm:%s279]
                %413 = vst [vmem:[%s287 + $0x1f0] sm:%s279] %v412
                %v414 = vld [vmem:[%s286 + $0x3b8] sm:%s279]
                %415 = vst [vmem:[%s287 + $0x1f8] sm:%s279] %v414
                %v416 = vld [vmem:[%s286 + $0x400] sm:%s279]
                %417 = vst [vmem:[%s287 + $0x200] sm:%s279] %v416
                %v418 = vld [vmem:[%s286 + $0x408] sm:%s279]
                %419 = vst [vmem:[%s287 + $0x208] sm:%s279] %v418
                %v420 = vld [vmem:[%s286 + $0x410] sm:%s279]
                %421 = vst [vmem:[%s287 + $0x210] sm:%s279] %v420
                %v422 = vld [vmem:[%s286 + $0x418] sm:%s279]
                %423 = vst [vmem:[%s287 + $0x218] sm:%s279] %v422
                %v424 = vld [vmem:[%s286 + $0x420] sm:%s279]
                %425 = vst [vmem:[%s287 + $0x220] sm:%s279] %v424
                %v426 = vld [vmem:[%s286 + $0x428] sm:%s279]
                %427 = vst [vmem:[%s287 + $0x228] sm:%s279] %v426
                %v428 = vld [vmem:[%s286 + $0x430] sm:%s279]
                %429 = vst [vmem:[%s287 + $0x230] sm:%s279] %v428
                %v430 = vld [vmem:[%s286 + $0x438] sm:%s279]
                %431 = vst [vmem:[%s287 + $0x238] sm:%s279] %v430
                %v432 = vld [vmem:[%s286 + $0x480] sm:%s279]
                %433 = vst [vmem:[%s287 + $0x240] sm:%s279] %v432
                %v434 = vld [vmem:[%s286 + $0x488] sm:%s279]
                %435 = vst [vmem:[%s287 + $0x248] sm:%s279] %v434
                %v436 = vld [vmem:[%s286 + $0x490] sm:%s279]
                %437 = vst [vmem:[%s287 + $0x250] sm:%s279] %v436
                %v438 = vld [vmem:[%s286 + $0x498] sm:%s279]
                %439 = vst [vmem:[%s287 + $0x258] sm:%s279] %v438
                %v440 = vld [vmem:[%s286 + $0x4a0] sm:%s279]
                %441 = vst [vmem:[%s287 + $0x260] sm:%s279] %v440
                %v442 = vld [vmem:[%s286 + $0x4a8] sm:%s279]
                %443 = vst [vmem:[%s287 + $0x268] sm:%s279] %v442
                %v444 = vld [vmem:[%s286 + $0x4b0] sm:%s279]
                %445 = vst [vmem:[%s287 + $0x270] sm:%s279] %v444
                %v446 = vld [vmem:[%s286 + $0x4b8] sm:%s279]
                %447 = vst [vmem:[%s287 + $0x278] sm:%s279] %v446
                %v448 = vld [vmem:[%s286 + $0x500] sm:%s279]
                %449 = vst [vmem:[%s287 + $0x280] sm:%s279] %v448
                %v450 = vld [vmem:[%s286 + $0x508] sm:%s279]
                %451 = vst [vmem:[%s287 + $0x288] sm:%s279] %v450
                %v452 = vld [vmem:[%s286 + $0x510] sm:%s279]
                %453 = vst [vmem:[%s287 + $0x290] sm:%s279] %v452
                %v454 = vld [vmem:[%s286 + $0x518] sm:%s279]
                %455 = vst [vmem:[%s287 + $0x298] sm:%s279] %v454
                %v456 = vld [vmem:[%s286 + $0x520] sm:%s279]
                %457 = vst [vmem:[%s287 + $0x2a0] sm:%s279] %v456
                %v458 = vld [vmem:[%s286 + $0x528] sm:%s279]
                %459 = vst [vmem:[%s287 + $0x2a8] sm:%s279] %v458
                %v460 = vld [vmem:[%s286 + $0x530] sm:%s279]
                %461 = vst [vmem:[%s287 + $0x2b0] sm:%s279] %v460
                %v462 = vld [vmem:[%s286 + $0x538] sm:%s279]
                %463 = vst [vmem:[%s287 + $0x2b8] sm:%s279] %v462
                %v464 = vld [vmem:[%s286 + $0x580] sm:%s279]
                %465 = vst [vmem:[%s287 + $0x2c0] sm:%s279] %v464
                %v466 = vld [vmem:[%s286 + $0x588] sm:%s279]
                %467 = vst [vmem:[%s287 + $0x2c8] sm:%s279] %v466
                %v468 = vld [vmem:[%s286 + $0x590] sm:%s279]
                %469 = vst [vmem:[%s287 + $0x2d0] sm:%s279] %v468
                %v470 = vld [vmem:[%s286 + $0x598] sm:%s279]
                %471 = vst [vmem:[%s287 + $0x2d8] sm:%s279] %v470
                %v472 = vld [vmem:[%s286 + $0x5a0] sm:%s279]
                %473 = vst [vmem:[%s287 + $0x2e0] sm:%s279] %v472
                %v474 = vld [vmem:[%s286 + $0x5a8] sm:%s279]
                %475 = vst [vmem:[%s287 + $0x2e8] sm:%s279] %v474
                %v476 = vld [vmem:[%s286 + $0x5b0] sm:%s279]
                %477 = vst [vmem:[%s287 + $0x2f0] sm:%s279] %v476
                %v478 = vld [vmem:[%s286 + $0x5b8] sm:%s279]
                %479 = vst [vmem:[%s287 + $0x2f8] sm:%s279] %v478
              $region57: #{vn_basic_block_1d.4} parent=51 // loop_footer
                %s285 = sadd.s32 1, %s281
              $region58: #{vn_basic_block_1d.4} parent=51 // loop_footer_branch
                %280 = sbr.rel target = $region54
              $region59: #{vn_basic_block_1d.4} parent=51 // loop_exit
                _
            $region52: #{vn_basic_block_1d.4} parent=43 // pred_fallthru
              _
          $region44: #{vn_basic_block_1d.4} parent=39 // pred_fallthru
            _
          %684 = vnop
        $region40: #{vn_basic_block_1d.4} parent=35 // pred_fallthru
          _
      $region36: #{vn_basic_block_1d.4} parent=5 // pred_fallthru
        _
      %p685 = scmp.le.s32.totalorder 1, %s15
      %p686 = scmp.lt.s32.totalorder %s15, 5
      %p687 = pnand %p685, %p686
      %p688 = pneg %p687
      // Predicated region
      $region75: #{vn_basic_block_1d.4} parent=5 // pred_check
        _
      $region76: #{vn_basic_block_1d.4} parent=5 // pred_check_branch
        %690 = sbr.rel (%p687) target = $region78
      $region77: #{vn_basic_block_1d.4} parent=5 // pred_region
        %s691 = ssub.s32 %s15, 1
        %s692 = sand.u32 %s42, 1
        %s693 = sand.u32 %s42, 1
        %s694 = smul.addr %s693, 768
        %s695 = scalar_lea.vmem [#allocation2], %s694
        // Predicated region
        $region79: #{vn_basic_block_1d.4} parent=77 // pred_check
          %p696 = pneg %p55
        $region80: #{vn_basic_block_1d.4} parent=77 // pred_check_branch
          %698 = sbr.rel (%p696) target = $region82
        $region81: #{vn_basic_block_1d.4} parent=77 // pred_region
          _
        $region82: #{vn_basic_block_1d.4} parent=77 // pred_fallthru
          _
        // Predicated region
        $region83: #{vn_basic_block_1d.4} parent=77 // pred_check
          %p699 = pneg %p76
        $region84: #{vn_basic_block_1d.4} parent=77 // pred_check_branch
          %701 = sbr.rel (%p699) target = $region86
        $region85: #{vn_basic_block_1d.4} parent=77 // pred_region
          %702 = dma.done [#allocation4], 64
        $region86: #{vn_basic_block_1d.4} parent=77 // pred_fallthru
          _
        // Predicated region
        $region87: #{vn_basic_block_1d.4} parent=77 // pred_check
          %p703 = pneg %p97
        $region88: #{vn_basic_block_1d.4} parent=77 // pred_check_branch
          %705 = sbr.rel (%p703) target = $region90
        $region89: #{vn_basic_block_1d.4} parent=77 // pred_region
          %706 = dma.done [#allocation6], 64
        $region90: #{vn_basic_block_1d.4} parent=77 // pred_fallthru
          _
        // Predicated region
        $region91: #{vn_basic_block_1d.4} parent=77 // pred_check
          %p707 = pneg %p118
        $region92: #{vn_basic_block_1d.4} parent=77 // pred_check_branch
          %709 = sbr.rel (%p707) target = $region94
        $region93: #{vn_basic_block_1d.4} parent=77 // pred_region
          %710 = dma.done [#allocation6], 64
        $region94: #{vn_basic_block_1d.4} parent=77 // pred_fallthru
          _
        // Predicated region
        $region95: #{vn_basic_block_1d.4} parent=77 // pred_check
          %p711 = pneg %p139
        $region96: #{vn_basic_block_1d.4} parent=77 // pred_check_branch
          %713 = sbr.rel (%p711) target = $region98
        $region97: #{vn_basic_block_1d.4} parent=77 // pred_region
          %714 = dma.done [#allocation9], 16
        $region98: #{vn_basic_block_1d.4} parent=77 // pred_fallthru
          _
        // Predicated region
        $region99: #{vn_basic_block_1d.4} parent=77 // pred_check
          %p715 = pneg %p160
        $region100: #{vn_basic_block_1d.4} parent=77 // pred_check_branch
          %717 = sbr.rel (%p715) target = $region102
        $region101: #{vn_basic_block_1d.4} parent=77 // pred_region
          %718 = dma.done [#allocation9], 16
        $region102: #{vn_basic_block_1d.4} parent=77 // pred_fallthru
          _
        %719 = sfence
        %s720 = sand.u32 %s42, 1
        %s721 = sand.u32 %s42, 1
        %s722 = smul.addr %s721, 768
        %s723 = scalar_lea.vmem [#allocation2], %s722
        %p724 = pneg %p55
        %p725 = pneg %p52
        %p726 = pneg %p76
        %p727 = pneg %p73
        %p728 = pneg %p97
        %p729 = pneg %p94
        %p730 = pneg %p118
        %p731 = pneg %p115
        %p732 = pneg %p139
        %p733 = pneg %p136
        %p734 = pneg %p160
        %p735 = pneg %p157
        %p736 = pneg %p186
        %p737 = pneg %p183
        %p738 = scmp.lt.s32.totalorder %s24, 1
        %s739 = scalar_select %p738, %s24, 1
        %s740 = smul.addr %s739, 8
        %s741 = smul.addr %s740, 8
        %s742 = scalar_lea.vmem %s6, %s741
        %s743 = smul.u32 8, %s25
        %p744 = scmp.lt.s32.totalorder %s24, 1
        %s745 = scalar_select %p744, %s24, 1
        %s746 = smul.addr %s745, 8
        %s747 = smul.addr %s746, 8
        %s748 = scalar_lea.vmem %s6, %s747
        %p749 = scmp.eq.s32.totalorder %s25, 0
        // Predicated region
        $region103: #{vn_basic_block_1d.4} parent=77 // pred_check
          %p750 = pneg %p749
        $region104: #{vn_basic_block_1d.4} parent=77 // pred_check_branch
          %752 = sbr.rel (%p750) target = $region106
        $region105: #{vn_basic_block_1d.4} parent=77 // pred_region
          %753 = vst [vmem:[%s748] sm:$0xff] 0.0
          %754 = vst [vmem:[%s748 + $0x8] sm:$0xff] 0.0
          %755 = vst [vmem:[%s748 + $0x10] sm:$0xff] 0.0
          %756 = vst [vmem:[%s748 + $0x18] sm:$0xff] 0.0
          %757 = vst [vmem:[%s748 + $0x20] sm:$0xff] 0.0
          %758 = vst [vmem:[%s748 + $0x28] sm:$0xff] 0.0
          %759 = vst [vmem:[%s748 + $0x30] sm:$0xff] 0.0
          %760 = vst [vmem:[%s748 + $0x38] sm:$0xff] 0.0
        $region106: #{vn_basic_block_1d.4} parent=77 // pred_fallthru
          _
        loop: start=0, step=1, limit=8
        $region107: #{vn_basic_block_1d.4} parent=77 // loop_pre_header
          _
        $region108: #{vn_basic_block_1d.4} parent=77 // loop_header
          %s762 = sphi 0, %s766
          %p763 = scmp.ge.s32.totalorder %s762, 8
        $region109: #{vn_basic_block_1d.4} parent=77 // loop_header_branch
          %765 = sbr.rel (%p763) target = $region113
        $region110: #{vn_basic_block_1d.4} parent=77 // loop_body
          %s767 = smul.u32 %s762, 8
          %s768 = scalar_lea.vmem %s695, %s767 [#allocation2]
          %v769 = vld [vmem:[%s768] sm:$0xff]
          %s770 = sadd.s32 %s767, 64
          %s771 = scalar_lea.vmem %s695, %s770 [#allocation2]
          %v772 = vld [vmem:[%s771] sm:$0xff]
          %s773 = sadd.s32 %s767, 128
          %s774 = scalar_lea.vmem %s695, %s773 [#allocation2]
          %v775 = vld [vmem:[%s774] sm:$0xff]
          %s776 = sadd.s32 %s767, 192
          %s777 = scalar_lea.vmem %s695, %s776 [#allocation2]
          %v778 = vld [vmem:[%s777] sm:$0xff]
          %s779 = sadd.s32 %s767, 256
          %s780 = scalar_lea.vmem %s695, %s779 [#allocation2]
          %v781 = vld [vmem:[%s780] sm:$0xff]
          %s782 = sadd.s32 %s767, 320
          %s783 = scalar_lea.vmem %s695, %s782 [#allocation2]
          %v784 = vld [vmem:[%s783] sm:$0xff]
          %s785 = sadd.s32 %s767, 384
          %s786 = scalar_lea.vmem %s695, %s785 [#allocation2]
          %v787 = vld [vmem:[%s786] sm:$0xff]
          %s788 = sadd.s32 %s767, 448
          %s789 = scalar_lea.vmem %s695, %s788 [#allocation2]
          %v790 = vld [vmem:[%s789] sm:$0xff]
          %s791 = sadd.s32 %s767, 512
          %s792 = scalar_lea.vmem %s695, %s791 [#allocation2]
          %v793 = vld [vmem:[%s792] sm:$0xff]
          %s794 = sadd.s32 %s767, 576
          %s795 = scalar_lea.vmem %s695, %s794 [#allocation2]
          %v796 = vld [vmem:[%s795] sm:$0xff]
          %s797 = sadd.s32 %s767, 640
          %s798 = scalar_lea.vmem %s695, %s797 [#allocation2]
          %v799 = vld [vmem:[%s798] sm:$0xff]
          %s800 = sadd.s32 %s767, 704
          %s801 = scalar_lea.vmem %s695, %s800 [#allocation2]
          %v802 = vld [vmem:[%s801] sm:$0xff]
          %s803 = sld [smem:[#allocation3]]
          %v804 = vstv %s803
          %v805 = vmul.f32 %v804, %v769
          %s806 = sld [smem:[#allocation3 + $0x1]]
          %v807 = vstv %s806
          %v808 = vmul.f32 %v807, %v778
          %v809 = vadd.f32 %v805, %v808
          %s810 = sld [smem:[#allocation3 + $0x2]]
          %v811 = vstv %s810
          %v812 = vmul.f32 %v811, %v787
          %v813 = vadd.f32 %v809, %v812
          %s814 = sld [smem:[#allocation3 + $0x3]]
          %v815 = vstv %s814
          %v816 = vmul.f32 %v815, %v796
          %v817 = vadd.f32 %v813, %v816
          %v818 = vmul.f32 %v804, %v772
          %v819 = vmul.f32 %v807, %v781
          %v820 = vadd.f32 %v818, %v819
          %v821 = vmul.f32 %v811, %v790
          %v822 = vadd.f32 %v820, %v821
          %v823 = vmul.f32 %v815, %v799
          %v824 = vadd.f32 %v822, %v823
          %v825 = vmul.f32 %v804, %v775
          %v826 = vmul.f32 %v807, %v784
          %v827 = vadd.f32 %v825, %v826
          %v828 = vmul.f32 %v811, %v793
          %v829 = vadd.f32 %v827, %v828
          %v830 = vmul.f32 %v815, %v802
          %v831 = vadd.f32 %v829, %v830
          %s832 = sld [smem:[#allocation3 + $0x80]]
          %v833 = vstv %s832
          %v834 = vmul.f32 %v833, %v769
          %s835 = sld [smem:[#allocation3 + $0x81]]
          %v836 = vstv %s835
          %v837 = vmul.f32 %v836, %v778
          %v838 = vadd.f32 %v834, %v837
          %s839 = sld [smem:[#allocation3 + $0x82]]
          %v840 = vstv %s839
          %v841 = vmul.f32 %v840, %v787
          %v842 = vadd.f32 %v838, %v841
          %s843 = sld [smem:[#allocation3 + $0x83]]
          %v844 = vstv %s843
          %v845 = vmul.f32 %v844, %v796
          %v846 = vadd.f32 %v842, %v845
          %v847 = vmul.f32 %v833, %v772
          %v848 = vmul.f32 %v836, %v781
          %v849 = vadd.f32 %v847, %v848
          %v850 = vmul.f32 %v840, %v790
          %v851 = vadd.f32 %v849, %v850
          %v852 = vmul.f32 %v844, %v799
          %v853 = vadd.f32 %v851, %v852
          %v854 = vmul.f32 %v833, %v775
          %v855 = vmul.f32 %v836, %v784
          %v856 = vadd.f32 %v854, %v855
          %v857 = vmul.f32 %v840, %v793
          %v858 = vadd.f32 %v856, %v857
          %v859 = vmul.f32 %v844, %v802
          %v860 = vadd.f32 %v858, %v859
          %s861 = sld [smem:[#allocation3 + $0x100]]
          %v862 = vstv %s861
          %v863 = vmul.f32 %v862, %v769
          %s864 = sld [smem:[#allocation3 + $0x101]]
          %v865 = vstv %s864
          %v866 = vmul.f32 %v865, %v778
          %v867 = vadd.f32 %v863, %v866
          %s868 = sld [smem:[#allocation3 + $0x102]]
          %v869 = vstv %s868
          %v870 = vmul.f32 %v869, %v787
          %v871 = vadd.f32 %v867, %v870
          %s872 = sld [smem:[#allocation3 + $0x103]]
          %v873 = vstv %s872
          %v874 = vmul.f32 %v873, %v796
          %v875 = vadd.f32 %v871, %v874
          %v876 = vmul.f32 %v862, %v772
          %v877 = vmul.f32 %v865, %v781
          %v878 = vadd.f32 %v876, %v877
          %v879 = vmul.f32 %v869, %v790
          %v880 = vadd.f32 %v878, %v879
          %v881 = vmul.f32 %v873, %v799
          %v882 = vadd.f32 %v880, %v881
          %v883 = vmul.f32 %v862, %v775
          %v884 = vmul.f32 %v865, %v784
          %v885 = vadd.f32 %v883, %v884
          %v886 = vmul.f32 %v869, %v793
          %v887 = vadd.f32 %v885, %v886
          %v888 = vmul.f32 %v873, %v802
          %v889 = vadd.f32 %v887, %v888
          %s890 = sld [smem:[#allocation3 + $0x180]]
          %v891 = vstv %s890
          %v892 = vmul.f32 %v891, %v769
          %s893 = sld [smem:[#allocation3 + $0x181]]
          %v894 = vstv %s893
          %v895 = vmul.f32 %v894, %v778
          %v896 = vadd.f32 %v892, %v895
          %s897 = sld [smem:[#allocation3 + $0x182]]
          %v898 = vstv %s897
          %v899 = vmul.f32 %v898, %v787
          %v900 = vadd.f32 %v896, %v899
          %s901 = sld [smem:[#allocation3 + $0x183]]
          %v902 = vstv %s901
          %v903 = vmul.f32 %v902, %v796
          %v904 = vadd.f32 %v900, %v903
          %v905 = vmul.f32 %v891, %v772
          %v906 = vmul.f32 %v894, %v781
          %v907 = vadd.f32 %v905, %v906
          %v908 = vmul.f32 %v898, %v790
          %v909 = vadd.f32 %v907, %v908
          %v910 = vmul.f32 %v902, %v799
          %v911 = vadd.f32 %v909, %v910
          %v912 = vmul.f32 %v891, %v775
          %v913 = vmul.f32 %v894, %v784
          %v914 = vadd.f32 %v912, %v913
          %v915 = vmul.f32 %v898, %v793
          %v916 = vadd.f32 %v914, %v915
          %v917 = vmul.f32 %v902, %v802
          %v918 = vadd.f32 %v916, %v917
          %v919 = vmul.f32 %v817, %v817
          %v920 = vmul.f32 %v824, %v824
          %v921 = vadd.f32 %v919, %v920
          %v922 = vmul.f32 %v831, %v831
          %v923 = vadd.f32 %v921, %v922
          %v924 = vrsqrt.pop %v923
          %v925 = vmul.f32 %v923, %v924
          %vm926 = vcmp.eq.f32.partialorder %v923, inf
          %v927 = vsel %vm926, %v923, %v925
          %vm928 = vcmp.eq.f32.partialorder %v923, 0.0
          %v929 = vand.u32 %v923, 2147483648
          %v930 = vsel %vm928, %v929, %v927
          %v931 = vadd.f32 %v930, 1e-06
          %v932 = vrcp.pop %v931
          %s933 = sld [smem:[#allocation8]]
          %s934 = sld [smem:[#allocation10]]
          %v935 = vstv %s934
          %v936 = vmul.f32 %v935, %v932
          %v937 = vstv %s933
          %v938 = vadd.f32 %v937, %v936
          %v939 = vmul.f32 %v817, %v938
          %v940 = vmul.f32 %v824, %v938
          %v941 = vmul.f32 %v831, %v938
          %v942 = vmul.f32 %v846, %v846
          %v943 = vmul.f32 %v853, %v853
          %v944 = vadd.f32 %v942, %v943
          %v945 = vmul.f32 %v860, %v860
          %v946 = vadd.f32 %v944, %v945
          %v947 = vrsqrt.pop %v946
          %v948 = vmul.f32 %v946, %v947
          %vm949 = vcmp.eq.f32.partialorder %v946, inf
          %v950 = vsel %vm949, %v946, %v948
          %vm951 = vcmp.eq.f32.partialorder %v946, 0.0
          %v952 = vand.u32 %v946, 2147483648
          %v953 = vsel %vm951, %v952, %v950
          %v954 = vadd.f32 %v953, 1e-06
          %v955 = vrcp.pop %v954
          %s956 = sld [smem:[#allocation8 + $0x1]]
          %s957 = sld [smem:[#allocation10 + $0x1]]
          %v958 = vstv %s957
          %v959 = vmul.f32 %v958, %v955
          %v960 = vstv %s956
          %v961 = vadd.f32 %v960, %v959
          %v962 = vmul.f32 %v846, %v961
          %v963 = vmul.f32 %v853, %v961
          %v964 = vmul.f32 %v860, %v961
          %v965 = vmul.f32 %v875, %v875
          %v966 = vmul.f32 %v882, %v882
          %v967 = vadd.f32 %v965, %v966
          %v968 = vmul.f32 %v889, %v889
          %v969 = vadd.f32 %v967, %v968
          %v970 = vrsqrt.pop %v969
          %v971 = vmul.f32 %v969, %v970
          %vm972 = vcmp.eq.f32.partialorder %v969, inf
          %v973 = vsel %vm972, %v969, %v971
          %vm974 = vcmp.eq.f32.partialorder %v969, 0.0
          %v975 = vand.u32 %v969, 2147483648
          %v976 = vsel %vm974, %v975, %v973
          %v977 = vadd.f32 %v976, 1e-06
          %v978 = vrcp.pop %v977
          %s979 = sld [smem:[#allocation8 + $0x2]]
          %s980 = sld [smem:[#allocation10 + $0x2]]
          %v981 = vstv %s980
          %v982 = vmul.f32 %v981, %v978
          %v983 = vstv %s979
          %v984 = vadd.f32 %v983, %v982
          %v985 = vmul.f32 %v875, %v984
          %v986 = vmul.f32 %v882, %v984
          %v987 = vmul.f32 %v889, %v984
          %v988 = vmul.f32 %v904, %v904
          %v989 = vmul.f32 %v911, %v911
          %v990 = vadd.f32 %v988, %v989
          %v991 = vmul.f32 %v918, %v918
          %v992 = vadd.f32 %v990, %v991
          %v993 = vrsqrt.pop %v992
          %v994 = vmul.f32 %v992, %v993
          %vm995 = vcmp.eq.f32.partialorder %v992, inf
          %v996 = vsel %vm995, %v992, %v994
          %vm997 = vcmp.eq.f32.partialorder %v992, 0.0
          %v998 = vand.u32 %v992, 2147483648
          %v999 = vsel %vm997, %v998, %v996
          %v1000 = vadd.f32 %v999, 1e-06
          %v1001 = vrcp.pop %v1000
          %s1002 = sld [smem:[#allocation8 + $0x3]]
          %s1003 = sld [smem:[#allocation10 + $0x3]]
          %v1004 = vstv %s1003
          %v1005 = vmul.f32 %v1004, %v1001
          %v1006 = vstv %s1002
          %v1007 = vadd.f32 %v1006, %v1005
          %v1008 = vmul.f32 %v904, %v1007
          %v1009 = vmul.f32 %v911, %v1007
          %v1010 = vmul.f32 %v918, %v1007
          %s1011 = sld [smem:[#allocation5]]
          %v1012 = vstv %s1011
          %v1013 = vmul.f32 %v1012, %v939
          %s1014 = sld [smem:[#allocation5 + $0x1]]
          %v1015 = vstv %s1014
          %v1016 = vmul.f32 %v1015, %v962
          %v1017 = vadd.f32 %v1013, %v1016
          %s1018 = sld [smem:[#allocation5 + $0x2]]
          %v1019 = vstv %s1018
          %v1020 = vmul.f32 %v1019, %v985
          %v1021 = vadd.f32 %v1017, %v1020
          %s1022 = sld [smem:[#allocation5 + $0x3]]
          %v1023 = vstv %s1022
          %v1024 = vmul.f32 %v1023, %v1008
          %v1025 = vadd.f32 %v1021, %v1024
          %v1026 = vmul.f32 %v1012, %v940
          %v1027 = vmul.f32 %v1015, %v963
          %v1028 = vadd.f32 %v1026, %v1027
          %v1029 = vmul.f32 %v1019, %v986
          %v1030 = vadd.f32 %v1028, %v1029
          %v1031 = vmul.f32 %v1023, %v1009
          %v1032 = vadd.f32 %v1030, %v1031
          %v1033 = vmul.f32 %v1012, %v941
          %v1034 = vmul.f32 %v1015, %v964
          %v1035 = vadd.f32 %v1033, %v1034
          %v1036 = vmul.f32 %v1019, %v987
          %v1037 = vadd.f32 %v1035, %v1036
          %v1038 = vmul.f32 %v1023, %v1010
          %v1039 = vadd.f32 %v1037, %v1038
          %s1040 = sld [smem:[#allocation5 + $0x80]]
          %v1041 = vstv %s1040
          %v1042 = vmul.f32 %v1041, %v939
          %s1043 = sld [smem:[#allocation5 + $0x81]]
          %v1044 = vstv %s1043
          %v1045 = vmul.f32 %v1044, %v962
          %v1046 = vadd.f32 %v1042, %v1045
          %s1047 = sld [smem:[#allocation5 + $0x82]]
          %v1048 = vstv %s1047
          %v1049 = vmul.f32 %v1048, %v985
          %v1050 = vadd.f32 %v1046, %v1049
          %s1051 = sld [smem:[#allocation5 + $0x83]]
          %v1052 = vstv %s1051
          %v1053 = vmul.f32 %v1052, %v1008
          %v1054 = vadd.f32 %v1050, %v1053
          %v1055 = vmul.f32 %v1041, %v940
          %v1056 = vmul.f32 %v1044, %v963
          %v1057 = vadd.f32 %v1055, %v1056
          %v1058 = vmul.f32 %v1048, %v986
          %v1059 = vadd.f32 %v1057, %v1058
          %v1060 = vmul.f32 %v1052, %v1009
          %v1061 = vadd.f32 %v1059, %v1060
          %v1062 = vmul.f32 %v1041, %v941
          %v1063 = vmul.f32 %v1044, %v964
          %v1064 = vadd.f32 %v1062, %v1063
          %v1065 = vmul.f32 %v1048, %v987
          %v1066 = vadd.f32 %v1064, %v1065
          %v1067 = vmul.f32 %v1052, %v1010
          %v1068 = vadd.f32 %v1066, %v1067
          %s1069 = sld [smem:[#allocation5 + $0x100]]
          %v1070 = vstv %s1069
          %v1071 = vmul.f32 %v1070, %v939
          %s1072 = sld [smem:[#allocation5 + $0x101]]
          %v1073 = vstv %s1072
          %v1074 = vmul.f32 %v1073, %v962
          %v1075 = vadd.f32 %v1071, %v1074
          %s1076 = sld [smem:[#allocation5 + $0x102]]
          %v1077 = vstv %s1076
          %v1078 = vmul.f32 %v1077, %v985
          %v1079 = vadd.f32 %v1075, %v1078
          %s1080 = sld [smem:[#allocation5 + $0x103]]
          %v1081 = vstv %s1080
          %v1082 = vmul.f32 %v1081, %v1008
          %v1083 = vadd.f32 %v1079, %v1082
          %v1084 = vmul.f32 %v1070, %v940
          %v1085 = vmul.f32 %v1073, %v963
          %v1086 = vadd.f32 %v1084, %v1085
          %v1087 = vmul.f32 %v1077, %v986
          %v1088 = vadd.f32 %v1086, %v1087
          %v1089 = vmul.f32 %v1081, %v1009
          %v1090 = vadd.f32 %v1088, %v1089
          %v1091 = vmul.f32 %v1070, %v941
          %v1092 = vmul.f32 %v1073, %v964
          %v1093 = vadd.f32 %v1091, %v1092
          %v1094 = vmul.f32 %v1077, %v987
          %v1095 = vadd.f32 %v1093, %v1094
          %v1096 = vmul.f32 %v1081, %v1010
          %v1097 = vadd.f32 %v1095, %v1096
          %s1098 = sld [smem:[#allocation5 + $0x180]]
          %v1099 = vstv %s1098
          %v1100 = vmul.f32 %v1099, %v939
          %s1101 = sld [smem:[#allocation5 + $0x181]]
          %v1102 = vstv %s1101
          %v1103 = vmul.f32 %v1102, %v962
          %v1104 = vadd.f32 %v1100, %v1103
          %s1105 = sld [smem:[#allocation5 + $0x182]]
          %v1106 = vstv %s1105
          %v1107 = vmul.f32 %v1106, %v985
          %v1108 = vadd.f32 %v1104, %v1107
          %s1109 = sld [smem:[#allocation5 + $0x183]]
          %v1110 = vstv %s1109
          %v1111 = vmul.f32 %v1110, %v1008
          %v1112 = vadd.f32 %v1108, %v1111
          %v1113 = vmul.f32 %v1099, %v940
          %v1114 = vmul.f32 %v1102, %v963
          %v1115 = vadd.f32 %v1113, %v1114
          %v1116 = vmul.f32 %v1106, %v986
          %v1117 = vadd.f32 %v1115, %v1116
          %v1118 = vmul.f32 %v1110, %v1009
          %v1119 = vadd.f32 %v1117, %v1118
          %v1120 = vmul.f32 %v1099, %v941
          %v1121 = vmul.f32 %v1102, %v964
          %v1122 = vadd.f32 %v1120, %v1121
          %v1123 = vmul.f32 %v1106, %v987
          %v1124 = vadd.f32 %v1122, %v1123
          %v1125 = vmul.f32 %v1110, %v1010
          %v1126 = vadd.f32 %v1124, %v1125
          %v1127 = vmul.f32 %v939, %v1025
          %v1128 = vmul.f32 %v940, %v1032
          %v1129 = vadd.f32 %v1127, %v1128
          %v1130 = vmul.f32 %v941, %v1039
          %v1131 = vadd.f32 %v1129, %v1130
          %v1132 = vmul.f32 %v1025, %v1025
          %v1133 = vmul.f32 %v1032, %v1032
          %v1134 = vadd.f32 %v1132, %v1133
          %v1135 = vmul.f32 %v1039, %v1039
          %v1136 = vadd.f32 %v1134, %v1135
          %vm1137 = vcmp.ge.f32.partialorder %v1131, 0.0
          %v1138 = vadd.f32 %v1136, 1e-06
          %v1139 = vrcp.pop %v1138
          %v1140 = vmul.f32 %v1131, %v1139
          %v1141 = vsel %vm1137, 0.0, %v1140
          %v1142 = vmul.f32 %v1141, %v1025
          %v1143 = vsub.f32 %v939, %v1142
          %v1144 = vmul.f32 %v1141, %v1032
          %v1145 = vsub.f32 %v940, %v1144
          %v1146 = vmul.f32 %v1141, %v1039
          %v1147 = vsub.f32 %v941, %v1146
          %v1148 = vmul.f32 %v962, %v1054
          %v1149 = vmul.f32 %v963, %v1061
          %v1150 = vadd.f32 %v1148, %v1149
          %v1151 = vmul.f32 %v964, %v1068
          %v1152 = vadd.f32 %v1150, %v1151
          %v1153 = vmul.f32 %v1054, %v1054
          %v1154 = vmul.f32 %v1061, %v1061
          %v1155 = vadd.f32 %v1153, %v1154
          %v1156 = vmul.f32 %v1068, %v1068
          %v1157 = vadd.f32 %v1155, %v1156
          %vm1158 = vcmp.ge.f32.partialorder %v1152, 0.0
          %v1159 = vadd.f32 %v1157, 1e-06
          %v1160 = vrcp.pop %v1159
          %v1161 = vmul.f32 %v1152, %v1160
          %v1162 = vsel %vm1158, 0.0, %v1161
          %v1163 = vmul.f32 %v1162, %v1054
          %v1164 = vsub.f32 %v962, %v1163
          %v1165 = vmul.f32 %v1162, %v1061
          %v1166 = vsub.f32 %v963, %v1165
          %v1167 = vmul.f32 %v1162, %v1068
          %v1168 = vsub.f32 %v964, %v1167
          %v1169 = vmul.f32 %v985, %v1083
          %v1170 = vmul.f32 %v986, %v1090
          %v1171 = vadd.f32 %v1169, %v1170
          %v1172 = vmul.f32 %v987, %v1097
          %v1173 = vadd.f32 %v1171, %v1172
          %v1174 = vmul.f32 %v1083, %v1083
          %v1175 = vmul.f32 %v1090, %v1090
          %v1176 = vadd.f32 %v1174, %v1175
          %v1177 = vmul.f32 %v1097, %v1097
          %v1178 = vadd.f32 %v1176, %v1177
          %vm1179 = vcmp.ge.f32.partialorder %v1173, 0.0
          %v1180 = vadd.f32 %v1178, 1e-06
          %v1181 = vrcp.pop %v1180
          %v1182 = vmul.f32 %v1173, %v1181
          %v1183 = vsel %vm1179, 0.0, %v1182
          %v1184 = vmul.f32 %v1183, %v1083
          %v1185 = vsub.f32 %v985, %v1184
          %v1186 = vmul.f32 %v1183, %v1090
          %v1187 = vsub.f32 %v986, %v1186
          %v1188 = vmul.f32 %v1183, %v1097
          %v1189 = vsub.f32 %v987, %v1188
          %v1190 = vmul.f32 %v1008, %v1112
          %v1191 = vmul.f32 %v1009, %v1119
          %v1192 = vadd.f32 %v1190, %v1191
          %v1193 = vmul.f32 %v1010, %v1126
          %v1194 = vadd.f32 %v1192, %v1193
          %v1195 = vmul.f32 %v1112, %v1112
          %v1196 = vmul.f32 %v1119, %v1119
          %v1197 = vadd.f32 %v1195, %v1196
          %v1198 = vmul.f32 %v1126, %v1126
          %v1199 = vadd.f32 %v1197, %v1198
          %vm1200 = vcmp.ge.f32.partialorder %v1194, 0.0
          %v1201 = vadd.f32 %v1199, 1e-06
          %v1202 = vrcp.pop %v1201
          %v1203 = vmul.f32 %v1194, %v1202
          %v1204 = vsel %vm1200, 0.0, %v1203
          %v1205 = vmul.f32 %v1204, %v1112
          %v1206 = vsub.f32 %v1008, %v1205
          %v1207 = vmul.f32 %v1204, %v1119
          %v1208 = vsub.f32 %v1009, %v1207
          %v1209 = vmul.f32 %v1204, %v1126
          %v1210 = vsub.f32 %v1010, %v1209
          %s1211 = sld [smem:[#allocation7]]
          %v1212 = vstv %s1211
          %v1213 = vmul.f32 %v1212, %v1143
          %s1214 = sld [smem:[#allocation7 + $0x1]]
          %v1215 = vstv %s1214
          %v1216 = vmul.f32 %v1215, %v1164
          %v1217 = vadd.f32 %v1213, %v1216
          %s1218 = sld [smem:[#allocation7 + $0x2]]
          %v1219 = vstv %s1218
          %v1220 = vmul.f32 %v1219, %v1185
          %v1221 = vadd.f32 %v1217, %v1220
          %s1222 = sld [smem:[#allocation7 + $0x3]]
          %v1223 = vstv %s1222
          %v1224 = vmul.f32 %v1223, %v1206
          %v1225 = vadd.f32 %v1221, %v1224
          %v1226 = vmul.f32 %v1212, %v1145
          %v1227 = vmul.f32 %v1215, %v1166
          %v1228 = vadd.f32 %v1226, %v1227
          %v1229 = vmul.f32 %v1219, %v1187
          %v1230 = vadd.f32 %v1228, %v1229
          %v1231 = vmul.f32 %v1223, %v1208
          %v1232 = vadd.f32 %v1230, %v1231
          %v1233 = vmul.f32 %v1212, %v1147
          %v1234 = vmul.f32 %v1215, %v1168
          %v1235 = vadd.f32 %v1233, %v1234
          %v1236 = vmul.f32 %v1219, %v1189
          %v1237 = vadd.f32 %v1235, %v1236
          %v1238 = vmul.f32 %v1223, %v1210
          %v1239 = vadd.f32 %v1237, %v1238
          %s1240 = sld [smem:[#allocation7 + $0x80]]
          %v1241 = vstv %s1240
          %v1242 = vmul.f32 %v1241, %v1143
          %s1243 = sld [smem:[#allocation7 + $0x81]]
          %v1244 = vstv %s1243
          %v1245 = vmul.f32 %v1244, %v1164
          %v1246 = vadd.f32 %v1242, %v1245
          %s1247 = sld [smem:[#allocation7 + $0x82]]
          %v1248 = vstv %s1247
          %v1249 = vmul.f32 %v1248, %v1185
          %v1250 = vadd.f32 %v1246, %v1249
          %s1251 = sld [smem:[#allocation7 + $0x83]]
          %v1252 = vstv %s1251
          %v1253 = vmul.f32 %v1252, %v1206
          %v1254 = vadd.f32 %v1250, %v1253
          %v1255 = vmul.f32 %v1241, %v1145
          %v1256 = vmul.f32 %v1244, %v1166
          %v1257 = vadd.f32 %v1255, %v1256
          %v1258 = vmul.f32 %v1248, %v1187
          %v1259 = vadd.f32 %v1257, %v1258
          %v1260 = vmul.f32 %v1252, %v1208
          %v1261 = vadd.f32 %v1259, %v1260
          %v1262 = vmul.f32 %v1241, %v1147
          %v1263 = vmul.f32 %v1244, %v1168
          %v1264 = vadd.f32 %v1262, %v1263
          %v1265 = vmul.f32 %v1248, %v1189
          %v1266 = vadd.f32 %v1264, %v1265
          %v1267 = vmul.f32 %v1252, %v1210
          %v1268 = vadd.f32 %v1266, %v1267
          %s1269 = sld [smem:[#allocation7 + $0x100]]
          %v1270 = vstv %s1269
          %v1271 = vmul.f32 %v1270, %v1143
          %s1272 = sld [smem:[#allocation7 + $0x101]]
          %v1273 = vstv %s1272
          %v1274 = vmul.f32 %v1273, %v1164
          %v1275 = vadd.f32 %v1271, %v1274
          %s1276 = sld [smem:[#allocation7 + $0x102]]
          %v1277 = vstv %s1276
          %v1278 = vmul.f32 %v1277, %v1185
          %v1279 = vadd.f32 %v1275, %v1278
          %s1280 = sld [smem:[#allocation7 + $0x103]]
          %v1281 = vstv %s1280
          %v1282 = vmul.f32 %v1281, %v1206
          %v1283 = vadd.f32 %v1279, %v1282
          %v1284 = vmul.f32 %v1270, %v1145
          %v1285 = vmul.f32 %v1273, %v1166
          %v1286 = vadd.f32 %v1284, %v1285
          %v1287 = vmul.f32 %v1277, %v1187
          %v1288 = vadd.f32 %v1286, %v1287
          %v1289 = vmul.f32 %v1281, %v1208
          %v1290 = vadd.f32 %v1288, %v1289
          %v1291 = vmul.f32 %v1270, %v1147
          %v1292 = vmul.f32 %v1273, %v1168
          %v1293 = vadd.f32 %v1291, %v1292
          %v1294 = vmul.f32 %v1277, %v1189
          %v1295 = vadd.f32 %v1293, %v1294
          %v1296 = vmul.f32 %v1281, %v1210
          %v1297 = vadd.f32 %v1295, %v1296
          %s1298 = sld [smem:[#allocation7 + $0x180]]
          %v1299 = vstv %s1298
          %v1300 = vmul.f32 %v1299, %v1143
          %s1301 = sld [smem:[#allocation7 + $0x181]]
          %v1302 = vstv %s1301
          %v1303 = vmul.f32 %v1302, %v1164
          %v1304 = vadd.f32 %v1300, %v1303
          %s1305 = sld [smem:[#allocation7 + $0x182]]
          %v1306 = vstv %s1305
          %v1307 = vmul.f32 %v1306, %v1185
          %v1308 = vadd.f32 %v1304, %v1307
          %s1309 = sld [smem:[#allocation7 + $0x183]]
          %v1310 = vstv %s1309
          %v1311 = vmul.f32 %v1310, %v1206
          %v1312 = vadd.f32 %v1308, %v1311
          %v1313 = vmul.f32 %v1299, %v1145
          %v1314 = vmul.f32 %v1302, %v1166
          %v1315 = vadd.f32 %v1313, %v1314
          %v1316 = vmul.f32 %v1306, %v1187
          %v1317 = vadd.f32 %v1315, %v1316
          %v1318 = vmul.f32 %v1310, %v1208
          %v1319 = vadd.f32 %v1317, %v1318
          %v1320 = vmul.f32 %v1299, %v1147
          %v1321 = vmul.f32 %v1302, %v1168
          %v1322 = vadd.f32 %v1320, %v1321
          %v1323 = vmul.f32 %v1306, %v1189
          %v1324 = vadd.f32 %v1322, %v1323
          %v1325 = vmul.f32 %v1310, %v1210
          %v1326 = vadd.f32 %v1324, %v1325
          %v1327 = vmul.f32 %v1225, %v1225
          %v1328 = vmul.f32 %v1232, %v1232
          %v1329 = vadd.f32 %v1327, %v1328
          %v1330 = vmul.f32 %v1239, %v1239
          %v1331 = vadd.f32 %v1329, %v1330
          %v1332 = vrsqrt.pop %v1331
          %v1333 = vmul.f32 %v1331, %v1332
          %vm1334 = vcmp.eq.f32.partialorder %v1331, inf
          %v1335 = vsel %vm1334, %v1331, %v1333
          %vm1336 = vcmp.eq.f32.partialorder %v1331, 0.0
          %v1337 = vand.u32 %v1331, 2147483648
          %v1338 = vsel %vm1336, %v1337, %v1335
          %v1339 = vadd.f32 %v1338, 1e-06
          %v1340 = vmul.f32 %v1254, %v1254
          %v1341 = vmul.f32 %v1261, %v1261
          %v1342 = vadd.f32 %v1340, %v1341
          %v1343 = vmul.f32 %v1268, %v1268
          %v1344 = vadd.f32 %v1342, %v1343
          %v1345 = vrsqrt.pop %v1344
          %v1346 = vmul.f32 %v1344, %v1345
          %vm1347 = vcmp.eq.f32.partialorder %v1344, inf
          %v1348 = vsel %vm1347, %v1344, %v1346
          %vm1349 = vcmp.eq.f32.partialorder %v1344, 0.0
          %v1350 = vand.u32 %v1344, 2147483648
          %v1351 = vsel %vm1349, %v1350, %v1348
          %v1352 = vadd.f32 %v1351, 1e-06
          %v1353 = vmul.f32 %v1283, %v1283
          %v1354 = vmul.f32 %v1290, %v1290
          %v1355 = vadd.f32 %v1353, %v1354
          %v1356 = vmul.f32 %v1297, %v1297
          %v1357 = vadd.f32 %v1355, %v1356
          %v1358 = vrsqrt.pop %v1357
          %v1359 = vmul.f32 %v1357, %v1358
          %vm1360 = vcmp.eq.f32.partialorder %v1357, inf
          %v1361 = vsel %vm1360, %v1357, %v1359
          %vm1362 = vcmp.eq.f32.partialorder %v1357, 0.0
          %v1363 = vand.u32 %v1357, 2147483648
          %v1364 = vsel %vm1362, %v1363, %v1361
          %v1365 = vadd.f32 %v1364, 1e-06
          %v1366 = vmul.f32 %v1312, %v1312
          %v1367 = vmul.f32 %v1319, %v1319
          %v1368 = vadd.f32 %v1366, %v1367
          %v1369 = vmul.f32 %v1326, %v1326
          %v1370 = vadd.f32 %v1368, %v1369
          %v1371 = vrsqrt.pop %v1370
          %v1372 = vmul.f32 %v1370, %v1371
          %vm1373 = vcmp.eq.f32.partialorder %v1370, inf
          %v1374 = vsel %vm1373, %v1370, %v1372
          %vm1375 = vcmp.eq.f32.partialorder %v1370, 0.0
          %v1376 = vand.u32 %v1370, 2147483648
          %v1377 = vsel %vm1375, %v1376, %v1374
          %v1378 = vadd.f32 %v1377, 1e-06
          %v1379 = vmul.f32 %v1339, %v1339
          %v1380 = vmul.f32 %v1352, %v1352
          %v1381 = vmul.f32 %v1365, %v1365
          %v1382 = vmul.f32 %v1378, %v1378
          %v1383 = vld [vmem:[%s748] sm:$0xff]
          %v1384 = vld [vmem:[%s748 + $0x8] sm:$0xff]
          %v1385 = vld [vmem:[%s748 + $0x10] sm:$0xff]
          %v1386 = vld [vmem:[%s748 + $0x18] sm:$0xff]
          %v1387 = vld [vmem:[%s748 + $0x20] sm:$0xff]
          %v1388 = vld [vmem:[%s748 + $0x28] sm:$0xff]
          %v1389 = vld [vmem:[%s748 + $0x30] sm:$0xff]
          %v1390 = vld [vmem:[%s748 + $0x38] sm:$0xff]
          %v1391 = vadd.f32 %v1383, %v1339
          %v1392 = vadd.f32 %v1384, %v1352
          %v1393 = vadd.f32 %v1385, %v1365
          %v1394 = vadd.f32 %v1386, %v1378
          %v1395 = vadd.f32 %v1387, %v1379
          %v1396 = vadd.f32 %v1388, %v1380
          %v1397 = vadd.f32 %v1389, %v1381
          %v1398 = vadd.f32 %v1390, %v1382
          %1399 = vst [vmem:[%s748] sm:$0xff] %v1391
          %1400 = vst [vmem:[%s748 + $0x8] sm:$0xff] %v1392
          %1401 = vst [vmem:[%s748 + $0x10] sm:$0xff] %v1393
          %1402 = vst [vmem:[%s748 + $0x18] sm:$0xff] %v1394
          %1403 = vst [vmem:[%s748 + $0x20] sm:$0xff] %v1395
          %1404 = vst [vmem:[%s748 + $0x28] sm:$0xff] %v1396
          %1405 = vst [vmem:[%s748 + $0x30] sm:$0xff] %v1397
          %1406 = vst [vmem:[%s748 + $0x38] sm:$0xff] %v1398
        $region111: #{vn_basic_block_1d.4} parent=77 // loop_footer
          %s766 = sadd.s32 1, %s762
        $region112: #{vn_basic_block_1d.4} parent=77 // loop_footer_branch
          %761 = sbr.rel target = $region108
        $region113: #{vn_basic_block_1d.4} parent=77 // loop_exit
          _
        %p1407 = scmp.lt.s32.totalorder %s24, 1
        %s1408 = scalar_select %p1407, %s24, 1
        %s1409 = smul.addr %s1408, 8
        %s1410 = smul.addr %s1409, 8
        %s1411 = scalar_lea.vmem %s6, %s1410
        // Predicated region
        $region114: #{vn_basic_block_1d.4} parent=77 // pred_check
          %p1412 = pneg %p183
        $region115: #{vn_basic_block_1d.4} parent=77 // pred_check_branch
          %1414 = sbr.rel (%p1412) target = $region117
        $region116: #{vn_basic_block_1d.4} parent=77 // pred_region
          _
        $region117: #{vn_basic_block_1d.4} parent=77 // pred_fallthru
          _
      $region78: #{vn_basic_block_1d.4} parent=5 // pred_fallthru
        _
      %p1415 = scmp.le.s32.totalorder 2, %s15
      // Predicated region
      $region118: #{vn_basic_block_1d.4} parent=5 // pred_check
        %p1416 = pneg %p1415
      $region119: #{vn_basic_block_1d.4} parent=5 // pred_check_branch
        %1418 = sbr.rel (%p1416) target = $region121
      $region120: #{vn_basic_block_1d.4} parent=5 // pred_region
        %s1419 = ssub.s32 %s15, 2
        // Predicated region
        $region122: #{vn_basic_block_1d.4} parent=120 // pred_check
          %p1420 = pneg %p189
        $region123: #{vn_basic_block_1d.4} parent=120 // pred_check_branch
          %1422 = sbr.rel (%p1420) target = $region125
        $region124: #{vn_basic_block_1d.4} parent=120 // pred_region
          %p1423 = scmp.lt.s32.totalorder %s26, 1
          %s1424 = scalar_select %p1423, %s26, 1
          %s1425 = smul.addr %s1424, 8
          %s1426 = smul.addr %s1425, 8
          %s1427 = scalar_lea.vmem %s6, %s1426
        $region125: #{vn_basic_block_1d.4} parent=120 // pred_fallthru
          _
      $region121: #{vn_basic_block_1d.4} parent=5 // pred_fallthru
        _
    $region6: #{vn_basic_block_1d.4} parent=1 // loop_footer
      %s19 = sadd.s32 1, %s15
    $region7: #{vn_basic_block_1d.4} parent=1 // loop_footer_branch
      %14 = sbr.rel target = $region3
    $region8: #{vn_basic_block_1d.4} parent=1 // loop_exit
      _
    %1428 = vsyncpa [#allocation4], 1
    %s1429 = scalar_lea.sflag [#allocation4], 1
    %1430 = vsyncpa %s1429, 1
    %1431 = vsyncpa [#allocation6], 1
    %1432 = vsyncpa [#allocation9], 1

// kernel: vn_basic_block_1d.5
$region0: #{vn_basic_block_1d.5}
  #allocation0 [shape = 'u32[]', space=smem, size = 0x4, offset = 0x4, fixed_abs, tag = 'smem constant byte address 0x4 - core index']
  #allocation1 [shape = 'u32[144,128]{1,0:T(1,128)}', space=vmem, size = 0x12000, scoped, tag = 'internal scratch']
  %s0 = inlined_call_operand.vmem [shape: f32[2,12,16,8,128], index: 0, kind: input, shape index: {}]
  %s1 = inlined_call_operand.vmem [shape: f32[4,4], index: 1, kind: input, shape index: {}]
  %s2 = inlined_call_operand.vmem [shape: f32[4,4], index: 2, kind: input, shape index: {}]
  %s3 = inlined_call_operand.vmem [shape: f32[4,4], index: 3, kind: input, shape index: {}]
  %s4 = inlined_call_operand.vmem [shape: f32[4], index: 4, kind: input, shape index: {}]
  %s5 = inlined_call_operand.vmem [shape: f32[4], index: 5, kind: input, shape index: {}]
  %s6 = inlined_call_operand.vmem [shape: f32[4], index: 6, kind: input, shape index: {}]
  %s7 = inlined_call_operand.vmem [shape: f32[4], index: 7, kind: input, shape index: {}]
  %s8 = inlined_call_operand.vmem [shape: f32[2,12,16,8,128], index: 8, kind: output, shape index: {}]
  %s9 = sld [smem:[#allocation0]]
  $region172: #{vn_basic_block_1d.5} parent=0
    _
  %s11 = ssub.s32 1, %s9
  %s12 = scalar_select 0, %s11, %s9
  $region1: #{vn_basic_block_1d.5} parent=0
    #allocation2 [shape = 'u8[786432]{0}', space=vmem, size = 0xc0000, scoped, tag = 'input window, operand 0']
    #allocation3 [shape = 'u8[2048]{0}', space=smem, size = 0x800, scoped, tag = 'input window, operand 1, single buffered']
    #allocation4 [shape = 's32[2]{0}', space=sflag, size = 0x8, scoped, tag = 'scoped memory for vn_basic_block_1d.5']
    #allocation5 [shape = 'u8[2048]{0}', space=smem, size = 0x800, scoped, tag = 'input window, operand 2, single buffered']
    #allocation6 [shape = 's32[1]{0}', space=sflag, size = 0x4, scoped, tag = 'scoped memory for vn_basic_block_1d.5']
    #allocation7 [shape = 'u8[2048]{0}', space=smem, size = 0x800, scoped, tag = 'input window, operand 3, single buffered']
    #allocation8 [shape = 'u8[512]{0}', space=smem, size = 0x200, scoped, tag = 'input window, operand 4, single buffered']
    #allocation9 [shape = 's32[1]{0}', space=sflag, size = 0x4, scoped, tag = 'scoped memory for vn_basic_block_1d.5']
    #allocation10 [shape = 'u8[512]{0}', space=smem, size = 0x200, scoped, tag = 'input window, operand 5, single buffered']
    #allocation11 [shape = 'u8[512]{0}', space=smem, size = 0x200, scoped, tag = 'input window, operand 6, single buffered']
    #allocation12 [shape = 's32[1]{0}', space=sflag, size = 0x4, scoped, tag = 'scoped memory for vn_basic_block_1d.5']
    #allocation13 [shape = 'u8[512]{0}', space=smem, size = 0x200, scoped, tag = 'input window, operand 7, single buffered']
    #allocation14 [shape = 'u8[786432]{0}', space=vmem, size = 0xc0000, scoped, tag = 'output window, operand 0']
    %13 = vsyncpa [#allocation4], 0
    %14 = vsyncpa [#allocation6], 0
    %15 = vsyncpa [#allocation9], 0
    %16 = vsyncpa [#allocation12], 0
    loop: start=0, step=1, limit=6
    $region2: #{vn_basic_block_1d.5} parent=1 // loop_pre_header
      _
    $region3: #{vn_basic_block_1d.5} parent=1 // loop_header
      %s18 = sphi 0, %s22
      %p19 = scmp.ge.s32.totalorder %s18, 6
      %s25 = sphi 0, %s37
      %s26 = sphi 0, %s33
      %s27 = sphi 0, %s25
      %s28 = sphi 0, %s26
      %s29 = sphi 0, %s27
      %s30 = sphi 0, %s28
      %s42 = sphi 0, %s44
      %s45 = sphi 0, %s42
      %s46 = sphi 0, %s45
      %s62 = sphi 0, %s46
      %s66 = sphi 0, %s66
      %s68 = sphi 0, %s66
      %s69 = sphi 0, %s68
      %s83 = sphi 0, %s69
      %s87 = sphi 0, %s87
      %s89 = sphi 0, %s87
      %s90 = sphi 0, %s89
      %s104 = sphi 0, %s90
      %s108 = sphi 0, %s108
      %s110 = sphi 0, %s108
      %s111 = sphi 0, %s110
      %s125 = sphi 0, %s111
      %s129 = sphi 0, %s129
      %s131 = sphi 0, %s129
      %s132 = sphi 0, %s131
      %s146 = sphi 0, %s132
      %s150 = sphi 0, %s150
      %s152 = sphi 0, %s150
      %s153 = sphi 0, %s152
      %s167 = sphi 0, %s153
      %s171 = sphi 0, %s171
      %s173 = sphi 0, %s171
      %s174 = sphi 0, %s173
      %s188 = sphi 0, %s174
      %s192 = sphi 0, %s192
      %s194 = sphi 0, %s192
      %s195 = sphi 0, %s194
      %s209 = sphi 0, %s195
      %s217 = sphi 0, %s219
      %s220 = sphi 0, %s217
      %s221 = sphi 0, %s220
      %s237 = sphi 0, %s221
    $region4: #{vn_basic_block_1d.5} parent=1 // loop_header_branch
      %21 = sbr.rel (%p19) target = $region8
    $region5: #{vn_basic_block_1d.5} parent=1 // loop_body
      %s23 = ssub.s32 %s18, 1
      %s24 = ssub.s32 %s18, 2
      %s31 = sadd.s32 1, %s26
      %p32 = scmp.ge.s32.totalorder %s31, 2
      %s33 = scalar_select %p32, 0, %s31
      %s34 = sadd.s32 1, %s25
      %s35 = scalar_select %p32, %s34, %s25
      %p36 = scmp.ge.s32.totalorder %s35, 2
      %s37 = scalar_select %p36, 0, %s35
      %s38 = ssub.s32 %s25, %s37
      %s39 = ssub.s32 %s26, %s33
      %s40 = sor.u32 %s38, %s39
      %p41 = scmp.eq.s32.totalorder %s40, 0
      %s43 = sadd.s32 %s42, 1
      %s44 = scalar_select %p41, %s42, %s43
      %p47 = pneg %p41
      %p48 = scmp.eq.s32.totalorder %s18, 3
      %p49 = por %p47, %p48
      %p50 = scmp.ne.s32.totalorder %s42, %s45
      %p51 = scmp.eq.s32.totalorder %s18, 0
      %p52 = por %p50, %p51
      %p53 = scmp.ne.s32.totalorder %s42, %s45
      %p54 = scmp.eq.s32.totalorder %s23, 3
      %p55 = por %p53, %p54
      %p56 = scmp.ne.s32.totalorder %s45, %s46
      %p57 = scmp.eq.s32.totalorder %s23, 0
      %p58 = por %p56, %p57
      %p59 = scmp.ne.s32.totalorder %s45, %s46
      %p60 = scmp.eq.s32.totalorder %s24, 3
      %p61 = por %p59, %p60
      %p63 = scmp.ne.s32.totalorder %s46, %s62
      %p64 = scmp.eq.s32.totalorder %s24, 0
      %p65 = por %p63, %p64
      %s67 = sadd.s32 %s66, 1
      %p70 = scmp.eq.s32.totalorder %s18, 3
      %p71 = scmp.ne.s32.totalorder %s66, %s68
      %p72 = scmp.eq.s32.totalorder %s18, 0
      %p73 = por %p71, %p72
      %p74 = scmp.ne.s32.totalorder %s66, %s68
      %p75 = scmp.eq.s32.totalorder %s23, 3
      %p76 = por %p74, %p75
      %p77 = scmp.ne.s32.totalorder %s68, %s69
      %p78 = scmp.eq.s32.totalorder %s23, 0
      %p79 = por %p77, %p78
      %p80 = scmp.ne.s32.totalorder %s68, %s69
      %p81 = scmp.eq.s32.totalorder %s24, 3
      %p82 = por %p80, %p81
      %p84 = scmp.ne.s32.totalorder %s69, %s83
      %p85 = scmp.eq.s32.totalorder %s24, 0
      %p86 = por %p84, %p85
      %s88 = sadd.s32 %s87, 1
      %p91 = scmp.eq.s32.totalorder %s18, 3
      %p92 = scmp.ne.s32.totalorder %s87, %s89
      %p93 = scmp.eq.s32.totalorder %s18, 0
      %p94 = por %p92, %p93
      %p95 = scmp.ne.s32.totalorder %s87, %s89
      %p96 = scmp.eq.s32.totalorder %s23, 3
      %p97 = por %p95, %p96
      %p98 = scmp.ne.s32.totalorder %s89, %s90
      %p99 = scmp.eq.s32.totalorder %s23, 0
      %p100 = por %p98, %p99
      %p101 = scmp.ne.s32.totalorder %s89, %s90
      %p102 = scmp.eq.s32.totalorder %s24, 3
      %p103 = por %p101, %p102
      %p105 = scmp.ne.s32.totalorder %s90, %s104
      %p106 = scmp.eq.s32.totalorder %s24, 0
      %p107 = por %p105, %p106
      %s109 = sadd.s32 %s108, 1
      %p112 = scmp.eq.s32.totalorder %s18, 3
      %p113 = scmp.ne.s32.totalorder %s108, %s110
      %p114 = scmp.eq.s32.totalorder %s18, 0
      %p115 = por %p113, %p114
      %p116 = scmp.ne.s32.totalorder %s108, %s110
      %p117 = scmp.eq.s32.totalorder %s23, 3
      %p118 = por %p116, %p117
      %p119 = scmp.ne.s32.totalorder %s110, %s111
      %p120 = scmp.eq.s32.totalorder %s23, 0
      %p121 = por %p119, %p120
      %p122 = scmp.ne.s32.totalorder %s110, %s111
      %p123 = scmp.eq.s32.totalorder %s24, 3
      %p124 = por %p122, %p123
      %p126 = scmp.ne.s32.totalorder %s111, %s125
      %p127 = scmp.eq.s32.totalorder %s24, 0
      %p128 = por %p126, %p127
      %s130 = sadd.s32 %s129, 1
      %p133 = scmp.eq.s32.totalorder %s18, 3
      %p134 = scmp.ne.s32.totalorder %s129, %s131
      %p135 = scmp.eq.s32.totalorder %s18, 0
      %p136 = por %p134, %p135
      %p137 = scmp.ne.s32.totalorder %s129, %s131
      %p138 = scmp.eq.s32.totalorder %s23, 3
      %p139 = por %p137, %p138
      %p140 = scmp.ne.s32.totalorder %s131, %s132
      %p141 = scmp.eq.s32.totalorder %s23, 0
      %p142 = por %p140, %p141
      %p143 = scmp.ne.s32.totalorder %s131, %s132
      %p144 = scmp.eq.s32.totalorder %s24, 3
      %p145 = por %p143, %p144
      %p147 = scmp.ne.s32.totalorder %s132, %s146
      %p148 = scmp.eq.s32.totalorder %s24, 0
      %p149 = por %p147, %p148
      %s151 = sadd.s32 %s150, 1
      %p154 = scmp.eq.s32.totalorder %s18, 3
      %p155 = scmp.ne.s32.totalorder %s150, %s152
      %p156 = scmp.eq.s32.totalorder %s18, 0
      %p157 = por %p155, %p156
      %p158 = scmp.ne.s32.totalorder %s150, %s152
      %p159 = scmp.eq.s32.totalorder %s23, 3
      %p160 = por %p158, %p159
      %p161 = scmp.ne.s32.totalorder %s152, %s153
      %p162 = scmp.eq.s32.totalorder %s23, 0
      %p163 = por %p161, %p162
      %p164 = scmp.ne.s32.totalorder %s152, %s153
      %p165 = scmp.eq.s32.totalorder %s24, 3
      %p166 = por %p164, %p165
      %p168 = scmp.ne.s32.totalorder %s153, %s167
      %p169 = scmp.eq.s32.totalorder %s24, 0
      %p170 = por %p168, %p169
      %s172 = sadd.s32 %s171, 1
      %p175 = scmp.eq.s32.totalorder %s18, 3
      %p176 = scmp.ne.s32.totalorder %s171, %s173
      %p177 = scmp.eq.s32.totalorder %s18, 0
      %p178 = por %p176, %p177
      %p179 = scmp.ne.s32.totalorder %s171, %s173
      %p180 = scmp.eq.s32.totalorder %s23, 3
      %p181 = por %p179, %p180
      %p182 = scmp.ne.s32.totalorder %s173, %s174
      %p183 = scmp.eq.s32.totalorder %s23, 0
      %p184 = por %p182, %p183
      %p185 = scmp.ne.s32.totalorder %s173, %s174
      %p186 = scmp.eq.s32.totalorder %s24, 3
      %p187 = por %p185, %p186
      %p189 = scmp.ne.s32.totalorder %s174, %s188
      %p190 = scmp.eq.s32.totalorder %s24, 0
      %p191 = por %p189, %p190
      %s193 = sadd.s32 %s192, 1
      %p196 = scmp.eq.s32.totalorder %s18, 3
      %p197 = scmp.ne.s32.totalorder %s192, %s194
      %p198 = scmp.eq.s32.totalorder %s18, 0
      %p199 = por %p197, %p198
      %p200 = scmp.ne.s32.totalorder %s192, %s194
      %p201 = scmp.eq.s32.totalorder %s23, 3
      %p202 = por %p200, %p201
      %p203 = scmp.ne.s32.totalorder %s194, %s195
      %p204 = scmp.eq.s32.totalorder %s23, 0
      %p205 = por %p203, %p204
      %p206 = scmp.ne.s32.totalorder %s194, %s195
      %p207 = scmp.eq.s32.totalorder %s24, 3
      %p208 = por %p206, %p207
      %p210 = scmp.ne.s32.totalorder %s195, %s209
      %p211 = scmp.eq.s32.totalorder %s24, 0
      %p212 = por %p210, %p211
      %s213 = ssub.s32 %s25, %s37
      %s214 = ssub.s32 %s26, %s33
      %s215 = sor.u32 %s213, %s214
      %p216 = scmp.eq.s32.totalorder %s215, 0
      %s218 = sadd.s32 %s217, 1
      %s219 = scalar_select %p216, %s217, %s218
      %p222 = pneg %p216
      %p223 = scmp.eq.s32.totalorder %s18, 3
      %p224 = por %p222, %p223
      %p225 = scmp.ne.s32.totalorder %s217, %s220
      %p226 = scmp.eq.s32.totalorder %s18, 0
      %p227 = por %p225, %p226
      %p228 = scmp.ne.s32.totalorder %s217, %s220
      %p229 = scmp.eq.s32.totalorder %s23, 3
      %p230 = por %p228, %p229
      %p231 = scmp.ne.s32.totalorder %s220, %s221
      %p232 = scmp.eq.s32.totalorder %s23, 0
      %p233 = por %p231, %p232
      %p234 = scmp.ne.s32.totalorder %s220, %s221
      %p235 = scmp.eq.s32.totalorder %s24, 3
      %p236 = por %p234, %p235
      %p238 = scmp.ne.s32.totalorder %s221, %s237
      %p239 = scmp.eq.s32.totalorder %s24, 0
      %p240 = por %p238, %p239
      %p241 = scmp.le.s32.totalorder 1, %s18
      %p242 = scmp.lt.s32.totalorder %s18, 5
      %p243 = pnand %p241, %p242
      %p244 = pneg %p243
      // Predicated region
      $region9: #{vn_basic_block_1d.5} parent=5 // pred_check
        _
      $region10: #{vn_basic_block_1d.5} parent=5 // pred_check_branch
        %246 = sbr.rel (%p243) target = $region12
      $region11: #{vn_basic_block_1d.5} parent=5 // pred_region
        %s247 = ssub.s32 %s18, 1
        // Predicated region
        $region13: #{vn_basic_block_1d.5} parent=11 // pred_check
          %p248 = pneg %p79
        $region14: #{vn_basic_block_1d.5} parent=11 // pred_check_branch
          %250 = sbr.rel (%p248) target = $region16
        $region15: #{vn_basic_block_1d.5} parent=11 // pred_region
          %s252 = ssub.s32 64, 64
          %253 = vsyncadd [#allocation4], %s252
          %s255 = sshll.u32 %s1, 4
          %s256 = int_to_ptr.vmem [resolvable:$true] %s255
          %258 = dma.vmem_to_smem %s256, 64, [#allocation3], [#allocation4]
        $region16: #{vn_basic_block_1d.5} parent=11 // pred_fallthru
          _
        // Predicated region
        $region17: #{vn_basic_block_1d.5} parent=11 // pred_check
          %p259 = pneg %p100
        $region18: #{vn_basic_block_1d.5} parent=11 // pred_check_branch
          %261 = sbr.rel (%p259) target = $region20
        $region19: #{vn_basic_block_1d.5} parent=11 // pred_region
          %s263 = ssub.s32 64, 64
          %264 = vsyncadd [#allocation6], %s263
          %s266 = sshll.u32 %s2, 4
          %s267 = int_to_ptr.vmem [resolvable:$true] %s266
          %269 = dma.vmem_to_smem %s267, 64, [#allocation5], [#allocation6]
        $region20: #{vn_basic_block_1d.5} parent=11 // pred_fallthru
          _
        // Predicated region
        $region21: #{vn_basic_block_1d.5} parent=11 // pred_check
          %p270 = pneg %p121
        $region22: #{vn_basic_block_1d.5} parent=11 // pred_check_branch
          %272 = sbr.rel (%p270) target = $region24
        $region23: #{vn_basic_block_1d.5} parent=11 // pred_region
          %s274 = ssub.s32 64, 64
          %275 = vsyncadd [#allocation6], %s274
          %s277 = sshll.u32 %s3, 4
          %s278 = int_to_ptr.vmem [resolvable:$true] %s277
          %280 = dma.vmem_to_smem %s278, 64, [#allocation7], [#allocation6]
        $region24: #{vn_basic_block_1d.5} parent=11 // pred_fallthru
          _
        // Predicated region
        $region25: #{vn_basic_block_1d.5} parent=11 // pred_check
          %p281 = pneg %p142
        $region26: #{vn_basic_block_1d.5} parent=11 // pred_check_branch
          %283 = sbr.rel (%p281) target = $region28
        $region27: #{vn_basic_block_1d.5} parent=11 // pred_region
          %s285 = ssub.s32 16, 16
          %286 = vsyncadd [#allocation9], %s285
          %s288 = sshll.u32 %s4, 4
          %s289 = int_to_ptr.vmem [resolvable:$true] %s288
          %291 = dma.vmem_to_smem %s289, 16, [#allocation8], [#allocation9]
        $region28: #{vn_basic_block_1d.5} parent=11 // pred_fallthru
          _
        // Predicated region
        $region29: #{vn_basic_block_1d.5} parent=11 // pred_check
          %p292 = pneg %p163
        $region30: #{vn_basic_block_1d.5} parent=11 // pred_check_branch
          %294 = sbr.rel (%p292) target = $region32
        $region31: #{vn_basic_block_1d.5} parent=11 // pred_region
          %s296 = ssub.s32 16, 16
          %297 = vsyncadd [#allocation9], %s296
          %s299 = sshll.u32 %s5, 4
          %s300 = int_to_ptr.vmem [resolvable:$true] %s299
          %302 = dma.vmem_to_smem %s300, 16, [#allocation10], [#allocation9]
        $region32: #{vn_basic_block_1d.5} parent=11 // pred_fallthru
          _
        // Predicated region
        $region33: #{vn_basic_block_1d.5} parent=11 // pred_check
          %p303 = pneg %p184
        $region34: #{vn_basic_block_1d.5} parent=11 // pred_check_branch
          %305 = sbr.rel (%p303) target = $region36
        $region35: #{vn_basic_block_1d.5} parent=11 // pred_region
          %s307 = ssub.s32 16, 16
          %308 = vsyncadd [#allocation12], %s307
          %s310 = sshll.u32 %s6, 4
          %s311 = int_to_ptr.vmem [resolvable:$true] %s310
          %313 = dma.vmem_to_smem %s311, 16, [#allocation11], [#allocation12]
        $region36: #{vn_basic_block_1d.5} parent=11 // pred_fallthru
          _
        // Predicated region
        $region37: #{vn_basic_block_1d.5} parent=11 // pred_check
          %p314 = pneg %p205
        $region38: #{vn_basic_block_1d.5} parent=11 // pred_check_branch
          %316 = sbr.rel (%p314) target = $region40
        $region39: #{vn_basic_block_1d.5} parent=11 // pred_region
          %s318 = ssub.s32 16, 16
          %319 = vsyncadd [#allocation12], %s318
          %s321 = sshll.u32 %s7, 4
          %s322 = int_to_ptr.vmem [resolvable:$true] %s321
          %324 = dma.vmem_to_smem %s322, 16, [#allocation13], [#allocation12]
        $region40: #{vn_basic_block_1d.5} parent=11 // pred_fallthru
          _
      $region12: #{vn_basic_block_1d.5} parent=5 // pred_fallthru
        _
      %p325 = scmp.lt.s32.totalorder %s18, 4
      // Predicated region
      $region41: #{vn_basic_block_1d.5} parent=5 // pred_check
        %p326 = pneg %p325
      $region42: #{vn_basic_block_1d.5} parent=5 // pred_check_branch
        %328 = sbr.rel (%p326) target = $region44
      $region43: #{vn_basic_block_1d.5} parent=5 // pred_region
        // Predicated region
        $region45: #{vn_basic_block_1d.5} parent=43 // pred_check
          %p329 = pneg %p52
        $region46: #{vn_basic_block_1d.5} parent=43 // pred_check_branch
          %331 = sbr.rel (%p329) target = $region48
        $region47: #{vn_basic_block_1d.5} parent=43 // pred_region
          %s332 = sand.u32 %s42, 1
          %s333 = sand.u32 %s42, 1
          %s334 = smul.addr %s333, 768
          %s335 = scalar_lea.vmem [#allocation2], %s334
          %s336 = smul.u32 8, %s26
          %s337 = smul.addr %s25, 192
          %s338 = sadd.s32 %s336, %s337
          %s339 = smul.addr %s338, 8
          %s340 = scalar_lea.vmem %s0, %s339
          // Predicated region
          $region49: #{vn_basic_block_1d.5} parent=47 // pred_check
            _
          $region50: #{vn_basic_block_1d.5} parent=47 // pred_check_branch
            %342 = sbr.rel (0) target = $region52
          $region51: #{vn_basic_block_1d.5} parent=47 // pred_region
            // Predicated region
            $region53: #{vn_basic_block_1d.5} parent=51 // pred_check
              _
            $region54: #{vn_basic_block_1d.5} parent=51 // pred_check_branch
              %344 = sbr.rel (0) target = $region56
            $region55: #{vn_basic_block_1d.5} parent=51 // pred_region
              // Predicated region
              $region68: #{vn_basic_block_1d.5} parent=55 // pred_check
                _
              $region69: #{vn_basic_block_1d.5} parent=55 // pred_check_branch
                %550 = sbr.rel (0) target = $region71
              $region70: #{vn_basic_block_1d.5} parent=55 // pred_region
                loop: start=0, step=1, limit=1
                $region72: #{vn_basic_block_1d.5} parent=70 // loop_pre_header
                  _
                $region73: #{vn_basic_block_1d.5} parent=70 // loop_header
                  %s552 = sphi 0, %s556
                  %p553 = scmp.ge.s32.totalorder %s552, 1
                  %s557 = sphi %s340, %s340
                  %s558 = sphi %s335, %s335
                $region74: #{vn_basic_block_1d.5} parent=70 // loop_header_branch
                  %555 = sbr.rel (%p553) target = $region78
                $region75: #{vn_basic_block_1d.5} parent=70 // loop_body
                  %v559 = vld [vmem:[%s557] sm:$0xff]
                  %560 = vst [vmem:[%s558] sm:$0xff] %v559
                  %v561 = vld [vmem:[%s557 + $0x8] sm:$0xff]
                  %562 = vst [vmem:[%s558 + $0x8] sm:$0xff] %v561
                  %v563 = vld [vmem:[%s557 + $0x10] sm:$0xff]
                  %564 = vst [vmem:[%s558 + $0x10] sm:$0xff] %v563
                  %v565 = vld [vmem:[%s557 + $0x18] sm:$0xff]
                  %566 = vst [vmem:[%s558 + $0x18] sm:$0xff] %v565
                  %v567 = vld [vmem:[%s557 + $0x20] sm:$0xff]
                  %568 = vst [vmem:[%s558 + $0x20] sm:$0xff] %v567
                  %v569 = vld [vmem:[%s557 + $0x28] sm:$0xff]
                  %570 = vst [vmem:[%s558 + $0x28] sm:$0xff] %v569
                  %v571 = vld [vmem:[%s557 + $0x30] sm:$0xff]
                  %572 = vst [vmem:[%s558 + $0x30] sm:$0xff] %v571
                  %v573 = vld [vmem:[%s557 + $0x38] sm:$0xff]
                  %574 = vst [vmem:[%s558 + $0x38] sm:$0xff] %v573
                  %v575 = vld [vmem:[%s557 + $0x80] sm:$0xff]
                  %576 = vst [vmem:[%s558 + $0x40] sm:$0xff] %v575
                  %v577 = vld [vmem:[%s557 + $0x88] sm:$0xff]
                  %578 = vst [vmem:[%s558 + $0x48] sm:$0xff] %v577
                  %v579 = vld [vmem:[%s557 + $0x90] sm:$0xff]
                  %580 = vst [vmem:[%s558 + $0x50] sm:$0xff] %v579
                  %v581 = vld [vmem:[%s557 + $0x98] sm:$0xff]
                  %582 = vst [vmem:[%s558 + $0x58] sm:$0xff] %v581
                  %v583 = vld [vmem:[%s557 + $0xa0] sm:$0xff]
                  %584 = vst [vmem:[%s558 + $0x60] sm:$0xff] %v583
                  %v585 = vld [vmem:[%s557 + $0xa8] sm:$0xff]
                  %586 = vst [vmem:[%s558 + $0x68] sm:$0xff] %v585
                  %v587 = vld [vmem:[%s557 + $0xb0] sm:$0xff]
                  %588 = vst [vmem:[%s558 + $0x70] sm:$0xff] %v587
                  %v589 = vld [vmem:[%s557 + $0xb8] sm:$0xff]
                  %590 = vst [vmem:[%s558 + $0x78] sm:$0xff] %v589
                  %v591 = vld [vmem:[%s557 + $0x100] sm:$0xff]
                  %592 = vst [vmem:[%s558 + $0x80] sm:$0xff] %v591
                  %v593 = vld [vmem:[%s557 + $0x108] sm:$0xff]
                  %594 = vst [vmem:[%s558 + $0x88] sm:$0xff] %v593
                  %v595 = vld [vmem:[%s557 + $0x110] sm:$0xff]
                  %596 = vst [vmem:[%s558 + $0x90] sm:$0xff] %v595
                  %v597 = vld [vmem:[%s557 + $0x118] sm:$0xff]
                  %598 = vst [vmem:[%s558 + $0x98] sm:$0xff] %v597
                  %v599 = vld [vmem:[%s557 + $0x120] sm:$0xff]
                  %600 = vst [vmem:[%s558 + $0xa0] sm:$0xff] %v599
                  %v601 = vld [vmem:[%s557 + $0x128] sm:$0xff]
                  %602 = vst [vmem:[%s558 + $0xa8] sm:$0xff] %v601
                  %v603 = vld [vmem:[%s557 + $0x130] sm:$0xff]
                  %604 = vst [vmem:[%s558 + $0xb0] sm:$0xff] %v603
                  %v605 = vld [vmem:[%s557 + $0x138] sm:$0xff]
                  %606 = vst [vmem:[%s558 + $0xb8] sm:$0xff] %v605
                  %v607 = vld [vmem:[%s557 + $0x180] sm:$0xff]
                  %608 = vst [vmem:[%s558 + $0xc0] sm:$0xff] %v607
                  %v609 = vld [vmem:[%s557 + $0x188] sm:$0xff]
                  %610 = vst [vmem:[%s558 + $0xc8] sm:$0xff] %v609
                  %v611 = vld [vmem:[%s557 + $0x190] sm:$0xff]
                  %612 = vst [vmem:[%s558 + $0xd0] sm:$0xff] %v611
                  %v613 = vld [vmem:[%s557 + $0x198] sm:$0xff]
                  %614 = vst [vmem:[%s558 + $0xd8] sm:$0xff] %v613
                  %v615 = vld [vmem:[%s557 + $0x1a0] sm:$0xff]
                  %616 = vst [vmem:[%s558 + $0xe0] sm:$0xff] %v615
                  %v617 = vld [vmem:[%s557 + $0x1a8] sm:$0xff]
                  %618 = vst [vmem:[%s558 + $0xe8] sm:$0xff] %v617
                  %v619 = vld [vmem:[%s557 + $0x1b0] sm:$0xff]
                  %620 = vst [vmem:[%s558 + $0xf0] sm:$0xff] %v619
                  %v621 = vld [vmem:[%s557 + $0x1b8] sm:$0xff]
                  %622 = vst [vmem:[%s558 + $0xf8] sm:$0xff] %v621
                  %v623 = vld [vmem:[%s557 + $0x200] sm:$0xff]
                  %624 = vst [vmem:[%s558 + $0x100] sm:$0xff] %v623
                  %v625 = vld [vmem:[%s557 + $0x208] sm:$0xff]
                  %626 = vst [vmem:[%s558 + $0x108] sm:$0xff] %v625
                  %v627 = vld [vmem:[%s557 + $0x210] sm:$0xff]
                  %628 = vst [vmem:[%s558 + $0x110] sm:$0xff] %v627
                  %v629 = vld [vmem:[%s557 + $0x218] sm:$0xff]
                  %630 = vst [vmem:[%s558 + $0x118] sm:$0xff] %v629
                  %v631 = vld [vmem:[%s557 + $0x220] sm:$0xff]
                  %632 = vst [vmem:[%s558 + $0x120] sm:$0xff] %v631
                  %v633 = vld [vmem:[%s557 + $0x228] sm:$0xff]
                  %634 = vst [vmem:[%s558 + $0x128] sm:$0xff] %v633
                  %v635 = vld [vmem:[%s557 + $0x230] sm:$0xff]
                  %636 = vst [vmem:[%s558 + $0x130] sm:$0xff] %v635
                  %v637 = vld [vmem:[%s557 + $0x238] sm:$0xff]
                  %638 = vst [vmem:[%s558 + $0x138] sm:$0xff] %v637
                  %v639 = vld [vmem:[%s557 + $0x280] sm:$0xff]
                  %640 = vst [vmem:[%s558 + $0x140] sm:$0xff] %v639
                  %v641 = vld [vmem:[%s557 + $0x288] sm:$0xff]
                  %642 = vst [vmem:[%s558 + $0x148] sm:$0xff] %v641
                  %v643 = vld [vmem:[%s557 + $0x290] sm:$0xff]
                  %644 = vst [vmem:[%s558 + $0x150] sm:$0xff] %v643
                  %v645 = vld [vmem:[%s557 + $0x298] sm:$0xff]
                  %646 = vst [vmem:[%s558 + $0x158] sm:$0xff] %v645
                  %v647 = vld [vmem:[%s557 + $0x2a0] sm:$0xff]
                  %648 = vst [vmem:[%s558 + $0x160] sm:$0xff] %v647
                  %v649 = vld [vmem:[%s557 + $0x2a8] sm:$0xff]
                  %650 = vst [vmem:[%s558 + $0x168] sm:$0xff] %v649
                  %v651 = vld [vmem:[%s557 + $0x2b0] sm:$0xff]
                  %652 = vst [vmem:[%s558 + $0x170] sm:$0xff] %v651
                  %v653 = vld [vmem:[%s557 + $0x2b8] sm:$0xff]
                  %654 = vst [vmem:[%s558 + $0x178] sm:$0xff] %v653
                  %v655 = vld [vmem:[%s557 + $0x300] sm:$0xff]
                  %656 = vst [vmem:[%s558 + $0x180] sm:$0xff] %v655
                  %v657 = vld [vmem:[%s557 + $0x308] sm:$0xff]
                  %658 = vst [vmem:[%s558 + $0x188] sm:$0xff] %v657
                  %v659 = vld [vmem:[%s557 + $0x310] sm:$0xff]
                  %660 = vst [vmem:[%s558 + $0x190] sm:$0xff] %v659
                  %v661 = vld [vmem:[%s557 + $0x318] sm:$0xff]
                  %662 = vst [vmem:[%s558 + $0x198] sm:$0xff] %v661
                  %v663 = vld [vmem:[%s557 + $0x320] sm:$0xff]
                  %664 = vst [vmem:[%s558 + $0x1a0] sm:$0xff] %v663
                  %v665 = vld [vmem:[%s557 + $0x328] sm:$0xff]
                  %666 = vst [vmem:[%s558 + $0x1a8] sm:$0xff] %v665
                  %v667 = vld [vmem:[%s557 + $0x330] sm:$0xff]
                  %668 = vst [vmem:[%s558 + $0x1b0] sm:$0xff] %v667
                  %v669 = vld [vmem:[%s557 + $0x338] sm:$0xff]
                  %670 = vst [vmem:[%s558 + $0x1b8] sm:$0xff] %v669
                  %v671 = vld [vmem:[%s557 + $0x380] sm:$0xff]
                  %672 = vst [vmem:[%s558 + $0x1c0] sm:$0xff] %v671
                  %v673 = vld [vmem:[%s557 + $0x388] sm:$0xff]
                  %674 = vst [vmem:[%s558 + $0x1c8] sm:$0xff] %v673
                  %v675 = vld [vmem:[%s557 + $0x390] sm:$0xff]
                  %676 = vst [vmem:[%s558 + $0x1d0] sm:$0xff] %v675
                  %v677 = vld [vmem:[%s557 + $0x398] sm:$0xff]
                  %678 = vst [vmem:[%s558 + $0x1d8] sm:$0xff] %v677
                  %v679 = vld [vmem:[%s557 + $0x3a0] sm:$0xff]
                  %680 = vst [vmem:[%s558 + $0x1e0] sm:$0xff] %v679
                  %v681 = vld [vmem:[%s557 + $0x3a8] sm:$0xff]
                  %682 = vst [vmem:[%s558 + $0x1e8] sm:$0xff] %v681
                  %v683 = vld [vmem:[%s557 + $0x3b0] sm:$0xff]
                  %684 = vst [vmem:[%s558 + $0x1f0] sm:$0xff] %v683
                  %v685 = vld [vmem:[%s557 + $0x3b8] sm:$0xff]
                  %686 = vst [vmem:[%s558 + $0x1f8] sm:$0xff] %v685
                  %v687 = vld [vmem:[%s557 + $0x400] sm:$0xff]
                  %688 = vst [vmem:[%s558 + $0x200] sm:$0xff] %v687
                  %v689 = vld [vmem:[%s557 + $0x408] sm:$0xff]
                  %690 = vst [vmem:[%s558 + $0x208] sm:$0xff] %v689
                  %v691 = vld [vmem:[%s557 + $0x410] sm:$0xff]
                  %692 = vst [vmem:[%s558 + $0x210] sm:$0xff] %v691
                  %v693 = vld [vmem:[%s557 + $0x418] sm:$0xff]
                  %694 = vst [vmem:[%s558 + $0x218] sm:$0xff] %v693
                  %v695 = vld [vmem:[%s557 + $0x420] sm:$0xff]
                  %696 = vst [vmem:[%s558 + $0x220] sm:$0xff] %v695
                  %v697 = vld [vmem:[%s557 + $0x428] sm:$0xff]
                  %698 = vst [vmem:[%s558 + $0x228] sm:$0xff] %v697
                  %v699 = vld [vmem:[%s557 + $0x430] sm:$0xff]
                  %700 = vst [vmem:[%s558 + $0x230] sm:$0xff] %v699
                  %v701 = vld [vmem:[%s557 + $0x438] sm:$0xff]
                  %702 = vst [vmem:[%s558 + $0x238] sm:$0xff] %v701
                  %v703 = vld [vmem:[%s557 + $0x480] sm:$0xff]
                  %704 = vst [vmem:[%s558 + $0x240] sm:$0xff] %v703
                  %v705 = vld [vmem:[%s557 + $0x488] sm:$0xff]
                  %706 = vst [vmem:[%s558 + $0x248] sm:$0xff] %v705
                  %v707 = vld [vmem:[%s557 + $0x490] sm:$0xff]
                  %708 = vst [vmem:[%s558 + $0x250] sm:$0xff] %v707
                  %v709 = vld [vmem:[%s557 + $0x498] sm:$0xff]
                  %710 = vst [vmem:[%s558 + $0x258] sm:$0xff] %v709
                  %v711 = vld [vmem:[%s557 + $0x4a0] sm:$0xff]
                  %712 = vst [vmem:[%s558 + $0x260] sm:$0xff] %v711
                  %v713 = vld [vmem:[%s557 + $0x4a8] sm:$0xff]
                  %714 = vst [vmem:[%s558 + $0x268] sm:$0xff] %v713
                  %v715 = vld [vmem:[%s557 + $0x4b0] sm:$0xff]
                  %716 = vst [vmem:[%s558 + $0x270] sm:$0xff] %v715
                  %v717 = vld [vmem:[%s557 + $0x4b8] sm:$0xff]
                  %718 = vst [vmem:[%s558 + $0x278] sm:$0xff] %v717
                  %v719 = vld [vmem:[%s557 + $0x500] sm:$0xff]
                  %720 = vst [vmem:[%s558 + $0x280] sm:$0xff] %v719
                  %v721 = vld [vmem:[%s557 + $0x508] sm:$0xff]
                  %722 = vst [vmem:[%s558 + $0x288] sm:$0xff] %v721
                  %v723 = vld [vmem:[%s557 + $0x510] sm:$0xff]
                  %724 = vst [vmem:[%s558 + $0x290] sm:$0xff] %v723
                  %v725 = vld [vmem:[%s557 + $0x518] sm:$0xff]
                  %726 = vst [vmem:[%s558 + $0x298] sm:$0xff] %v725
                  %v727 = vld [vmem:[%s557 + $0x520] sm:$0xff]
                  %728 = vst [vmem:[%s558 + $0x2a0] sm:$0xff] %v727
                  %v729 = vld [vmem:[%s557 + $0x528] sm:$0xff]
                  %730 = vst [vmem:[%s558 + $0x2a8] sm:$0xff] %v729
                  %v731 = vld [vmem:[%s557 + $0x530] sm:$0xff]
                  %732 = vst [vmem:[%s558 + $0x2b0] sm:$0xff] %v731
                  %v733 = vld [vmem:[%s557 + $0x538] sm:$0xff]
                  %734 = vst [vmem:[%s558 + $0x2b8] sm:$0xff] %v733
                  %v735 = vld [vmem:[%s557 + $0x580] sm:$0xff]
                  %736 = vst [vmem:[%s558 + $0x2c0] sm:$0xff] %v735
                  %v737 = vld [vmem:[%s557 + $0x588] sm:$0xff]
                  %738 = vst [vmem:[%s558 + $0x2c8] sm:$0xff] %v737
                  %v739 = vld [vmem:[%s557 + $0x590] sm:$0xff]
                  %740 = vst [vmem:[%s558 + $0x2d0] sm:$0xff] %v739
                  %v741 = vld [vmem:[%s557 + $0x598] sm:$0xff]
                  %742 = vst [vmem:[%s558 + $0x2d8] sm:$0xff] %v741
                  %v743 = vld [vmem:[%s557 + $0x5a0] sm:$0xff]
                  %744 = vst [vmem:[%s558 + $0x2e0] sm:$0xff] %v743
                  %v745 = vld [vmem:[%s557 + $0x5a8] sm:$0xff]
                  %746 = vst [vmem:[%s558 + $0x2e8] sm:$0xff] %v745
                  %v747 = vld [vmem:[%s557 + $0x5b0] sm:$0xff]
                  %748 = vst [vmem:[%s558 + $0x2f0] sm:$0xff] %v747
                  %v749 = vld [vmem:[%s557 + $0x5b8] sm:$0xff]
                  %750 = vst [vmem:[%s558 + $0x2f8] sm:$0xff] %v749
                $region76: #{vn_basic_block_1d.5} parent=70 // loop_footer
                  %s556 = sadd.s32 1, %s552
                $region77: #{vn_basic_block_1d.5} parent=70 // loop_footer_branch
                  %551 = sbr.rel target = $region73
                $region78: #{vn_basic_block_1d.5} parent=70 // loop_exit
                  _
              $region71: #{vn_basic_block_1d.5} parent=55 // pred_fallthru
                _
              // Predicated region
              $region79: #{vn_basic_block_1d.5} parent=55 // pred_check
                _
              $region80: #{vn_basic_block_1d.5} parent=55 // pred_check_branch
                %752 = sbr.rel target = $region82
              $region81: #{vn_basic_block_1d.5} parent=55 // pred_region
                _
              $region82: #{vn_basic_block_1d.5} parent=55 // pred_fallthru
                _
            $region56: #{vn_basic_block_1d.5} parent=51 // pred_fallthru
              _
            // Predicated region
            $region57: #{vn_basic_block_1d.5} parent=51 // pred_check
              _
            $region58: #{vn_basic_block_1d.5} parent=51 // pred_check_branch
              %346 = sbr.rel target = $region60
            $region59: #{vn_basic_block_1d.5} parent=51 // pred_region
              %s348 = ssub.s32 256, 1
              loop: start=0, step=1, limit=1
              $region61: #{vn_basic_block_1d.5} parent=59 // loop_pre_header
                _
              $region62: #{vn_basic_block_1d.5} parent=59 // loop_header
                %s350 = sphi 0, %s354
                %p351 = scmp.ge.s32.totalorder %s350, 1
                %s355 = sphi %s340, %s340
                %s356 = sphi %s335, %s335
              $region63: #{vn_basic_block_1d.5} parent=59 // loop_header_branch
                %353 = sbr.rel (%p351) target = $region67
              $region64: #{vn_basic_block_1d.5} parent=59 // loop_body
                %v357 = vld [vmem:[%s355] sm:%s348]
                %358 = vst [vmem:[%s356] sm:%s348] %v357
                %v359 = vld [vmem:[%s355 + $0x8] sm:%s348]
                %360 = vst [vmem:[%s356 + $0x8] sm:%s348] %v359
                %v361 = vld [vmem:[%s355 + $0x10] sm:%s348]
                %362 = vst [vmem:[%s356 + $0x10] sm:%s348] %v361
                %v363 = vld [vmem:[%s355 + $0x18] sm:%s348]
                %364 = vst [vmem:[%s356 + $0x18] sm:%s348] %v363
                %v365 = vld [vmem:[%s355 + $0x20] sm:%s348]
                %366 = vst [vmem:[%s356 + $0x20] sm:%s348] %v365
                %v367 = vld [vmem:[%s355 + $0x28] sm:%s348]
                %368 = vst [vmem:[%s356 + $0x28] sm:%s348] %v367
                %v369 = vld [vmem:[%s355 + $0x30] sm:%s348]
                %370 = vst [vmem:[%s356 + $0x30] sm:%s348] %v369
                %v371 = vld [vmem:[%s355 + $0x38] sm:%s348]
                %372 = vst [vmem:[%s356 + $0x38] sm:%s348] %v371
                %v373 = vld [vmem:[%s355 + $0x80] sm:%s348]
                %374 = vst [vmem:[%s356 + $0x40] sm:%s348] %v373
                %v375 = vld [vmem:[%s355 + $0x88] sm:%s348]
                %376 = vst [vmem:[%s356 + $0x48] sm:%s348] %v375
                %v377 = vld [vmem:[%s355 + $0x90] sm:%s348]
                %378 = vst [vmem:[%s356 + $0x50] sm:%s348] %v377
                %v379 = vld [vmem:[%s355 + $0x98] sm:%s348]
                %380 = vst [vmem:[%s356 + $0x58] sm:%s348] %v379
                %v381 = vld [vmem:[%s355 + $0xa0] sm:%s348]
                %382 = vst [vmem:[%s356 + $0x60] sm:%s348] %v381
                %v383 = vld [vmem:[%s355 + $0xa8] sm:%s348]
                %384 = vst [vmem:[%s356 + $0x68] sm:%s348] %v383
                %v385 = vld [vmem:[%s355 + $0xb0] sm:%s348]
                %386 = vst [vmem:[%s356 + $0x70] sm:%s348] %v385
                %v387 = vld [vmem:[%s355 + $0xb8] sm:%s348]
                %388 = vst [vmem:[%s356 + $0x78] sm:%s348] %v387
                %v389 = vld [vmem:[%s355 + $0x100] sm:%s348]
                %390 = vst [vmem:[%s356 + $0x80] sm:%s348] %v389
                %v391 = vld [vmem:[%s355 + $0x108] sm:%s348]
                %392 = vst [vmem:[%s356 + $0x88] sm:%s348] %v391
                %v393 = vld [vmem:[%s355 + $0x110] sm:%s348]
                %394 = vst [vmem:[%s356 + $0x90] sm:%s348] %v393
                %v395 = vld [vmem:[%s355 + $0x118] sm:%s348]
                %396 = vst [vmem:[%s356 + $0x98] sm:%s348] %v395
                %v397 = vld [vmem:[%s355 + $0x120] sm:%s348]
                %398 = vst [vmem:[%s356 + $0xa0] sm:%s348] %v397
                %v399 = vld [vmem:[%s355 + $0x128] sm:%s348]
                %400 = vst [vmem:[%s356 + $0xa8] sm:%s348] %v399
                %v401 = vld [vmem:[%s355 + $0x130] sm:%s348]
                %402 = vst [vmem:[%s356 + $0xb0] sm:%s348] %v401
                %v403 = vld [vmem:[%s355 + $0x138] sm:%s348]
                %404 = vst [vmem:[%s356 + $0xb8] sm:%s348] %v403
                %v405 = vld [vmem:[%s355 + $0x180] sm:%s348]
                %406 = vst [vmem:[%s356 + $0xc0] sm:%s348] %v405
                %v407 = vld [vmem:[%s355 + $0x188] sm:%s348]
                %408 = vst [vmem:[%s356 + $0xc8] sm:%s348] %v407
                %v409 = vld [vmem:[%s355 + $0x190] sm:%s348]
                %410 = vst [vmem:[%s356 + $0xd0] sm:%s348] %v409
                %v411 = vld [vmem:[%s355 + $0x198] sm:%s348]
                %412 = vst [vmem:[%s356 + $0xd8] sm:%s348] %v411
                %v413 = vld [vmem:[%s355 + $0x1a0] sm:%s348]
                %414 = vst [vmem:[%s356 + $0xe0] sm:%s348] %v413
                %v415 = vld [vmem:[%s355 + $0x1a8] sm:%s348]
                %416 = vst [vmem:[%s356 + $0xe8] sm:%s348] %v415
                %v417 = vld [vmem:[%s355 + $0x1b0] sm:%s348]
                %418 = vst [vmem:[%s356 + $0xf0] sm:%s348] %v417
                %v419 = vld [vmem:[%s355 + $0x1b8] sm:%s348]
                %420 = vst [vmem:[%s356 + $0xf8] sm:%s348] %v419
                %v421 = vld [vmem:[%s355 + $0x200] sm:%s348]
                %422 = vst [vmem:[%s356 + $0x100] sm:%s348] %v421
                %v423 = vld [vmem:[%s355 + $0x208] sm:%s348]
                %424 = vst [vmem:[%s356 + $0x108] sm:%s348] %v423
                %v425 = vld [vmem:[%s355 + $0x210] sm:%s348]
                %426 = vst [vmem:[%s356 + $0x110] sm:%s348] %v425
                %v427 = vld [vmem:[%s355 + $0x218] sm:%s348]
                %428 = vst [vmem:[%s356 + $0x118] sm:%s348] %v427
                %v429 = vld [vmem:[%s355 + $0x220] sm:%s348]
                %430 = vst [vmem:[%s356 + $0x120] sm:%s348] %v429
                %v431 = vld [vmem:[%s355 + $0x228] sm:%s348]
                %432 = vst [vmem:[%s356 + $0x128] sm:%s348] %v431
                %v433 = vld [vmem:[%s355 + $0x230] sm:%s348]
                %434 = vst [vmem:[%s356 + $0x130] sm:%s348] %v433
                %v435 = vld [vmem:[%s355 + $0x238] sm:%s348]
                %436 = vst [vmem:[%s356 + $0x138] sm:%s348] %v435
                %v437 = vld [vmem:[%s355 + $0x280] sm:%s348]
                %438 = vst [vmem:[%s356 + $0x140] sm:%s348] %v437
                %v439 = vld [vmem:[%s355 + $0x288] sm:%s348]
                %440 = vst [vmem:[%s356 + $0x148] sm:%s348] %v439
                %v441 = vld [vmem:[%s355 + $0x290] sm:%s348]
                %442 = vst [vmem:[%s356 + $0x150] sm:%s348] %v441
                %v443 = vld [vmem:[%s355 + $0x298] sm:%s348]
                %444 = vst [vmem:[%s356 + $0x158] sm:%s348] %v443
                %v445 = vld [vmem:[%s355 + $0x2a0] sm:%s348]
                %446 = vst [vmem:[%s356 + $0x160] sm:%s348] %v445
                %v447 = vld [vmem:[%s355 + $0x2a8] sm:%s348]
                %448 = vst [vmem:[%s356 + $0x168] sm:%s348] %v447
                %v449 = vld [vmem:[%s355 + $0x2b0] sm:%s348]
                %450 = vst [vmem:[%s356 + $0x170] sm:%s348] %v449
                %v451 = vld [vmem:[%s355 + $0x2b8] sm:%s348]
                %452 = vst [vmem:[%s356 + $0x178] sm:%s348] %v451
                %v453 = vld [vmem:[%s355 + $0x300] sm:%s348]
                %454 = vst [vmem:[%s356 + $0x180] sm:%s348] %v453
                %v455 = vld [vmem:[%s355 + $0x308] sm:%s348]
                %456 = vst [vmem:[%s356 + $0x188] sm:%s348] %v455
                %v457 = vld [vmem:[%s355 + $0x310] sm:%s348]
                %458 = vst [vmem:[%s356 + $0x190] sm:%s348] %v457
                %v459 = vld [vmem:[%s355 + $0x318] sm:%s348]
                %460 = vst [vmem:[%s356 + $0x198] sm:%s348] %v459
                %v461 = vld [vmem:[%s355 + $0x320] sm:%s348]
                %462 = vst [vmem:[%s356 + $0x1a0] sm:%s348] %v461
                %v463 = vld [vmem:[%s355 + $0x328] sm:%s348]
                %464 = vst [vmem:[%s356 + $0x1a8] sm:%s348] %v463
                %v465 = vld [vmem:[%s355 + $0x330] sm:%s348]
                %466 = vst [vmem:[%s356 + $0x1b0] sm:%s348] %v465
                %v467 = vld [vmem:[%s355 + $0x338] sm:%s348]
                %468 = vst [vmem:[%s356 + $0x1b8] sm:%s348] %v467
                %v469 = vld [vmem:[%s355 + $0x380] sm:%s348]
                %470 = vst [vmem:[%s356 + $0x1c0] sm:%s348] %v469
                %v471 = vld [vmem:[%s355 + $0x388] sm:%s348]
                %472 = vst [vmem:[%s356 + $0x1c8] sm:%s348] %v471
                %v473 = vld [vmem:[%s355 + $0x390] sm:%s348]
                %474 = vst [vmem:[%s356 + $0x1d0] sm:%s348] %v473
                %v475 = vld [vmem:[%s355 + $0x398] sm:%s348]
                %476 = vst [vmem:[%s356 + $0x1d8] sm:%s348] %v475
                %v477 = vld [vmem:[%s355 + $0x3a0] sm:%s348]
                %478 = vst [vmem:[%s356 + $0x1e0] sm:%s348] %v477
                %v479 = vld [vmem:[%s355 + $0x3a8] sm:%s348]
                %480 = vst [vmem:[%s356 + $0x1e8] sm:%s348] %v479
                %v481 = vld [vmem:[%s355 + $0x3b0] sm:%s348]
                %482 = vst [vmem:[%s356 + $0x1f0] sm:%s348] %v481
                %v483 = vld [vmem:[%s355 + $0x3b8] sm:%s348]
                %484 = vst [vmem:[%s356 + $0x1f8] sm:%s348] %v483
                %v485 = vld [vmem:[%s355 + $0x400] sm:%s348]
                %486 = vst [vmem:[%s356 + $0x200] sm:%s348] %v485
                %v487 = vld [vmem:[%s355 + $0x408] sm:%s348]
                %488 = vst [vmem:[%s356 + $0x208] sm:%s348] %v487
                %v489 = vld [vmem:[%s355 + $0x410] sm:%s348]
                %490 = vst [vmem:[%s356 + $0x210] sm:%s348] %v489
                %v491 = vld [vmem:[%s355 + $0x418] sm:%s348]
                %492 = vst [vmem:[%s356 + $0x218] sm:%s348] %v491
                %v493 = vld [vmem:[%s355 + $0x420] sm:%s348]
                %494 = vst [vmem:[%s356 + $0x220] sm:%s348] %v493
                %v495 = vld [vmem:[%s355 + $0x428] sm:%s348]
                %496 = vst [vmem:[%s356 + $0x228] sm:%s348] %v495
                %v497 = vld [vmem:[%s355 + $0x430] sm:%s348]
                %498 = vst [vmem:[%s356 + $0x230] sm:%s348] %v497
                %v499 = vld [vmem:[%s355 + $0x438] sm:%s348]
                %500 = vst [vmem:[%s356 + $0x238] sm:%s348] %v499
                %v501 = vld [vmem:[%s355 + $0x480] sm:%s348]
                %502 = vst [vmem:[%s356 + $0x240] sm:%s348] %v501
                %v503 = vld [vmem:[%s355 + $0x488] sm:%s348]
                %504 = vst [vmem:[%s356 + $0x248] sm:%s348] %v503
                %v505 = vld [vmem:[%s355 + $0x490] sm:%s348]
                %506 = vst [vmem:[%s356 + $0x250] sm:%s348] %v505
                %v507 = vld [vmem:[%s355 + $0x498] sm:%s348]
                %508 = vst [vmem:[%s356 + $0x258] sm:%s348] %v507
                %v509 = vld [vmem:[%s355 + $0x4a0] sm:%s348]
                %510 = vst [vmem:[%s356 + $0x260] sm:%s348] %v509
                %v511 = vld [vmem:[%s355 + $0x4a8] sm:%s348]
                %512 = vst [vmem:[%s356 + $0x268] sm:%s348] %v511
                %v513 = vld [vmem:[%s355 + $0x4b0] sm:%s348]
                %514 = vst [vmem:[%s356 + $0x270] sm:%s348] %v513
                %v515 = vld [vmem:[%s355 + $0x4b8] sm:%s348]
                %516 = vst [vmem:[%s356 + $0x278] sm:%s348] %v515
                %v517 = vld [vmem:[%s355 + $0x500] sm:%s348]
                %518 = vst [vmem:[%s356 + $0x280] sm:%s348] %v517
                %v519 = vld [vmem:[%s355 + $0x508] sm:%s348]
                %520 = vst [vmem:[%s356 + $0x288] sm:%s348] %v519
                %v521 = vld [vmem:[%s355 + $0x510] sm:%s348]
                %522 = vst [vmem:[%s356 + $0x290] sm:%s348] %v521
                %v523 = vld [vmem:[%s355 + $0x518] sm:%s348]
                %524 = vst [vmem:[%s356 + $0x298] sm:%s348] %v523
                %v525 = vld [vmem:[%s355 + $0x520] sm:%s348]
                %526 = vst [vmem:[%s356 + $0x2a0] sm:%s348] %v525
                %v527 = vld [vmem:[%s355 + $0x528] sm:%s348]
                %528 = vst [vmem:[%s356 + $0x2a8] sm:%s348] %v527
                %v529 = vld [vmem:[%s355 + $0x530] sm:%s348]
                %530 = vst [vmem:[%s356 + $0x2b0] sm:%s348] %v529
                %v531 = vld [vmem:[%s355 + $0x538] sm:%s348]
                %532 = vst [vmem:[%s356 + $0x2b8] sm:%s348] %v531
                %v533 = vld [vmem:[%s355 + $0x580] sm:%s348]
                %534 = vst [vmem:[%s356 + $0x2c0] sm:%s348] %v533
                %v535 = vld [vmem:[%s355 + $0x588] sm:%s348]
                %536 = vst [vmem:[%s356 + $0x2c8] sm:%s348] %v535
                %v537 = vld [vmem:[%s355 + $0x590] sm:%s348]
                %538 = vst [vmem:[%s356 + $0x2d0] sm:%s348] %v537
                %v539 = vld [vmem:[%s355 + $0x598] sm:%s348]
                %540 = vst [vmem:[%s356 + $0x2d8] sm:%s348] %v539
                %v541 = vld [vmem:[%s355 + $0x5a0] sm:%s348]
                %542 = vst [vmem:[%s356 + $0x2e0] sm:%s348] %v541
                %v543 = vld [vmem:[%s355 + $0x5a8] sm:%s348]
                %544 = vst [vmem:[%s356 + $0x2e8] sm:%s348] %v543
                %v545 = vld [vmem:[%s355 + $0x5b0] sm:%s348]
                %546 = vst [vmem:[%s356 + $0x2f0] sm:%s348] %v545
                %v547 = vld [vmem:[%s355 + $0x5b8] sm:%s348]
                %548 = vst [vmem:[%s356 + $0x2f8] sm:%s348] %v547
              $region65: #{vn_basic_block_1d.5} parent=59 // loop_footer
                %s354 = sadd.s32 1, %s350
              $region66: #{vn_basic_block_1d.5} parent=59 // loop_footer_branch
                %349 = sbr.rel target = $region62
              $region67: #{vn_basic_block_1d.5} parent=59 // loop_exit
                _
            $region60: #{vn_basic_block_1d.5} parent=51 // pred_fallthru
              _
          $region52: #{vn_basic_block_1d.5} parent=47 // pred_fallthru
            _
          %753 = vnop
        $region48: #{vn_basic_block_1d.5} parent=43 // pred_fallthru
          _
      $region44: #{vn_basic_block_1d.5} parent=5 // pred_fallthru
        _
      %p754 = scmp.le.s32.totalorder 1, %s18
      %p755 = scmp.lt.s32.totalorder %s18, 5
      %p756 = pnand %p754, %p755
      %p757 = pneg %p756
      // Predicated region
      $region83: #{vn_basic_block_1d.5} parent=5 // pred_check
        _
      $region84: #{vn_basic_block_1d.5} parent=5 // pred_check_branch
        %759 = sbr.rel (%p756) target = $region86
      $region85: #{vn_basic_block_1d.5} parent=5 // pred_region
        %s760 = ssub.s32 %s18, 1
        %s761 = sand.u32 %s45, 1
        %s762 = sand.u32 %s45, 1
        %s763 = smul.addr %s762, 768
        %s764 = scalar_lea.vmem [#allocation2], %s763
        // Predicated region
        $region87: #{vn_basic_block_1d.5} parent=85 // pred_check
          %p765 = pneg %p58
        $region88: #{vn_basic_block_1d.5} parent=85 // pred_check_branch
          %767 = sbr.rel (%p765) target = $region90
        $region89: #{vn_basic_block_1d.5} parent=85 // pred_region
          _
        $region90: #{vn_basic_block_1d.5} parent=85 // pred_fallthru
          _
        // Predicated region
        $region91: #{vn_basic_block_1d.5} parent=85 // pred_check
          %p768 = pneg %p79
        $region92: #{vn_basic_block_1d.5} parent=85 // pred_check_branch
          %770 = sbr.rel (%p768) target = $region94
        $region93: #{vn_basic_block_1d.5} parent=85 // pred_region
          %771 = dma.done [#allocation4], 64
        $region94: #{vn_basic_block_1d.5} parent=85 // pred_fallthru
          _
        // Predicated region
        $region95: #{vn_basic_block_1d.5} parent=85 // pred_check
          %p772 = pneg %p100
        $region96: #{vn_basic_block_1d.5} parent=85 // pred_check_branch
          %774 = sbr.rel (%p772) target = $region98
        $region97: #{vn_basic_block_1d.5} parent=85 // pred_region
          %775 = dma.done [#allocation6], 64
        $region98: #{vn_basic_block_1d.5} parent=85 // pred_fallthru
          _
        // Predicated region
        $region99: #{vn_basic_block_1d.5} parent=85 // pred_check
          %p776 = pneg %p121
        $region100: #{vn_basic_block_1d.5} parent=85 // pred_check_branch
          %778 = sbr.rel (%p776) target = $region102
        $region101: #{vn_basic_block_1d.5} parent=85 // pred_region
          %779 = dma.done [#allocation6], 64
        $region102: #{vn_basic_block_1d.5} parent=85 // pred_fallthru
          _
        // Predicated region
        $region103: #{vn_basic_block_1d.5} parent=85 // pred_check
          %p780 = pneg %p142
        $region104: #{vn_basic_block_1d.5} parent=85 // pred_check_branch
          %782 = sbr.rel (%p780) target = $region106
        $region105: #{vn_basic_block_1d.5} parent=85 // pred_region
          %783 = dma.done [#allocation9], 16
        $region106: #{vn_basic_block_1d.5} parent=85 // pred_fallthru
          _
        // Predicated region
        $region107: #{vn_basic_block_1d.5} parent=85 // pred_check
          %p784 = pneg %p163
        $region108: #{vn_basic_block_1d.5} parent=85 // pred_check_branch
          %786 = sbr.rel (%p784) target = $region110
        $region109: #{vn_basic_block_1d.5} parent=85 // pred_region
          %787 = dma.done [#allocation9], 16
        $region110: #{vn_basic_block_1d.5} parent=85 // pred_fallthru
          _
        // Predicated region
        $region111: #{vn_basic_block_1d.5} parent=85 // pred_check
          %p788 = pneg %p184
        $region112: #{vn_basic_block_1d.5} parent=85 // pred_check_branch
          %790 = sbr.rel (%p788) target = $region114
        $region113: #{vn_basic_block_1d.5} parent=85 // pred_region
          %791 = dma.done [#allocation12], 16
        $region114: #{vn_basic_block_1d.5} parent=85 // pred_fallthru
          _
        // Predicated region
        $region115: #{vn_basic_block_1d.5} parent=85 // pred_check
          %p792 = pneg %p205
        $region116: #{vn_basic_block_1d.5} parent=85 // pred_check_branch
          %794 = sbr.rel (%p792) target = $region118
        $region117: #{vn_basic_block_1d.5} parent=85 // pred_region
          %795 = dma.done [#allocation12], 16
        $region118: #{vn_basic_block_1d.5} parent=85 // pred_fallthru
          _
        %796 = sfence
        %s797 = sand.u32 %s45, 1
        %s798 = sand.u32 %s45, 1
        %s799 = smul.addr %s798, 768
        %s800 = scalar_lea.vmem [#allocation2], %s799
        %p801 = pneg %p58
        %p802 = pneg %p55
        %p803 = pneg %p79
        %p804 = pneg %p76
        %p805 = pneg %p100
        %p806 = pneg %p97
        %p807 = pneg %p121
        %p808 = pneg %p118
        %p809 = pneg %p142
        %p810 = pneg %p139
        %p811 = pneg %p163
        %p812 = pneg %p160
        %p813 = pneg %p184
        %p814 = pneg %p181
        %p815 = pneg %p205
        %p816 = pneg %p202
        %p817 = pneg %p233
        %p818 = pneg %p230
        %s819 = sand.u32 %s220, 1
        %s820 = sand.u32 %s220, 1
        %s821 = smul.addr %s820, 768
        %s822 = scalar_lea.vmem [#allocation14], %s821
        %s823 = smul.u32 8, %s28
        %s824 = smul.u32 8, %s28
        loop: start=0, step=1, limit=8
        $region119: #{vn_basic_block_1d.5} parent=85 // loop_pre_header
          _
        $region120: #{vn_basic_block_1d.5} parent=85 // loop_header
          %s826 = sphi 0, %s830
          %p827 = scmp.ge.s32.totalorder %s826, 8
        $region121: #{vn_basic_block_1d.5} parent=85 // loop_header_branch
          %829 = sbr.rel (%p827) target = $region125
        $region122: #{vn_basic_block_1d.5} parent=85 // loop_body
          %s831 = smul.u32 %s826, 8
          %s832 = scalar_lea.vmem %s764, %s831 [#allocation2]
          %v833 = vld [vmem:[%s832] sm:$0xff]
          %s834 = sadd.s32 %s831, 64
          %s835 = scalar_lea.vmem %s764, %s834 [#allocation2]
          %v836 = vld [vmem:[%s835] sm:$0xff]
          %s837 = sadd.s32 %s831, 128
          %s838 = scalar_lea.vmem %s764, %s837 [#allocation2]
          %v839 = vld [vmem:[%s838] sm:$0xff]
          %s840 = sadd.s32 %s831, 192
          %s841 = scalar_lea.vmem %s764, %s840 [#allocation2]
          %v842 = vld [vmem:[%s841] sm:$0xff]
          %s843 = sadd.s32 %s831, 256
          %s844 = scalar_lea.vmem %s764, %s843 [#allocation2]
          %v845 = vld [vmem:[%s844] sm:$0xff]
          %s846 = sadd.s32 %s831, 320
          %s847 = scalar_lea.vmem %s764, %s846 [#allocation2]
          %v848 = vld [vmem:[%s847] sm:$0xff]
          %s849 = sadd.s32 %s831, 384
          %s850 = scalar_lea.vmem %s764, %s849 [#allocation2]
          %v851 = vld [vmem:[%s850] sm:$0xff]
          %s852 = sadd.s32 %s831, 448
          %s853 = scalar_lea.vmem %s764, %s852 [#allocation2]
          %v854 = vld [vmem:[%s853] sm:$0xff]
          %s855 = sadd.s32 %s831, 512
          %s856 = scalar_lea.vmem %s764, %s855 [#allocation2]
          %v857 = vld [vmem:[%s856] sm:$0xff]
          %s858 = sadd.s32 %s831, 576
          %s859 = scalar_lea.vmem %s764, %s858 [#allocation2]
          %v860 = vld [vmem:[%s859] sm:$0xff]
          %s861 = sadd.s32 %s831, 640
          %s862 = scalar_lea.vmem %s764, %s861 [#allocation2]
          %v863 = vld [vmem:[%s862] sm:$0xff]
          %s864 = sadd.s32 %s831, 704
          %s865 = scalar_lea.vmem %s764, %s864 [#allocation2]
          %v866 = vld [vmem:[%s865] sm:$0xff]
          %s867 = sld [smem:[#allocation3]]
          %v868 = vstv %s867
          %v869 = vmul.f32 %v868, %v833
          %s870 = sld [smem:[#allocation3 + $0x1]]
          %v871 = vstv %s870
          %v872 = vmul.f32 %v871, %v842
          %v873 = vadd.f32 %v869, %v872
          %s874 = sld [smem:[#allocation3 + $0x2]]
          %v875 = vstv %s874
          %v876 = vmul.f32 %v875, %v851
          %v877 = vadd.f32 %v873, %v876
          %s878 = sld [smem:[#allocation3 + $0x3]]
          %v879 = vstv %s878
          %v880 = vmul.f32 %v879, %v860
          %v881 = vadd.f32 %v877, %v880
          %v882 = vmul.f32 %v868, %v836
          %v883 = vmul.f32 %v871, %v845
          %v884 = vadd.f32 %v882, %v883
          %v885 = vmul.f32 %v875, %v854
          %v886 = vadd.f32 %v884, %v885
          %v887 = vmul.f32 %v879, %v863
          %v888 = vadd.f32 %v886, %v887
          %v889 = vmul.f32 %v868, %v839
          %v890 = vmul.f32 %v871, %v848
          %v891 = vadd.f32 %v889, %v890
          %v892 = vmul.f32 %v875, %v857
          %v893 = vadd.f32 %v891, %v892
          %v894 = vmul.f32 %v879, %v866
          %v895 = vadd.f32 %v893, %v894
          %s896 = sld [smem:[#allocation3 + $0x80]]
          %v897 = vstv %s896
          %v898 = vmul.f32 %v897, %v833
          %s899 = sld [smem:[#allocation3 + $0x81]]
          %v900 = vstv %s899
          %v901 = vmul.f32 %v900, %v842
          %v902 = vadd.f32 %v898, %v901
          %s903 = sld [smem:[#allocation3 + $0x82]]
          %v904 = vstv %s903
          %v905 = vmul.f32 %v904, %v851
          %v906 = vadd.f32 %v902, %v905
          %s907 = sld [smem:[#allocation3 + $0x83]]
          %v908 = vstv %s907
          %v909 = vmul.f32 %v908, %v860
          %v910 = vadd.f32 %v906, %v909
          %v911 = vmul.f32 %v897, %v836
          %v912 = vmul.f32 %v900, %v845
          %v913 = vadd.f32 %v911, %v912
          %v914 = vmul.f32 %v904, %v854
          %v915 = vadd.f32 %v913, %v914
          %v916 = vmul.f32 %v908, %v863
          %v917 = vadd.f32 %v915, %v916
          %v918 = vmul.f32 %v897, %v839
          %v919 = vmul.f32 %v900, %v848
          %v920 = vadd.f32 %v918, %v919
          %v921 = vmul.f32 %v904, %v857
          %v922 = vadd.f32 %v920, %v921
          %v923 = vmul.f32 %v908, %v866
          %v924 = vadd.f32 %v922, %v923
          %s925 = sld [smem:[#allocation3 + $0x100]]
          %v926 = vstv %s925
          %v927 = vmul.f32 %v926, %v833
          %s928 = sld [smem:[#allocation3 + $0x101]]
          %v929 = vstv %s928
          %v930 = vmul.f32 %v929, %v842
          %v931 = vadd.f32 %v927, %v930
          %s932 = sld [smem:[#allocation3 + $0x102]]
          %v933 = vstv %s932
          %v934 = vmul.f32 %v933, %v851
          %v935 = vadd.f32 %v931, %v934
          %s936 = sld [smem:[#allocation3 + $0x103]]
          %v937 = vstv %s936
          %v938 = vmul.f32 %v937, %v860
          %v939 = vadd.f32 %v935, %v938
          %v940 = vmul.f32 %v926, %v836
          %v941 = vmul.f32 %v929, %v845
          %v942 = vadd.f32 %v940, %v941
          %v943 = vmul.f32 %v933, %v854
          %v944 = vadd.f32 %v942, %v943
          %v945 = vmul.f32 %v937, %v863
          %v946 = vadd.f32 %v944, %v945
          %v947 = vmul.f32 %v926, %v839
          %v948 = vmul.f32 %v929, %v848
          %v949 = vadd.f32 %v947, %v948
          %v950 = vmul.f32 %v933, %v857
          %v951 = vadd.f32 %v949, %v950
          %v952 = vmul.f32 %v937, %v866
          %v953 = vadd.f32 %v951, %v952
          %s954 = sld [smem:[#allocation3 + $0x180]]
          %v955 = vstv %s954
          %v956 = vmul.f32 %v955, %v833
          %s957 = sld [smem:[#allocation3 + $0x181]]
          %v958 = vstv %s957
          %v959 = vmul.f32 %v958, %v842
          %v960 = vadd.f32 %v956, %v959
          %s961 = sld [smem:[#allocation3 + $0x182]]
          %v962 = vstv %s961
          %v963 = vmul.f32 %v962, %v851
          %v964 = vadd.f32 %v960, %v963
          %s965 = sld [smem:[#allocation3 + $0x183]]
          %v966 = vstv %s965
          %v967 = vmul.f32 %v966, %v860
          %v968 = vadd.f32 %v964, %v967
          %v969 = vmul.f32 %v955, %v836
          %v970 = vmul.f32 %v958, %v845
          %v971 = vadd.f32 %v969, %v970
          %v972 = vmul.f32 %v962, %v854
          %v973 = vadd.f32 %v971, %v972
          %v974 = vmul.f32 %v966, %v863
          %v975 = vadd.f32 %v973, %v974
          %v976 = vmul.f32 %v955, %v839
          %v977 = vmul.f32 %v958, %v848
          %v978 = vadd.f32 %v976, %v977
          %v979 = vmul.f32 %v962, %v857
          %v980 = vadd.f32 %v978, %v979
          %v981 = vmul.f32 %v966, %v866
          %v982 = vadd.f32 %v980, %v981
          %v983 = vmul.f32 %v881, %v881
          %v984 = vmul.f32 %v888, %v888
          %v985 = vadd.f32 %v983, %v984
          %v986 = vmul.f32 %v895, %v895
          %v987 = vadd.f32 %v985, %v986
          %v988 = vrsqrt.pop %v987
          %v989 = vmul.f32 %v987, %v988
          %vm990 = vcmp.eq.f32.partialorder %v987, inf
          %v991 = vsel %vm990, %v987, %v989
          %vm992 = vcmp.eq.f32.partialorder %v987, 0.0
          %v993 = vand.u32 %v987, 2147483648
          %v994 = vsel %vm992, %v993, %v991
          %v995 = vadd.f32 %v994, 1e-06
          %v996 = vrcp.pop %v995
          %s997 = sld [smem:[#allocation8]]
          %s998 = sld [smem:[#allocation10]]
          %v999 = vstv %s998
          %v1000 = vmul.f32 %v999, %v996
          %v1001 = vstv %s997
          %v1002 = vadd.f32 %v1001, %v1000
          %v1003 = vmul.f32 %v881, %v1002
          %v1004 = vmul.f32 %v888, %v1002
          %v1005 = vmul.f32 %v895, %v1002
          %v1006 = vmul.f32 %v910, %v910
          %v1007 = vmul.f32 %v917, %v917
          %v1008 = vadd.f32 %v1006, %v1007
          %v1009 = vmul.f32 %v924, %v924
          %v1010 = vadd.f32 %v1008, %v1009
          %v1011 = vrsqrt.pop %v1010
          %v1012 = vmul.f32 %v1010, %v1011
          %vm1013 = vcmp.eq.f32.partialorder %v1010, inf
          %v1014 = vsel %vm1013, %v1010, %v1012
          %vm1015 = vcmp.eq.f32.partialorder %v1010, 0.0
          %v1016 = vand.u32 %v1010, 2147483648
          %v1017 = vsel %vm1015, %v1016, %v1014
          %v1018 = vadd.f32 %v1017, 1e-06
          %v1019 = vrcp.pop %v1018
          %s1020 = sld [smem:[#allocation8 + $0x1]]
          %s1021 = sld [smem:[#allocation10 + $0x1]]
          %v1022 = vstv %s1021
          %v1023 = vmul.f32 %v1022, %v1019
          %v1024 = vstv %s1020
          %v1025 = vadd.f32 %v1024, %v1023
          %v1026 = vmul.f32 %v910, %v1025
          %v1027 = vmul.f32 %v917, %v1025
          %v1028 = vmul.f32 %v924, %v1025
          %v1029 = vmul.f32 %v939, %v939
          %v1030 = vmul.f32 %v946, %v946
          %v1031 = vadd.f32 %v1029, %v1030
          %v1032 = vmul.f32 %v953, %v953
          %v1033 = vadd.f32 %v1031, %v1032
          %v1034 = vrsqrt.pop %v1033
          %v1035 = vmul.f32 %v1033, %v1034
          %vm1036 = vcmp.eq.f32.partialorder %v1033, inf
          %v1037 = vsel %vm1036, %v1033, %v1035
          %vm1038 = vcmp.eq.f32.partialorder %v1033, 0.0
          %v1039 = vand.u32 %v1033, 2147483648
          %v1040 = vsel %vm1038, %v1039, %v1037
          %v1041 = vadd.f32 %v1040, 1e-06
          %v1042 = vrcp.pop %v1041
          %s1043 = sld [smem:[#allocation8 + $0x2]]
          %s1044 = sld [smem:[#allocation10 + $0x2]]
          %v1045 = vstv %s1044
          %v1046 = vmul.f32 %v1045, %v1042
          %v1047 = vstv %s1043
          %v1048 = vadd.f32 %v1047, %v1046
          %v1049 = vmul.f32 %v939, %v1048
          %v1050 = vmul.f32 %v946, %v1048
          %v1051 = vmul.f32 %v953, %v1048
          %v1052 = vmul.f32 %v968, %v968
          %v1053 = vmul.f32 %v975, %v975
          %v1054 = vadd.f32 %v1052, %v1053
          %v1055 = vmul.f32 %v982, %v982
          %v1056 = vadd.f32 %v1054, %v1055
          %v1057 = vrsqrt.pop %v1056
          %v1058 = vmul.f32 %v1056, %v1057
          %vm1059 = vcmp.eq.f32.partialorder %v1056, inf
          %v1060 = vsel %vm1059, %v1056, %v1058
          %vm1061 = vcmp.eq.f32.partialorder %v1056, 0.0
          %v1062 = vand.u32 %v1056, 2147483648
          %v1063 = vsel %vm1061, %v1062, %v1060
          %v1064 = vadd.f32 %v1063, 1e-06
          %v1065 = vrcp.pop %v1064
          %s1066 = sld [smem:[#allocation8 + $0x3]]
          %s1067 = sld [smem:[#allocation10 + $0x3]]
          %v1068 = vstv %s1067
          %v1069 = vmul.f32 %v1068, %v1065
          %v1070 = vstv %s1066
          %v1071 = vadd.f32 %v1070, %v1069
          %v1072 = vmul.f32 %v968, %v1071
          %v1073 = vmul.f32 %v975, %v1071
          %v1074 = vmul.f32 %v982, %v1071
          %s1075 = sld [smem:[#allocation5]]
          %v1076 = vstv %s1075
          %v1077 = vmul.f32 %v1076, %v1003
          %s1078 = sld [smem:[#allocation5 + $0x1]]
          %v1079 = vstv %s1078
          %v1080 = vmul.f32 %v1079, %v1026
          %v1081 = vadd.f32 %v1077, %v1080
          %s1082 = sld [smem:[#allocation5 + $0x2]]
          %v1083 = vstv %s1082
          %v1084 = vmul.f32 %v1083, %v1049
          %v1085 = vadd.f32 %v1081, %v1084
          %s1086 = sld [smem:[#allocation5 + $0x3]]
          %v1087 = vstv %s1086
          %v1088 = vmul.f32 %v1087, %v1072
          %v1089 = vadd.f32 %v1085, %v1088
          %v1090 = vmul.f32 %v1076, %v1004
          %v1091 = vmul.f32 %v1079, %v1027
          %v1092 = vadd.f32 %v1090, %v1091
          %v1093 = vmul.f32 %v1083, %v1050
          %v1094 = vadd.f32 %v1092, %v1093
          %v1095 = vmul.f32 %v1087, %v1073
          %v1096 = vadd.f32 %v1094, %v1095
          %v1097 = vmul.f32 %v1076, %v1005
          %v1098 = vmul.f32 %v1079, %v1028
          %v1099 = vadd.f32 %v1097, %v1098
          %v1100 = vmul.f32 %v1083, %v1051
          %v1101 = vadd.f32 %v1099, %v1100
          %v1102 = vmul.f32 %v1087, %v1074
          %v1103 = vadd.f32 %v1101, %v1102
          %s1104 = sld [smem:[#allocation5 + $0x80]]
          %v1105 = vstv %s1104
          %v1106 = vmul.f32 %v1105, %v1003
          %s1107 = sld [smem:[#allocation5 + $0x81]]
          %v1108 = vstv %s1107
          %v1109 = vmul.f32 %v1108, %v1026
          %v1110 = vadd.f32 %v1106, %v1109
          %s1111 = sld [smem:[#allocation5 + $0x82]]
          %v1112 = vstv %s1111
          %v1113 = vmul.f32 %v1112, %v1049
          %v1114 = vadd.f32 %v1110, %v1113
          %s1115 = sld [smem:[#allocation5 + $0x83]]
          %v1116 = vstv %s1115
          %v1117 = vmul.f32 %v1116, %v1072
          %v1118 = vadd.f32 %v1114, %v1117
          %v1119 = vmul.f32 %v1105, %v1004
          %v1120 = vmul.f32 %v1108, %v1027
          %v1121 = vadd.f32 %v1119, %v1120
          %v1122 = vmul.f32 %v1112, %v1050
          %v1123 = vadd.f32 %v1121, %v1122
          %v1124 = vmul.f32 %v1116, %v1073
          %v1125 = vadd.f32 %v1123, %v1124
          %v1126 = vmul.f32 %v1105, %v1005
          %v1127 = vmul.f32 %v1108, %v1028
          %v1128 = vadd.f32 %v1126, %v1127
          %v1129 = vmul.f32 %v1112, %v1051
          %v1130 = vadd.f32 %v1128, %v1129
          %v1131 = vmul.f32 %v1116, %v1074
          %v1132 = vadd.f32 %v1130, %v1131
          %s1133 = sld [smem:[#allocation5 + $0x100]]
          %v1134 = vstv %s1133
          %v1135 = vmul.f32 %v1134, %v1003
          %s1136 = sld [smem:[#allocation5 + $0x101]]
          %v1137 = vstv %s1136
          %v1138 = vmul.f32 %v1137, %v1026
          %v1139 = vadd.f32 %v1135, %v1138
          %s1140 = sld [smem:[#allocation5 + $0x102]]
          %v1141 = vstv %s1140
          %v1142 = vmul.f32 %v1141, %v1049
          %v1143 = vadd.f32 %v1139, %v1142
          %s1144 = sld [smem:[#allocation5 + $0x103]]
          %v1145 = vstv %s1144
          %v1146 = vmul.f32 %v1145, %v1072
          %v1147 = vadd.f32 %v1143, %v1146
          %v1148 = vmul.f32 %v1134, %v1004
          %v1149 = vmul.f32 %v1137, %v1027
          %v1150 = vadd.f32 %v1148, %v1149
          %v1151 = vmul.f32 %v1141, %v1050
          %v1152 = vadd.f32 %v1150, %v1151
          %v1153 = vmul.f32 %v1145, %v1073
          %v1154 = vadd.f32 %v1152, %v1153
          %v1155 = vmul.f32 %v1134, %v1005
          %v1156 = vmul.f32 %v1137, %v1028
          %v1157 = vadd.f32 %v1155, %v1156
          %v1158 = vmul.f32 %v1141, %v1051
          %v1159 = vadd.f32 %v1157, %v1158
          %v1160 = vmul.f32 %v1145, %v1074
          %v1161 = vadd.f32 %v1159, %v1160
          %s1162 = sld [smem:[#allocation5 + $0x180]]
          %v1163 = vstv %s1162
          %v1164 = vmul.f32 %v1163, %v1003
          %s1165 = sld [smem:[#allocation5 + $0x181]]
          %v1166 = vstv %s1165
          %v1167 = vmul.f32 %v1166, %v1026
          %v1168 = vadd.f32 %v1164, %v1167
          %s1169 = sld [smem:[#allocation5 + $0x182]]
          %v1170 = vstv %s1169
          %v1171 = vmul.f32 %v1170, %v1049
          %v1172 = vadd.f32 %v1168, %v1171
          %s1173 = sld [smem:[#allocation5 + $0x183]]
          %v1174 = vstv %s1173
          %v1175 = vmul.f32 %v1174, %v1072
          %v1176 = vadd.f32 %v1172, %v1175
          %v1177 = vmul.f32 %v1163, %v1004
          %v1178 = vmul.f32 %v1166, %v1027
          %v1179 = vadd.f32 %v1177, %v1178
          %v1180 = vmul.f32 %v1170, %v1050
          %v1181 = vadd.f32 %v1179, %v1180
          %v1182 = vmul.f32 %v1174, %v1073
          %v1183 = vadd.f32 %v1181, %v1182
          %v1184 = vmul.f32 %v1163, %v1005
          %v1185 = vmul.f32 %v1166, %v1028
          %v1186 = vadd.f32 %v1184, %v1185
          %v1187 = vmul.f32 %v1170, %v1051
          %v1188 = vadd.f32 %v1186, %v1187
          %v1189 = vmul.f32 %v1174, %v1074
          %v1190 = vadd.f32 %v1188, %v1189
          %v1191 = vmul.f32 %v1003, %v1089
          %v1192 = vmul.f32 %v1004, %v1096
          %v1193 = vadd.f32 %v1191, %v1192
          %v1194 = vmul.f32 %v1005, %v1103
          %v1195 = vadd.f32 %v1193, %v1194
          %v1196 = vmul.f32 %v1089, %v1089
          %v1197 = vmul.f32 %v1096, %v1096
          %v1198 = vadd.f32 %v1196, %v1197
          %v1199 = vmul.f32 %v1103, %v1103
          %v1200 = vadd.f32 %v1198, %v1199
          %vm1201 = vcmp.ge.f32.partialorder %v1195, 0.0
          %v1202 = vadd.f32 %v1200, 1e-06
          %v1203 = vrcp.pop %v1202
          %v1204 = vmul.f32 %v1195, %v1203
          %v1205 = vsel %vm1201, 0.0, %v1204
          %v1206 = vmul.f32 %v1205, %v1089
          %v1207 = vsub.f32 %v1003, %v1206
          %v1208 = vmul.f32 %v1205, %v1096
          %v1209 = vsub.f32 %v1004, %v1208
          %v1210 = vmul.f32 %v1205, %v1103
          %v1211 = vsub.f32 %v1005, %v1210
          %v1212 = vmul.f32 %v1026, %v1118
          %v1213 = vmul.f32 %v1027, %v1125
          %v1214 = vadd.f32 %v1212, %v1213
          %v1215 = vmul.f32 %v1028, %v1132
          %v1216 = vadd.f32 %v1214, %v1215
          %v1217 = vmul.f32 %v1118, %v1118
          %v1218 = vmul.f32 %v1125, %v1125
          %v1219 = vadd.f32 %v1217, %v1218
          %v1220 = vmul.f32 %v1132, %v1132
          %v1221 = vadd.f32 %v1219, %v1220
          %vm1222 = vcmp.ge.f32.partialorder %v1216, 0.0
          %v1223 = vadd.f32 %v1221, 1e-06
          %v1224 = vrcp.pop %v1223
          %v1225 = vmul.f32 %v1216, %v1224
          %v1226 = vsel %vm1222, 0.0, %v1225
          %v1227 = vmul.f32 %v1226, %v1118
          %v1228 = vsub.f32 %v1026, %v1227
          %v1229 = vmul.f32 %v1226, %v1125
          %v1230 = vsub.f32 %v1027, %v1229
          %v1231 = vmul.f32 %v1226, %v1132
          %v1232 = vsub.f32 %v1028, %v1231
          %v1233 = vmul.f32 %v1049, %v1147
          %v1234 = vmul.f32 %v1050, %v1154
          %v1235 = vadd.f32 %v1233, %v1234
          %v1236 = vmul.f32 %v1051, %v1161
          %v1237 = vadd.f32 %v1235, %v1236
          %v1238 = vmul.f32 %v1147, %v1147
          %v1239 = vmul.f32 %v1154, %v1154
          %v1240 = vadd.f32 %v1238, %v1239
          %v1241 = vmul.f32 %v1161, %v1161
          %v1242 = vadd.f32 %v1240, %v1241
          %vm1243 = vcmp.ge.f32.partialorder %v1237, 0.0
          %v1244 = vadd.f32 %v1242, 1e-06
          %v1245 = vrcp.pop %v1244
          %v1246 = vmul.f32 %v1237, %v1245
          %v1247 = vsel %vm1243, 0.0, %v1246
          %v1248 = vmul.f32 %v1247, %v1147
          %v1249 = vsub.f32 %v1049, %v1248
          %v1250 = vmul.f32 %v1247, %v1154
          %v1251 = vsub.f32 %v1050, %v1250
          %v1252 = vmul.f32 %v1247, %v1161
          %v1253 = vsub.f32 %v1051, %v1252
          %v1254 = vmul.f32 %v1072, %v1176
          %v1255 = vmul.f32 %v1073, %v1183
          %v1256 = vadd.f32 %v1254, %v1255
          %v1257 = vmul.f32 %v1074, %v1190
          %v1258 = vadd.f32 %v1256, %v1257
          %v1259 = vmul.f32 %v1176, %v1176
          %v1260 = vmul.f32 %v1183, %v1183
          %v1261 = vadd.f32 %v1259, %v1260
          %v1262 = vmul.f32 %v1190, %v1190
          %v1263 = vadd.f32 %v1261, %v1262
          %vm1264 = vcmp.ge.f32.partialorder %v1258, 0.0
          %v1265 = vadd.f32 %v1263, 1e-06
          %v1266 = vrcp.pop %v1265
          %v1267 = vmul.f32 %v1258, %v1266
          %v1268 = vsel %vm1264, 0.0, %v1267
          %v1269 = vmul.f32 %v1268, %v1176
          %v1270 = vsub.f32 %v1072, %v1269
          %v1271 = vmul.f32 %v1268, %v1183
          %v1272 = vsub.f32 %v1073, %v1271
          %v1273 = vmul.f32 %v1268, %v1190
          %v1274 = vsub.f32 %v1074, %v1273
          %s1275 = sld [smem:[#allocation7]]
          %v1276 = vstv %s1275
          %v1277 = vmul.f32 %v1276, %v1207
          %s1278 = sld [smem:[#allocation7 + $0x1]]
          %v1279 = vstv %s1278
          %v1280 = vmul.f32 %v1279, %v1228
          %v1281 = vadd.f32 %v1277, %v1280
          %s1282 = sld [smem:[#allocation7 + $0x2]]
          %v1283 = vstv %s1282
          %v1284 = vmul.f32 %v1283, %v1249
          %v1285 = vadd.f32 %v1281, %v1284
          %s1286 = sld [smem:[#allocation7 + $0x3]]
          %v1287 = vstv %s1286
          %v1288 = vmul.f32 %v1287, %v1270
          %v1289 = vadd.f32 %v1285, %v1288
          %v1290 = vmul.f32 %v1276, %v1209
          %v1291 = vmul.f32 %v1279, %v1230
          %v1292 = vadd.f32 %v1290, %v1291
          %v1293 = vmul.f32 %v1283, %v1251
          %v1294 = vadd.f32 %v1292, %v1293
          %v1295 = vmul.f32 %v1287, %v1272
          %v1296 = vadd.f32 %v1294, %v1295
          %v1297 = vmul.f32 %v1276, %v1211
          %v1298 = vmul.f32 %v1279, %v1232
          %v1299 = vadd.f32 %v1297, %v1298
          %v1300 = vmul.f32 %v1283, %v1253
          %v1301 = vadd.f32 %v1299, %v1300
          %v1302 = vmul.f32 %v1287, %v1274
          %v1303 = vadd.f32 %v1301, %v1302
          %s1304 = sld [smem:[#allocation7 + $0x80]]
          %v1305 = vstv %s1304
          %v1306 = vmul.f32 %v1305, %v1207
          %s1307 = sld [smem:[#allocation7 + $0x81]]
          %v1308 = vstv %s1307
          %v1309 = vmul.f32 %v1308, %v1228
          %v1310 = vadd.f32 %v1306, %v1309
          %s1311 = sld [smem:[#allocation7 + $0x82]]
          %v1312 = vstv %s1311
          %v1313 = vmul.f32 %v1312, %v1249
          %v1314 = vadd.f32 %v1310, %v1313
          %s1315 = sld [smem:[#allocation7 + $0x83]]
          %v1316 = vstv %s1315
          %v1317 = vmul.f32 %v1316, %v1270
          %v1318 = vadd.f32 %v1314, %v1317
          %v1319 = vmul.f32 %v1305, %v1209
          %v1320 = vmul.f32 %v1308, %v1230
          %v1321 = vadd.f32 %v1319, %v1320
          %v1322 = vmul.f32 %v1312, %v1251
          %v1323 = vadd.f32 %v1321, %v1322
          %v1324 = vmul.f32 %v1316, %v1272
          %v1325 = vadd.f32 %v1323, %v1324
          %v1326 = vmul.f32 %v1305, %v1211
          %v1327 = vmul.f32 %v1308, %v1232
          %v1328 = vadd.f32 %v1326, %v1327
          %v1329 = vmul.f32 %v1312, %v1253
          %v1330 = vadd.f32 %v1328, %v1329
          %v1331 = vmul.f32 %v1316, %v1274
          %v1332 = vadd.f32 %v1330, %v1331
          %s1333 = sld [smem:[#allocation7 + $0x100]]
          %v1334 = vstv %s1333
          %v1335 = vmul.f32 %v1334, %v1207
          %s1336 = sld [smem:[#allocation7 + $0x101]]
          %v1337 = vstv %s1336
          %v1338 = vmul.f32 %v1337, %v1228
          %v1339 = vadd.f32 %v1335, %v1338
          %s1340 = sld [smem:[#allocation7 + $0x102]]
          %v1341 = vstv %s1340
          %v1342 = vmul.f32 %v1341, %v1249
          %v1343 = vadd.f32 %v1339, %v1342
          %s1344 = sld [smem:[#allocation7 + $0x103]]
          %v1345 = vstv %s1344
          %v1346 = vmul.f32 %v1345, %v1270
          %v1347 = vadd.f32 %v1343, %v1346
          %v1348 = vmul.f32 %v1334, %v1209
          %v1349 = vmul.f32 %v1337, %v1230
          %v1350 = vadd.f32 %v1348, %v1349
          %v1351 = vmul.f32 %v1341, %v1251
          %v1352 = vadd.f32 %v1350, %v1351
          %v1353 = vmul.f32 %v1345, %v1272
          %v1354 = vadd.f32 %v1352, %v1353
          %v1355 = vmul.f32 %v1334, %v1211
          %v1356 = vmul.f32 %v1337, %v1232
          %v1357 = vadd.f32 %v1355, %v1356
          %v1358 = vmul.f32 %v1341, %v1253
          %v1359 = vadd.f32 %v1357, %v1358
          %v1360 = vmul.f32 %v1345, %v1274
          %v1361 = vadd.f32 %v1359, %v1360
          %s1362 = sld [smem:[#allocation7 + $0x180]]
          %v1363 = vstv %s1362
          %v1364 = vmul.f32 %v1363, %v1207
          %s1365 = sld [smem:[#allocation7 + $0x181]]
          %v1366 = vstv %s1365
          %v1367 = vmul.f32 %v1366, %v1228
          %v1368 = vadd.f32 %v1364, %v1367
          %s1369 = sld [smem:[#allocation7 + $0x182]]
          %v1370 = vstv %s1369
          %v1371 = vmul.f32 %v1370, %v1249
          %v1372 = vadd.f32 %v1368, %v1371
          %s1373 = sld [smem:[#allocation7 + $0x183]]
          %v1374 = vstv %s1373
          %v1375 = vmul.f32 %v1374, %v1270
          %v1376 = vadd.f32 %v1372, %v1375
          %v1377 = vmul.f32 %v1363, %v1209
          %v1378 = vmul.f32 %v1366, %v1230
          %v1379 = vadd.f32 %v1377, %v1378
          %v1380 = vmul.f32 %v1370, %v1251
          %v1381 = vadd.f32 %v1379, %v1380
          %v1382 = vmul.f32 %v1374, %v1272
          %v1383 = vadd.f32 %v1381, %v1382
          %v1384 = vmul.f32 %v1363, %v1211
          %v1385 = vmul.f32 %v1366, %v1232
          %v1386 = vadd.f32 %v1384, %v1385
          %v1387 = vmul.f32 %v1370, %v1253
          %v1388 = vadd.f32 %v1386, %v1387
          %v1389 = vmul.f32 %v1374, %v1274
          %v1390 = vadd.f32 %v1388, %v1389
          %v1391 = vmul.f32 %v1289, %v1289
          %v1392 = vmul.f32 %v1296, %v1296
          %v1393 = vadd.f32 %v1391, %v1392
          %v1394 = vmul.f32 %v1303, %v1303
          %v1395 = vadd.f32 %v1393, %v1394
          %v1396 = vrsqrt.pop %v1395
          %v1397 = vmul.f32 %v1395, %v1396
          %vm1398 = vcmp.eq.f32.partialorder %v1395, inf
          %v1399 = vsel %vm1398, %v1395, %v1397
          %vm1400 = vcmp.eq.f32.partialorder %v1395, 0.0
          %v1401 = vand.u32 %v1395, 2147483648
          %v1402 = vsel %vm1400, %v1401, %v1399
          %v1403 = vadd.f32 %v1402, 1e-06
          %v1404 = vrcp.pop %v1403
          %s1405 = sld [smem:[#allocation11]]
          %s1406 = sld [smem:[#allocation13]]
          %v1407 = vstv %s1406
          %v1408 = vmul.f32 %v1407, %v1404
          %v1409 = vstv %s1405
          %v1410 = vadd.f32 %v1409, %v1408
          %v1411 = vmul.f32 %v1289, %v1410
          %v1412 = vmul.f32 %v1296, %v1410
          %v1413 = vmul.f32 %v1303, %v1410
          %v1414 = vmul.f32 %v1318, %v1318
          %v1415 = vmul.f32 %v1325, %v1325
          %v1416 = vadd.f32 %v1414, %v1415
          %v1417 = vmul.f32 %v1332, %v1332
          %v1418 = vadd.f32 %v1416, %v1417
          %v1419 = vrsqrt.pop %v1418
          %v1420 = vmul.f32 %v1418, %v1419
          %vm1421 = vcmp.eq.f32.partialorder %v1418, inf
          %v1422 = vsel %vm1421, %v1418, %v1420
          %vm1423 = vcmp.eq.f32.partialorder %v1418, 0.0
          %v1424 = vand.u32 %v1418, 2147483648
          %v1425 = vsel %vm1423, %v1424, %v1422
          %v1426 = vadd.f32 %v1425, 1e-06
          %v1427 = vrcp.pop %v1426
          %s1428 = sld [smem:[#allocation11 + $0x1]]
          %s1429 = sld [smem:[#allocation13 + $0x1]]
          %v1430 = vstv %s1429
          %v1431 = vmul.f32 %v1430, %v1427
          %v1432 = vstv %s1428
          %v1433 = vadd.f32 %v1432, %v1431
          %v1434 = vmul.f32 %v1318, %v1433
          %v1435 = vmul.f32 %v1325, %v1433
          %v1436 = vmul.f32 %v1332, %v1433
          %v1437 = vmul.f32 %v1347, %v1347
          %v1438 = vmul.f32 %v1354, %v1354
          %v1439 = vadd.f32 %v1437, %v1438
          %v1440 = vmul.f32 %v1361, %v1361
          %v1441 = vadd.f32 %v1439, %v1440
          %v1442 = vrsqrt.pop %v1441
          %v1443 = vmul.f32 %v1441, %v1442
          %vm1444 = vcmp.eq.f32.partialorder %v1441, inf
          %v1445 = vsel %vm1444, %v1441, %v1443
          %vm1446 = vcmp.eq.f32.partialorder %v1441, 0.0
          %v1447 = vand.u32 %v1441, 2147483648
          %v1448 = vsel %vm1446, %v1447, %v1445
          %v1449 = vadd.f32 %v1448, 1e-06
          %v1450 = vrcp.pop %v1449
          %s1451 = sld [smem:[#allocation11 + $0x2]]
          %s1452 = sld [smem:[#allocation13 + $0x2]]
          %v1453 = vstv %s1452
          %v1454 = vmul.f32 %v1453, %v1450
          %v1455 = vstv %s1451
          %v1456 = vadd.f32 %v1455, %v1454
          %v1457 = vmul.f32 %v1347, %v1456
          %v1458 = vmul.f32 %v1354, %v1456
          %v1459 = vmul.f32 %v1361, %v1456
          %v1460 = vmul.f32 %v1376, %v1376
          %v1461 = vmul.f32 %v1383, %v1383
          %v1462 = vadd.f32 %v1460, %v1461
          %v1463 = vmul.f32 %v1390, %v1390
          %v1464 = vadd.f32 %v1462, %v1463
          %v1465 = vrsqrt.pop %v1464
          %v1466 = vmul.f32 %v1464, %v1465
          %vm1467 = vcmp.eq.f32.partialorder %v1464, inf
          %v1468 = vsel %vm1467, %v1464, %v1466
          %vm1469 = vcmp.eq.f32.partialorder %v1464, 0.0
          %v1470 = vand.u32 %v1464, 2147483648
          %v1471 = vsel %vm1469, %v1470, %v1468
          %v1472 = vadd.f32 %v1471, 1e-06
          %v1473 = vrcp.pop %v1472
          %s1474 = sld [smem:[#allocation11 + $0x3]]
          %s1475 = sld [smem:[#allocation13 + $0x3]]
          %v1476 = vstv %s1475
          %v1477 = vmul.f32 %v1476, %v1473
          %v1478 = vstv %s1474
          %v1479 = vadd.f32 %v1478, %v1477
          %v1480 = vmul.f32 %v1376, %v1479
          %v1481 = vmul.f32 %v1383, %v1479
          %v1482 = vmul.f32 %v1390, %v1479
          %v1483 = vadd.f32 %v1411, %v833
          %v1484 = vadd.f32 %v1412, %v836
          %v1485 = vadd.f32 %v1413, %v839
          %v1486 = vadd.f32 %v1434, %v842
          %v1487 = vadd.f32 %v1435, %v845
          %v1488 = vadd.f32 %v1436, %v848
          %v1489 = vadd.f32 %v1457, %v851
          %v1490 = vadd.f32 %v1458, %v854
          %v1491 = vadd.f32 %v1459, %v857
          %v1492 = vadd.f32 %v1480, %v860
          %v1493 = vadd.f32 %v1481, %v863
          %v1494 = vadd.f32 %v1482, %v866
          %v1495 = vmul.f32 %v1076, %v1483
          %v1496 = vmul.f32 %v1079, %v1486
          %v1497 = vadd.f32 %v1495, %v1496
          %v1498 = vmul.f32 %v1083, %v1489
          %v1499 = vadd.f32 %v1497, %v1498
          %v1500 = vmul.f32 %v1087, %v1492
          %v1501 = vadd.f32 %v1499, %v1500
          %v1502 = vmul.f32 %v1076, %v1484
          %v1503 = vmul.f32 %v1079, %v1487
          %v1504 = vadd.f32 %v1502, %v1503
          %v1505 = vmul.f32 %v1083, %v1490
          %v1506 = vadd.f32 %v1504, %v1505
          %v1507 = vmul.f32 %v1087, %v1493
          %v1508 = vadd.f32 %v1506, %v1507
          %v1509 = vmul.f32 %v1076, %v1485
          %v1510 = vmul.f32 %v1079, %v1488
          %v1511 = vadd.f32 %v1509, %v1510
          %v1512 = vmul.f32 %v1083, %v1491
          %v1513 = vadd.f32 %v1511, %v1512
          %v1514 = vmul.f32 %v1087, %v1494
          %v1515 = vadd.f32 %v1513, %v1514
          %v1516 = vmul.f32 %v1105, %v1483
          %v1517 = vmul.f32 %v1108, %v1486
          %v1518 = vadd.f32 %v1516, %v1517
          %v1519 = vmul.f32 %v1112, %v1489
          %v1520 = vadd.f32 %v1518, %v1519
          %v1521 = vmul.f32 %v1116, %v1492
          %v1522 = vadd.f32 %v1520, %v1521
          %v1523 = vmul.f32 %v1105, %v1484
          %v1524 = vmul.f32 %v1108, %v1487
          %v1525 = vadd.f32 %v1523, %v1524
          %v1526 = vmul.f32 %v1112, %v1490
          %v1527 = vadd.f32 %v1525, %v1526
          %v1528 = vmul.f32 %v1116, %v1493
          %v1529 = vadd.f32 %v1527, %v1528
          %v1530 = vmul.f32 %v1105, %v1485
          %v1531 = vmul.f32 %v1108, %v1488
          %v1532 = vadd.f32 %v1530, %v1531
          %v1533 = vmul.f32 %v1112, %v1491
          %v1534 = vadd.f32 %v1532, %v1533
          %v1535 = vmul.f32 %v1116, %v1494
          %v1536 = vadd.f32 %v1534, %v1535
          %v1537 = vmul.f32 %v1134, %v1483
          %v1538 = vmul.f32 %v1137, %v1486
          %v1539 = vadd.f32 %v1537, %v1538
          %v1540 = vmul.f32 %v1141, %v1489
          %v1541 = vadd.f32 %v1539, %v1540
          %v1542 = vmul.f32 %v1145, %v1492
          %v1543 = vadd.f32 %v1541, %v1542
          %v1544 = vmul.f32 %v1134, %v1484
          %v1545 = vmul.f32 %v1137, %v1487
          %v1546 = vadd.f32 %v1544, %v1545
          %v1547 = vmul.f32 %v1141, %v1490
          %v1548 = vadd.f32 %v1546, %v1547
          %v1549 = vmul.f32 %v1145, %v1493
          %v1550 = vadd.f32 %v1548, %v1549
          %v1551 = vmul.f32 %v1134, %v1485
          %v1552 = vmul.f32 %v1137, %v1488
          %v1553 = vadd.f32 %v1551, %v1552
          %v1554 = vmul.f32 %v1141, %v1491
          %v1555 = vadd.f32 %v1553, %v1554
          %v1556 = vmul.f32 %v1145, %v1494
          %v1557 = vadd.f32 %v1555, %v1556
          %v1558 = vmul.f32 %v1163, %v1483
          %v1559 = vmul.f32 %v1166, %v1486
          %v1560 = vadd.f32 %v1558, %v1559
          %v1561 = vmul.f32 %v1170, %v1489
          %v1562 = vadd.f32 %v1560, %v1561
          %v1563 = vmul.f32 %v1174, %v1492
          %v1564 = vadd.f32 %v1562, %v1563
          %v1565 = vmul.f32 %v1163, %v1484
          %v1566 = vmul.f32 %v1166, %v1487
          %v1567 = vadd.f32 %v1565, %v1566
          %v1568 = vmul.f32 %v1170, %v1490
          %v1569 = vadd.f32 %v1567, %v1568
          %v1570 = vmul.f32 %v1174, %v1493
          %v1571 = vadd.f32 %v1569, %v1570
          %v1572 = vmul.f32 %v1163, %v1485
          %v1573 = vmul.f32 %v1166, %v1488
          %v1574 = vadd.f32 %v1572, %v1573
          %v1575 = vmul.f32 %v1170, %v1491
          %v1576 = vadd.f32 %v1574, %v1575
          %v1577 = vmul.f32 %v1174, %v1494
          %v1578 = vadd.f32 %v1576, %v1577
          %v1579 = vmul.f32 %v1483, %v1501
          %v1580 = vmul.f32 %v1484, %v1508
          %v1581 = vadd.f32 %v1579, %v1580
          %v1582 = vmul.f32 %v1485, %v1515
          %v1583 = vadd.f32 %v1581, %v1582
          %v1584 = vmul.f32 %v1501, %v1501
          %v1585 = vmul.f32 %v1508, %v1508
          %v1586 = vadd.f32 %v1584, %v1585
          %v1587 = vmul.f32 %v1515, %v1515
          %v1588 = vadd.f32 %v1586, %v1587
          %vm1589 = vcmp.ge.f32.partialorder %v1583, 0.0
          %v1590 = vadd.f32 %v1588, 1e-06
          %v1591 = vrcp.pop %v1590
          %v1592 = vmul.f32 %v1583, %v1591
          %v1593 = vsel %vm1589, 0.0, %v1592
          %v1594 = vmul.f32 %v1593, %v1501
          %v1595 = vsub.f32 %v1483, %v1594
          %v1596 = vmul.f32 %v1593, %v1508
          %v1597 = vsub.f32 %v1484, %v1596
          %v1598 = vmul.f32 %v1593, %v1515
          %v1599 = vsub.f32 %v1485, %v1598
          %v1600 = vmul.f32 %v1486, %v1522
          %v1601 = vmul.f32 %v1487, %v1529
          %v1602 = vadd.f32 %v1600, %v1601
          %v1603 = vmul.f32 %v1488, %v1536
          %v1604 = vadd.f32 %v1602, %v1603
          %v1605 = vmul.f32 %v1522, %v1522
          %v1606 = vmul.f32 %v1529, %v1529
          %v1607 = vadd.f32 %v1605, %v1606
          %v1608 = vmul.f32 %v1536, %v1536
          %v1609 = vadd.f32 %v1607, %v1608
          %vm1610 = vcmp.ge.f32.partialorder %v1604, 0.0
          %v1611 = vadd.f32 %v1609, 1e-06
          %v1612 = vrcp.pop %v1611
          %v1613 = vmul.f32 %v1604, %v1612
          %v1614 = vsel %vm1610, 0.0, %v1613
          %v1615 = vmul.f32 %v1614, %v1522
          %v1616 = vsub.f32 %v1486, %v1615
          %v1617 = vmul.f32 %v1614, %v1529
          %v1618 = vsub.f32 %v1487, %v1617
          %v1619 = vmul.f32 %v1614, %v1536
          %v1620 = vsub.f32 %v1488, %v1619
          %v1621 = vmul.f32 %v1489, %v1543
          %v1622 = vmul.f32 %v1490, %v1550
          %v1623 = vadd.f32 %v1621, %v1622
          %v1624 = vmul.f32 %v1491, %v1557
          %v1625 = vadd.f32 %v1623, %v1624
          %v1626 = vmul.f32 %v1543, %v1543
          %v1627 = vmul.f32 %v1550, %v1550
          %v1628 = vadd.f32 %v1626, %v1627
          %v1629 = vmul.f32 %v1557, %v1557
          %v1630 = vadd.f32 %v1628, %v1629
          %vm1631 = vcmp.ge.f32.partialorder %v1625, 0.0
          %v1632 = vadd.f32 %v1630, 1e-06
          %v1633 = vrcp.pop %v1632
          %v1634 = vmul.f32 %v1625, %v1633
          %v1635 = vsel %vm1631, 0.0, %v1634
          %v1636 = vmul.f32 %v1635, %v1543
          %v1637 = vsub.f32 %v1489, %v1636
          %v1638 = vmul.f32 %v1635, %v1550
          %v1639 = vsub.f32 %v1490, %v1638
          %v1640 = vmul.f32 %v1635, %v1557
          %v1641 = vsub.f32 %v1491, %v1640
          %v1642 = vmul.f32 %v1492, %v1564
          %v1643 = vmul.f32 %v1493, %v1571
          %v1644 = vadd.f32 %v1642, %v1643
          %v1645 = vmul.f32 %v1494, %v1578
          %v1646 = vadd.f32 %v1644, %v1645
          %v1647 = vmul.f32 %v1564, %v1564
          %v1648 = vmul.f32 %v1571, %v1571
          %v1649 = vadd.f32 %v1647, %v1648
          %v1650 = vmul.f32 %v1578, %v1578
          %v1651 = vadd.f32 %v1649, %v1650
          %vm1652 = vcmp.ge.f32.partialorder %v1646, 0.0
          %v1653 = vadd.f32 %v1651, 1e-06
          %v1654 = vrcp.pop %v1653
          %v1655 = vmul.f32 %v1646, %v1654
          %v1656 = vsel %vm1652, 0.0, %v1655
          %v1657 = vmul.f32 %v1656, %v1564
          %v1658 = vsub.f32 %v1492, %v1657
          %v1659 = vmul.f32 %v1656, %v1571
          %v1660 = vsub.f32 %v1493, %v1659
          %v1661 = vmul.f32 %v1656, %v1578
          %v1662 = vsub.f32 %v1494, %v1661
          %s1663 = scalar_lea.vmem %s822, %s831 [#allocation14]
          %1664 = vst [vmem:[%s1663] sm:$0xff] %v1595
          %s1665 = scalar_lea.vmem %s822, %s834 [#allocation14]
          %1666 = vst [vmem:[%s1665] sm:$0xff] %v1597
          %s1667 = scalar_lea.vmem %s822, %s837 [#allocation14]
          %1668 = vst [vmem:[%s1667] sm:$0xff] %v1599
          %s1669 = scalar_lea.vmem %s822, %s840 [#allocation14]
          %1670 = vst [vmem:[%s1669] sm:$0xff] %v1616
          %s1671 = scalar_lea.vmem %s822, %s843 [#allocation14]
          %1672 = vst [vmem:[%s1671] sm:$0xff] %v1618
          %s1673 = scalar_lea.vmem %s822, %s846 [#allocation14]
          %1674 = vst [vmem:[%s1673] sm:$0xff] %v1620
          %s1675 = scalar_lea.vmem %s822, %s849 [#allocation14]
          %1676 = vst [vmem:[%s1675] sm:$0xff] %v1637
          %s1677 = scalar_lea.vmem %s822, %s852 [#allocation14]
          %1678 = vst [vmem:[%s1677] sm:$0xff] %v1639
          %s1679 = scalar_lea.vmem %s822, %s855 [#allocation14]
          %1680 = vst [vmem:[%s1679] sm:$0xff] %v1641
          %s1681 = scalar_lea.vmem %s822, %s858 [#allocation14]
          %1682 = vst [vmem:[%s1681] sm:$0xff] %v1658
          %s1683 = scalar_lea.vmem %s822, %s861 [#allocation14]
          %1684 = vst [vmem:[%s1683] sm:$0xff] %v1660
          %s1685 = scalar_lea.vmem %s822, %s864 [#allocation14]
          %1686 = vst [vmem:[%s1685] sm:$0xff] %v1662
        $region123: #{vn_basic_block_1d.5} parent=85 // loop_footer
          %s830 = sadd.s32 1, %s826
        $region124: #{vn_basic_block_1d.5} parent=85 // loop_footer_branch
          %825 = sbr.rel target = $region120
        $region125: #{vn_basic_block_1d.5} parent=85 // loop_exit
          _
        %s1687 = sand.u32 %s220, 1
        %s1688 = sand.u32 %s220, 1
        %s1689 = smul.addr %s1688, 768
        %s1690 = scalar_lea.vmem [#allocation14], %s1689
        // Predicated region
        $region126: #{vn_basic_block_1d.5} parent=85 // pred_check
          %p1691 = pneg %p230
        $region127: #{vn_basic_block_1d.5} parent=85 // pred_check_branch
          %1693 = sbr.rel (%p1691) target = $region129
        $region128: #{vn_basic_block_1d.5} parent=85 // pred_region
          %s1694 = smul.u32 8, %s28
          %s1695 = smul.addr %s27, 192
          %s1696 = sadd.s32 %s1694, %s1695
          %s1697 = smul.addr %s1696, 8
          %s1698 = scalar_lea.vmem %s8, %s1697
          // Predicated region
          $region130: #{vn_basic_block_1d.5} parent=128 // pred_check
            _
          $region131: #{vn_basic_block_1d.5} parent=128 // pred_check_branch
            %1700 = sbr.rel (0) target = $region133
          $region132: #{vn_basic_block_1d.5} parent=128 // pred_region
            // Predicated region
            $region134: #{vn_basic_block_1d.5} parent=132 // pred_check
              _
            $region135: #{vn_basic_block_1d.5} parent=132 // pred_check_branch
              %1702 = sbr.rel (0) target = $region137
            $region136: #{vn_basic_block_1d.5} parent=132 // pred_region
              // Predicated region
              $region149: #{vn_basic_block_1d.5} parent=136 // pred_check
                _
              $region150: #{vn_basic_block_1d.5} parent=136 // pred_check_branch
                %1908 = sbr.rel (0) target = $region152
              $region151: #{vn_basic_block_1d.5} parent=136 // pred_region
                loop: start=0, step=1, limit=1
                $region153: #{vn_basic_block_1d.5} parent=151 // loop_pre_header
                  _
                $region154: #{vn_basic_block_1d.5} parent=151 // loop_header
                  %s1910 = sphi 0, %s1914
                  %p1911 = scmp.ge.s32.totalorder %s1910, 1
                  %s1915 = sphi %s1690, %s1690
                  %s1916 = sphi %s1698, %s1698
                $region155: #{vn_basic_block_1d.5} parent=151 // loop_header_branch
                  %1913 = sbr.rel (%p1911) target = $region159
                $region156: #{vn_basic_block_1d.5} parent=151 // loop_body
                  %v1917 = vld [vmem:[%s1915] sm:$0xff]
                  %1918 = vst [vmem:[%s1916] sm:$0xff] %v1917
                  %v1919 = vld [vmem:[%s1915 + $0x8] sm:$0xff]
                  %1920 = vst [vmem:[%s1916 + $0x8] sm:$0xff] %v1919
                  %v1921 = vld [vmem:[%s1915 + $0x10] sm:$0xff]
                  %1922 = vst [vmem:[%s1916 + $0x10] sm:$0xff] %v1921
                  %v1923 = vld [vmem:[%s1915 + $0x18] sm:$0xff]
                  %1924 = vst [vmem:[%s1916 + $0x18] sm:$0xff] %v1923
                  %v1925 = vld [vmem:[%s1915 + $0x20] sm:$0xff]
                  %1926 = vst [vmem:[%s1916 + $0x20] sm:$0xff] %v1925
                  %v1927 = vld [vmem:[%s1915 + $0x28] sm:$0xff]
                  %1928 = vst [vmem:[%s1916 + $0x28] sm:$0xff] %v1927
                  %v1929 = vld [vmem:[%s1915 + $0x30] sm:$0xff]
                  %1930 = vst [vmem:[%s1916 + $0x30] sm:$0xff] %v1929
                  %v1931 = vld [vmem:[%s1915 + $0x38] sm:$0xff]
                  %1932 = vst [vmem:[%s1916 + $0x38] sm:$0xff] %v1931
                  %v1933 = vld [vmem:[%s1915 + $0x40] sm:$0xff]
                  %1934 = vst [vmem:[%s1916 + $0x80] sm:$0xff] %v1933
                  %v1935 = vld [vmem:[%s1915 + $0x48] sm:$0xff]
                  %1936 = vst [vmem:[%s1916 + $0x88] sm:$0xff] %v1935
                  %v1937 = vld [vmem:[%s1915 + $0x50] sm:$0xff]
                  %1938 = vst [vmem:[%s1916 + $0x90] sm:$0xff] %v1937
                  %v1939 = vld [vmem:[%s1915 + $0x58] sm:$0xff]
                  %1940 = vst [vmem:[%s1916 + $0x98] sm:$0xff] %v1939
                  %v1941 = vld [vmem:[%s1915 + $0x60] sm:$0xff]
                  %1942 = vst [vmem:[%s1916 + $0xa0] sm:$0xff] %v1941
                  %v1943 = vld [vmem:[%s1915 + $0x68] sm:$0xff]
                  %1944 = vst [vmem:[%s1916 + $0xa8] sm:$0xff] %v1943
                  %v1945 = vld [vmem:[%s1915 + $0x70] sm:$0xff]
                  %1946 = vst [vmem:[%s1916 + $0xb0] sm:$0xff] %v1945
                  %v1947 = vld [vmem:[%s1915 + $0x78] sm:$0xff]
                  %1948 = vst [vmem:[%s1916 + $0xb8] sm:$0xff] %v1947
                  %v1949 = vld [vmem:[%s1915 + $0x80] sm:$0xff]
                  %1950 = vst [vmem:[%s1916 + $0x100] sm:$0xff] %v1949
                  %v1951 = vld [vmem:[%s1915 + $0x88] sm:$0xff]
                  %1952 = vst [vmem:[%s1916 + $0x108] sm:$0xff] %v1951
                  %v1953 = vld [vmem:[%s1915 + $0x90] sm:$0xff]
                  %1954 = vst [vmem:[%s1916 + $0x110] sm:$0xff] %v1953
                  %v1955 = vld [vmem:[%s1915 + $0x98] sm:$0xff]
                  %1956 = vst [vmem:[%s1916 + $0x118] sm:$0xff] %v1955
                  %v1957 = vld [vmem:[%s1915 + $0xa0] sm:$0xff]
                  %1958 = vst [vmem:[%s1916 + $0x120] sm:$0xff] %v1957
                  %v1959 = vld [vmem:[%s1915 + $0xa8] sm:$0xff]
                  %1960 = vst [vmem:[%s1916 + $0x128] sm:$0xff] %v1959
                  %v1961 = vld [vmem:[%s1915 + $0xb0] sm:$0xff]
                  %1962 = vst [vmem:[%s1916 + $0x130] sm:$0xff] %v1961
                  %v1963 = vld [vmem:[%s1915 + $0xb8] sm:$0xff]
                  %1964 = vst [vmem:[%s1916 + $0x138] sm:$0xff] %v1963
                  %v1965 = vld [vmem:[%s1915 + $0xc0] sm:$0xff]
                  %1966 = vst [vmem:[%s1916 + $0x180] sm:$0xff] %v1965
                  %v1967 = vld [vmem:[%s1915 + $0xc8] sm:$0xff]
                  %1968 = vst [vmem:[%s1916 + $0x188] sm:$0xff] %v1967
                  %v1969 = vld [vmem:[%s1915 + $0xd0] sm:$0xff]
                  %1970 = vst [vmem:[%s1916 + $0x190] sm:$0xff] %v1969
                  %v1971 = vld [vmem:[%s1915 + $0xd8] sm:$0xff]
                  %1972 = vst [vmem:[%s1916 + $0x198] sm:$0xff] %v1971
                  %v1973 = vld [vmem:[%s1915 + $0xe0] sm:$0xff]
                  %1974 = vst [vmem:[%s1916 + $0x1a0] sm:$0xff] %v1973
                  %v1975 = vld [vmem:[%s1915 + $0xe8] sm:$0xff]
                  %1976 = vst [vmem:[%s1916 + $0x1a8] sm:$0xff] %v1975
                  %v1977 = vld [vmem:[%s1915 + $0xf0] sm:$0xff]
                  %1978 = vst [vmem:[%s1916 + $0x1b0] sm:$0xff] %v1977
                  %v1979 = vld [vmem:[%s1915 + $0xf8] sm:$0xff]
                  %1980 = vst [vmem:[%s1916 + $0x1b8] sm:$0xff] %v1979
                  %v1981 = vld [vmem:[%s1915 + $0x100] sm:$0xff]
                  %1982 = vst [vmem:[%s1916 + $0x200] sm:$0xff] %v1981
                  %v1983 = vld [vmem:[%s1915 + $0x108] sm:$0xff]
                  %1984 = vst [vmem:[%s1916 + $0x208] sm:$0xff] %v1983
                  %v1985 = vld [vmem:[%s1915 + $0x110] sm:$0xff]
                  %1986 = vst [vmem:[%s1916 + $0x210] sm:$0xff] %v1985
                  %v1987 = vld [vmem:[%s1915 + $0x118] sm:$0xff]
                  %1988 = vst [vmem:[%s1916 + $0x218] sm:$0xff] %v1987
                  %v1989 = vld [vmem:[%s1915 + $0x120] sm:$0xff]
                  %1990 = vst [vmem:[%s1916 + $0x220] sm:$0xff] %v1989
                  %v1991 = vld [vmem:[%s1915 + $0x128] sm:$0xff]
                  %1992 = vst [vmem:[%s1916 + $0x228] sm:$0xff] %v1991
                  %v1993 = vld [vmem:[%s1915 + $0x130] sm:$0xff]
                  %1994 = vst [vmem:[%s1916 + $0x230] sm:$0xff] %v1993
                  %v1995 = vld [vmem:[%s1915 + $0x138] sm:$0xff]
                  %1996 = vst [vmem:[%s1916 + $0x238] sm:$0xff] %v1995
                  %v1997 = vld [vmem:[%s1915 + $0x140] sm:$0xff]
                  %1998 = vst [vmem:[%s1916 + $0x280] sm:$0xff] %v1997
                  %v1999 = vld [vmem:[%s1915 + $0x148] sm:$0xff]
                  %2000 = vst [vmem:[%s1916 + $0x288] sm:$0xff] %v1999
                  %v2001 = vld [vmem:[%s1915 + $0x150] sm:$0xff]
                  %2002 = vst [vmem:[%s1916 + $0x290] sm:$0xff] %v2001
                  %v2003 = vld [vmem:[%s1915 + $0x158] sm:$0xff]
                  %2004 = vst [vmem:[%s1916 + $0x298] sm:$0xff] %v2003
                  %v2005 = vld [vmem:[%s1915 + $0x160] sm:$0xff]
                  %2006 = vst [vmem:[%s1916 + $0x2a0] sm:$0xff] %v2005
                  %v2007 = vld [vmem:[%s1915 + $0x168] sm:$0xff]
                  %2008 = vst [vmem:[%s1916 + $0x2a8] sm:$0xff] %v2007
                  %v2009 = vld [vmem:[%s1915 + $0x170] sm:$0xff]
                  %2010 = vst [vmem:[%s1916 + $0x2b0] sm:$0xff] %v2009
                  %v2011 = vld [vmem:[%s1915 + $0x178] sm:$0xff]
                  %2012 = vst [vmem:[%s1916 + $0x2b8] sm:$0xff] %v2011
                  %v2013 = vld [vmem:[%s1915 + $0x180] sm:$0xff]
                  %2014 = vst [vmem:[%s1916 + $0x300] sm:$0xff] %v2013
                  %v2015 = vld [vmem:[%s1915 + $0x188] sm:$0xff]
                  %2016 = vst [vmem:[%s1916 + $0x308] sm:$0xff] %v2015
                  %v2017 = vld [vmem:[%s1915 + $0x190] sm:$0xff]
                  %2018 = vst [vmem:[%s1916 + $0x310] sm:$0xff] %v2017
                  %v2019 = vld [vmem:[%s1915 + $0x198] sm:$0xff]
                  %2020 = vst [vmem:[%s1916 + $0x318] sm:$0xff] %v2019
                  %v2021 = vld [vmem:[%s1915 + $0x1a0] sm:$0xff]
                  %2022 = vst [vmem:[%s1916 + $0x320] sm:$0xff] %v2021
                  %v2023 = vld [vmem:[%s1915 + $0x1a8] sm:$0xff]
                  %2024 = vst [vmem:[%s1916 + $0x328] sm:$0xff] %v2023
                  %v2025 = vld [vmem:[%s1915 + $0x1b0] sm:$0xff]
                  %2026 = vst [vmem:[%s1916 + $0x330] sm:$0xff] %v2025
                  %v2027 = vld [vmem:[%s1915 + $0x1b8] sm:$0xff]
                  %2028 = vst [vmem:[%s1916 + $0x338] sm:$0xff] %v2027
                  %v2029 = vld [vmem:[%s1915 + $0x1c0] sm:$0xff]
                  %2030 = vst [vmem:[%s1916 + $0x380] sm:$0xff] %v2029
                  %v2031 = vld [vmem:[%s1915 + $0x1c8] sm:$0xff]
                  %2032 = vst [vmem:[%s1916 + $0x388] sm:$0xff] %v2031
                  %v2033 = vld [vmem:[%s1915 + $0x1d0] sm:$0xff]
                  %2034 = vst [vmem:[%s1916 + $0x390] sm:$0xff] %v2033
                  %v2035 = vld [vmem:[%s1915 + $0x1d8] sm:$0xff]
                  %2036 = vst [vmem:[%s1916 + $0x398] sm:$0xff] %v2035
                  %v2037 = vld [vmem:[%s1915 + $0x1e0] sm:$0xff]
                  %2038 = vst [vmem:[%s1916 + $0x3a0] sm:$0xff] %v2037
                  %v2039 = vld [vmem:[%s1915 + $0x1e8] sm:$0xff]
                  %2040 = vst [vmem:[%s1916 + $0x3a8] sm:$0xff] %v2039
                  %v2041 = vld [vmem:[%s1915 + $0x1f0] sm:$0xff]
                  %2042 = vst [vmem:[%s1916 + $0x3b0] sm:$0xff] %v2041
                  %v2043 = vld [vmem:[%s1915 + $0x1f8] sm:$0xff]
                  %2044 = vst [vmem:[%s1916 + $0x3b8] sm:$0xff] %v2043
                  %v2045 = vld [vmem:[%s1915 + $0x200] sm:$0xff]
                  %2046 = vst [vmem:[%s1916 + $0x400] sm:$0xff] %v2045
                  %v2047 = vld [vmem:[%s1915 + $0x208] sm:$0xff]
                  %2048 = vst [vmem:[%s1916 + $0x408] sm:$0xff] %v2047
                  %v2049 = vld [vmem:[%s1915 + $0x210] sm:$0xff]
                  %2050 = vst [vmem:[%s1916 + $0x410] sm:$0xff] %v2049
                  %v2051 = vld [vmem:[%s1915 + $0x218] sm:$0xff]
                  %2052 = vst [vmem:[%s1916 + $0x418] sm:$0xff] %v2051
                  %v2053 = vld [vmem:[%s1915 + $0x220] sm:$0xff]
                  %2054 = vst [vmem:[%s1916 + $0x420] sm:$0xff] %v2053
                  %v2055 = vld [vmem:[%s1915 + $0x228] sm:$0xff]
                  %2056 = vst [vmem:[%s1916 + $0x428] sm:$0xff] %v2055
                  %v2057 = vld [vmem:[%s1915 + $0x230] sm:$0xff]
                  %2058 = vst [vmem:[%s1916 + $0x430] sm:$0xff] %v2057
                  %v2059 = vld [vmem:[%s1915 + $0x238] sm:$0xff]
                  %2060 = vst [vmem:[%s1916 + $0x438] sm:$0xff] %v2059
                  %v2061 = vld [vmem:[%s1915 + $0x240] sm:$0xff]
                  %2062 = vst [vmem:[%s1916 + $0x480] sm:$0xff] %v2061
                  %v2063 = vld [vmem:[%s1915 + $0x248] sm:$0xff]
                  %2064 = vst [vmem:[%s1916 + $0x488] sm:$0xff] %v2063
                  %v2065 = vld [vmem:[%s1915 + $0x250] sm:$0xff]
                  %2066 = vst [vmem:[%s1916 + $0x490] sm:$0xff] %v2065
                  %v2067 = vld [vmem:[%s1915 + $0x258] sm:$0xff]
                  %2068 = vst [vmem:[%s1916 + $0x498] sm:$0xff] %v2067
                  %v2069 = vld [vmem:[%s1915 + $0x260] sm:$0xff]
                  %2070 = vst [vmem:[%s1916 + $0x4a0] sm:$0xff] %v2069
                  %v2071 = vld [vmem:[%s1915 + $0x268] sm:$0xff]
                  %2072 = vst [vmem:[%s1916 + $0x4a8] sm:$0xff] %v2071
                  %v2073 = vld [vmem:[%s1915 + $0x270] sm:$0xff]
                  %2074 = vst [vmem:[%s1916 + $0x4b0] sm:$0xff] %v2073
                  %v2075 = vld [vmem:[%s1915 + $0x278] sm:$0xff]
                  %2076 = vst [vmem:[%s1916 + $0x4b8] sm:$0xff] %v2075
                  %v2077 = vld [vmem:[%s1915 + $0x280] sm:$0xff]
                  %2078 = vst [vmem:[%s1916 + $0x500] sm:$0xff] %v2077
                  %v2079 = vld [vmem:[%s1915 + $0x288] sm:$0xff]
                  %2080 = vst [vmem:[%s1916 + $0x508] sm:$0xff] %v2079
                  %v2081 = vld [vmem:[%s1915 + $0x290] sm:$0xff]
                  %2082 = vst [vmem:[%s1916 + $0x510] sm:$0xff] %v2081
                  %v2083 = vld [vmem:[%s1915 + $0x298] sm:$0xff]
                  %2084 = vst [vmem:[%s1916 + $0x518] sm:$0xff] %v2083
                  %v2085 = vld [vmem:[%s1915 + $0x2a0] sm:$0xff]
                  %2086 = vst [vmem:[%s1916 + $0x520] sm:$0xff] %v2085
                  %v2087 = vld [vmem:[%s1915 + $0x2a8] sm:$0xff]
                  %2088 = vst [vmem:[%s1916 + $0x528] sm:$0xff] %v2087
                  %v2089 = vld [vmem:[%s1915 + $0x2b0] sm:$0xff]
                  %2090 = vst [vmem:[%s1916 + $0x530] sm:$0xff] %v2089
                  %v2091 = vld [vmem:[%s1915 + $0x2b8] sm:$0xff]
                  %2092 = vst [vmem:[%s1916 + $0x538] sm:$0xff] %v2091
                  %v2093 = vld [vmem:[%s1915 + $0x2c0] sm:$0xff]
                  %2094 = vst [vmem:[%s1916 + $0x580] sm:$0xff] %v2093
                  %v2095 = vld [vmem:[%s1915 + $0x2c8] sm:$0xff]
                  %2096 = vst [vmem:[%s1916 + $0x588] sm:$0xff] %v2095
                  %v2097 = vld [vmem:[%s1915 + $0x2d0] sm:$0xff]
                  %2098 = vst [vmem:[%s1916 + $0x590] sm:$0xff] %v2097
                  %v2099 = vld [vmem:[%s1915 + $0x2d8] sm:$0xff]
                  %2100 = vst [vmem:[%s1916 + $0x598] sm:$0xff] %v2099
                  %v2101 = vld [vmem:[%s1915 + $0x2e0] sm:$0xff]
                  %2102 = vst [vmem:[%s1916 + $0x5a0] sm:$0xff] %v2101
                  %v2103 = vld [vmem:[%s1915 + $0x2e8] sm:$0xff]
                  %2104 = vst [vmem:[%s1916 + $0x5a8] sm:$0xff] %v2103
                  %v2105 = vld [vmem:[%s1915 + $0x2f0] sm:$0xff]
                  %2106 = vst [vmem:[%s1916 + $0x5b0] sm:$0xff] %v2105
                  %v2107 = vld [vmem:[%s1915 + $0x2f8] sm:$0xff]
                  %2108 = vst [vmem:[%s1916 + $0x5b8] sm:$0xff] %v2107
                $region157: #{vn_basic_block_1d.5} parent=151 // loop_footer
                  %s1914 = sadd.s32 1, %s1910
                $region158: #{vn_basic_block_1d.5} parent=151 // loop_footer_branch
                  %1909 = sbr.rel target = $region154
                $region159: #{vn_basic_block_1d.5} parent=151 // loop_exit
                  _
              $region152: #{vn_basic_block_1d.5} parent=136 // pred_fallthru
                _
              // Predicated region
              $region160: #{vn_basic_block_1d.5} parent=136 // pred_check
                _
              $region161: #{vn_basic_block_1d.5} parent=136 // pred_check_branch
                %2110 = sbr.rel target = $region163
              $region162: #{vn_basic_block_1d.5} parent=136 // pred_region
                _
              $region163: #{vn_basic_block_1d.5} parent=136 // pred_fallthru
                _
            $region137: #{vn_basic_block_1d.5} parent=132 // pred_fallthru
              _
            // Predicated region
            $region138: #{vn_basic_block_1d.5} parent=132 // pred_check
              _
            $region139: #{vn_basic_block_1d.5} parent=132 // pred_check_branch
              %1704 = sbr.rel target = $region141
            $region140: #{vn_basic_block_1d.5} parent=132 // pred_region
              %s1706 = ssub.s32 256, 1
              loop: start=0, step=1, limit=1
              $region142: #{vn_basic_block_1d.5} parent=140 // loop_pre_header
                _
              $region143: #{vn_basic_block_1d.5} parent=140 // loop_header
                %s1708 = sphi 0, %s1712
                %p1709 = scmp.ge.s32.totalorder %s1708, 1
                %s1713 = sphi %s1690, %s1690
                %s1714 = sphi %s1698, %s1698
              $region144: #{vn_basic_block_1d.5} parent=140 // loop_header_branch
                %1711 = sbr.rel (%p1709) target = $region148
              $region145: #{vn_basic_block_1d.5} parent=140 // loop_body
                %v1715 = vld [vmem:[%s1713] sm:%s1706]
                %1716 = vst [vmem:[%s1714] sm:%s1706] %v1715
                %v1717 = vld [vmem:[%s1713 + $0x8] sm:%s1706]
                %1718 = vst [vmem:[%s1714 + $0x8] sm:%s1706] %v1717
                %v1719 = vld [vmem:[%s1713 + $0x10] sm:%s1706]
                %1720 = vst [vmem:[%s1714 + $0x10] sm:%s1706] %v1719
                %v1721 = vld [vmem:[%s1713 + $0x18] sm:%s1706]
                %1722 = vst [vmem:[%s1714 + $0x18] sm:%s1706] %v1721
                %v1723 = vld [vmem:[%s1713 + $0x20] sm:%s1706]
                %1724 = vst [vmem:[%s1714 + $0x20] sm:%s1706] %v1723
                %v1725 = vld [vmem:[%s1713 + $0x28] sm:%s1706]
                %1726 = vst [vmem:[%s1714 + $0x28] sm:%s1706] %v1725
                %v1727 = vld [vmem:[%s1713 + $0x30] sm:%s1706]
                %1728 = vst [vmem:[%s1714 + $0x30] sm:%s1706] %v1727
                %v1729 = vld [vmem:[%s1713 + $0x38] sm:%s1706]
                %1730 = vst [vmem:[%s1714 + $0x38] sm:%s1706] %v1729
                %v1731 = vld [vmem:[%s1713 + $0x40] sm:%s1706]
                %1732 = vst [vmem:[%s1714 + $0x80] sm:%s1706] %v1731
                %v1733 = vld [vmem:[%s1713 + $0x48] sm:%s1706]
                %1734 = vst [vmem:[%s1714 + $0x88] sm:%s1706] %v1733
                %v1735 = vld [vmem:[%s1713 + $0x50] sm:%s1706]
                %1736 = vst [vmem:[%s1714 + $0x90] sm:%s1706] %v1735
                %v1737 = vld [vmem:[%s1713 + $0x58] sm:%s1706]
                %1738 = vst [vmem:[%s1714 + $0x98] sm:%s1706] %v1737
                %v1739 = vld [vmem:[%s1713 + $0x60] sm:%s1706]
                %1740 = vst [vmem:[%s1714 + $0xa0] sm:%s1706] %v1739
                %v1741 = vld [vmem:[%s1713 + $0x68] sm:%s1706]
                %1742 = vst [vmem:[%s1714 + $0xa8] sm:%s1706] %v1741
                %v1743 = vld [vmem:[%s1713 + $0x70] sm:%s1706]
                %1744 = vst [vmem:[%s1714 + $0xb0] sm:%s1706] %v1743
                %v1745 = vld [vmem:[%s1713 + $0x78] sm:%s1706]
                %1746 = vst [vmem:[%s1714 + $0xb8] sm:%s1706] %v1745
                %v1747 = vld [vmem:[%s1713 + $0x80] sm:%s1706]
                %1748 = vst [vmem:[%s1714 + $0x100] sm:%s1706] %v1747
                %v1749 = vld [vmem:[%s1713 + $0x88] sm:%s1706]
                %1750 = vst [vmem:[%s1714 + $0x108] sm:%s1706] %v1749
                %v1751 = vld [vmem:[%s1713 + $0x90] sm:%s1706]
                %1752 = vst [vmem:[%s1714 + $0x110] sm:%s1706] %v1751
                %v1753 = vld [vmem:[%s1713 + $0x98] sm:%s1706]
                %1754 = vst [vmem:[%s1714 + $0x118] sm:%s1706] %v1753
                %v1755 = vld [vmem:[%s1713 + $0xa0] sm:%s1706]
                %1756 = vst [vmem:[%s1714 + $0x120] sm:%s1706] %v1755
                %v1757 = vld [vmem:[%s1713 + $0xa8] sm:%s1706]
                %1758 = vst [vmem:[%s1714 + $0x128] sm:%s1706] %v1757
                %v1759 = vld [vmem:[%s1713 + $0xb0] sm:%s1706]
                %1760 = vst [vmem:[%s1714 + $0x130] sm:%s1706] %v1759
                %v1761 = vld [vmem:[%s1713 + $0xb8] sm:%s1706]
                %1762 = vst [vmem:[%s1714 + $0x138] sm:%s1706] %v1761
                %v1763 = vld [vmem:[%s1713 + $0xc0] sm:%s1706]
                %1764 = vst [vmem:[%s1714 + $0x180] sm:%s1706] %v1763
                %v1765 = vld [vmem:[%s1713 + $0xc8] sm:%s1706]
                %1766 = vst [vmem:[%s1714 + $0x188] sm:%s1706] %v1765
                %v1767 = vld [vmem:[%s1713 + $0xd0] sm:%s1706]
                %1768 = vst [vmem:[%s1714 + $0x190] sm:%s1706] %v1767
                %v1769 = vld [vmem:[%s1713 + $0xd8] sm:%s1706]
                %1770 = vst [vmem:[%s1714 + $0x198] sm:%s1706] %v1769
                %v1771 = vld [vmem:[%s1713 + $0xe0] sm:%s1706]
                %1772 = vst [vmem:[%s1714 + $0x1a0] sm:%s1706] %v1771
                %v1773 = vld [vmem:[%s1713 + $0xe8] sm:%s1706]
                %1774 = vst [vmem:[%s1714 + $0x1a8] sm:%s1706] %v1773
                %v1775 = vld [vmem:[%s1713 + $0xf0] sm:%s1706]
                %1776 = vst [vmem:[%s1714 + $0x1b0] sm:%s1706] %v1775
                %v1777 = vld [vmem:[%s1713 + $0xf8] sm:%s1706]
                %1778 = vst [vmem:[%s1714 + $0x1b8] sm:%s1706] %v1777
                %v1779 = vld [vmem:[%s1713 + $0x100] sm:%s1706]
                %1780 = vst [vmem:[%s1714 + $0x200] sm:%s1706] %v1779
                %v1781 = vld [vmem:[%s1713 + $0x108] sm:%s1706]
                %1782 = vst [vmem:[%s1714 + $0x208] sm:%s1706] %v1781
                %v1783 = vld [vmem:[%s1713 + $0x110] sm:%s1706]
                %1784 = vst [vmem:[%s1714 + $0x210] sm:%s1706] %v1783
                %v1785 = vld [vmem:[%s1713 + $0x118] sm:%s1706]
                %1786 = vst [vmem:[%s1714 + $0x218] sm:%s1706] %v1785
                %v1787 = vld [vmem:[%s1713 + $0x120] sm:%s1706]
                %1788 = vst [vmem:[%s1714 + $0x220] sm:%s1706] %v1787
                %v1789 = vld [vmem:[%s1713 + $0x128] sm:%s1706]
                %1790 = vst [vmem:[%s1714 + $0x228] sm:%s1706] %v1789
                %v1791 = vld [vmem:[%s1713 + $0x130] sm:%s1706]
                %1792 = vst [vmem:[%s1714 + $0x230] sm:%s1706] %v1791
                %v1793 = vld [vmem:[%s1713 + $0x138] sm:%s1706]
                %1794 = vst [vmem:[%s1714 + $0x238] sm:%s1706] %v1793
                %v1795 = vld [vmem:[%s1713 + $0x140] sm:%s1706]
                %1796 = vst [vmem:[%s1714 + $0x280] sm:%s1706] %v1795
                %v1797 = vld [vmem:[%s1713 + $0x148] sm:%s1706]
                %1798 = vst [vmem:[%s1714 + $0x288] sm:%s1706] %v1797
                %v1799 = vld [vmem:[%s1713 + $0x150] sm:%s1706]
                %1800 = vst [vmem:[%s1714 + $0x290] sm:%s1706] %v1799
                %v1801 = vld [vmem:[%s1713 + $0x158] sm:%s1706]
                %1802 = vst [vmem:[%s1714 + $0x298] sm:%s1706] %v1801
                %v1803 = vld [vmem:[%s1713 + $0x160] sm:%s1706]
                %1804 = vst [vmem:[%s1714 + $0x2a0] sm:%s1706] %v1803
                %v1805 = vld [vmem:[%s1713 + $0x168] sm:%s1706]
                %1806 = vst [vmem:[%s1714 + $0x2a8] sm:%s1706] %v1805
                %v1807 = vld [vmem:[%s1713 + $0x170] sm:%s1706]
                %1808 = vst [vmem:[%s1714 + $0x2b0] sm:%s1706] %v1807
                %v1809 = vld [vmem:[%s1713 + $0x178] sm:%s1706]
                %1810 = vst [vmem:[%s1714 + $0x2b8] sm:%s1706] %v1809
                %v1811 = vld [vmem:[%s1713 + $0x180] sm:%s1706]
                %1812 = vst [vmem:[%s1714 + $0x300] sm:%s1706] %v1811
                %v1813 = vld [vmem:[%s1713 + $0x188] sm:%s1706]
                %1814 = vst [vmem:[%s1714 + $0x308] sm:%s1706] %v1813
                %v1815 = vld [vmem:[%s1713 + $0x190] sm:%s1706]
                %1816 = vst [vmem:[%s1714 + $0x310] sm:%s1706] %v1815
                %v1817 = vld [vmem:[%s1713 + $0x198] sm:%s1706]
                %1818 = vst [vmem:[%s1714 + $0x318] sm:%s1706] %v1817
                %v1819 = vld [vmem:[%s1713 + $0x1a0] sm:%s1706]
                %1820 = vst [vmem:[%s1714 + $0x320] sm:%s1706] %v1819
                %v1821 = vld [vmem:[%s1713 + $0x1a8] sm:%s1706]
                %1822 = vst [vmem:[%s1714 + $0x328] sm:%s1706] %v1821
                %v1823 = vld [vmem:[%s1713 + $0x1b0] sm:%s1706]
                %1824 = vst [vmem:[%s1714 + $0x330] sm:%s1706] %v1823
                %v1825 = vld [vmem:[%s1713 + $0x1b8] sm:%s1706]
                %1826 = vst [vmem:[%s1714 + $0x338] sm:%s1706] %v1825
                %v1827 = vld [vmem:[%s1713 + $0x1c0] sm:%s1706]
                %1828 = vst [vmem:[%s1714 + $0x380] sm:%s1706] %v1827
                %v1829 = vld [vmem:[%s1713 + $0x1c8] sm:%s1706]
                %1830 = vst [vmem:[%s1714 + $0x388] sm:%s1706] %v1829
                %v1831 = vld [vmem:[%s1713 + $0x1d0] sm:%s1706]
                %1832 = vst [vmem:[%s1714 + $0x390] sm:%s1706] %v1831
                %v1833 = vld [vmem:[%s1713 + $0x1d8] sm:%s1706]
                %1834 = vst [vmem:[%s1714 + $0x398] sm:%s1706] %v1833
                %v1835 = vld [vmem:[%s1713 + $0x1e0] sm:%s1706]
                %1836 = vst [vmem:[%s1714 + $0x3a0] sm:%s1706] %v1835
                %v1837 = vld [vmem:[%s1713 + $0x1e8] sm:%s1706]
                %1838 = vst [vmem:[%s1714 + $0x3a8] sm:%s1706] %v1837
                %v1839 = vld [vmem:[%s1713 + $0x1f0] sm:%s1706]
                %1840 = vst [vmem:[%s1714 + $0x3b0] sm:%s1706] %v1839
                %v1841 = vld [vmem:[%s1713 + $0x1f8] sm:%s1706]
                %1842 = vst [vmem:[%s1714 + $0x3b8] sm:%s1706] %v1841
                %v1843 = vld [vmem:[%s1713 + $0x200] sm:%s1706]
                %1844 = vst [vmem:[%s1714 + $0x400] sm:%s1706] %v1843
                %v1845 = vld [vmem:[%s1713 + $0x208] sm:%s1706]
                %1846 = vst [vmem:[%s1714 + $0x408] sm:%s1706] %v1845
                %v1847 = vld [vmem:[%s1713 + $0x210] sm:%s1706]
                %1848 = vst [vmem:[%s1714 + $0x410] sm:%s1706] %v1847
                %v1849 = vld [vmem:[%s1713 + $0x218] sm:%s1706]
                %1850 = vst [vmem:[%s1714 + $0x418] sm:%s1706] %v1849
                %v1851 = vld [vmem:[%s1713 + $0x220] sm:%s1706]
                %1852 = vst [vmem:[%s1714 + $0x420] sm:%s1706] %v1851
                %v1853 = vld [vmem:[%s1713 + $0x228] sm:%s1706]
                %1854 = vst [vmem:[%s1714 + $0x428] sm:%s1706] %v1853
                %v1855 = vld [vmem:[%s1713 + $0x230] sm:%s1706]
                %1856 = vst [vmem:[%s1714 + $0x430] sm:%s1706] %v1855
                %v1857 = vld [vmem:[%s1713 + $0x238] sm:%s1706]
                %1858 = vst [vmem:[%s1714 + $0x438] sm:%s1706] %v1857
                %v1859 = vld [vmem:[%s1713 + $0x240] sm:%s1706]
                %1860 = vst [vmem:[%s1714 + $0x480] sm:%s1706] %v1859
                %v1861 = vld [vmem:[%s1713 + $0x248] sm:%s1706]
                %1862 = vst [vmem:[%s1714 + $0x488] sm:%s1706] %v1861
                %v1863 = vld [vmem:[%s1713 + $0x250] sm:%s1706]
                %1864 = vst [vmem:[%s1714 + $0x490] sm:%s1706] %v1863
                %v1865 = vld [vmem:[%s1713 + $0x258] sm:%s1706]
                %1866 = vst [vmem:[%s1714 + $0x498] sm:%s1706] %v1865
                %v1867 = vld [vmem:[%s1713 + $0x260] sm:%s1706]
                %1868 = vst [vmem:[%s1714 + $0x4a0] sm:%s1706] %v1867
                %v1869 = vld [vmem:[%s1713 + $0x268] sm:%s1706]
                %1870 = vst [vmem:[%s1714 + $0x4a8] sm:%s1706] %v1869
                %v1871 = vld [vmem:[%s1713 + $0x270] sm:%s1706]
                %1872 = vst [vmem:[%s1714 + $0x4b0] sm:%s1706] %v1871
                %v1873 = vld [vmem:[%s1713 + $0x278] sm:%s1706]
                %1874 = vst [vmem:[%s1714 + $0x4b8] sm:%s1706] %v1873
                %v1875 = vld [vmem:[%s1713 + $0x280] sm:%s1706]
                %1876 = vst [vmem:[%s1714 + $0x500] sm:%s1706] %v1875
                %v1877 = vld [vmem:[%s1713 + $0x288] sm:%s1706]
                %1878 = vst [vmem:[%s1714 + $0x508] sm:%s1706] %v1877
                %v1879 = vld [vmem:[%s1713 + $0x290] sm:%s1706]
                %1880 = vst [vmem:[%s1714 + $0x510] sm:%s1706] %v1879
                %v1881 = vld [vmem:[%s1713 + $0x298] sm:%s1706]
                %1882 = vst [vmem:[%s1714 + $0x518] sm:%s1706] %v1881
                %v1883 = vld [vmem:[%s1713 + $0x2a0] sm:%s1706]
                %1884 = vst [vmem:[%s1714 + $0x520] sm:%s1706] %v1883
                %v1885 = vld [vmem:[%s1713 + $0x2a8] sm:%s1706]
                %1886 = vst [vmem:[%s1714 + $0x528] sm:%s1706] %v1885
                %v1887 = vld [vmem:[%s1713 + $0x2b0] sm:%s1706]
                %1888 = vst [vmem:[%s1714 + $0x530] sm:%s1706] %v1887
                %v1889 = vld [vmem:[%s1713 + $0x2b8] sm:%s1706]
                %1890 = vst [vmem:[%s1714 + $0x538] sm:%s1706] %v1889
                %v1891 = vld [vmem:[%s1713 + $0x2c0] sm:%s1706]
                %1892 = vst [vmem:[%s1714 + $0x580] sm:%s1706] %v1891
                %v1893 = vld [vmem:[%s1713 + $0x2c8] sm:%s1706]
                %1894 = vst [vmem:[%s1714 + $0x588] sm:%s1706] %v1893
                %v1895 = vld [vmem:[%s1713 + $0x2d0] sm:%s1706]
                %1896 = vst [vmem:[%s1714 + $0x590] sm:%s1706] %v1895
                %v1897 = vld [vmem:[%s1713 + $0x2d8] sm:%s1706]
                %1898 = vst [vmem:[%s1714 + $0x598] sm:%s1706] %v1897
                %v1899 = vld [vmem:[%s1713 + $0x2e0] sm:%s1706]
                %1900 = vst [vmem:[%s1714 + $0x5a0] sm:%s1706] %v1899
                %v1901 = vld [vmem:[%s1713 + $0x2e8] sm:%s1706]
                %1902 = vst [vmem:[%s1714 + $0x5a8] sm:%s1706] %v1901
                %v1903 = vld [vmem:[%s1713 + $0x2f0] sm:%s1706]
                %1904 = vst [vmem:[%s1714 + $0x5b0] sm:%s1706] %v1903
                %v1905 = vld [vmem:[%s1713 + $0x2f8] sm:%s1706]
                %1906 = vst [vmem:[%s1714 + $0x5b8] sm:%s1706] %v1905
              $region146: #{vn_basic_block_1d.5} parent=140 // loop_footer
                %s1712 = sadd.s32 1, %s1708
              $region147: #{vn_basic_block_1d.5} parent=140 // loop_footer_branch
                %1707 = sbr.rel target = $region143
              $region148: #{vn_basic_block_1d.5} parent=140 // loop_exit
                _
            $region141: #{vn_basic_block_1d.5} parent=132 // pred_fallthru
              _
          $region133: #{vn_basic_block_1d.5} parent=128 // pred_fallthru
            _
          %2111 = vnop
        $region129: #{vn_basic_block_1d.5} parent=85 // pred_fallthru
          _
      $region86: #{vn_basic_block_1d.5} parent=5 // pred_fallthru
        _
      %p2112 = scmp.le.s32.totalorder 2, %s18
      // Predicated region
      $region164: #{vn_basic_block_1d.5} parent=5 // pred_check
        %p2113 = pneg %p2112
      $region165: #{vn_basic_block_1d.5} parent=5 // pred_check_branch
        %2115 = sbr.rel (%p2113) target = $region167
      $region166: #{vn_basic_block_1d.5} parent=5 // pred_region
        %s2116 = ssub.s32 %s18, 2
        // Predicated region
        $region168: #{vn_basic_block_1d.5} parent=166 // pred_check
          %p2117 = pneg %p236
        $region169: #{vn_basic_block_1d.5} parent=166 // pred_check_branch
          %2119 = sbr.rel (%p2117) target = $region171
        $region170: #{vn_basic_block_1d.5} parent=166 // pred_region
          %s2120 = sand.u32 %s221, 1
          %s2121 = sand.u32 %s221, 1
          %s2122 = smul.addr %s2121, 768
          %s2123 = scalar_lea.vmem [#allocation14], %s2122
        $region171: #{vn_basic_block_1d.5} parent=166 // pred_fallthru
          _
      $region167: #{vn_basic_block_1d.5} parent=5 // pred_fallthru
        _
    $region6: #{vn_basic_block_1d.5} parent=1 // loop_footer
      %s22 = sadd.s32 1, %s18
    $region7: #{vn_basic_block_1d.5} parent=1 // loop_footer_branch
      %17 = sbr.rel target = $region3
    $region8: #{vn_basic_block_1d.5} parent=1 // loop_exit
      _
    %2124 = vsyncpa [#allocation4], 1
    %s2125 = scalar_lea.sflag [#allocation4], 1
    %2126 = vsyncpa %s2125, 1
    %2127 = vsyncpa [#allocation6], 1
    %2128 = vsyncpa [#allocation9], 1
    %2129 = vsyncpa [#allocation12], 1

</llo_original>
